<compile_context>
chip_gen: v6e
topology: v6e:2x2x1
jax: 0.10.0
libtpu: 0.0.40
codegen_flags: <defaults>
</compile_context>

<pallas_src>
import jax
import jax.numpy as jnp
from jax.experimental import pallas as pl
from jax.experimental.pallas import tpu as pltpu

# ----------------------------- config (cfg.*) -------------------------------
N_IMGS = 2
H = 16
W = 16
N_RAYS = 256          # cfg.N_RAYS
TILE = 128            # rays per grid step (lanes)
N_SAMPLES = 16        # samples per ray (renderer)
HID = 32              # SDF / color MLP hidden width
FEAT = 16             # SDF feature width
LAMBDA_FINE = 1.0     # cfg.LOSS.LAMBDA_FINE
LAMBDA_EIKONAL = 0.1  # cfg.LOSS.LAMBDA_EIKONAL
FOCAL_ORDER = 2       # cfg.FOCAL_ORDER
NORMALIZE_DIR = True  # cfg.NORMALIZE_DIR
OPENGL_SYS = True     # camera looks down -z

OUT_ROWS = 8          # packed output sublanes: [rgb(3), wsum, eik, depth, pad(2)]
DIST = 2.0 / float(N_SAMPLES - 1)   # far - near == 2 exactly (unit sphere)
M_ALL = TILE * N_SAMPLES            # batched point count per grid step
CIN = 9 + FEAT                      # fused color-MLP input width

_F32 = jnp.float32


# ============================ Pallas render kernel ===========================
def _render_kernel(
    rays_o_ref, rays_d_ref, inv_s_ref, offs_ref,
    w0t_ref, b0c_ref, w1t_ref, b1c_ref, whead_ref, bhead_ref,
    w0_ref, w1_ref, w2s_ref,
    wc0_ref, bc0_ref, wc1t_ref, bc1_ref,
    out_ref,
):
    o_t = rays_o_ref[...]            # (3, TILE)   rays on lanes
    d_t = rays_d_ref[...]            # (3, TILE)
    inv_s = inv_s_ref[0, 0]          # scalar (SMEM)
    offs = offs_ref[...]             # (1, M_ALL) lane-dense sample offsets

    w0t = w0t_ref[...]; b0c = b0c_ref[...]      # (HID,3), (HID,1)
    w1t = w1t_ref[...]; b1c = b1c_ref[...]      # (HID,HID), (HID,1)
    whead = whead_ref[...]; bhead = bhead_ref[...]  # (1+FEAT,HID), (1+FEAT,1)
    w0 = w0_ref[...]; w1 = w1_ref[...]; w2s = w2s_ref[...]  # grad path (untransposed)
    wc0 = wc0_ref[...]; bc0 = bc0_ref[...]       # (HID, CIN), (HID,1)
    wc1t = wc1t_ref[...]; bc1 = bc1_ref[...]     # (3, HID), (3,1)

    def act_pair(pre):
        # shared exponential between softplus and its derivative (sigmoid);
        # stable for both signs of `pre`.
        e = jnp.exp(-jnp.abs(pre))
        denom = 1.0 + e
        sig = jnp.where(pre >= 0.0, 1.0, e) / denom
        sp = jnp.maximum(pre, 0.0) + jnp.log(denom)
        return sp, sig

    def sigmoid(x):
        e = jnp.exp(-jnp.abs(x))
        return jnp.where(x >= 0.0, 1.0, e) / (1.0 + e)

    # ---- near from unit sphere (far - near == 2, dist is constant) ---------
    a = jnp.sum(d_t * d_t, axis=0, keepdims=True)       # (1, TILE)
    od = jnp.sum(o_t * d_t, axis=0, keepdims=True)       # (1, TILE)
    near = -od / a - 1.0                                  # (1, TILE)

    # ---- lane-dense (sample-major) point batch: lanes = s*TILE + r ---------
    o_rep = jnp.tile(o_t, (1, N_SAMPLES))                 # (3, M)
    dirs = jnp.tile(d_t, (1, N_SAMPLES))                  # (3, M)
    z_row = jnp.tile(near, (1, N_SAMPLES)) + offs         # (1, M)
    pts = o_rep + dirs * z_row                            # (3, M)

    # ---- SDF trunk: features on sublanes, points on lanes ------------------
    pre0 = jnp.dot(w0t, pts, preferred_element_type=_F32) + b0c    # (HID, M)
    h0, sig0 = act_pair(pre0)
    pre1 = jnp.dot(w1t, h0, preferred_element_type=_F32) + b1c     # (HID, M)
    h1, sig1 = act_pair(pre1)

    # fused sdf + feature head
    head = jnp.dot(whead, h1, preferred_element_type=_F32) + bhead  # (1+FEAT, M)
    sdf = head[0:1, :]                                     # (1, M)
    feat = head[1:1 + FEAT, :]                             # (FEAT, M)

    # ---- analytic SDF gradient (exact Jacobian of the softplus trunk) ------
    # grads_t = w0 @ ((w1 @ (sig1 * w2s)) * sig0)
    v1 = sig1 * w2s                                        # (HID, M)
    v0 = jnp.dot(w1, v1, preferred_element_type=_F32) * sig0
    grads = jnp.dot(w0, v0, preferred_element_type=_F32)   # (3, M)

    gsq = jnp.sum(grads * grads, axis=0, keepdims=True) + 1e-8     # (1, M)
    inv_gn = jax.lax.rsqrt(gsq)                                     # EUP
    gnorm = gsq * inv_gn
    eik_term = (gnorm - 1.0) ** 2                                   # (1, M)

    # ---- NeuS alpha (cos_anneal_ratio = 1) ----------------------------------
    true_cos = jnp.sum(dirs * grads, axis=0, keepdims=True)         # (1, M)
    iter_cos = -jnp.abs(true_cos)
    half = iter_cos * (0.5 * DIST)
    prev_cdf = sigmoid((sdf - half) * inv_s)
    next_cdf = sigmoid((sdf + half) * inv_s)
    alpha = jnp.clip((prev_cdf - next_cdf + 1e-5) / (prev_cdf + 1e-5), 0.0, 1.0)

    # ---- color MLP: single fused first-layer matmul -------------------------
    cin = jnp.concatenate([pts, dirs, grads * inv_gn, feat], axis=0)  # (CIN, M)
    hc = jnp.maximum(jnp.dot(wc0, cin, preferred_element_type=_F32) + bc0, 0.0)
    rgb = sigmoid(jnp.dot(wc1t, hc, preferred_element_type=_F32) + bc1)  # (3, M)

    # ---- eikonal mean over samples (independent of transmittance) ----------
    eik = jnp.zeros((1, TILE), _F32)
    for s in range(N_SAMPLES):
        eik = eik + eik_term[:, s * TILE:(s + 1) * TILE]

    # ---- sequential transmittance compositing (static lane slices) ---------
    T = jnp.ones((1, TILE), _F32)
    col = jnp.zeros((3, TILE), _F32)
    wsum = jnp.zeros((1, TILE), _F32)
    dep = jnp.zeros((1, TILE), _F32)
    for s in range(N_SAMPLES):
        lo = s * TILE
        a_s = alpha[:, lo:lo + TILE]               # (1, TILE) static lane slice
        w = a_s * T
        col = col + w * rgb[:, lo:lo + TILE]
        wsum = wsum + w
        dep = dep + w * z_row[:, lo:lo + TILE]
        T = T * (1.0 - a_s)

    # ---- single lane-dense packed output store ------------------------------
    packed = jnp.concatenate(
        [col, wsum, eik * (1.0 / float(N_SAMPLES)), dep,
         jnp.zeros((2, TILE), _F32)], axis=0)       # (8, TILE)
    out_ref[...] = packed


def render_rays_pallas(rays_o, rays_d, inv_s, params):
    """Run the NeuS-style renderer over (R, 3) rays with a Pallas kernel."""
    R = rays_o.shape[0]
    assert R % TILE == 0

    # transposed, lane-dense ray layout: (3, R), rays on lanes
    rays_o_t = jnp.transpose(rays_o)
    rays_d_t = jnp.transpose(rays_d)

    ray_spec = pl.BlockSpec((3, TILE), lambda i: (0, i))
    out_spec = pl.BlockSpec((OUT_ROWS, TILE), lambda i: (0, i))
    smem_spec = pl.BlockSpec(memory_space=pltpu.MemorySpace.SMEM)

    def full_spec(arr):
        nd = arr.ndim
        return pl.BlockSpec(arr.shape, lambda i, _nd=nd: (0,) * _nd)

    # ---- host-side weight prep (tiny, free) --------------------------------
    w0 = params["w0"]; w1 = params["w1"]
    w2s = params["w2s"]; w2f = params["w2f"]
    w0t = jnp.transpose(w0)                              # (HID, 3)
    w1t = jnp.transpose(w1)                              # (HID, HID)
    b0c = jnp.reshape(params["b0"], (HID, 1))
    b1c = jnp.reshape(params["b1"], (HID, 1))
    whead_t = jnp.transpose(jnp.concatenate([w2s, w2f], axis=1))   # (1+FEAT, HID)
    bhead_c = jnp.reshape(
        jnp.concatenate([params["b2s"], params["b2f"]], axis=1), (1 + FEAT, 1))
    wc0_all_t = jnp.transpose(jnp.concatenate(
        [params["wc0x"], params["wc0d"], params["wc0n"], params["wc0f"]],
        axis=0))                                          # (HID, CIN)
    bc0c = jnp.reshape(params["bc0"], (HID, 1))
    wc1t = jnp.transpose(params["wc1"])                   # (3, HID)
    bc1c = jnp.reshape(params["bc1"], (3, 1))

    # lane-dense sample offsets: offs[0, s*TILE + r] = s * DIST
    offs_row = jnp.repeat(
        jnp.arange(N_SAMPLES, dtype=_F32) * DIST, TILE).reshape(1, M_ALL)

    weights = [w0t, b0c, w1t, b1c, whead_t, bhead_c,
               w0, w1, w2s,
               wc0_all_t, bc0c, wc1t, bc1c]

    in_specs = (
        [ray_spec, ray_spec, smem_spec, full_spec(offs_row)]
        + [full_spec(w) for w in weights]
    )

    fn = pl.pallas_call(
        _render_kernel,
        grid=(R // TILE,),
        in_specs=in_specs,
        out_specs=out_spec,
        out_shape=jax.ShapeDtypeStruct((OUT_ROWS, R), _F32),
        compiler_params=pltpu.CompilerParams(
            dimension_semantics=("parallel",),
            vmem_limit_bytes=32 * 1024 * 1024),
    )
    packed = fn(rays_o_t, rays_d_t, jnp.reshape(inv_s, (1, 1)), offs_row, *weights)

    color = jnp.transpose(packed[0:3, :])    # (R, 3)
    wsum = jnp.transpose(packed[3:4, :])     # (R, 1)
    eik = jnp.transpose(packed[4:5, :])      # (R, 1)
    depth = jnp.transpose(packed[5:6, :])    # (R, 1)
    return color, wsum, eik, depth


# ================================ JAX glue ===================================
def rodrigues(rvec, eps=1e-8):
    """(N,3) axis-angle -> (N,3,3) rotation matrices."""
    theta = jnp.linalg.norm(rvec, axis=-1, keepdims=True)
    k = rvec / (theta + eps)
    kx, ky, kz = k[..., 0], k[..., 1], k[..., 2]
    zero = jnp.zeros_like(kx)
    K = jnp.stack(
        [jnp.stack([zero, -kz, ky], -1),
         jnp.stack([kz, zero, -kx], -1),
         jnp.stack([-ky, kx, zero], -1)], -2)
    I = jnp.eye(3, dtype=rvec.dtype)
    st = jnp.sin(theta)[..., None]
    ct = jnp.cos(theta)[..., None]
    return I + st * K + (1.0 - ct) * (K @ K)


def focal_net(init_focal, fx_param, fy_param, order=FOCAL_ORDER):
    fx = init_focal[0] * fx_param ** order
    fy = init_focal[1] * fy_param ** order
    return jnp.stack([fx, fy])


def pose_net(img_ids, init_c2w, r_param, t_param):
    """Refine init_c2w with learnable (r, t): c2w = [R(r)|t] @ init_c2w."""
    r = r_param[img_ids]                    # (B,3)
    t = t_param[img_ids]                    # (B,3)
    Rm = rodrigues(r)                       # (B,3,3)
    delta = jnp.concatenate(
        [jnp.concatenate([Rm, t[..., None]], axis=-1),
         jnp.broadcast_to(jnp.array([[[0., 0., 0., 1.]]], _F32),
                          (r.shape[0], 1, 4))], axis=-2)
    return delta @ init_c2w[img_ids]        # (B,4,4)


def get_rays_multicam(key, c2w, focal, images_nhwc, n_rays,
                      normalize=NORMALIZE_DIR, opengl=OPENGL_SYS):
    n_imgs, h, w, _ = images_nhwc.shape
    k1, k2, k3 = jax.random.split(key, 3)
    img_idx = jax.random.randint(k1, (n_rays,), 0, n_imgs)
    us = jax.random.randint(k2, (n_rays,), 0, w)
    vs = jax.random.randint(k3, (n_rays,), 0, h)

    fx, fy = focal[0], focal[1]
    u_f = us.astype(_F32)
    v_f = vs.astype(_F32)
    z_sign = -1.0 if opengl else 1.0
    dirs = jnp.stack(
        [(u_f - 0.5 * w) / fx,
         -(v_f - 0.5 * h) / fy,
         z_sign * jnp.ones_like(u_f)], axis=-1)                 # (R,3) cam frame

    Rsel = c2w[img_idx, :3, :3]                                 # (R,3,3)
    rays_d = jnp.einsum("rij,rj->ri", Rsel, dirs)
    if normalize:
        rays_d = rays_d / (jnp.linalg.norm(rays_d, axis=-1, keepdims=True) + 1e-8)
    rays_o = c2w[img_idx, :3, 3]
    rgb_gt = images_nhwc[img_idx, vs, us, :]
    return rays_o, rays_d, rgb_gt


def init_renderer_params(key):
    ks = jax.random.split(key, 9)

    def lin(k, fan_in, fan_out):
        return (jax.random.normal(k, (fan_in, fan_out), _F32)
                / jnp.sqrt(jnp.array(fan_in, _F32)))

    params = {
        "w0": lin(ks[0], 3, HID),      "b0": jnp.zeros((1, HID), _F32),
        "w1": lin(ks[1], HID, HID),    "b1": jnp.zeros((1, HID), _F32),
        "w2s": lin(ks[2], HID, 1),     "b2s": jnp.full((1, 1), 0.3, _F32),
        "w2f": lin(ks[3], HID, FEAT),  "b2f": jnp.zeros((1, FEAT), _F32),
        "wc0x": lin(ks[4], 3, HID),
        "wc0d": lin(ks[5], 3, HID),
        "wc0n": lin(ks[6], 3, HID),
        "wc0f": lin(ks[7], FEAT, HID), "bc0": jnp.zeros((1, HID), _F32),
        "wc1": lin(ks[8], HID, 3),     "bc1": jnp.zeros((1, 3), _F32),
    }
    return params


def neus_training_step(batch, params, scene, ray_key):
    """Mirror of NeuS_Trainer.training_step forward semantics."""
    images = batch["images"]                           # NCHW, like the torch module
    images_nhwc = jnp.transpose(images, (0, 2, 3, 1))  # permute(0,2,3,1)
    img_ids = batch["img_ids"]

    focal = focal_net(scene["init_focal"], params["fx_param"], params["fy_param"])
    c2w = pose_net(img_ids, scene["init_c2w"], params["r_param"], params["t_param"])

    rays_o, rays_d, rgb_gt = get_rays_multicam(
        ray_key, c2w, focal, images_nhwc, N_RAYS)

    rays_o = (rays_o - scene["origin"]).astype(_F32)
    rays_o = (rays_o / scene["radius"]).astype(_F32)

    color_fine, weight_sum, grad_err, depth = render_rays_pallas(
        rays_o, rays_d, params["inv_s"], params)

    # compute_loss
    rgb_fine_loss = jnp.mean((color_fine - rgb_gt) ** 2)   # MSELoss
    eikonal_loss = jnp.mean(grad_err)
    loss = LAMBDA_FINE * rgb_fine_loss + LAMBDA_EIKONAL * eikonal_loss

    render_dict = {
        "color_fine": color_fine,
        "weight_sum": weight_sum,
        "gradient_error": eikonal_loss,
        "depth": depth,
        "rgb_map_gt": rgb_gt,
        "cam_ids": img_ids,
    }
    loss_dict = {
        "loss": loss,
        "rgb_fine_loss": rgb_fine_loss,
        "eikonal_loss": eikonal_loss,
    }
    return render_dict, loss_dict


# ================================== main =====================================
if __name__ == "__main__":
    key = jax.random.PRNGKey(0)
    k_img, k_pose, k_mlp, k_ray = jax.random.split(key, 4)

    # deterministic synthetic batch (NCHW images, as the torch module receives)
    images = jax.random.uniform(k_img, (N_IMGS, 3, H, W), _F32)
    img_ids = jnp.arange(N_IMGS, dtype=jnp.int32)
    batch = {"images": images, "img_ids": img_ids}

    # scene data (data['origin'], data['radius'], data['focal'], data['poses'])
    k_rot, k_tr = jax.random.split(k_pose)
    init_rvec = 0.1 * jax.random.normal(k_rot, (N_IMGS, 3), _F32)
    init_R = rodrigues(init_rvec)
    init_t = jnp.concatenate(
        [0.2 * jax.random.normal(k_tr, (N_IMGS, 2), _F32),
         3.0 * jnp.ones((N_IMGS, 1), _F32)], axis=-1)
    init_c2w = jnp.concatenate(
        [jnp.concatenate([init_R, init_t[..., None]], axis=-1),
         jnp.broadcast_to(jnp.array([[[0., 0., 0., 1.]]], _F32), (N_IMGS, 1, 4))],
        axis=-2)                                           # (N_IMGS,4,4)
    scene = {
        "init_c2w": init_c2w,
        "init_focal": jnp.array([20.0, 20.0], _F32),
        "origin": jnp.zeros((3,), _F32),
        "radius": jnp.array(1.5, _F32),
    }

    # parameters (Focal_Net / Pose_Net / renderer MLPs / variance)
    params = init_renderer_params(k_mlp)
    params["fx_param"] = jnp.array(1.0, _F32)
    params["fy_param"] = jnp.array(1.0, _F32)
    params["r_param"] = jnp.zeros((N_IMGS, 3), _F32)
    params["t_param"] = jnp.zeros((N_IMGS, 3), _F32)
    params["inv_s"] = jnp.full((1, 1), jnp.exp(0.3 * 10.0), _F32)

    render_dict, loss_dict = neus_training_step(batch, params, scene, k_ray)
    jax.block_until_ready(loss_dict["loss"])
    jax.block_until_ready(render_dict["color_fine"])
    print("KERNEL_OK")
</pallas_src>

<mosaic_0001>
module attributes {stable_mosaic.version = 11 : i64} {
  func.func @_render_kernel(%arg0: i32, %arg1: memref<3x128xf32, #tpu.memory_space<vmem>>, %arg2: memref<3x128xf32, #tpu.memory_space<vmem>>, %arg3: memref<1x1xf32, #tpu.memory_space<smem>>, %arg4: memref<1x2048xf32, #tpu.memory_space<vmem>>, %arg5: memref<32x3xf32, #tpu.memory_space<vmem>>, %arg6: memref<32x1xf32, #tpu.memory_space<vmem>>, %arg7: memref<32x32xf32, #tpu.memory_space<vmem>>, %arg8: memref<32x1xf32, #tpu.memory_space<vmem>>, %arg9: memref<17x32xf32, #tpu.memory_space<vmem>>, %arg10: memref<17x1xf32, #tpu.memory_space<vmem>>, %arg11: memref<3x32xf32, #tpu.memory_space<vmem>>, %arg12: memref<32x32xf32, #tpu.memory_space<vmem>>, %arg13: memref<32x1xf32, #tpu.memory_space<vmem>>, %arg14: memref<32x25xf32, #tpu.memory_space<vmem>>, %arg15: memref<32x1xf32, #tpu.memory_space<vmem>>, %arg16: memref<3x32xf32, #tpu.memory_space<vmem>>, %arg17: memref<3x1xf32, #tpu.memory_space<vmem>>, %arg18: memref<8x128xf32, #tpu.memory_space<vmem>>) attributes {dimension_semantics = [#tpu.dimension_semantics<parallel>], iteration_bounds = array<i64: 2>, scalar_prefetch = 0 : i64, scratch_operands = 0 : i64, tpu.core_type = #tpu.core_type<tc>, window_params = [{transform_indices = @transform_0, window_bounds = array<i64: 3, 128>}, {transform_indices = @transform_1, window_bounds = array<i64: 3, 128>}, {transform_indices = @transform_2, window_bounds = array<i64: 1, 1>}, {pipeline_mode = #tpu.pipeline_mode<synchronous>, transform_indices = @transform_3, window_bounds = array<i64: 1, 2048>}, {pipeline_mode = #tpu.pipeline_mode<synchronous>, transform_indices = @transform_4, window_bounds = array<i64: 32, 3>}, {pipeline_mode = #tpu.pipeline_mode<synchronous>, transform_indices = @transform_5, window_bounds = array<i64: 32, 1>}, {pipeline_mode = #tpu.pipeline_mode<synchronous>, transform_indices = @transform_6, window_bounds = array<i64: 32, 32>}, {pipeline_mode = #tpu.pipeline_mode<synchronous>, transform_indices = @transform_7, window_bounds = array<i64: 32, 1>}, {pipeline_mode = #tpu.pipeline_mode<synchronous>, transform_indices = @transform_8, window_bounds = array<i64: 17, 32>}, {pipeline_mode = #tpu.pipeline_mode<synchronous>, transform_indices = @transform_9, window_bounds = array<i64: 17, 1>}, {pipeline_mode = #tpu.pipeline_mode<synchronous>, transform_indices = @transform_10, window_bounds = array<i64: 3, 32>}, {pipeline_mode = #tpu.pipeline_mode<synchronous>, transform_indices = @transform_11, window_bounds = array<i64: 32, 32>}, {pipeline_mode = #tpu.pipeline_mode<synchronous>, transform_indices = @transform_12, window_bounds = array<i64: 32, 1>}, {pipeline_mode = #tpu.pipeline_mode<synchronous>, transform_indices = @transform_13, window_bounds = array<i64: 32, 25>}, {pipeline_mode = #tpu.pipeline_mode<synchronous>, transform_indices = @transform_14, window_bounds = array<i64: 32, 1>}, {pipeline_mode = #tpu.pipeline_mode<synchronous>, transform_indices = @transform_15, window_bounds = array<i64: 3, 32>}, {pipeline_mode = #tpu.pipeline_mode<synchronous>, transform_indices = @transform_16, window_bounds = array<i64: 3, 1>}, {transform_indices = @transform_17, window_bounds = array<i64: 8, 128>}]} {
    %c0 = arith.constant 0 : index
    %c0_0 = arith.constant 0 : index
    %0 = vector.load %arg1[%c0, %c0_0] : memref<3x128xf32, #tpu.memory_space<vmem>>, vector<3x128xf32>
    %c0_1 = arith.constant 0 : index
    %c0_2 = arith.constant 0 : index
    %1 = vector.load %arg2[%c0_1, %c0_2] : memref<3x128xf32, #tpu.memory_space<vmem>>, vector<3x128xf32>
    %c0_3 = arith.constant 0 : index
    %c0_4 = arith.constant 0 : index
    %2 = memref.load %arg3[%c0_3, %c0_4] : memref<1x1xf32, #tpu.memory_space<smem>>
    %c0_5 = arith.constant 0 : index
    %c0_6 = arith.constant 0 : index
    %3 = vector.load %arg4[%c0_5, %c0_6] : memref<1x2048xf32, #tpu.memory_space<vmem>>, vector<1x2048xf32>
    %c0_7 = arith.constant 0 : index
    %c0_8 = arith.constant 0 : index
    %4 = vector.load %arg5[%c0_7, %c0_8] : memref<32x3xf32, #tpu.memory_space<vmem>>, vector<32x3xf32>
    %c0_9 = arith.constant 0 : index
    %c0_10 = arith.constant 0 : index
    %5 = vector.load %arg6[%c0_9, %c0_10] : memref<32x1xf32, #tpu.memory_space<vmem>>, vector<32x1xf32>
    %c0_11 = arith.constant 0 : index
    %c0_12 = arith.constant 0 : index
    %6 = vector.load %arg7[%c0_11, %c0_12] : memref<32x32xf32, #tpu.memory_space<vmem>>, vector<32x32xf32>
    %c0_13 = arith.constant 0 : index
    %c0_14 = arith.constant 0 : index
    %7 = vector.load %arg8[%c0_13, %c0_14] : memref<32x1xf32, #tpu.memory_space<vmem>>, vector<32x1xf32>
    %c0_15 = arith.constant 0 : index
    %c0_16 = arith.constant 0 : index
    %8 = vector.load %arg9[%c0_15, %c0_16] : memref<17x32xf32, #tpu.memory_space<vmem>>, vector<17x32xf32>
    %c0_17 = arith.constant 0 : index
    %c0_18 = arith.constant 0 : index
    %9 = vector.load %arg10[%c0_17, %c0_18] : memref<17x1xf32, #tpu.memory_space<vmem>>, vector<17x1xf32>
    %c0_19 = arith.constant 0 : index
    %c0_20 = arith.constant 0 : index
    %10 = vector.load %arg11[%c0_19, %c0_20] : memref<3x32xf32, #tpu.memory_space<vmem>>, vector<3x32xf32>
    %c0_21 = arith.constant 0 : index
    %c0_22 = arith.constant 0 : index
    %11 = vector.load %arg12[%c0_21, %c0_22] : memref<32x32xf32, #tpu.memory_space<vmem>>, vector<32x32xf32>
    %c0_23 = arith.constant 0 : index
    %c0_24 = arith.constant 0 : index
    %12 = vector.load %arg13[%c0_23, %c0_24] : memref<32x1xf32, #tpu.memory_space<vmem>>, vector<32x1xf32>
    %c0_25 = arith.constant 0 : index
    %c0_26 = arith.constant 0 : index
    %13 = vector.load %arg14[%c0_25, %c0_26] : memref<32x25xf32, #tpu.memory_space<vmem>>, vector<32x25xf32>
    %c0_27 = arith.constant 0 : index
    %c0_28 = arith.constant 0 : index
    %14 = vector.load %arg15[%c0_27, %c0_28] : memref<32x1xf32, #tpu.memory_space<vmem>>, vector<32x1xf32>
    %c0_29 = arith.constant 0 : index
    %c0_30 = arith.constant 0 : index
    %15 = vector.load %arg16[%c0_29, %c0_30] : memref<3x32xf32, #tpu.memory_space<vmem>>, vector<3x32xf32>
    %c0_31 = arith.constant 0 : index
    %c0_32 = arith.constant 0 : index
    %16 = vector.load %arg17[%c0_31, %c0_32] : memref<3x1xf32, #tpu.memory_space<vmem>>, vector<3x1xf32>
    %17 = arith.mulf %1, %1 : vector<3x128xf32>
    %cst = arith.constant dense<0.000000e+00> : vector<128xf32>
    %18 = vector.multi_reduction <add>, %17, %cst [0] : vector<3x128xf32> to vector<128xf32>
    %19 = vector.shape_cast %18 : vector<128xf32> to vector<1x128xf32>
    %20 = arith.mulf %0, %1 : vector<3x128xf32>
    %cst_33 = arith.constant dense<0.000000e+00> : vector<128xf32>
    %21 = vector.multi_reduction <add>, %20, %cst_33 [0] : vector<3x128xf32> to vector<128xf32>
    %22 = vector.shape_cast %21 : vector<128xf32> to vector<1x128xf32>
    %cst_34 = arith.constant 0.000000e+00 : f32
    %23 = vector.broadcast %cst_34 : f32 to vector<1x128xf32>
    %24 = arith.subf %23, %22 : vector<1x128xf32>
    %25 = arith.divf %24, %19 : vector<1x128xf32>
    %cst_35 = arith.constant 1.000000e+00 : f32
    %26 = vector.broadcast %cst_35 : f32 to vector<1x128xf32>
    %27 = arith.subf %25, %26 : vector<1x128xf32>
    %28 = tpu.concatenate %0, %0, %0, %0, %0, %0, %0, %0, %0, %0, %0, %0, %0, %0, %0, %0 in 1 : vector<3x128xf32>, vector<3x128xf32>, vector<3x128xf32>, vector<3x128xf32>, vector<3x128xf32>, vector<3x128xf32>, vector<3x128xf32>, vector<3x128xf32>, vector<3x128xf32>, vector<3x128xf32>, vector<3x128xf32>, vector<3x128xf32>, vector<3x128xf32>, vector<3x128xf32>, vector<3x128xf32>, vector<3x128xf32> -> vector<3x2048xf32>
    %29 = tpu.concatenate %1, %1, %1, %1, %1, %1, %1, %1, %1, %1, %1, %1, %1, %1, %1, %1 in 1 : vector<3x128xf32>, vector<3x128xf32>, vector<3x128xf32>, vector<3x128xf32>, vector<3x128xf32>, vector<3x128xf32>, vector<3x128xf32>, vector<3x128xf32>, vector<3x128xf32>, vector<3x128xf32>, vector<3x128xf32>, vector<3x128xf32>, vector<3x128xf32>, vector<3x128xf32>, vector<3x128xf32>, vector<3x128xf32> -> vector<3x2048xf32>
    %30 = tpu.concatenate %27, %27, %27, %27, %27, %27, %27, %27, %27, %27, %27, %27, %27, %27, %27, %27 in 1 : vector<1x128xf32>, vector<1x128xf32>, vector<1x128xf32>, vector<1x128xf32>, vector<1x128xf32>, vector<1x128xf32>, vector<1x128xf32>, vector<1x128xf32>, vector<1x128xf32>, vector<1x128xf32>, vector<1x128xf32>, vector<1x128xf32>, vector<1x128xf32>, vector<1x128xf32>, vector<1x128xf32>, vector<1x128xf32> -> vector<1x2048xf32>
    %31 = arith.addf %30, %3 : vector<1x2048xf32>
    %32 = vector.broadcast %31 : vector<1x2048xf32> to vector<3x2048xf32>
    %33 = arith.mulf %29, %32 : vector<3x2048xf32>
    %34 = arith.addf %28, %33 : vector<3x2048xf32>
    %cst_36 = arith.constant dense<0.000000e+00> : vector<32x2048xf32>
    %35 = tpu.matmul %4, %34, %cst_36 {dimension_numbers = #tpu.dot_dimension_numbers<[1], [0], [0], [1], [0, 0, 1, 1], [], []>} : vector<32x3xf32>, vector<3x2048xf32>, vector<32x2048xf32> -> vector<32x2048xf32>
    %36 = vector.broadcast %5 : vector<32x1xf32> to vector<32x2048xf32>
    %37 = arith.addf %35, %36 : vector<32x2048xf32>
    %38 = math.absf %37 : vector<32x2048xf32>
    %cst_37 = arith.constant 0.000000e+00 : f32
    %39 = vector.broadcast %cst_37 : f32 to vector<32x2048xf32>
    %40 = arith.subf %39, %38 : vector<32x2048xf32>
    %41 = math.exp %40 : vector<32x2048xf32>
    %cst_38 = arith.constant 1.000000e+00 : f32
    %42 = vector.broadcast %cst_38 : f32 to vector<32x2048xf32>
    %43 = arith.addf %42, %41 : vector<32x2048xf32>
    %cst_39 = arith.constant 0.000000e+00 : f32
    %44 = vector.broadcast %cst_39 : f32 to vector<32x2048xf32>
    %45 = arith.cmpf oge, %37, %44 : vector<32x2048xf32>
    %cst_40 = arith.constant 1.000000e+00 : f32
    %46 = vector.broadcast %cst_40 : f32 to vector<32x2048xf32>
    %47 = arith.select %45, %46, %41 : vector<32x2048xi1>, vector<32x2048xf32>
    %48 = arith.divf %47, %43 : vector<32x2048xf32>
    %cst_41 = arith.constant 0.000000e+00 : f32
    %49 = vector.broadcast %cst_41 : f32 to vector<32x2048xf32>
    %50 = arith.maximumf %37, %49 : vector<32x2048xf32>
    %51 = math.log %43 : vector<32x2048xf32>
    %52 = arith.addf %50, %51 : vector<32x2048xf32>
    %cst_42 = arith.constant dense<0.000000e+00> : vector<32x2048xf32>
    %53 = tpu.matmul %6, %52, %cst_42 {dimension_numbers = #tpu.dot_dimension_numbers<[1], [0], [0], [1], [0, 0, 1, 1], [], []>} : vector<32x32xf32>, vector<32x2048xf32>, vector<32x2048xf32> -> vector<32x2048xf32>
    %54 = vector.broadcast %7 : vector<32x1xf32> to vector<32x2048xf32>
    %55 = arith.addf %53, %54 : vector<32x2048xf32>
    %56 = math.absf %55 : vector<32x2048xf32>
    %cst_43 = arith.constant 0.000000e+00 : f32
    %57 = vector.broadcast %cst_43 : f32 to vector<32x2048xf32>
    %58 = arith.subf %57, %56 : vector<32x2048xf32>
    %59 = math.exp %58 : vector<32x2048xf32>
    %cst_44 = arith.constant 1.000000e+00 : f32
    %60 = vector.broadcast %cst_44 : f32 to vector<32x2048xf32>
    %61 = arith.addf %60, %59 : vector<32x2048xf32>
    %cst_45 = arith.constant 0.000000e+00 : f32
    %62 = vector.broadcast %cst_45 : f32 to vector<32x2048xf32>
    %63 = arith.cmpf oge, %55, %62 : vector<32x2048xf32>
    %cst_46 = arith.constant 1.000000e+00 : f32
    %64 = vector.broadcast %cst_46 : f32 to vector<32x2048xf32>
    %65 = arith.select %63, %64, %59 : vector<32x2048xi1>, vector<32x2048xf32>
    %66 = arith.divf %65, %61 : vector<32x2048xf32>
    %cst_47 = arith.constant 0.000000e+00 : f32
    %67 = vector.broadcast %cst_47 : f32 to vector<32x2048xf32>
    %68 = arith.maximumf %55, %67 : vector<32x2048xf32>
    %69 = math.log %61 : vector<32x2048xf32>
    %70 = arith.addf %68, %69 : vector<32x2048xf32>
    %cst_48 = arith.constant dense<0.000000e+00> : vector<17x2048xf32>
    %71 = tpu.matmul %8, %70, %cst_48 {dimension_numbers = #tpu.dot_dimension_numbers<[1], [0], [0], [1], [0, 0, 1, 1], [], []>} : vector<17x32xf32>, vector<32x2048xf32>, vector<17x2048xf32> -> vector<17x2048xf32>
    %72 = vector.broadcast %9 : vector<17x1xf32> to vector<17x2048xf32>
    %73 = arith.addf %71, %72 : vector<17x2048xf32>
    %74 = vector.extract_strided_slice %73 {offsets = [0, 0], sizes = [1, 2048], strides = [1, 1]} : vector<17x2048xf32> to vector<1x2048xf32>
    %75 = vector.extract_strided_slice %73 {offsets = [1, 0], sizes = [16, 2048], strides = [1, 1]} : vector<17x2048xf32> to vector<16x2048xf32>
    %76 = vector.broadcast %12 : vector<32x1xf32> to vector<32x2048xf32>
    %77 = arith.mulf %66, %76 : vector<32x2048xf32>
    %cst_49 = arith.constant dense<0.000000e+00> : vector<32x2048xf32>
    %78 = tpu.matmul %11, %77, %cst_49 {dimension_numbers = #tpu.dot_dimension_numbers<[1], [0], [0], [1], [0, 0, 1, 1], [], []>} : vector<32x32xf32>, vector<32x2048xf32>, vector<32x2048xf32> -> vector<32x2048xf32>
    %79 = arith.mulf %78, %48 : vector<32x2048xf32>
    %cst_50 = arith.constant dense<0.000000e+00> : vector<3x2048xf32>
    %80 = tpu.matmul %10, %79, %cst_50 {dimension_numbers = #tpu.dot_dimension_numbers<[1], [0], [0], [1], [0, 0, 1, 1], [], []>} : vector<3x32xf32>, vector<32x2048xf32>, vector<3x2048xf32> -> vector<3x2048xf32>
    %81 = arith.mulf %80, %80 : vector<3x2048xf32>
    %cst_51 = arith.constant dense<0.000000e+00> : vector<2048xf32>
    %82 = vector.multi_reduction <add>, %81, %cst_51 [0] : vector<3x2048xf32> to vector<2048xf32>
    %83 = vector.shape_cast %82 : vector<2048xf32> to vector<1x2048xf32>
    %cst_52 = arith.constant 9.99999993E-9 : f32
    %84 = vector.broadcast %cst_52 : f32 to vector<1x2048xf32>
    %85 = arith.addf %83, %84 : vector<1x2048xf32>
    %86 = math.rsqrt %85 : vector<1x2048xf32>
    %87 = arith.mulf %85, %86 : vector<1x2048xf32>
    %cst_53 = arith.constant 1.000000e+00 : f32
    %88 = vector.broadcast %cst_53 : f32 to vector<1x2048xf32>
    %89 = arith.subf %87, %88 : vector<1x2048xf32>
    %90 = arith.mulf %89, %89 : vector<1x2048xf32>
    %91 = arith.mulf %29, %80 : vector<3x2048xf32>
    %cst_54 = arith.constant dense<0.000000e+00> : vector<2048xf32>
    %92 = vector.multi_reduction <add>, %91, %cst_54 [0] : vector<3x2048xf32> to vector<2048xf32>
    %93 = vector.shape_cast %92 : vector<2048xf32> to vector<1x2048xf32>
    %94 = math.absf %93 : vector<1x2048xf32>
    %cst_55 = arith.constant 0.000000e+00 : f32
    %95 = vector.broadcast %cst_55 : f32 to vector<1x2048xf32>
    %96 = arith.subf %95, %94 : vector<1x2048xf32>
    %cst_56 = arith.constant 0.0666666701 : f32
    %97 = vector.broadcast %cst_56 : f32 to vector<1x2048xf32>
    %98 = arith.mulf %96, %97 : vector<1x2048xf32>
    %99 = arith.subf %74, %98 : vector<1x2048xf32>
    %100 = vector.broadcast %2 : f32 to vector<1x2048xf32>
    %101 = arith.mulf %99, %100 : vector<1x2048xf32>
    %102 = math.absf %101 : vector<1x2048xf32>
    %cst_57 = arith.constant 0.000000e+00 : f32
    %103 = vector.broadcast %cst_57 : f32 to vector<1x2048xf32>
    %104 = arith.subf %103, %102 : vector<1x2048xf32>
    %105 = math.exp %104 : vector<1x2048xf32>
    %cst_58 = arith.constant 0.000000e+00 : f32
    %106 = vector.broadcast %cst_58 : f32 to vector<1x2048xf32>
    %107 = arith.cmpf oge, %101, %106 : vector<1x2048xf32>
    %cst_59 = arith.constant 1.000000e+00 : f32
    %108 = vector.broadcast %cst_59 : f32 to vector<1x2048xf32>
    %109 = arith.select %107, %108, %105 : vector<1x2048xi1>, vector<1x2048xf32>
    %cst_60 = arith.constant 1.000000e+00 : f32
    %110 = vector.broadcast %cst_60 : f32 to vector<1x2048xf32>
    %111 = arith.addf %110, %105 : vector<1x2048xf32>
    %112 = arith.divf %109, %111 : vector<1x2048xf32>
    %113 = arith.addf %74, %98 : vector<1x2048xf32>
    %114 = vector.broadcast %2 : f32 to vector<1x2048xf32>
    %115 = arith.mulf %113, %114 : vector<1x2048xf32>
    %116 = math.absf %115 : vector<1x2048xf32>
    %cst_61 = arith.constant 0.000000e+00 : f32
    %117 = vector.broadcast %cst_61 : f32 to vector<1x2048xf32>
    %118 = arith.subf %117, %116 : vector<1x2048xf32>
    %119 = math.exp %118 : vector<1x2048xf32>
    %cst_62 = arith.constant 0.000000e+00 : f32
    %120 = vector.broadcast %cst_62 : f32 to vector<1x2048xf32>
    %121 = arith.cmpf oge, %115, %120 : vector<1x2048xf32>
    %cst_63 = arith.constant 1.000000e+00 : f32
    %122 = vector.broadcast %cst_63 : f32 to vector<1x2048xf32>
    %123 = arith.select %121, %122, %119 : vector<1x2048xi1>, vector<1x2048xf32>
    %cst_64 = arith.constant 1.000000e+00 : f32
    %124 = vector.broadcast %cst_64 : f32 to vector<1x2048xf32>
    %125 = arith.addf %124, %119 : vector<1x2048xf32>
    %126 = arith.divf %123, %125 : vector<1x2048xf32>
    %127 = arith.subf %112, %126 : vector<1x2048xf32>
    %cst_65 = arith.constant 9.99999974E-6 : f32
    %128 = vector.broadcast %cst_65 : f32 to vector<1x2048xf32>
    %129 = arith.addf %127, %128 : vector<1x2048xf32>
    %cst_66 = arith.constant 9.99999974E-6 : f32
    %130 = vector.broadcast %cst_66 : f32 to vector<1x2048xf32>
    %131 = arith.addf %112, %130 : vector<1x2048xf32>
    %132 = arith.divf %129, %131 : vector<1x2048xf32>
    %cst_67 = arith.constant 0.000000e+00 : f32
    %cst_68 = arith.constant 1.000000e+00 : f32
    %133 = vector.broadcast %cst_67 : f32 to vector<1x2048xf32>
    %134 = arith.maximumf %133, %132 : vector<1x2048xf32>
    %135 = vector.broadcast %cst_68 : f32 to vector<1x2048xf32>
    %136 = arith.minimumf %135, %134 : vector<1x2048xf32>
    %137 = vector.broadcast %86 : vector<1x2048xf32> to vector<3x2048xf32>
    %138 = arith.mulf %80, %137 : vector<3x2048xf32>
    %139 = tpu.concatenate %34, %29, %138, %75 in 0 : vector<3x2048xf32>, vector<3x2048xf32>, vector<3x2048xf32>, vector<16x2048xf32> -> vector<25x2048xf32>
    %cst_69 = arith.constant dense<0.000000e+00> : vector<32x2048xf32>
    %140 = tpu.matmul %13, %139, %cst_69 {dimension_numbers = #tpu.dot_dimension_numbers<[1], [0], [0], [1], [0, 0, 1, 1], [], []>} : vector<32x25xf32>, vector<25x2048xf32>, vector<32x2048xf32> -> vector<32x2048xf32>
    %141 = vector.broadcast %14 : vector<32x1xf32> to vector<32x2048xf32>
    %142 = arith.addf %140, %141 : vector<32x2048xf32>
    %cst_70 = arith.constant 0.000000e+00 : f32
    %143 = vector.broadcast %cst_70 : f32 to vector<32x2048xf32>
    %144 = arith.maximumf %142, %143 : vector<32x2048xf32>
    %cst_71 = arith.constant dense<0.000000e+00> : vector<3x2048xf32>
    %145 = tpu.matmul %15, %144, %cst_71 {dimension_numbers = #tpu.dot_dimension_numbers<[1], [0], [0], [1], [0, 0, 1, 1], [], []>} : vector<3x32xf32>, vector<32x2048xf32>, vector<3x2048xf32> -> vector<3x2048xf32>
    %146 = vector.broadcast %16 : vector<3x1xf32> to vector<3x2048xf32>
    %147 = arith.addf %145, %146 : vector<3x2048xf32>
    %148 = math.absf %147 : vector<3x2048xf32>
    %cst_72 = arith.constant 0.000000e+00 : f32
    %149 = vector.broadcast %cst_72 : f32 to vector<3x2048xf32>
    %150 = arith.subf %149, %148 : vector<3x2048xf32>
    %151 = math.exp %150 : vector<3x2048xf32>
    %cst_73 = arith.constant 0.000000e+00 : f32
    %152 = vector.broadcast %cst_73 : f32 to vector<3x2048xf32>
    %153 = arith.cmpf oge, %147, %152 : vector<3x2048xf32>
    %cst_74 = arith.constant 1.000000e+00 : f32
    %154 = vector.broadcast %cst_74 : f32 to vector<3x2048xf32>
    %155 = arith.select %153, %154, %151 : vector<3x2048xi1>, vector<3x2048xf32>
    %cst_75 = arith.constant 1.000000e+00 : f32
    %156 = vector.broadcast %cst_75 : f32 to vector<3x2048xf32>
    %157 = arith.addf %156, %151 : vector<3x2048xf32>
    %158 = arith.divf %155, %157 : vector<3x2048xf32>
    %cst_76 = arith.constant 0.000000e+00 : f32
    %159 = vector.broadcast %cst_76 : f32 to vector<1x128xf32>
    %160 = vector.extract_strided_slice %90 {offsets = [0, 0], sizes = [1, 128], strides = [1, 1]} : vector<1x2048xf32> to vector<1x128xf32>
    %161 = arith.addf %159, %160 : vector<1x128xf32>
    %162 = vector.extract_strided_slice %90 {offsets = [0, 128], sizes = [1, 128], strides = [1, 1]} : vector<1x2048xf32> to vector<1x128xf32>
    %163 = arith.addf %161, %162 : vector<1x128xf32>
    %164 = vector.extract_strided_slice %90 {offsets = [0, 256], sizes = [1, 128], strides = [1, 1]} : vector<1x2048xf32> to vector<1x128xf32>
    %165 = arith.addf %163, %164 : vector<1x128xf32>
    %166 = vector.extract_strided_slice %90 {offsets = [0, 384], sizes = [1, 128], strides = [1, 1]} : vector<1x2048xf32> to vector<1x128xf32>
    %167 = arith.addf %165, %166 : vector<1x128xf32>
    %168 = vector.extract_strided_slice %90 {offsets = [0, 512], sizes = [1, 128], strides = [1, 1]} : vector<1x2048xf32> to vector<1x128xf32>
    %169 = arith.addf %167, %168 : vector<1x128xf32>
    %170 = vector.extract_strided_slice %90 {offsets = [0, 640], sizes = [1, 128], strides = [1, 1]} : vector<1x2048xf32> to vector<1x128xf32>
    %171 = arith.addf %169, %170 : vector<1x128xf32>
    %172 = vector.extract_strided_slice %90 {offsets = [0, 768], sizes = [1, 128], strides = [1, 1]} : vector<1x2048xf32> to vector<1x128xf32>
    %173 = arith.addf %171, %172 : vector<1x128xf32>
    %174 = vector.extract_strided_slice %90 {offsets = [0, 896], sizes = [1, 128], strides = [1, 1]} : vector<1x2048xf32> to vector<1x128xf32>
    %175 = arith.addf %173, %174 : vector<1x128xf32>
    %176 = vector.extract_strided_slice %90 {offsets = [0, 1024], sizes = [1, 128], strides = [1, 1]} : vector<1x2048xf32> to vector<1x128xf32>
    %177 = arith.addf %175, %176 : vector<1x128xf32>
    %178 = vector.extract_strided_slice %90 {offsets = [0, 1152], sizes = [1, 128], strides = [1, 1]} : vector<1x2048xf32> to vector<1x128xf32>
    %179 = arith.addf %177, %178 : vector<1x128xf32>
    %180 = vector.extract_strided_slice %90 {offsets = [0, 1280], sizes = [1, 128], strides = [1, 1]} : vector<1x2048xf32> to vector<1x128xf32>
    %181 = arith.addf %179, %180 : vector<1x128xf32>
    %182 = vector.extract_strided_slice %90 {offsets = [0, 1408], sizes = [1, 128], strides = [1, 1]} : vector<1x2048xf32> to vector<1x128xf32>
    %183 = arith.addf %181, %182 : vector<1x128xf32>
    %184 = vector.extract_strided_slice %90 {offsets = [0, 1536], sizes = [1, 128], strides = [1, 1]} : vector<1x2048xf32> to vector<1x128xf32>
    %185 = arith.addf %183, %184 : vector<1x128xf32>
    %186 = vector.extract_strided_slice %90 {offsets = [0, 1664], sizes = [1, 128], strides = [1, 1]} : vector<1x2048xf32> to vector<1x128xf32>
    %187 = arith.addf %185, %186 : vector<1x128xf32>
    %188 = vector.extract_strided_slice %90 {offsets = [0, 1792], sizes = [1, 128], strides = [1, 1]} : vector<1x2048xf32> to vector<1x128xf32>
    %189 = arith.addf %187, %188 : vector<1x128xf32>
    %190 = vector.extract_strided_slice %90 {offsets = [0, 1920], sizes = [1, 128], strides = [1, 1]} : vector<1x2048xf32> to vector<1x128xf32>
    %191 = arith.addf %189, %190 : vector<1x128xf32>
    %cst_77 = arith.constant 1.000000e+00 : f32
    %192 = vector.broadcast %cst_77 : f32 to vector<1x128xf32>
    %cst_78 = arith.constant 0.000000e+00 : f32
    %193 = vector.broadcast %cst_78 : f32 to vector<3x128xf32>
    %cst_79 = arith.constant 0.000000e+00 : f32
    %194 = vector.broadcast %cst_79 : f32 to vector<1x128xf32>
    %cst_80 = arith.constant 0.000000e+00 : f32
    %195 = vector.broadcast %cst_80 : f32 to vector<1x128xf32>
    %196 = vector.extract_strided_slice %136 {offsets = [0, 0], sizes = [1, 128], strides = [1, 1]} : vector<1x2048xf32> to vector<1x128xf32>
    %197 = arith.mulf %196, %192 : vector<1x128xf32>
    %198 = vector.extract_strided_slice %158 {offsets = [0, 0], sizes = [3, 128], strides = [1, 1]} : vector<3x2048xf32> to vector<3x128xf32>
    %199 = vector.broadcast %197 : vector<1x128xf32> to vector<3x128xf32>
    %200 = arith.mulf %199, %198 : vector<3x128xf32>
    %201 = arith.addf %193, %200 : vector<3x128xf32>
    %202 = arith.addf %194, %197 : vector<1x128xf32>
    %203 = vector.extract_strided_slice %31 {offsets = [0, 0], sizes = [1, 128], strides = [1, 1]} : vector<1x2048xf32> to vector<1x128xf32>
    %204 = arith.mulf %197, %203 : vector<1x128xf32>
    %205 = arith.addf %195, %204 : vector<1x128xf32>
    %cst_81 = arith.constant 1.000000e+00 : f32
    %206 = vector.broadcast %cst_81 : f32 to vector<1x128xf32>
    %207 = arith.subf %206, %196 : vector<1x128xf32>
    %208 = arith.mulf %192, %207 : vector<1x128xf32>
    %209 = vector.extract_strided_slice %136 {offsets = [0, 128], sizes = [1, 128], strides = [1, 1]} : vector<1x2048xf32> to vector<1x128xf32>
    %210 = arith.mulf %209, %208 : vector<1x128xf32>
    %211 = vector.extract_strided_slice %158 {offsets = [0, 128], sizes = [3, 128], strides = [1, 1]} : vector<3x2048xf32> to vector<3x128xf32>
    %212 = vector.broadcast %210 : vector<1x128xf32> to vector<3x128xf32>
    %213 = arith.mulf %212, %211 : vector<3x128xf32>
    %214 = arith.addf %201, %213 : vector<3x128xf32>
    %215 = arith.addf %202, %210 : vector<1x128xf32>
    %216 = vector.extract_strided_slice %31 {offsets = [0, 128], sizes = [1, 128], strides = [1, 1]} : vector<1x2048xf32> to vector<1x128xf32>
    %217 = arith.mulf %210, %216 : vector<1x128xf32>
    %218 = arith.addf %205, %217 : vector<1x128xf32>
    %cst_82 = arith.constant 1.000000e+00 : f32
    %219 = vector.broadcast %cst_82 : f32 to vector<1x128xf32>
    %220 = arith.subf %219, %209 : vector<1x128xf32>
    %221 = arith.mulf %208, %220 : vector<1x128xf32>
    %222 = vector.extract_strided_slice %136 {offsets = [0, 256], sizes = [1, 128], strides = [1, 1]} : vector<1x2048xf32> to vector<1x128xf32>
    %223 = arith.mulf %222, %221 : vector<1x128xf32>
    %224 = vector.extract_strided_slice %158 {offsets = [0, 256], sizes = [3, 128], strides = [1, 1]} : vector<3x2048xf32> to vector<3x128xf32>
    %225 = vector.broadcast %223 : vector<1x128xf32> to vector<3x128xf32>
    %226 = arith.mulf %225, %224 : vector<3x128xf32>
    %227 = arith.addf %214, %226 : vector<3x128xf32>
    %228 = arith.addf %215, %223 : vector<1x128xf32>
    %229 = vector.extract_strided_slice %31 {offsets = [0, 256], sizes = [1, 128], strides = [1, 1]} : vector<1x2048xf32> to vector<1x128xf32>
    %230 = arith.mulf %223, %229 : vector<1x128xf32>
    %231 = arith.addf %218, %230 : vector<1x128xf32>
    %cst_83 = arith.constant 1.000000e+00 : f32
    %232 = vector.broadcast %cst_83 : f32 to vector<1x128xf32>
    %233 = arith.subf %232, %222 : vector<1x128xf32>
    %234 = arith.mulf %221, %233 : vector<1x128xf32>
    %235 = vector.extract_strided_slice %136 {offsets = [0, 384], sizes = [1, 128], strides = [1, 1]} : vector<1x2048xf32> to vector<1x128xf32>
    %236 = arith.mulf %235, %234 : vector<1x128xf32>
    %237 = vector.extract_strided_slice %158 {offsets = [0, 384], sizes = [3, 128], strides = [1, 1]} : vector<3x2048xf32> to vector<3x128xf32>
    %238 = vector.broadcast %236 : vector<1x128xf32> to vector<3x128xf32>
    %239 = arith.mulf %238, %237 : vector<3x128xf32>
    %240 = arith.addf %227, %239 : vector<3x128xf32>
    %241 = arith.addf %228, %236 : vector<1x128xf32>
    %242 = vector.extract_strided_slice %31 {offsets = [0, 384], sizes = [1, 128], strides = [1, 1]} : vector<1x2048xf32> to vector<1x128xf32>
    %243 = arith.mulf %236, %242 : vector<1x128xf32>
    %244 = arith.addf %231, %243 : vector<1x128xf32>
    %cst_84 = arith.constant 1.000000e+00 : f32
    %245 = vector.broadcast %cst_84 : f32 to vector<1x128xf32>
    %246 = arith.subf %245, %235 : vector<1x128xf32>
    %247 = arith.mulf %234, %246 : vector<1x128xf32>
    %248 = vector.extract_strided_slice %136 {offsets = [0, 512], sizes = [1, 128], strides = [1, 1]} : vector<1x2048xf32> to vector<1x128xf32>
    %249 = arith.mulf %248, %247 : vector<1x128xf32>
    %250 = vector.extract_strided_slice %158 {offsets = [0, 512], sizes = [3, 128], strides = [1, 1]} : vector<3x2048xf32> to vector<3x128xf32>
    %251 = vector.broadcast %249 : vector<1x128xf32> to vector<3x128xf32>
    %252 = arith.mulf %251, %250 : vector<3x128xf32>
    %253 = arith.addf %240, %252 : vector<3x128xf32>
    %254 = arith.addf %241, %249 : vector<1x128xf32>
    %255 = vector.extract_strided_slice %31 {offsets = [0, 512], sizes = [1, 128], strides = [1, 1]} : vector<1x2048xf32> to vector<1x128xf32>
    %256 = arith.mulf %249, %255 : vector<1x128xf32>
    %257 = arith.addf %244, %256 : vector<1x128xf32>
    %cst_85 = arith.constant 1.000000e+00 : f32
    %258 = vector.broadcast %cst_85 : f32 to vector<1x128xf32>
    %259 = arith.subf %258, %248 : vector<1x128xf32>
    %260 = arith.mulf %247, %259 : vector<1x128xf32>
    %261 = vector.extract_strided_slice %136 {offsets = [0, 640], sizes = [1, 128], strides = [1, 1]} : vector<1x2048xf32> to vector<1x128xf32>
    %262 = arith.mulf %261, %260 : vector<1x128xf32>
    %263 = vector.extract_strided_slice %158 {offsets = [0, 640], sizes = [3, 128], strides = [1, 1]} : vector<3x2048xf32> to vector<3x128xf32>
    %264 = vector.broadcast %262 : vector<1x128xf32> to vector<3x128xf32>
    %265 = arith.mulf %264, %263 : vector<3x128xf32>
    %266 = arith.addf %253, %265 : vector<3x128xf32>
    %267 = arith.addf %254, %262 : vector<1x128xf32>
    %268 = vector.extract_strided_slice %31 {offsets = [0, 640], sizes = [1, 128], strides = [1, 1]} : vector<1x2048xf32> to vector<1x128xf32>
    %269 = arith.mulf %262, %268 : vector<1x128xf32>
    %270 = arith.addf %257, %269 : vector<1x128xf32>
    %cst_86 = arith.constant 1.000000e+00 : f32
    %271 = vector.broadcast %cst_86 : f32 to vector<1x128xf32>
    %272 = arith.subf %271, %261 : vector<1x128xf32>
    %273 = arith.mulf %260, %272 : vector<1x128xf32>
    %274 = vector.extract_strided_slice %136 {offsets = [0, 768], sizes = [1, 128], strides = [1, 1]} : vector<1x2048xf32> to vector<1x128xf32>
    %275 = arith.mulf %274, %273 : vector<1x128xf32>
    %276 = vector.extract_strided_slice %158 {offsets = [0, 768], sizes = [3, 128], strides = [1, 1]} : vector<3x2048xf32> to vector<3x128xf32>
    %277 = vector.broadcast %275 : vector<1x128xf32> to vector<3x128xf32>
    %278 = arith.mulf %277, %276 : vector<3x128xf32>
    %279 = arith.addf %266, %278 : vector<3x128xf32>
    %280 = arith.addf %267, %275 : vector<1x128xf32>
    %281 = vector.extract_strided_slice %31 {offsets = [0, 768], sizes = [1, 128], strides = [1, 1]} : vector<1x2048xf32> to vector<1x128xf32>
    %282 = arith.mulf %275, %281 : vector<1x128xf32>
    %283 = arith.addf %270, %282 : vector<1x128xf32>
    %cst_87 = arith.constant 1.000000e+00 : f32
    %284 = vector.broadcast %cst_87 : f32 to vector<1x128xf32>
    %285 = arith.subf %284, %274 : vector<1x128xf32>
    %286 = arith.mulf %273, %285 : vector<1x128xf32>
    %287 = vector.extract_strided_slice %136 {offsets = [0, 896], sizes = [1, 128], strides = [1, 1]} : vector<1x2048xf32> to vector<1x128xf32>
    %288 = arith.mulf %287, %286 : vector<1x128xf32>
    %289 = vector.extract_strided_slice %158 {offsets = [0, 896], sizes = [3, 128], strides = [1, 1]} : vector<3x2048xf32> to vector<3x128xf32>
    %290 = vector.broadcast %288 : vector<1x128xf32> to vector<3x128xf32>
    %291 = arith.mulf %290, %289 : vector<3x128xf32>
    %292 = arith.addf %279, %291 : vector<3x128xf32>
    %293 = arith.addf %280, %288 : vector<1x128xf32>
    %294 = vector.extract_strided_slice %31 {offsets = [0, 896], sizes = [1, 128], strides = [1, 1]} : vector<1x2048xf32> to vector<1x128xf32>
    %295 = arith.mulf %288, %294 : vector<1x128xf32>
    %296 = arith.addf %283, %295 : vector<1x128xf32>
    %cst_88 = arith.constant 1.000000e+00 : f32
    %297 = vector.broadcast %cst_88 : f32 to vector<1x128xf32>
    %298 = arith.subf %297, %287 : vector<1x128xf32>
    %299 = arith.mulf %286, %298 : vector<1x128xf32>
    %300 = vector.extract_strided_slice %136 {offsets = [0, 1024], sizes = [1, 128], strides = [1, 1]} : vector<1x2048xf32> to vector<1x128xf32>
    %301 = arith.mulf %300, %299 : vector<1x128xf32>
    %302 = vector.extract_strided_slice %158 {offsets = [0, 1024], sizes = [3, 128], strides = [1, 1]} : vector<3x2048xf32> to vector<3x128xf32>
    %303 = vector.broadcast %301 : vector<1x128xf32> to vector<3x128xf32>
    %304 = arith.mulf %303, %302 : vector<3x128xf32>
    %305 = arith.addf %292, %304 : vector<3x128xf32>
    %306 = arith.addf %293, %301 : vector<1x128xf32>
    %307 = vector.extract_strided_slice %31 {offsets = [0, 1024], sizes = [1, 128], strides = [1, 1]} : vector<1x2048xf32> to vector<1x128xf32>
    %308 = arith.mulf %301, %307 : vector<1x128xf32>
    %309 = arith.addf %296, %308 : vector<1x128xf32>
    %cst_89 = arith.constant 1.000000e+00 : f32
    %310 = vector.broadcast %cst_89 : f32 to vector<1x128xf32>
    %311 = arith.subf %310, %300 : vector<1x128xf32>
    %312 = arith.mulf %299, %311 : vector<1x128xf32>
    %313 = vector.extract_strided_slice %136 {offsets = [0, 1152], sizes = [1, 128], strides = [1, 1]} : vector<1x2048xf32> to vector<1x128xf32>
    %314 = arith.mulf %313, %312 : vector<1x128xf32>
    %315 = vector.extract_strided_slice %158 {offsets = [0, 1152], sizes = [3, 128], strides = [1, 1]} : vector<3x2048xf32> to vector<3x128xf32>
    %316 = vector.broadcast %314 : vector<1x128xf32> to vector<3x128xf32>
    %317 = arith.mulf %316, %315 : vector<3x128xf32>
    %318 = arith.addf %305, %317 : vector<3x128xf32>
    %319 = arith.addf %306, %314 : vector<1x128xf32>
    %320 = vector.extract_strided_slice %31 {offsets = [0, 1152], sizes = [1, 128], strides = [1, 1]} : vector<1x2048xf32> to vector<1x128xf32>
    %321 = arith.mulf %314, %320 : vector<1x128xf32>
    %322 = arith.addf %309, %321 : vector<1x128xf32>
    %cst_90 = arith.constant 1.000000e+00 : f32
    %323 = vector.broadcast %cst_90 : f32 to vector<1x128xf32>
    %324 = arith.subf %323, %313 : vector<1x128xf32>
    %325 = arith.mulf %312, %324 : vector<1x128xf32>
    %326 = vector.extract_strided_slice %136 {offsets = [0, 1280], sizes = [1, 128], strides = [1, 1]} : vector<1x2048xf32> to vector<1x128xf32>
    %327 = arith.mulf %326, %325 : vector<1x128xf32>
    %328 = vector.extract_strided_slice %158 {offsets = [0, 1280], sizes = [3, 128], strides = [1, 1]} : vector<3x2048xf32> to vector<3x128xf32>
    %329 = vector.broadcast %327 : vector<1x128xf32> to vector<3x128xf32>
    %330 = arith.mulf %329, %328 : vector<3x128xf32>
    %331 = arith.addf %318, %330 : vector<3x128xf32>
    %332 = arith.addf %319, %327 : vector<1x128xf32>
    %333 = vector.extract_strided_slice %31 {offsets = [0, 1280], sizes = [1, 128], strides = [1, 1]} : vector<1x2048xf32> to vector<1x128xf32>
    %334 = arith.mulf %327, %333 : vector<1x128xf32>
    %335 = arith.addf %322, %334 : vector<1x128xf32>
    %cst_91 = arith.constant 1.000000e+00 : f32
    %336 = vector.broadcast %cst_91 : f32 to vector<1x128xf32>
    %337 = arith.subf %336, %326 : vector<1x128xf32>
    %338 = arith.mulf %325, %337 : vector<1x128xf32>
    %339 = vector.extract_strided_slice %136 {offsets = [0, 1408], sizes = [1, 128], strides = [1, 1]} : vector<1x2048xf32> to vector<1x128xf32>
    %340 = arith.mulf %339, %338 : vector<1x128xf32>
    %341 = vector.extract_strided_slice %158 {offsets = [0, 1408], sizes = [3, 128], strides = [1, 1]} : vector<3x2048xf32> to vector<3x128xf32>
    %342 = vector.broadcast %340 : vector<1x128xf32> to vector<3x128xf32>
    %343 = arith.mulf %342, %341 : vector<3x128xf32>
    %344 = arith.addf %331, %343 : vector<3x128xf32>
    %345 = arith.addf %332, %340 : vector<1x128xf32>
    %346 = vector.extract_strided_slice %31 {offsets = [0, 1408], sizes = [1, 128], strides = [1, 1]} : vector<1x2048xf32> to vector<1x128xf32>
    %347 = arith.mulf %340, %346 : vector<1x128xf32>
    %348 = arith.addf %335, %347 : vector<1x128xf32>
    %cst_92 = arith.constant 1.000000e+00 : f32
    %349 = vector.broadcast %cst_92 : f32 to vector<1x128xf32>
    %350 = arith.subf %349, %339 : vector<1x128xf32>
    %351 = arith.mulf %338, %350 : vector<1x128xf32>
    %352 = vector.extract_strided_slice %136 {offsets = [0, 1536], sizes = [1, 128], strides = [1, 1]} : vector<1x2048xf32> to vector<1x128xf32>
    %353 = arith.mulf %352, %351 : vector<1x128xf32>
    %354 = vector.extract_strided_slice %158 {offsets = [0, 1536], sizes = [3, 128], strides = [1, 1]} : vector<3x2048xf32> to vector<3x128xf32>
    %355 = vector.broadcast %353 : vector<1x128xf32> to vector<3x128xf32>
    %356 = arith.mulf %355, %354 : vector<3x128xf32>
    %357 = arith.addf %344, %356 : vector<3x128xf32>
    %358 = arith.addf %345, %353 : vector<1x128xf32>
    %359 = vector.extract_strided_slice %31 {offsets = [0, 1536], sizes = [1, 128], strides = [1, 1]} : vector<1x2048xf32> to vector<1x128xf32>
    %360 = arith.mulf %353, %359 : vector<1x128xf32>
    %361 = arith.addf %348, %360 : vector<1x128xf32>
    %cst_93 = arith.constant 1.000000e+00 : f32
    %362 = vector.broadcast %cst_93 : f32 to vector<1x128xf32>
    %363 = arith.subf %362, %352 : vector<1x128xf32>
    %364 = arith.mulf %351, %363 : vector<1x128xf32>
    %365 = vector.extract_strided_slice %136 {offsets = [0, 1664], sizes = [1, 128], strides = [1, 1]} : vector<1x2048xf32> to vector<1x128xf32>
    %366 = arith.mulf %365, %364 : vector<1x128xf32>
    %367 = vector.extract_strided_slice %158 {offsets = [0, 1664], sizes = [3, 128], strides = [1, 1]} : vector<3x2048xf32> to vector<3x128xf32>
    %368 = vector.broadcast %366 : vector<1x128xf32> to vector<3x128xf32>
    %369 = arith.mulf %368, %367 : vector<3x128xf32>
    %370 = arith.addf %357, %369 : vector<3x128xf32>
    %371 = arith.addf %358, %366 : vector<1x128xf32>
    %372 = vector.extract_strided_slice %31 {offsets = [0, 1664], sizes = [1, 128], strides = [1, 1]} : vector<1x2048xf32> to vector<1x128xf32>
    %373 = arith.mulf %366, %372 : vector<1x128xf32>
    %374 = arith.addf %361, %373 : vector<1x128xf32>
    %cst_94 = arith.constant 1.000000e+00 : f32
    %375 = vector.broadcast %cst_94 : f32 to vector<1x128xf32>
    %376 = arith.subf %375, %365 : vector<1x128xf32>
    %377 = arith.mulf %364, %376 : vector<1x128xf32>
    %378 = vector.extract_strided_slice %136 {offsets = [0, 1792], sizes = [1, 128], strides = [1, 1]} : vector<1x2048xf32> to vector<1x128xf32>
    %379 = arith.mulf %378, %377 : vector<1x128xf32>
    %380 = vector.extract_strided_slice %158 {offsets = [0, 1792], sizes = [3, 128], strides = [1, 1]} : vector<3x2048xf32> to vector<3x128xf32>
    %381 = vector.broadcast %379 : vector<1x128xf32> to vector<3x128xf32>
    %382 = arith.mulf %381, %380 : vector<3x128xf32>
    %383 = arith.addf %370, %382 : vector<3x128xf32>
    %384 = arith.addf %371, %379 : vector<1x128xf32>
    %385 = vector.extract_strided_slice %31 {offsets = [0, 1792], sizes = [1, 128], strides = [1, 1]} : vector<1x2048xf32> to vector<1x128xf32>
    %386 = arith.mulf %379, %385 : vector<1x128xf32>
    %387 = arith.addf %374, %386 : vector<1x128xf32>
    %cst_95 = arith.constant 1.000000e+00 : f32
    %388 = vector.broadcast %cst_95 : f32 to vector<1x128xf32>
    %389 = arith.subf %388, %378 : vector<1x128xf32>
    %390 = arith.mulf %377, %389 : vector<1x128xf32>
    %391 = vector.extract_strided_slice %136 {offsets = [0, 1920], sizes = [1, 128], strides = [1, 1]} : vector<1x2048xf32> to vector<1x128xf32>
    %392 = arith.mulf %391, %390 : vector<1x128xf32>
    %393 = vector.extract_strided_slice %158 {offsets = [0, 1920], sizes = [3, 128], strides = [1, 1]} : vector<3x2048xf32> to vector<3x128xf32>
    %394 = vector.broadcast %392 : vector<1x128xf32> to vector<3x128xf32>
    %395 = arith.mulf %394, %393 : vector<3x128xf32>
    %396 = arith.addf %383, %395 : vector<3x128xf32>
    %397 = arith.addf %384, %392 : vector<1x128xf32>
    %398 = vector.extract_strided_slice %31 {offsets = [0, 1920], sizes = [1, 128], strides = [1, 1]} : vector<1x2048xf32> to vector<1x128xf32>
    %399 = arith.mulf %392, %398 : vector<1x128xf32>
    %400 = arith.addf %387, %399 : vector<1x128xf32>
    %cst_96 = arith.constant 6.250000e-02 : f32
    %401 = vector.broadcast %cst_96 : f32 to vector<1x128xf32>
    %402 = arith.mulf %191, %401 : vector<1x128xf32>
    %cst_97 = arith.constant 0.000000e+00 : f32
    %403 = vector.broadcast %cst_97 : f32 to vector<2x128xf32>
    %404 = tpu.concatenate %396, %397, %402, %400, %403 in 0 : vector<3x128xf32>, vector<1x128xf32>, vector<1x128xf32>, vector<1x128xf32>, vector<2x128xf32> -> vector<8x128xf32>
    %c0_98 = arith.constant 0 : index
    %c0_99 = arith.constant 0 : index
    %405 = vector.load %arg18[%c0_98, %c0_99] : memref<8x128xf32, #tpu.memory_space<vmem>>, vector<8x128xf32>
    tpu.vector_store %arg18[%c0_98, %c0_99], %404 {strides = array<i32>} : memref<8x128xf32, #tpu.memory_space<vmem>>, vector<8x128xf32>,
    return
  }
  func.func @transform_0(%arg0: i32) -> (i32, i32) {
    %c0_i32 = arith.constant 0 : i32
    %c0_i32_0 = arith.constant 0 : i32
    return %c0_i32, %arg0 : i32, i32
  }
  func.func @transform_1(%arg0: i32) -> (i32, i32) {
    %c0_i32 = arith.constant 0 : i32
    %c0_i32_0 = arith.constant 0 : i32
    return %c0_i32, %arg0 : i32, i32
  }
  func.func @transform_2(%arg0: i32) -> (i32, i32) {
    %c0_i32 = arith.constant 0 : i32
    %c0_i32_0 = arith.constant 0 : i32
    %c0_i32_1 = arith.constant 0 : i32
    return %c0_i32, %c0_i32_0 : i32, i32
  }
  func.func @transform_3(%arg0: i32) -> (i32, i32) {
    %c0_i32 = arith.constant 0 : i32
    %c0_i32_0 = arith.constant 0 : i32
    %c0_i32_1 = arith.constant 0 : i32
    return %c0_i32, %c0_i32_0 : i32, i32
  }
  func.func @transform_4(%arg0: i32) -> (i32, i32) {
    %c0_i32 = arith.constant 0 : i32
    %c0_i32_0 = arith.constant 0 : i32
    %c0_i32_1 = arith.constant 0 : i32
    return %c0_i32, %c0_i32_0 : i32, i32
  }
  func.func @transform_5(%arg0: i32) -> (i32, i32) {
    %c0_i32 = arith.constant 0 : i32
    %c0_i32_0 = arith.constant 0 : i32
    %c0_i32_1 = arith.constant 0 : i32
    return %c0_i32, %c0_i32_0 : i32, i32
  }
  func.func @transform_6(%arg0: i32) -> (i32, i32) {
    %c0_i32 = arith.constant 0 : i32
    %c0_i32_0 = arith.constant 0 : i32
    %c0_i32_1 = arith.constant 0 : i32
    return %c0_i32, %c0_i32_0 : i32, i32
  }
  func.func @transform_7(%arg0: i32) -> (i32, i32) {
    %c0_i32 = arith.constant 0 : i32
    %c0_i32_0 = arith.constant 0 : i32
    %c0_i32_1 = arith.constant 0 : i32
    return %c0_i32, %c0_i32_0 : i32, i32
  }
  func.func @transform_8(%arg0: i32) -> (i32, i32) {
    %c0_i32 = arith.constant 0 : i32
    %c0_i32_0 = arith.constant 0 : i32
    %c0_i32_1 = arith.constant 0 : i32
    return %c0_i32, %c0_i32_0 : i32, i32
  }
  func.func @transform_9(%arg0: i32) -> (i32, i32) {
    %c0_i32 = arith.constant 0 : i32
    %c0_i32_0 = arith.constant 0 : i32
    %c0_i32_1 = arith.constant 0 : i32
    return %c0_i32, %c0_i32_0 : i32, i32
  }
  func.func @transform_10(%arg0: i32) -> (i32, i32) {
    %c0_i32 = arith.constant 0 : i32
    %c0_i32_0 = arith.constant 0 : i32
    %c0_i32_1 = arith.constant 0 : i32
    return %c0_i32, %c0_i32_0 : i32, i32
  }
  func.func @transform_11(%arg0: i32) -> (i32, i32) {
    %c0_i32 = arith.constant 0 : i32
    %c0_i32_0 = arith.constant 0 : i32
    %c0_i32_1 = arith.constant 0 : i32
    return %c0_i32, %c0_i32_0 : i32, i32
  }
  func.func @transform_12(%arg0: i32) -> (i32, i32) {
    %c0_i32 = arith.constant 0 : i32
    %c0_i32_0 = arith.constant 0 : i32
    %c0_i32_1 = arith.constant 0 : i32
    return %c0_i32, %c0_i32_0 : i32, i32
  }
  func.func @transform_13(%arg0: i32) -> (i32, i32) {
    %c0_i32 = arith.constant 0 : i32
    %c0_i32_0 = arith.constant 0 : i32
    %c0_i32_1 = arith.constant 0 : i32
    return %c0_i32, %c0_i32_0 : i32, i32
  }
  func.func @transform_14(%arg0: i32) -> (i32, i32) {
    %c0_i32 = arith.constant 0 : i32
    %c0_i32_0 = arith.constant 0 : i32
    %c0_i32_1 = arith.constant 0 : i32
    return %c0_i32, %c0_i32_0 : i32, i32
  }
  func.func @transform_15(%arg0: i32) -> (i32, i32) {
    %c0_i32 = arith.constant 0 : i32
    %c0_i32_0 = arith.constant 0 : i32
    %c0_i32_1 = arith.constant 0 : i32
    return %c0_i32, %c0_i32_0 : i32, i32
  }
  func.func @transform_16(%arg0: i32) -> (i32, i32) {
    %c0_i32 = arith.constant 0 : i32
    %c0_i32_0 = arith.constant 0 : i32
    %c0_i32_1 = arith.constant 0 : i32
    return %c0_i32, %c0_i32_0 : i32, i32
  }
  func.func @transform_17(%arg0: i32) -> (i32, i32) {
    %c0_i32 = arith.constant 0 : i32
    %c0_i32_0 = arith.constant 0 : i32
    return %c0_i32, %arg0 : i32, i32
  }
}

</mosaic_0001>

<llo_original>
// kernel: tpu_custom_call.1
$region0: #{tpu_custom_call.1}
  #allocation0 [shape = 'u32[]', space=smem, size = 0x4, offset = 0x4, fixed_abs, tag = 'smem constant byte address 0x4 - core index']
  #allocation1 [shape = 'u32[144,128]{1,0:T(1,128)}', space=vmem, size = 0x12000, scoped, tag = 'internal scratch']
  #allocation2 [shape = 'f32[1,1]{1,0:T(1,128)S(6)}', space=smem, size = 0x200, scoped, tag = 'scoped memory for tpu_custom_call.1']
  %s0 = inlined_call_operand.vmem [shape: f32[3,256], index: 0, kind: input, shape index: {}]
  %s1 = inlined_call_operand.vmem [shape: f32[3,256], index: 1, kind: input, shape index: {}]
  %s2 = inlined_call_operand.<no memory space> [shape: f32[1,1], index: 2, kind: input, shape index: {}]
  %s3 = inlined_call_operand.vmem [shape: f32[1,2048], index: 3, kind: input, shape index: {}]
  %s4 = inlined_call_operand.vmem [shape: f32[32,3], index: 4, kind: input, shape index: {}]
  %s5 = inlined_call_operand.vmem [shape: f32[32,1], index: 5, kind: input, shape index: {}]
  %s6 = inlined_call_operand.vmem [shape: f32[32,32], index: 6, kind: input, shape index: {}]
  %s7 = inlined_call_operand.vmem [shape: f32[32,1], index: 7, kind: input, shape index: {}]
  %s8 = inlined_call_operand.vmem [shape: f32[17,32], index: 8, kind: input, shape index: {}]
  %s9 = inlined_call_operand.vmem [shape: f32[17,1], index: 9, kind: input, shape index: {}]
  %s10 = inlined_call_operand.vmem [shape: f32[3,32], index: 10, kind: input, shape index: {}]
  %s11 = inlined_call_operand.vmem [shape: f32[32,32], index: 11, kind: input, shape index: {}]
  %s12 = inlined_call_operand.vmem [shape: f32[32,1], index: 12, kind: input, shape index: {}]
  %s13 = inlined_call_operand.vmem [shape: f32[32,25], index: 13, kind: input, shape index: {}]
  %s14 = inlined_call_operand.vmem [shape: f32[32,1], index: 14, kind: input, shape index: {}]
  %s15 = inlined_call_operand.vmem [shape: f32[3,32], index: 15, kind: input, shape index: {}]
  %s16 = inlined_call_operand.vmem [shape: f32[3,1], index: 16, kind: input, shape index: {}]
  %s17 = inlined_call_operand.hbm [shape: f32[8,256], index: 17, kind: output, shape index: {}]
  %s18 = sld [smem:[#allocation0]]
  $region101: #{tpu_custom_call.1} parent=0
    _
  %s20 = ssub.s32 1, %s18
  %s21 = scalar_select 0, %s20, %s18
  %22 = sst [smem:[#allocation2]] %s2
  $region1: #{tpu_custom_call.1} parent=0
    #allocation3 [shape = 'u8[8192]{0}', space=vmem, size = 0x2000, scoped, tag = 'output window, operand 0']
    #allocation4 [shape = 's32[2]{0}', space=sflag, size = 0x8, scoped, tag = 'scoped memory for tpu_custom_call.1']
    %23 = vsyncpa [#allocation4], 0
    %s24 = scalar_lea.sflag [#allocation4], 1
    %25 = vsyncpa %s24, 0
    loop: start=0, step=1, limit=4
    $region2: #{tpu_custom_call.1} parent=1 // loop_pre_header
      _
    $region3: #{tpu_custom_call.1} parent=1 // loop_header
      %s27 = sphi 0, %s31
      %p28 = scmp.ge.s32.totalorder %s27, 4
      %s37 = sphi 0, %s39
      %s40 = sphi 0, %s37
      %s41 = sphi 0, %s40
      %s57 = sphi 0, %s41
      %s63 = sphi 0, %s65
      %s66 = sphi 0, %s63
      %s67 = sphi 0, %s66
      %s83 = sphi 0, %s67
      %s87 = sphi 0, %s87
      %s89 = sphi 0, %s87
      %s90 = sphi 0, %s89
      %s104 = sphi 0, %s90
      %s108 = sphi 0, %s108
      %s110 = sphi 0, %s108
      %s111 = sphi 0, %s110
      %s125 = sphi 0, %s111
      %s129 = sphi 0, %s129
      %s131 = sphi 0, %s129
      %s132 = sphi 0, %s131
      %s146 = sphi 0, %s132
      %s150 = sphi 0, %s150
      %s152 = sphi 0, %s150
      %s153 = sphi 0, %s152
      %s167 = sphi 0, %s153
      %s171 = sphi 0, %s171
      %s173 = sphi 0, %s171
      %s174 = sphi 0, %s173
      %s188 = sphi 0, %s174
      %s192 = sphi 0, %s192
      %s194 = sphi 0, %s192
      %s195 = sphi 0, %s194
      %s209 = sphi 0, %s195
      %s213 = sphi 0, %s213
      %s215 = sphi 0, %s213
      %s216 = sphi 0, %s215
      %s230 = sphi 0, %s216
      %s234 = sphi 0, %s234
      %s236 = sphi 0, %s234
      %s237 = sphi 0, %s236
      %s251 = sphi 0, %s237
      %s255 = sphi 0, %s255
      %s257 = sphi 0, %s255
      %s258 = sphi 0, %s257
      %s272 = sphi 0, %s258
      %s276 = sphi 0, %s276
      %s278 = sphi 0, %s276
      %s279 = sphi 0, %s278
      %s293 = sphi 0, %s279
      %s297 = sphi 0, %s297
      %s299 = sphi 0, %s297
      %s300 = sphi 0, %s299
      %s314 = sphi 0, %s300
      %s318 = sphi 0, %s318
      %s320 = sphi 0, %s318
      %s321 = sphi 0, %s320
      %s335 = sphi 0, %s321
      %s339 = sphi 0, %s339
      %s341 = sphi 0, %s339
      %s342 = sphi 0, %s341
      %s356 = sphi 0, %s342
      %s360 = sphi 0, %s360
      %s362 = sphi 0, %s360
      %s363 = sphi 0, %s362
      %s377 = sphi 0, %s363
      %s381 = sphi 0, %s381
      %s383 = sphi 0, %s381
      %s384 = sphi 0, %s383
      %s398 = sphi 0, %s384
      %s404 = sphi 0, %s406
      %s407 = sphi 0, %s404
      %s408 = sphi 0, %s407
      %s424 = sphi 0, %s408
    $region4: #{tpu_custom_call.1} parent=1 // loop_header_branch
      %30 = sbr.rel (%p28) target = $region8
    $region5: #{tpu_custom_call.1} parent=1 // loop_body
      %s32 = ssub.s32 %s27, 1
      %s33 = ssub.s32 %s27, 2
      %s34 = sadd.s32 %s27, 1
      %s35 = ssub.s32 %s27, %s34
      %p36 = scmp.eq.s32.totalorder %s35, 0
      %s38 = sadd.s32 %s37, 1
      %s39 = scalar_select %p36, %s37, %s38
      %p42 = pneg %p36
      %p43 = scmp.eq.s32.totalorder %s27, 1
      %p44 = por %p42, %p43
      %p45 = scmp.ne.s32.totalorder %s37, %s40
      %p46 = scmp.eq.s32.totalorder %s27, 0
      %p47 = por %p45, %p46
      %p48 = scmp.ne.s32.totalorder %s37, %s40
      %p49 = scmp.eq.s32.totalorder %s32, 1
      %p50 = por %p48, %p49
      %p51 = scmp.ne.s32.totalorder %s40, %s41
      %p52 = scmp.eq.s32.totalorder %s32, 0
      %p53 = por %p51, %p52
      %p54 = scmp.ne.s32.totalorder %s40, %s41
      %p55 = scmp.eq.s32.totalorder %s33, 1
      %p56 = por %p54, %p55
      %p58 = scmp.ne.s32.totalorder %s41, %s57
      %p59 = scmp.eq.s32.totalorder %s33, 0
      %p60 = por %p58, %p59
      %s61 = ssub.s32 %s27, %s34
      %p62 = scmp.eq.s32.totalorder %s61, 0
      %s64 = sadd.s32 %s63, 1
      %s65 = scalar_select %p62, %s63, %s64
      %p68 = pneg %p62
      %p69 = scmp.eq.s32.totalorder %s27, 1
      %p70 = por %p68, %p69
      %p71 = scmp.ne.s32.totalorder %s63, %s66
      %p72 = scmp.eq.s32.totalorder %s27, 0
      %p73 = por %p71, %p72
      %p74 = scmp.ne.s32.totalorder %s63, %s66
      %p75 = scmp.eq.s32.totalorder %s32, 1
      %p76 = por %p74, %p75
      %p77 = scmp.ne.s32.totalorder %s66, %s67
      %p78 = scmp.eq.s32.totalorder %s32, 0
      %p79 = por %p77, %p78
      %p80 = scmp.ne.s32.totalorder %s66, %s67
      %p81 = scmp.eq.s32.totalorder %s33, 1
      %p82 = por %p80, %p81
      %p84 = scmp.ne.s32.totalorder %s67, %s83
      %p85 = scmp.eq.s32.totalorder %s33, 0
      %p86 = por %p84, %p85
      %s88 = sadd.s32 %s87, 1
      %p91 = scmp.eq.s32.totalorder %s27, 1
      %p92 = scmp.ne.s32.totalorder %s87, %s89
      %p93 = scmp.eq.s32.totalorder %s27, 0
      %p94 = por %p92, %p93
      %p95 = scmp.ne.s32.totalorder %s87, %s89
      %p96 = scmp.eq.s32.totalorder %s32, 1
      %p97 = por %p95, %p96
      %p98 = scmp.ne.s32.totalorder %s89, %s90
      %p99 = scmp.eq.s32.totalorder %s32, 0
      %p100 = por %p98, %p99
      %p101 = scmp.ne.s32.totalorder %s89, %s90
      %p102 = scmp.eq.s32.totalorder %s33, 1
      %p103 = por %p101, %p102
      %p105 = scmp.ne.s32.totalorder %s90, %s104
      %p106 = scmp.eq.s32.totalorder %s33, 0
      %p107 = por %p105, %p106
      %s109 = sadd.s32 %s108, 1
      %p112 = scmp.eq.s32.totalorder %s27, 1
      %p113 = scmp.ne.s32.totalorder %s108, %s110
      %p114 = scmp.eq.s32.totalorder %s27, 0
      %p115 = por %p113, %p114
      %p116 = scmp.ne.s32.totalorder %s108, %s110
      %p117 = scmp.eq.s32.totalorder %s32, 1
      %p118 = por %p116, %p117
      %p119 = scmp.ne.s32.totalorder %s110, %s111
      %p120 = scmp.eq.s32.totalorder %s32, 0
      %p121 = por %p119, %p120
      %p122 = scmp.ne.s32.totalorder %s110, %s111
      %p123 = scmp.eq.s32.totalorder %s33, 1
      %p124 = por %p122, %p123
      %p126 = scmp.ne.s32.totalorder %s111, %s125
      %p127 = scmp.eq.s32.totalorder %s33, 0
      %p128 = por %p126, %p127
      %s130 = sadd.s32 %s129, 1
      %p133 = scmp.eq.s32.totalorder %s27, 1
      %p134 = scmp.ne.s32.totalorder %s129, %s131
      %p135 = scmp.eq.s32.totalorder %s27, 0
      %p136 = por %p134, %p135
      %p137 = scmp.ne.s32.totalorder %s129, %s131
      %p138 = scmp.eq.s32.totalorder %s32, 1
      %p139 = por %p137, %p138
      %p140 = scmp.ne.s32.totalorder %s131, %s132
      %p141 = scmp.eq.s32.totalorder %s32, 0
      %p142 = por %p140, %p141
      %p143 = scmp.ne.s32.totalorder %s131, %s132
      %p144 = scmp.eq.s32.totalorder %s33, 1
      %p145 = por %p143, %p144
      %p147 = scmp.ne.s32.totalorder %s132, %s146
      %p148 = scmp.eq.s32.totalorder %s33, 0
      %p149 = por %p147, %p148
      %s151 = sadd.s32 %s150, 1
      %p154 = scmp.eq.s32.totalorder %s27, 1
      %p155 = scmp.ne.s32.totalorder %s150, %s152
      %p156 = scmp.eq.s32.totalorder %s27, 0
      %p157 = por %p155, %p156
      %p158 = scmp.ne.s32.totalorder %s150, %s152
      %p159 = scmp.eq.s32.totalorder %s32, 1
      %p160 = por %p158, %p159
      %p161 = scmp.ne.s32.totalorder %s152, %s153
      %p162 = scmp.eq.s32.totalorder %s32, 0
      %p163 = por %p161, %p162
      %p164 = scmp.ne.s32.totalorder %s152, %s153
      %p165 = scmp.eq.s32.totalorder %s33, 1
      %p166 = por %p164, %p165
      %p168 = scmp.ne.s32.totalorder %s153, %s167
      %p169 = scmp.eq.s32.totalorder %s33, 0
      %p170 = por %p168, %p169
      %s172 = sadd.s32 %s171, 1
      %p175 = scmp.eq.s32.totalorder %s27, 1
      %p176 = scmp.ne.s32.totalorder %s171, %s173
      %p177 = scmp.eq.s32.totalorder %s27, 0
      %p178 = por %p176, %p177
      %p179 = scmp.ne.s32.totalorder %s171, %s173
      %p180 = scmp.eq.s32.totalorder %s32, 1
      %p181 = por %p179, %p180
      %p182 = scmp.ne.s32.totalorder %s173, %s174
      %p183 = scmp.eq.s32.totalorder %s32, 0
      %p184 = por %p182, %p183
      %p185 = scmp.ne.s32.totalorder %s173, %s174
      %p186 = scmp.eq.s32.totalorder %s33, 1
      %p187 = por %p185, %p186
      %p189 = scmp.ne.s32.totalorder %s174, %s188
      %p190 = scmp.eq.s32.totalorder %s33, 0
      %p191 = por %p189, %p190
      %s193 = sadd.s32 %s192, 1
      %p196 = scmp.eq.s32.totalorder %s27, 1
      %p197 = scmp.ne.s32.totalorder %s192, %s194
      %p198 = scmp.eq.s32.totalorder %s27, 0
      %p199 = por %p197, %p198
      %p200 = scmp.ne.s32.totalorder %s192, %s194
      %p201 = scmp.eq.s32.totalorder %s32, 1
      %p202 = por %p200, %p201
      %p203 = scmp.ne.s32.totalorder %s194, %s195
      %p204 = scmp.eq.s32.totalorder %s32, 0
      %p205 = por %p203, %p204
      %p206 = scmp.ne.s32.totalorder %s194, %s195
      %p207 = scmp.eq.s32.totalorder %s33, 1
      %p208 = por %p206, %p207
      %p210 = scmp.ne.s32.totalorder %s195, %s209
      %p211 = scmp.eq.s32.totalorder %s33, 0
      %p212 = por %p210, %p211
      %s214 = sadd.s32 %s213, 1
      %p217 = scmp.eq.s32.totalorder %s27, 1
      %p218 = scmp.ne.s32.totalorder %s213, %s215
      %p219 = scmp.eq.s32.totalorder %s27, 0
      %p220 = por %p218, %p219
      %p221 = scmp.ne.s32.totalorder %s213, %s215
      %p222 = scmp.eq.s32.totalorder %s32, 1
      %p223 = por %p221, %p222
      %p224 = scmp.ne.s32.totalorder %s215, %s216
      %p225 = scmp.eq.s32.totalorder %s32, 0
      %p226 = por %p224, %p225
      %p227 = scmp.ne.s32.totalorder %s215, %s216
      %p228 = scmp.eq.s32.totalorder %s33, 1
      %p229 = por %p227, %p228
      %p231 = scmp.ne.s32.totalorder %s216, %s230
      %p232 = scmp.eq.s32.totalorder %s33, 0
      %p233 = por %p231, %p232
      %s235 = sadd.s32 %s234, 1
      %p238 = scmp.eq.s32.totalorder %s27, 1
      %p239 = scmp.ne.s32.totalorder %s234, %s236
      %p240 = scmp.eq.s32.totalorder %s27, 0
      %p241 = por %p239, %p240
      %p242 = scmp.ne.s32.totalorder %s234, %s236
      %p243 = scmp.eq.s32.totalorder %s32, 1
      %p244 = por %p242, %p243
      %p245 = scmp.ne.s32.totalorder %s236, %s237
      %p246 = scmp.eq.s32.totalorder %s32, 0
      %p247 = por %p245, %p246
      %p248 = scmp.ne.s32.totalorder %s236, %s237
      %p249 = scmp.eq.s32.totalorder %s33, 1
      %p250 = por %p248, %p249
      %p252 = scmp.ne.s32.totalorder %s237, %s251
      %p253 = scmp.eq.s32.totalorder %s33, 0
      %p254 = por %p252, %p253
      %s256 = sadd.s32 %s255, 1
      %p259 = scmp.eq.s32.totalorder %s27, 1
      %p260 = scmp.ne.s32.totalorder %s255, %s257
      %p261 = scmp.eq.s32.totalorder %s27, 0
      %p262 = por %p260, %p261
      %p263 = scmp.ne.s32.totalorder %s255, %s257
      %p264 = scmp.eq.s32.totalorder %s32, 1
      %p265 = por %p263, %p264
      %p266 = scmp.ne.s32.totalorder %s257, %s258
      %p267 = scmp.eq.s32.totalorder %s32, 0
      %p268 = por %p266, %p267
      %p269 = scmp.ne.s32.totalorder %s257, %s258
      %p270 = scmp.eq.s32.totalorder %s33, 1
      %p271 = por %p269, %p270
      %p273 = scmp.ne.s32.totalorder %s258, %s272
      %p274 = scmp.eq.s32.totalorder %s33, 0
      %p275 = por %p273, %p274
      %s277 = sadd.s32 %s276, 1
      %p280 = scmp.eq.s32.totalorder %s27, 1
      %p281 = scmp.ne.s32.totalorder %s276, %s278
      %p282 = scmp.eq.s32.totalorder %s27, 0
      %p283 = por %p281, %p282
      %p284 = scmp.ne.s32.totalorder %s276, %s278
      %p285 = scmp.eq.s32.totalorder %s32, 1
      %p286 = por %p284, %p285
      %p287 = scmp.ne.s32.totalorder %s278, %s279
      %p288 = scmp.eq.s32.totalorder %s32, 0
      %p289 = por %p287, %p288
      %p290 = scmp.ne.s32.totalorder %s278, %s279
      %p291 = scmp.eq.s32.totalorder %s33, 1
      %p292 = por %p290, %p291
      %p294 = scmp.ne.s32.totalorder %s279, %s293
      %p295 = scmp.eq.s32.totalorder %s33, 0
      %p296 = por %p294, %p295
      %s298 = sadd.s32 %s297, 1
      %p301 = scmp.eq.s32.totalorder %s27, 1
      %p302 = scmp.ne.s32.totalorder %s297, %s299
      %p303 = scmp.eq.s32.totalorder %s27, 0
      %p304 = por %p302, %p303
      %p305 = scmp.ne.s32.totalorder %s297, %s299
      %p306 = scmp.eq.s32.totalorder %s32, 1
      %p307 = por %p305, %p306
      %p308 = scmp.ne.s32.totalorder %s299, %s300
      %p309 = scmp.eq.s32.totalorder %s32, 0
      %p310 = por %p308, %p309
      %p311 = scmp.ne.s32.totalorder %s299, %s300
      %p312 = scmp.eq.s32.totalorder %s33, 1
      %p313 = por %p311, %p312
      %p315 = scmp.ne.s32.totalorder %s300, %s314
      %p316 = scmp.eq.s32.totalorder %s33, 0
      %p317 = por %p315, %p316
      %s319 = sadd.s32 %s318, 1
      %p322 = scmp.eq.s32.totalorder %s27, 1
      %p323 = scmp.ne.s32.totalorder %s318, %s320
      %p324 = scmp.eq.s32.totalorder %s27, 0
      %p325 = por %p323, %p324
      %p326 = scmp.ne.s32.totalorder %s318, %s320
      %p327 = scmp.eq.s32.totalorder %s32, 1
      %p328 = por %p326, %p327
      %p329 = scmp.ne.s32.totalorder %s320, %s321
      %p330 = scmp.eq.s32.totalorder %s32, 0
      %p331 = por %p329, %p330
      %p332 = scmp.ne.s32.totalorder %s320, %s321
      %p333 = scmp.eq.s32.totalorder %s33, 1
      %p334 = por %p332, %p333
      %p336 = scmp.ne.s32.totalorder %s321, %s335
      %p337 = scmp.eq.s32.totalorder %s33, 0
      %p338 = por %p336, %p337
      %s340 = sadd.s32 %s339, 1
      %p343 = scmp.eq.s32.totalorder %s27, 1
      %p344 = scmp.ne.s32.totalorder %s339, %s341
      %p345 = scmp.eq.s32.totalorder %s27, 0
      %p346 = por %p344, %p345
      %p347 = scmp.ne.s32.totalorder %s339, %s341
      %p348 = scmp.eq.s32.totalorder %s32, 1
      %p349 = por %p347, %p348
      %p350 = scmp.ne.s32.totalorder %s341, %s342
      %p351 = scmp.eq.s32.totalorder %s32, 0
      %p352 = por %p350, %p351
      %p353 = scmp.ne.s32.totalorder %s341, %s342
      %p354 = scmp.eq.s32.totalorder %s33, 1
      %p355 = por %p353, %p354
      %p357 = scmp.ne.s32.totalorder %s342, %s356
      %p358 = scmp.eq.s32.totalorder %s33, 0
      %p359 = por %p357, %p358
      %s361 = sadd.s32 %s360, 1
      %p364 = scmp.eq.s32.totalorder %s27, 1
      %p365 = scmp.ne.s32.totalorder %s360, %s362
      %p366 = scmp.eq.s32.totalorder %s27, 0
      %p367 = por %p365, %p366
      %p368 = scmp.ne.s32.totalorder %s360, %s362
      %p369 = scmp.eq.s32.totalorder %s32, 1
      %p370 = por %p368, %p369
      %p371 = scmp.ne.s32.totalorder %s362, %s363
      %p372 = scmp.eq.s32.totalorder %s32, 0
      %p373 = por %p371, %p372
      %p374 = scmp.ne.s32.totalorder %s362, %s363
      %p375 = scmp.eq.s32.totalorder %s33, 1
      %p376 = por %p374, %p375
      %p378 = scmp.ne.s32.totalorder %s363, %s377
      %p379 = scmp.eq.s32.totalorder %s33, 0
      %p380 = por %p378, %p379
      %s382 = sadd.s32 %s381, 1
      %p385 = scmp.eq.s32.totalorder %s27, 1
      %p386 = scmp.ne.s32.totalorder %s381, %s383
      %p387 = scmp.eq.s32.totalorder %s27, 0
      %p388 = por %p386, %p387
      %p389 = scmp.ne.s32.totalorder %s381, %s383
      %p390 = scmp.eq.s32.totalorder %s32, 1
      %p391 = por %p389, %p390
      %p392 = scmp.ne.s32.totalorder %s383, %s384
      %p393 = scmp.eq.s32.totalorder %s32, 0
      %p394 = por %p392, %p393
      %p395 = scmp.ne.s32.totalorder %s383, %s384
      %p396 = scmp.eq.s32.totalorder %s33, 1
      %p397 = por %p395, %p396
      %p399 = scmp.ne.s32.totalorder %s384, %s398
      %p400 = scmp.eq.s32.totalorder %s33, 0
      %p401 = por %p399, %p400
      %s402 = ssub.s32 %s27, %s34
      %p403 = scmp.eq.s32.totalorder %s402, 0
      %s405 = sadd.s32 %s404, 1
      %s406 = scalar_select %p403, %s404, %s405
      %p409 = pneg %p403
      %p410 = scmp.eq.s32.totalorder %s27, 1
      %p411 = por %p409, %p410
      %p412 = scmp.ne.s32.totalorder %s404, %s407
      %p413 = scmp.eq.s32.totalorder %s27, 0
      %p414 = por %p412, %p413
      %p415 = scmp.ne.s32.totalorder %s404, %s407
      %p416 = scmp.eq.s32.totalorder %s32, 1
      %p417 = por %p415, %p416
      %p418 = scmp.ne.s32.totalorder %s407, %s408
      %p419 = scmp.eq.s32.totalorder %s32, 0
      %p420 = por %p418, %p419
      %p421 = scmp.ne.s32.totalorder %s407, %s408
      %p422 = scmp.eq.s32.totalorder %s33, 1
      %p423 = por %p421, %p422
      %p425 = scmp.ne.s32.totalorder %s408, %s424
      %p426 = scmp.eq.s32.totalorder %s33, 0
      %p427 = por %p425, %p426
      %p428 = scmp.le.s32.totalorder 1, %s27
      %p429 = scmp.lt.s32.totalorder %s27, 3
      %p430 = pnand %p428, %p429
      %p431 = pneg %p430
      // Predicated region
      $region9: #{tpu_custom_call.1} parent=5 // pred_check
        _
      $region10: #{tpu_custom_call.1} parent=5 // pred_check_branch
        %433 = sbr.rel (%p430) target = $region12
      $region11: #{tpu_custom_call.1} parent=5 // pred_region
        %s434 = ssub.s32 %s27, 1
        // Predicated region
        $region13: #{tpu_custom_call.1} parent=11 // pred_check
          %p435 = pneg %p100
        $region14: #{tpu_custom_call.1} parent=11 // pred_check_branch
          %437 = sbr.rel (%p435) target = $region16
        $region15: #{tpu_custom_call.1} parent=11 // pred_region
          _
        $region16: #{tpu_custom_call.1} parent=11 // pred_fallthru
          _
        // Predicated region
        $region17: #{tpu_custom_call.1} parent=11 // pred_check
          %p438 = pneg %p121
        $region18: #{tpu_custom_call.1} parent=11 // pred_check_branch
          %440 = sbr.rel (%p438) target = $region20
        $region19: #{tpu_custom_call.1} parent=11 // pred_region
          _
        $region20: #{tpu_custom_call.1} parent=11 // pred_fallthru
          _
        // Predicated region
        $region21: #{tpu_custom_call.1} parent=11 // pred_check
          %p441 = pneg %p142
        $region22: #{tpu_custom_call.1} parent=11 // pred_check_branch
          %443 = sbr.rel (%p441) target = $region24
        $region23: #{tpu_custom_call.1} parent=11 // pred_region
          _
        $region24: #{tpu_custom_call.1} parent=11 // pred_fallthru
          _
        // Predicated region
        $region25: #{tpu_custom_call.1} parent=11 // pred_check
          %p444 = pneg %p163
        $region26: #{tpu_custom_call.1} parent=11 // pred_check_branch
          %446 = sbr.rel (%p444) target = $region28
        $region27: #{tpu_custom_call.1} parent=11 // pred_region
          _
        $region28: #{tpu_custom_call.1} parent=11 // pred_fallthru
          _
        // Predicated region
        $region29: #{tpu_custom_call.1} parent=11 // pred_check
          %p447 = pneg %p184
        $region30: #{tpu_custom_call.1} parent=11 // pred_check_branch
          %449 = sbr.rel (%p447) target = $region32
        $region31: #{tpu_custom_call.1} parent=11 // pred_region
          _
        $region32: #{tpu_custom_call.1} parent=11 // pred_fallthru
          _
        // Predicated region
        $region33: #{tpu_custom_call.1} parent=11 // pred_check
          %p450 = pneg %p205
        $region34: #{tpu_custom_call.1} parent=11 // pred_check_branch
          %452 = sbr.rel (%p450) target = $region36
        $region35: #{tpu_custom_call.1} parent=11 // pred_region
          _
        $region36: #{tpu_custom_call.1} parent=11 // pred_fallthru
          _
        // Predicated region
        $region37: #{tpu_custom_call.1} parent=11 // pred_check
          %p453 = pneg %p226
        $region38: #{tpu_custom_call.1} parent=11 // pred_check_branch
          %455 = sbr.rel (%p453) target = $region40
        $region39: #{tpu_custom_call.1} parent=11 // pred_region
          _
        $region40: #{tpu_custom_call.1} parent=11 // pred_fallthru
          _
        // Predicated region
        $region41: #{tpu_custom_call.1} parent=11 // pred_check
          %p456 = pneg %p247
        $region42: #{tpu_custom_call.1} parent=11 // pred_check_branch
          %458 = sbr.rel (%p456) target = $region44
        $region43: #{tpu_custom_call.1} parent=11 // pred_region
          _
        $region44: #{tpu_custom_call.1} parent=11 // pred_fallthru
          _
        // Predicated region
        $region45: #{tpu_custom_call.1} parent=11 // pred_check
          %p459 = pneg %p268
        $region46: #{tpu_custom_call.1} parent=11 // pred_check_branch
          %461 = sbr.rel (%p459) target = $region48
        $region47: #{tpu_custom_call.1} parent=11 // pred_region
          _
        $region48: #{tpu_custom_call.1} parent=11 // pred_fallthru
          _
        // Predicated region
        $region49: #{tpu_custom_call.1} parent=11 // pred_check
          %p462 = pneg %p289
        $region50: #{tpu_custom_call.1} parent=11 // pred_check_branch
          %464 = sbr.rel (%p462) target = $region52
        $region51: #{tpu_custom_call.1} parent=11 // pred_region
          _
        $region52: #{tpu_custom_call.1} parent=11 // pred_fallthru
          _
        // Predicated region
        $region53: #{tpu_custom_call.1} parent=11 // pred_check
          %p465 = pneg %p310
        $region54: #{tpu_custom_call.1} parent=11 // pred_check_branch
          %467 = sbr.rel (%p465) target = $region56
        $region55: #{tpu_custom_call.1} parent=11 // pred_region
          _
        $region56: #{tpu_custom_call.1} parent=11 // pred_fallthru
          _
        // Predicated region
        $region57: #{tpu_custom_call.1} parent=11 // pred_check
          %p468 = pneg %p331
        $region58: #{tpu_custom_call.1} parent=11 // pred_check_branch
          %470 = sbr.rel (%p468) target = $region60
        $region59: #{tpu_custom_call.1} parent=11 // pred_region
          _
        $region60: #{tpu_custom_call.1} parent=11 // pred_fallthru
          _
        // Predicated region
        $region61: #{tpu_custom_call.1} parent=11 // pred_check
          %p471 = pneg %p352
        $region62: #{tpu_custom_call.1} parent=11 // pred_check_branch
          %473 = sbr.rel (%p471) target = $region64
        $region63: #{tpu_custom_call.1} parent=11 // pred_region
          _
        $region64: #{tpu_custom_call.1} parent=11 // pred_fallthru
          _
        // Predicated region
        $region65: #{tpu_custom_call.1} parent=11 // pred_check
          %p474 = pneg %p373
        $region66: #{tpu_custom_call.1} parent=11 // pred_check_branch
          %476 = sbr.rel (%p474) target = $region68
        $region67: #{tpu_custom_call.1} parent=11 // pred_region
          _
        $region68: #{tpu_custom_call.1} parent=11 // pred_fallthru
          _
        // Predicated region
        $region69: #{tpu_custom_call.1} parent=11 // pred_check
          %p477 = pneg %p394
        $region70: #{tpu_custom_call.1} parent=11 // pred_check_branch
          %479 = sbr.rel (%p477) target = $region72
        $region71: #{tpu_custom_call.1} parent=11 // pred_region
          _
        $region72: #{tpu_custom_call.1} parent=11 // pred_fallthru
          _
      $region12: #{tpu_custom_call.1} parent=5 // pred_fallthru
        _
      %p480 = scmp.lt.s32.totalorder %s27, 2
      // Predicated region
      $region73: #{tpu_custom_call.1} parent=5 // pred_check
        %p481 = pneg %p480
      $region74: #{tpu_custom_call.1} parent=5 // pred_check_branch
        %483 = sbr.rel (%p481) target = $region76
      $region75: #{tpu_custom_call.1} parent=5 // pred_region
        // Predicated region
        $region77: #{tpu_custom_call.1} parent=75 // pred_check
          %p484 = pneg %p47
        $region78: #{tpu_custom_call.1} parent=75 // pred_check_branch
          %486 = sbr.rel (%p484) target = $region80
        $region79: #{tpu_custom_call.1} parent=75 // pred_region
          %p487 = scmp.lt.s32.totalorder %s27, 1
          %s488 = scalar_select %p487, %s27, 1
          %s489 = smul.addr %s488, 4
          %s490 = scalar_lea.vmem %s0, %s489
        $region80: #{tpu_custom_call.1} parent=75 // pred_fallthru
          _
        // Predicated region
        $region81: #{tpu_custom_call.1} parent=75 // pred_check
          %p491 = pneg %p73
        $region82: #{tpu_custom_call.1} parent=75 // pred_check_branch
          %493 = sbr.rel (%p491) target = $region84
        $region83: #{tpu_custom_call.1} parent=75 // pred_region
          %p494 = scmp.lt.s32.totalorder %s27, 1
          %s495 = scalar_select %p494, %s27, 1
          %s496 = smul.addr %s495, 4
          %s497 = scalar_lea.vmem %s1, %s496
        $region84: #{tpu_custom_call.1} parent=75 // pred_fallthru
          _
      $region76: #{tpu_custom_call.1} parent=5 // pred_fallthru
        _
      %p498 = scmp.le.s32.totalorder 1, %s27
      %p499 = scmp.lt.s32.totalorder %s27, 3
      %p500 = pnand %p498, %p499
      %p501 = pneg %p500
      // Predicated region
      $region85: #{tpu_custom_call.1} parent=5 // pred_check
        _
      $region86: #{tpu_custom_call.1} parent=5 // pred_check_branch
        %503 = sbr.rel (%p500) target = $region88
      $region87: #{tpu_custom_call.1} parent=5 // pred_region
        %s504 = ssub.s32 %s27, 1
        %p505 = scmp.lt.s32.totalorder %s32, 1
        %s506 = scalar_select %p505, %s32, 1
        %s507 = smul.addr %s506, 4
        %s508 = scalar_lea.vmem %s0, %s507
        %p509 = pneg %p53
        %p510 = pneg %p50
        %p511 = scmp.lt.s32.totalorder %s32, 1
        %s512 = scalar_select %p511, %s32, 1
        %s513 = smul.addr %s512, 4
        %s514 = scalar_lea.vmem %s1, %s513
        %p515 = pneg %p79
        %p516 = pneg %p76
        %p517 = pneg %p100
        %p518 = pneg %p97
        %p519 = pneg %p121
        %p520 = pneg %p118
        %p521 = pneg %p142
        %p522 = pneg %p139
        %p523 = pneg %p163
        %p524 = pneg %p160
        %p525 = pneg %p184
        %p526 = pneg %p181
        %p527 = pneg %p205
        %p528 = pneg %p202
        %p529 = pneg %p226
        %p530 = pneg %p223
        %p531 = pneg %p247
        %p532 = pneg %p244
        %p533 = pneg %p268
        %p534 = pneg %p265
        %p535 = pneg %p289
        %p536 = pneg %p286
        %p537 = pneg %p310
        %p538 = pneg %p307
        %p539 = pneg %p331
        %p540 = pneg %p328
        %p541 = pneg %p352
        %p542 = pneg %p349
        %p543 = pneg %p373
        %p544 = pneg %p370
        %p545 = pneg %p394
        %p546 = pneg %p391
        %p547 = pneg %p420
        %p548 = pneg %p417
        %s549 = sand.u32 %s407, 1
        %s550 = scalar_lea.sflag [#allocation4], %s549
        %s551 = sand.u32 %s407, 1
        %s552 = smul.addr %s551, 8
        %s553 = scalar_lea.vmem [#allocation3], %s552
        %p554 = scmp.lt.s32.totalorder %s32, 1
        %s555 = scalar_select %p554, %s32, 1
        %s556 = smul.addr %s555, 4
        %s557 = scalar_lea.vmem %s0, %s556
        %p558 = scmp.lt.s32.totalorder %s32, 1
        %s559 = scalar_select %p558, %s32, 1
        %s560 = smul.addr %s559, 4
        %s561 = scalar_lea.vmem %s1, %s560
        %v562 = vld [vmem:[%s557] sm:$0x7]
        %v563 = vld [vmem:[%s561] sm:$0x7]
        %s564 = sld [smem:[#allocation2]]
        %v565 = vld [vmem:[%s3] sm:$0xff]
        %v566 = vld [vmem:[%s3 + $0x8] sm:$0xff]
        %v567 = vld [vmem:[%s4] sm:$0xff]
        %v568 = vld [vmem:[%s4 + $0x8] sm:$0xff]
        %v569 = vld [vmem:[%s4 + $0x10] sm:$0xff]
        %v570 = vld [vmem:[%s4 + $0x18] sm:$0xff]
        %v571 = vld [vmem:[%s5] sm:$0xff]
        %v572 = vld [vmem:[%s5 + $0x8] sm:$0xff]
        %v573 = vld [vmem:[%s5 + $0x10] sm:$0xff]
        %v574 = vld [vmem:[%s5 + $0x18] sm:$0xff]
        %v575 = vld [vmem:[%s6] sm:$0xff]
        %v576 = vld [vmem:[%s6 + $0x8] sm:$0xff]
        %v577 = vld [vmem:[%s6 + $0x10] sm:$0xff]
        %v578 = vld [vmem:[%s6 + $0x18] sm:$0xff]
        %v579 = vld [vmem:[%s7] sm:$0xff]
        %v580 = vld [vmem:[%s7 + $0x8] sm:$0xff]
        %v581 = vld [vmem:[%s7 + $0x10] sm:$0xff]
        %v582 = vld [vmem:[%s7 + $0x18] sm:$0xff]
        %v583 = vld [vmem:[%s8] sm:$0xff]
        %v584 = vld [vmem:[%s8 + $0x8] sm:$0xff]
        %v585 = vld [vmem:[%s8 + $0x10] sm:$0x1]
        %v586 = vld [vmem:[%s9] sm:$0xff]
        %v587 = vld [vmem:[%s9 + $0x8] sm:$0xff]
        %v588 = vld [vmem:[%s9 + $0x10] sm:$0x1]
        %v589 = vld [vmem:[%s10] sm:$0x7]
        %v590 = vld [vmem:[%s11] sm:$0xff]
        %v591 = vld [vmem:[%s11 + $0x8] sm:$0xff]
        %v592 = vld [vmem:[%s11 + $0x10] sm:$0xff]
        %v593 = vld [vmem:[%s11 + $0x18] sm:$0xff]
        %v594 = vld [vmem:[%s12] sm:$0xff]
        %v595 = vld [vmem:[%s12 + $0x8] sm:$0xff]
        %v596 = vld [vmem:[%s12 + $0x10] sm:$0xff]
        %v597 = vld [vmem:[%s12 + $0x18] sm:$0xff]
        %v598 = vld [vmem:[%s13] sm:$0xff]
        %v599 = vld [vmem:[%s13 + $0x8] sm:$0xff]
        %v600 = vld [vmem:[%s13 + $0x10] sm:$0xff]
        %v601 = vld [vmem:[%s13 + $0x18] sm:$0xff]
        %v602 = vld [vmem:[%s14] sm:$0xff]
        %v603 = vld [vmem:[%s14 + $0x8] sm:$0xff]
        %v604 = vld [vmem:[%s14 + $0x10] sm:$0xff]
        %v605 = vld [vmem:[%s14 + $0x18] sm:$0xff]
        %v606 = vld [vmem:[%s15] sm:$0x7]
        %v607 = vld [vmem:[%s16] sm:$0x7]
        %v608 = vmul.f32 %v563, %v563
        %vm609 = vcmask 1042432
        %v610 = vsel %vm609, %v608, 0.0
        %v611 = vrot.slane %v610, 4
        %v612 = vadd.f32 %v610, %v611
        %v613 = vrot.slane %v612, 2
        %v614 = vadd.f32 %v612, %v613
        %v615 = vrot.slane %v614, 1
        %v616 = vadd.f32 %v614, %v615
        %v617 = vmul.f32 %v562, %v563
        %v618 = vsel %vm609, %v617, 0.0
        %v619 = vrot.slane %v618, 4
        %v620 = vadd.f32 %v618, %v619
        %v621 = vrot.slane %v620, 2
        %v622 = vadd.f32 %v620, %v621
        %v623 = vrot.slane %v622, 1
        %v624 = vadd.f32 %v622, %v623
        %v625 = vsub.f32 0.0, %v624
        %v626 = vrcp.pop %v616
        %v627 = vmul.f32 %v625, %v626
        %v628 = vsub.f32 %v627, 1.0
        %v631 = vlaneseq
        %v632 = vshrl.u32 %v631, 7
        %v633 = vsub.s32 0, %v632
        %v634 = vrot.slane %v565, %v633
        %v635 = vlaneseq
        %v636 = vshrl.u32 %v635, 7
        %v637 = vsub.s32 1, %v636
        %v638 = vrot.slane %v565, %v637
        %v639 = vlaneseq
        %v640 = vshrl.u32 %v639, 7
        %v641 = vsub.s32 2, %v640
        %v642 = vrot.slane %v565, %v641
        %v643 = vlaneseq
        %v644 = vshrl.u32 %v643, 7
        %v645 = vsub.s32 3, %v644
        %v646 = vrot.slane %v565, %v645
        %v647 = vlaneseq
        %v648 = vshrl.u32 %v647, 7
        %v649 = vsub.s32 4, %v648
        %v650 = vrot.slane %v565, %v649
        %v651 = vlaneseq
        %v652 = vshrl.u32 %v651, 7
        %v653 = vsub.s32 5, %v652
        %v654 = vrot.slane %v565, %v653
        %v655 = vlaneseq
        %v656 = vshrl.u32 %v655, 7
        %v657 = vsub.s32 6, %v656
        %v658 = vrot.slane %v565, %v657
        %v659 = vlaneseq
        %v660 = vshrl.u32 %v659, 7
        %v661 = vsub.s32 7, %v660
        %v662 = vrot.slane %v565, %v661
        %v663 = vlaneseq
        %v664 = vshrl.u32 %v663, 7
        %v665 = vsub.s32 0, %v664
        %v666 = vrot.slane %v566, %v665
        %v667 = vlaneseq
        %v668 = vshrl.u32 %v667, 7
        %v669 = vsub.s32 1, %v668
        %v670 = vrot.slane %v566, %v669
        %v671 = vlaneseq
        %v672 = vshrl.u32 %v671, 7
        %v673 = vsub.s32 2, %v672
        %v674 = vrot.slane %v566, %v673
        %v675 = vlaneseq
        %v676 = vshrl.u32 %v675, 7
        %v677 = vsub.s32 3, %v676
        %v678 = vrot.slane %v566, %v677
        %v679 = vlaneseq
        %v680 = vshrl.u32 %v679, 7
        %v681 = vsub.s32 4, %v680
        %v682 = vrot.slane %v566, %v681
        %v683 = vlaneseq
        %v684 = vshrl.u32 %v683, 7
        %v685 = vsub.s32 5, %v684
        %v686 = vrot.slane %v566, %v685
        %v687 = vlaneseq
        %v688 = vshrl.u32 %v687, 7
        %v689 = vsub.s32 6, %v688
        %v690 = vrot.slane %v566, %v689
        %v691 = vlaneseq
        %v692 = vshrl.u32 %v691, 7
        %v693 = vsub.s32 7, %v692
        %v694 = vrot.slane %v566, %v693
        %v711 = vadd.f32 %v628, %v634
        %v712 = vadd.f32 %v628, %v638
        %v713 = vadd.f32 %v628, %v642
        %v714 = vadd.f32 %v628, %v646
        %v715 = vadd.f32 %v628, %v650
        %v716 = vadd.f32 %v628, %v654
        %v717 = vadd.f32 %v628, %v658
        %v718 = vadd.f32 %v628, %v662
        %v719 = vadd.f32 %v628, %v666
        %v720 = vadd.f32 %v628, %v670
        %v721 = vadd.f32 %v628, %v674
        %v722 = vadd.f32 %v628, %v678
        %v723 = vadd.f32 %v628, %v682
        %v724 = vadd.f32 %v628, %v686
        %v725 = vadd.f32 %v628, %v690
        %v726 = vadd.f32 %v628, %v694
        %v727 = vlaneseq
        %v728 = vshrl.u32 %v727, 7
        %v729 = vsub.s32 0, %v728
        %v730 = vrot.slane %v711, %v729
        %v731 = vlaneseq
        %v732 = vshrl.u32 %v731, 7
        %v733 = vsub.s32 0, %v732
        %v734 = vrot.slane %v712, %v733
        %v735 = vlaneseq
        %v736 = vshrl.u32 %v735, 7
        %v737 = vsub.s32 0, %v736
        %v738 = vrot.slane %v713, %v737
        %v739 = vlaneseq
        %v740 = vshrl.u32 %v739, 7
        %v741 = vsub.s32 0, %v740
        %v742 = vrot.slane %v714, %v741
        %v743 = vlaneseq
        %v744 = vshrl.u32 %v743, 7
        %v745 = vsub.s32 0, %v744
        %v746 = vrot.slane %v715, %v745
        %v747 = vlaneseq
        %v748 = vshrl.u32 %v747, 7
        %v749 = vsub.s32 0, %v748
        %v750 = vrot.slane %v716, %v749
        %v751 = vlaneseq
        %v752 = vshrl.u32 %v751, 7
        %v753 = vsub.s32 0, %v752
        %v754 = vrot.slane %v717, %v753
        %v755 = vlaneseq
        %v756 = vshrl.u32 %v755, 7
        %v757 = vsub.s32 0, %v756
        %v758 = vrot.slane %v718, %v757
        %v759 = vlaneseq
        %v760 = vshrl.u32 %v759, 7
        %v761 = vsub.s32 0, %v760
        %v762 = vrot.slane %v719, %v761
        %v763 = vlaneseq
        %v764 = vshrl.u32 %v763, 7
        %v765 = vsub.s32 0, %v764
        %v766 = vrot.slane %v720, %v765
        %v767 = vlaneseq
        %v768 = vshrl.u32 %v767, 7
        %v769 = vsub.s32 0, %v768
        %v770 = vrot.slane %v721, %v769
        %v771 = vlaneseq
        %v772 = vshrl.u32 %v771, 7
        %v773 = vsub.s32 0, %v772
        %v774 = vrot.slane %v722, %v773
        %v775 = vlaneseq
        %v776 = vshrl.u32 %v775, 7
        %v777 = vsub.s32 0, %v776
        %v778 = vrot.slane %v723, %v777
        %v779 = vlaneseq
        %v780 = vshrl.u32 %v779, 7
        %v781 = vsub.s32 0, %v780
        %v782 = vrot.slane %v724, %v781
        %v783 = vlaneseq
        %v784 = vshrl.u32 %v783, 7
        %v785 = vsub.s32 0, %v784
        %v786 = vrot.slane %v725, %v785
        %v787 = vlaneseq
        %v788 = vshrl.u32 %v787, 7
        %v789 = vsub.s32 0, %v788
        %v790 = vrot.slane %v726, %v789
        %v791 = vmul.f32 %v563, %v730
        %v792 = vmul.f32 %v563, %v734
        %v793 = vmul.f32 %v563, %v738
        %v794 = vmul.f32 %v563, %v742
        %v795 = vmul.f32 %v563, %v746
        %v796 = vmul.f32 %v563, %v750
        %v797 = vmul.f32 %v563, %v754
        %v798 = vmul.f32 %v563, %v758
        %v799 = vmul.f32 %v563, %v762
        %v800 = vmul.f32 %v563, %v766
        %v801 = vmul.f32 %v563, %v770
        %v802 = vmul.f32 %v563, %v774
        %v803 = vmul.f32 %v563, %v778
        %v804 = vmul.f32 %v563, %v782
        %v805 = vmul.f32 %v563, %v786
        %v806 = vmul.f32 %v563, %v790
        %v807 = vadd.f32 %v562, %v791
        %v808 = vadd.f32 %v562, %v792
        %v809 = vadd.f32 %v562, %v793
        %v810 = vadd.f32 %v562, %v794
        %v811 = vadd.f32 %v562, %v795
        %v812 = vadd.f32 %v562, %v796
        %v813 = vadd.f32 %v562, %v797
        %v814 = vadd.f32 %v562, %v798
        %v815 = vadd.f32 %v562, %v799
        %v816 = vadd.f32 %v562, %v800
        %v817 = vadd.f32 %v562, %v801
        %v818 = vadd.f32 %v562, %v802
        %v819 = vadd.f32 %v562, %v803
        %v820 = vadd.f32 %v562, %v804
        %v821 = vadd.f32 %v562, %v805
        %v822 = vadd.f32 %v562, %v806
        %824 = vset.pattern.permute.xlu0 0
        %825 = vperm.xlu0 %824, %v571
        %v826 = vpop.permute.xlu0 %825
        %829 = vset.pattern.permute.xlu0 0
        %830 = vperm.xlu0 %829, %v572
        %v831 = vpop.permute.xlu0 %830
        %834 = vset.pattern.permute.xlu0 0
        %835 = vperm.xlu0 %834, %v573
        %v836 = vpop.permute.xlu0 %835
        %839 = vset.pattern.permute.xlu0 0
        %840 = vperm.xlu0 %839, %v574
        %v841 = vpop.permute.xlu0 %840
        %vm843 = vcmask 23552
        %v845 = vsel %vm843, %v567, 0
        %v848 = vsel %vm843, %v568, 0
        %v851 = vsel %vm843, %v569, 0
        %v854 = vsel %vm843, %v570, 0
        %v857 = vsel %vm609, %v807, 0
        %v860 = vsel %vm609, %v808, 0
        %v863 = vsel %vm609, %v809, 0
        %v866 = vsel %vm609, %v810, 0
        %v869 = vsel %vm609, %v811, 0
        %v872 = vsel %vm609, %v812, 0
        %v875 = vsel %vm609, %v813, 0
        %v878 = vsel %vm609, %v814, 0
        %v881 = vsel %vm609, %v815, 0
        %v884 = vsel %vm609, %v816, 0
        %v887 = vsel %vm609, %v817, 0
        %v890 = vsel %vm609, %v818, 0
        %v893 = vsel %vm609, %v819, 0
        %v896 = vsel %vm609, %v820, 0
        %v899 = vsel %vm609, %v821, 0
        %v902 = vsel %vm609, %v822, 0
        %904 = vmatprep.subr.mxu0 0.0
        %905 = vmatpush1.msra.mxu0 0.0
        %906 = vmatprep.subr.mxu0 0.0
        %907 = vmatpush1.msra.mxu0 0.0
        %908 = vmatprep.subr.mxu0 0.0
        %909 = vmatpush1.msra.mxu0 0.0
        %910 = vmatprep.subr.mxu0 0.0
        %911 = vmatpush1.msra.mxu0 0.0
        %912 = vmatprep.subr.mxu0 0.0
        %913 = vmatpush1.msra.mxu0 0.0
        %914 = vmatprep.subr.mxu0 0.0
        %915 = vmatpush1.msra.mxu0 0.0
        %916 = vmatprep.subr.mxu0 0.0
        %917 = vmatpush1.msra.mxu0 0.0
        %918 = vmatprep.subr.mxu0 0.0
        %919 = vmatpush1.msra.mxu0 0.0
        %920 = vmatprep.subr.mxu0 0.0
        %921 = vmatpush1.msra.mxu0 0.0
        %922 = vmatprep.subr.mxu0 0.0
        %923 = vmatpush1.msra.mxu0 0.0
        %924 = vmatprep.subr.mxu0 0.0
        %925 = vmatpush1.msra.mxu0 0.0
        %926 = vmatprep.subr.mxu0 0.0
        %927 = vmatpush1.msra.mxu0 0.0
        %928 = vmatprep.subr.mxu0 0.0
        %929 = vmatpush1.msra.mxu0 0.0
        %930 = vmatprep.subr.mxu0 0.0
        %931 = vmatpush1.msra.mxu0 0.0
        %932 = vmatprep.subr.mxu0 0.0
        %933 = vmatpush1.msra.mxu0 0.0
        %934 = vmatprep.subr.mxu0 %v860
        %935 = vmatpush1.msra.mxu0 %v857
        %936 = vmatprep.subr.mxu0 0.0
        %937 = vmatpush2.msra.mxu0 0.0
        %938 = vmatprep.subr.mxu0 0.0
        %939 = vmatpush2.msra.mxu0 0.0
        %940 = vmatprep.subr.mxu0 0.0
        %941 = vmatpush2.msra.mxu0 0.0
        %942 = vmatprep.subr.mxu0 0.0
        %943 = vmatpush2.msra.mxu0 0.0
        %944 = vmatprep.subr.mxu0 0.0
        %945 = vmatpush2.msra.mxu0 0.0
        %946 = vmatprep.subr.mxu0 0.0
        %947 = vmatpush2.msra.mxu0 0.0
        %948 = vmatprep.subr.mxu0 0.0
        %949 = vmatpush2.msra.mxu0 0.0
        %950 = vmatprep.subr.mxu0 0.0
        %951 = vmatpush2.msra.mxu0 0.0
        %952 = vmatprep.subr.mxu0 0.0
        %953 = vmatpush2.msra.mxu0 0.0
        %954 = vmatprep.subr.mxu0 0.0
        %955 = vmatpush2.msra.mxu0 0.0
        %956 = vmatprep.subr.mxu0 0.0
        %957 = vmatpush2.msra.mxu0 0.0
        %958 = vmatprep.subr.mxu0 0.0
        %959 = vmatpush2.msra.mxu0 0.0
        %960 = vmatprep.subr.mxu0 0.0
        %961 = vmatpush2.msra.mxu0 0.0
        %962 = vmatprep.subr.mxu0 0.0
        %963 = vmatpush2.msra.mxu0 0.0
        %964 = vmatprep.subr.mxu0 0.0
        %965 = vmatpush2.msra.mxu0 0.0
        %966 = vmatprep.subr.mxu0 0.0
        %967 = vmatpush2.msra.mxu0 0.0
        %968 = vmatprep.mubr.f32.mxu0 0.0
        %969 = vmatmul.mubr.f32.gmra.mxu0 %v845
        %v970 = vpop.f32.mrf.mxu0
        %v971 = vadd.f32 %v826, %v970
        %v972 = vpop.f32.mrf.mxu0
        %v973 = vadd.f32 %v826, %v972
        %974 = vmatprep.mubr.f32.mxu0 0.0
        %975 = vmatmul.mubr.f32.gmra.mxu0 %v848
        %v976 = vpop.f32.mrf.mxu0
        %v977 = vadd.f32 %v831, %v976
        %v978 = vpop.f32.mrf.mxu0
        %v979 = vadd.f32 %v831, %v978
        %980 = vmatprep.mubr.f32.mxu0 0.0
        %981 = vmatmul.mubr.f32.gmra.mxu0 %v851
        %v982 = vpop.f32.mrf.mxu0
        %v983 = vadd.f32 %v836, %v982
        %v984 = vpop.f32.mrf.mxu0
        %v985 = vadd.f32 %v836, %v984
        %986 = vmatprep.mubr.f32.mxu0 0.0
        %987 = vmatmul.mubr.f32.gmra.mxu0 %v854
        %v988 = vpop.f32.mrf.mxu0
        %v989 = vadd.f32 %v841, %v988
        %v990 = vpop.f32.mrf.mxu0
        %v991 = vadd.f32 %v841, %v990
        %992 = vdwg.mxu0
        %993 = vmatprep.subr.mxu0 0.0
        %994 = vmatpush1.msra.mxu0 0.0
        %995 = vmatprep.subr.mxu0 0.0
        %996 = vmatpush1.msra.mxu0 0.0
        %997 = vmatprep.subr.mxu0 0.0
        %998 = vmatpush1.msra.mxu0 0.0
        %999 = vmatprep.subr.mxu0 0.0
        %1000 = vmatpush1.msra.mxu0 0.0
        %1001 = vmatprep.subr.mxu0 0.0
        %1002 = vmatpush1.msra.mxu0 0.0
        %1003 = vmatprep.subr.mxu0 0.0
        %1004 = vmatpush1.msra.mxu0 0.0
        %1005 = vmatprep.subr.mxu0 0.0
        %1006 = vmatpush1.msra.mxu0 0.0
        %1007 = vmatprep.subr.mxu0 0.0
        %1008 = vmatpush1.msra.mxu0 0.0
        %1009 = vmatprep.subr.mxu0 0.0
        %1010 = vmatpush1.msra.mxu0 0.0
        %1011 = vmatprep.subr.mxu0 0.0
        %1012 = vmatpush1.msra.mxu0 0.0
        %1013 = vmatprep.subr.mxu0 0.0
        %1014 = vmatpush1.msra.mxu0 0.0
        %1015 = vmatprep.subr.mxu0 0.0
        %1016 = vmatpush1.msra.mxu0 0.0
        %1017 = vmatprep.subr.mxu0 0.0
        %1018 = vmatpush1.msra.mxu0 0.0
        %1019 = vmatprep.subr.mxu0 0.0
        %1020 = vmatpush1.msra.mxu0 0.0
        %1021 = vmatprep.subr.mxu0 0.0
        %1022 = vmatpush1.msra.mxu0 0.0
        %1023 = vmatprep.subr.mxu0 %v866
        %1024 = vmatpush1.msra.mxu0 %v863
        %1025 = vmatprep.subr.mxu0 0.0
        %1026 = vmatpush2.msra.mxu0 0.0
        %1027 = vmatprep.subr.mxu0 0.0
        %1028 = vmatpush2.msra.mxu0 0.0
        %1029 = vmatprep.subr.mxu0 0.0
        %1030 = vmatpush2.msra.mxu0 0.0
        %1031 = vmatprep.subr.mxu0 0.0
        %1032 = vmatpush2.msra.mxu0 0.0
        %1033 = vmatprep.subr.mxu0 0.0
        %1034 = vmatpush2.msra.mxu0 0.0
        %1035 = vmatprep.subr.mxu0 0.0
        %1036 = vmatpush2.msra.mxu0 0.0
        %1037 = vmatprep.subr.mxu0 0.0
        %1038 = vmatpush2.msra.mxu0 0.0
        %1039 = vmatprep.subr.mxu0 0.0
        %1040 = vmatpush2.msra.mxu0 0.0
        %1041 = vmatprep.subr.mxu0 0.0
        %1042 = vmatpush2.msra.mxu0 0.0
        %1043 = vmatprep.subr.mxu0 0.0
        %1044 = vmatpush2.msra.mxu0 0.0
        %1045 = vmatprep.subr.mxu0 0.0
        %1046 = vmatpush2.msra.mxu0 0.0
        %1047 = vmatprep.subr.mxu0 0.0
        %1048 = vmatpush2.msra.mxu0 0.0
        %1049 = vmatprep.subr.mxu0 0.0
        %1050 = vmatpush2.msra.mxu0 0.0
        %1051 = vmatprep.subr.mxu0 0.0
        %1052 = vmatpush2.msra.mxu0 0.0
        %1053 = vmatprep.subr.mxu0 0.0
        %1054 = vmatpush2.msra.mxu0 0.0
        %1055 = vmatprep.subr.mxu0 0.0
        %1056 = vmatpush2.msra.mxu0 0.0
        %1057 = vmatprep.mubr.f32.mxu0 0.0
        %1058 = vmatmul.mubr.f32.gmra.mxu0 %v845
        %v1059 = vpop.f32.mrf.mxu0
        %v1060 = vadd.f32 %v826, %v1059
        %v1061 = vpop.f32.mrf.mxu0
        %v1062 = vadd.f32 %v826, %v1061
        %1063 = vmatprep.mubr.f32.mxu0 0.0
        %1064 = vmatmul.mubr.f32.gmra.mxu0 %v848
        %v1065 = vpop.f32.mrf.mxu0
        %v1066 = vadd.f32 %v831, %v1065
        %v1067 = vpop.f32.mrf.mxu0
        %v1068 = vadd.f32 %v831, %v1067
        %1069 = vmatprep.mubr.f32.mxu0 0.0
        %1070 = vmatmul.mubr.f32.gmra.mxu0 %v851
        %v1071 = vpop.f32.mrf.mxu0
        %v1072 = vadd.f32 %v836, %v1071
        %v1073 = vpop.f32.mrf.mxu0
        %v1074 = vadd.f32 %v836, %v1073
        %1075 = vmatprep.mubr.f32.mxu0 0.0
        %1076 = vmatmul.mubr.f32.gmra.mxu0 %v854
        %v1077 = vpop.f32.mrf.mxu0
        %v1078 = vadd.f32 %v841, %v1077
        %v1079 = vpop.f32.mrf.mxu0
        %v1080 = vadd.f32 %v841, %v1079
        %1081 = vdwg.mxu0
        %1082 = vmatprep.subr.mxu0 0.0
        %1083 = vmatpush1.msra.mxu0 0.0
        %1084 = vmatprep.subr.mxu0 0.0
        %1085 = vmatpush1.msra.mxu0 0.0
        %1086 = vmatprep.subr.mxu0 0.0
        %1087 = vmatpush1.msra.mxu0 0.0
        %1088 = vmatprep.subr.mxu0 0.0
        %1089 = vmatpush1.msra.mxu0 0.0
        %1090 = vmatprep.subr.mxu0 0.0
        %1091 = vmatpush1.msra.mxu0 0.0
        %1092 = vmatprep.subr.mxu0 0.0
        %1093 = vmatpush1.msra.mxu0 0.0
        %1094 = vmatprep.subr.mxu0 0.0
        %1095 = vmatpush1.msra.mxu0 0.0
        %1096 = vmatprep.subr.mxu0 0.0
        %1097 = vmatpush1.msra.mxu0 0.0
        %1098 = vmatprep.subr.mxu0 0.0
        %1099 = vmatpush1.msra.mxu0 0.0
        %1100 = vmatprep.subr.mxu0 0.0
        %1101 = vmatpush1.msra.mxu0 0.0
        %1102 = vmatprep.subr.mxu0 0.0
        %1103 = vmatpush1.msra.mxu0 0.0
        %1104 = vmatprep.subr.mxu0 0.0
        %1105 = vmatpush1.msra.mxu0 0.0
        %1106 = vmatprep.subr.mxu0 0.0
        %1107 = vmatpush1.msra.mxu0 0.0
        %1108 = vmatprep.subr.mxu0 0.0
        %1109 = vmatpush1.msra.mxu0 0.0
        %1110 = vmatprep.subr.mxu0 0.0
        %1111 = vmatpush1.msra.mxu0 0.0
        %1112 = vmatprep.subr.mxu0 %v872
        %1113 = vmatpush1.msra.mxu0 %v869
        %1114 = vmatprep.subr.mxu0 0.0
        %1115 = vmatpush2.msra.mxu0 0.0
        %1116 = vmatprep.subr.mxu0 0.0
        %1117 = vmatpush2.msra.mxu0 0.0
        %1118 = vmatprep.subr.mxu0 0.0
        %1119 = vmatpush2.msra.mxu0 0.0
        %1120 = vmatprep.subr.mxu0 0.0
        %1121 = vmatpush2.msra.mxu0 0.0
        %1122 = vmatprep.subr.mxu0 0.0
        %1123 = vmatpush2.msra.mxu0 0.0
        %1124 = vmatprep.subr.mxu0 0.0
        %1125 = vmatpush2.msra.mxu0 0.0
        %1126 = vmatprep.subr.mxu0 0.0
        %1127 = vmatpush2.msra.mxu0 0.0
        %1128 = vmatprep.subr.mxu0 0.0
        %1129 = vmatpush2.msra.mxu0 0.0
        %1130 = vmatprep.subr.mxu0 0.0
        %1131 = vmatpush2.msra.mxu0 0.0
        %1132 = vmatprep.subr.mxu0 0.0
        %1133 = vmatpush2.msra.mxu0 0.0
        %1134 = vmatprep.subr.mxu0 0.0
        %1135 = vmatpush2.msra.mxu0 0.0
        %1136 = vmatprep.subr.mxu0 0.0
        %1137 = vmatpush2.msra.mxu0 0.0
        %1138 = vmatprep.subr.mxu0 0.0
        %1139 = vmatpush2.msra.mxu0 0.0
        %1140 = vmatprep.subr.mxu0 0.0
        %1141 = vmatpush2.msra.mxu0 0.0
        %1142 = vmatprep.subr.mxu0 0.0
        %1143 = vmatpush2.msra.mxu0 0.0
        %1144 = vmatprep.subr.mxu0 0.0
        %1145 = vmatpush2.msra.mxu0 0.0
        %1146 = vmatprep.mubr.f32.mxu0 0.0
        %1147 = vmatmul.mubr.f32.gmra.mxu0 %v845
        %v1148 = vpop.f32.mrf.mxu0
        %v1149 = vadd.f32 %v826, %v1148
        %v1150 = vpop.f32.mrf.mxu0
        %v1151 = vadd.f32 %v826, %v1150
        %1152 = vmatprep.mubr.f32.mxu0 0.0
        %1153 = vmatmul.mubr.f32.gmra.mxu0 %v848
        %v1154 = vpop.f32.mrf.mxu0
        %v1155 = vadd.f32 %v831, %v1154
        %v1156 = vpop.f32.mrf.mxu0
        %v1157 = vadd.f32 %v831, %v1156
        %1158 = vmatprep.mubr.f32.mxu0 0.0
        %1159 = vmatmul.mubr.f32.gmra.mxu0 %v851
        %v1160 = vpop.f32.mrf.mxu0
        %v1161 = vadd.f32 %v836, %v1160
        %v1162 = vpop.f32.mrf.mxu0
        %v1163 = vadd.f32 %v836, %v1162
        %1164 = vmatprep.mubr.f32.mxu0 0.0
        %1165 = vmatmul.mubr.f32.gmra.mxu0 %v854
        %v1166 = vpop.f32.mrf.mxu0
        %v1167 = vadd.f32 %v841, %v1166
        %v1168 = vpop.f32.mrf.mxu0
        %v1169 = vadd.f32 %v841, %v1168
        %1170 = vdwg.mxu0
        %1171 = vmatprep.subr.mxu0 0.0
        %1172 = vmatpush1.msra.mxu0 0.0
        %1173 = vmatprep.subr.mxu0 0.0
        %1174 = vmatpush1.msra.mxu0 0.0
        %1175 = vmatprep.subr.mxu0 0.0
        %1176 = vmatpush1.msra.mxu0 0.0
        %1177 = vmatprep.subr.mxu0 0.0
        %1178 = vmatpush1.msra.mxu0 0.0
        %1179 = vmatprep.subr.mxu0 0.0
        %1180 = vmatpush1.msra.mxu0 0.0
        %1181 = vmatprep.subr.mxu0 0.0
        %1182 = vmatpush1.msra.mxu0 0.0
        %1183 = vmatprep.subr.mxu0 0.0
        %1184 = vmatpush1.msra.mxu0 0.0
        %1185 = vmatprep.subr.mxu0 0.0
        %1186 = vmatpush1.msra.mxu0 0.0
        %1187 = vmatprep.subr.mxu0 0.0
        %1188 = vmatpush1.msra.mxu0 0.0
        %1189 = vmatprep.subr.mxu0 0.0
        %1190 = vmatpush1.msra.mxu0 0.0
        %1191 = vmatprep.subr.mxu0 0.0
        %1192 = vmatpush1.msra.mxu0 0.0
        %1193 = vmatprep.subr.mxu0 0.0
        %1194 = vmatpush1.msra.mxu0 0.0
        %1195 = vmatprep.subr.mxu0 0.0
        %1196 = vmatpush1.msra.mxu0 0.0
        %1197 = vmatprep.subr.mxu0 0.0
        %1198 = vmatpush1.msra.mxu0 0.0
        %1199 = vmatprep.subr.mxu0 0.0
        %1200 = vmatpush1.msra.mxu0 0.0
        %1201 = vmatprep.subr.mxu0 %v878
        %1202 = vmatpush1.msra.mxu0 %v875
        %1203 = vmatprep.subr.mxu0 0.0
        %1204 = vmatpush2.msra.mxu0 0.0
        %1205 = vmatprep.subr.mxu0 0.0
        %1206 = vmatpush2.msra.mxu0 0.0
        %1207 = vmatprep.subr.mxu0 0.0
        %1208 = vmatpush2.msra.mxu0 0.0
        %1209 = vmatprep.subr.mxu0 0.0
        %1210 = vmatpush2.msra.mxu0 0.0
        %1211 = vmatprep.subr.mxu0 0.0
        %1212 = vmatpush2.msra.mxu0 0.0
        %1213 = vmatprep.subr.mxu0 0.0
        %1214 = vmatpush2.msra.mxu0 0.0
        %1215 = vmatprep.subr.mxu0 0.0
        %1216 = vmatpush2.msra.mxu0 0.0
        %1217 = vmatprep.subr.mxu0 0.0
        %1218 = vmatpush2.msra.mxu0 0.0
        %1219 = vmatprep.subr.mxu0 0.0
        %1220 = vmatpush2.msra.mxu0 0.0
        %1221 = vmatprep.subr.mxu0 0.0
        %1222 = vmatpush2.msra.mxu0 0.0
        %1223 = vmatprep.subr.mxu0 0.0
        %1224 = vmatpush2.msra.mxu0 0.0
        %1225 = vmatprep.subr.mxu0 0.0
        %1226 = vmatpush2.msra.mxu0 0.0
        %1227 = vmatprep.subr.mxu0 0.0
        %1228 = vmatpush2.msra.mxu0 0.0
        %1229 = vmatprep.subr.mxu0 0.0
        %1230 = vmatpush2.msra.mxu0 0.0
        %1231 = vmatprep.subr.mxu0 0.0
        %1232 = vmatpush2.msra.mxu0 0.0
        %1233 = vmatprep.subr.mxu0 0.0
        %1234 = vmatpush2.msra.mxu0 0.0
        %1235 = vmatprep.mubr.f32.mxu0 0.0
        %1236 = vmatmul.mubr.f32.gmra.mxu0 %v845
        %v1237 = vpop.f32.mrf.mxu0
        %v1238 = vadd.f32 %v826, %v1237
        %v1239 = vpop.f32.mrf.mxu0
        %v1240 = vadd.f32 %v826, %v1239
        %1241 = vmatprep.mubr.f32.mxu0 0.0
        %1242 = vmatmul.mubr.f32.gmra.mxu0 %v848
        %v1243 = vpop.f32.mrf.mxu0
        %v1244 = vadd.f32 %v831, %v1243
        %v1245 = vpop.f32.mrf.mxu0
        %v1246 = vadd.f32 %v831, %v1245
        %1247 = vmatprep.mubr.f32.mxu0 0.0
        %1248 = vmatmul.mubr.f32.gmra.mxu0 %v851
        %v1249 = vpop.f32.mrf.mxu0
        %v1250 = vadd.f32 %v836, %v1249
        %v1251 = vpop.f32.mrf.mxu0
        %v1252 = vadd.f32 %v836, %v1251
        %1253 = vmatprep.mubr.f32.mxu0 0.0
        %1254 = vmatmul.mubr.f32.gmra.mxu0 %v854
        %v1255 = vpop.f32.mrf.mxu0
        %v1256 = vadd.f32 %v841, %v1255
        %v1257 = vpop.f32.mrf.mxu0
        %v1258 = vadd.f32 %v841, %v1257
        %1259 = vdwg.mxu0
        %1260 = vmatprep.subr.mxu0 0.0
        %1261 = vmatpush1.msra.mxu0 0.0
        %1262 = vmatprep.subr.mxu0 0.0
        %1263 = vmatpush1.msra.mxu0 0.0
        %1264 = vmatprep.subr.mxu0 0.0
        %1265 = vmatpush1.msra.mxu0 0.0
        %1266 = vmatprep.subr.mxu0 0.0
        %1267 = vmatpush1.msra.mxu0 0.0
        %1268 = vmatprep.subr.mxu0 0.0
        %1269 = vmatpush1.msra.mxu0 0.0
        %1270 = vmatprep.subr.mxu0 0.0
        %1271 = vmatpush1.msra.mxu0 0.0
        %1272 = vmatprep.subr.mxu0 0.0
        %1273 = vmatpush1.msra.mxu0 0.0
        %1274 = vmatprep.subr.mxu0 0.0
        %1275 = vmatpush1.msra.mxu0 0.0
        %1276 = vmatprep.subr.mxu0 0.0
        %1277 = vmatpush1.msra.mxu0 0.0
        %1278 = vmatprep.subr.mxu0 0.0
        %1279 = vmatpush1.msra.mxu0 0.0
        %1280 = vmatprep.subr.mxu0 0.0
        %1281 = vmatpush1.msra.mxu0 0.0
        %1282 = vmatprep.subr.mxu0 0.0
        %1283 = vmatpush1.msra.mxu0 0.0
        %1284 = vmatprep.subr.mxu0 0.0
        %1285 = vmatpush1.msra.mxu0 0.0
        %1286 = vmatprep.subr.mxu0 0.0
        %1287 = vmatpush1.msra.mxu0 0.0
        %1288 = vmatprep.subr.mxu0 0.0
        %1289 = vmatpush1.msra.mxu0 0.0
        %1290 = vmatprep.subr.mxu0 %v884
        %1291 = vmatpush1.msra.mxu0 %v881
        %1292 = vmatprep.subr.mxu0 0.0
        %1293 = vmatpush2.msra.mxu0 0.0
        %1294 = vmatprep.subr.mxu0 0.0
        %1295 = vmatpush2.msra.mxu0 0.0
        %1296 = vmatprep.subr.mxu0 0.0
        %1297 = vmatpush2.msra.mxu0 0.0
        %1298 = vmatprep.subr.mxu0 0.0
        %1299 = vmatpush2.msra.mxu0 0.0
        %1300 = vmatprep.subr.mxu0 0.0
        %1301 = vmatpush2.msra.mxu0 0.0
        %1302 = vmatprep.subr.mxu0 0.0
        %1303 = vmatpush2.msra.mxu0 0.0
        %1304 = vmatprep.subr.mxu0 0.0
        %1305 = vmatpush2.msra.mxu0 0.0
        %1306 = vmatprep.subr.mxu0 0.0
        %1307 = vmatpush2.msra.mxu0 0.0
        %1308 = vmatprep.subr.mxu0 0.0
        %1309 = vmatpush2.msra.mxu0 0.0
        %1310 = vmatprep.subr.mxu0 0.0
        %1311 = vmatpush2.msra.mxu0 0.0
        %1312 = vmatprep.subr.mxu0 0.0
        %1313 = vmatpush2.msra.mxu0 0.0
        %1314 = vmatprep.subr.mxu0 0.0
        %1315 = vmatpush2.msra.mxu0 0.0
        %1316 = vmatprep.subr.mxu0 0.0
        %1317 = vmatpush2.msra.mxu0 0.0
        %1318 = vmatprep.subr.mxu0 0.0
        %1319 = vmatpush2.msra.mxu0 0.0
        %1320 = vmatprep.subr.mxu0 0.0
        %1321 = vmatpush2.msra.mxu0 0.0
        %1322 = vmatprep.subr.mxu0 0.0
        %1323 = vmatpush2.msra.mxu0 0.0
        %1324 = vmatprep.mubr.f32.mxu0 0.0
        %1325 = vmatmul.mubr.f32.gmra.mxu0 %v845
        %v1326 = vpop.f32.mrf.mxu0
        %v1327 = vadd.f32 %v826, %v1326
        %v1328 = vpop.f32.mrf.mxu0
        %v1329 = vadd.f32 %v826, %v1328
        %1330 = vmatprep.mubr.f32.mxu0 0.0
        %1331 = vmatmul.mubr.f32.gmra.mxu0 %v848
        %v1332 = vpop.f32.mrf.mxu0
        %v1333 = vadd.f32 %v831, %v1332
        %v1334 = vpop.f32.mrf.mxu0
        %v1335 = vadd.f32 %v831, %v1334
        %1336 = vmatprep.mubr.f32.mxu0 0.0
        %1337 = vmatmul.mubr.f32.gmra.mxu0 %v851
        %v1338 = vpop.f32.mrf.mxu0
        %v1339 = vadd.f32 %v836, %v1338
        %v1340 = vpop.f32.mrf.mxu0
        %v1341 = vadd.f32 %v836, %v1340
        %1342 = vmatprep.mubr.f32.mxu0 0.0
        %1343 = vmatmul.mubr.f32.gmra.mxu0 %v854
        %v1344 = vpop.f32.mrf.mxu0
        %v1345 = vadd.f32 %v841, %v1344
        %v1346 = vpop.f32.mrf.mxu0
        %v1347 = vadd.f32 %v841, %v1346
        %1348 = vdwg.mxu0
        %1349 = vmatprep.subr.mxu0 0.0
        %1350 = vmatpush1.msra.mxu0 0.0
        %1351 = vmatprep.subr.mxu0 0.0
        %1352 = vmatpush1.msra.mxu0 0.0
        %1353 = vmatprep.subr.mxu0 0.0
        %1354 = vmatpush1.msra.mxu0 0.0
        %1355 = vmatprep.subr.mxu0 0.0
        %1356 = vmatpush1.msra.mxu0 0.0
        %1357 = vmatprep.subr.mxu0 0.0
        %1358 = vmatpush1.msra.mxu0 0.0
        %1359 = vmatprep.subr.mxu0 0.0
        %1360 = vmatpush1.msra.mxu0 0.0
        %1361 = vmatprep.subr.mxu0 0.0
        %1362 = vmatpush1.msra.mxu0 0.0
        %1363 = vmatprep.subr.mxu0 0.0
        %1364 = vmatpush1.msra.mxu0 0.0
        %1365 = vmatprep.subr.mxu0 0.0
        %1366 = vmatpush1.msra.mxu0 0.0
        %1367 = vmatprep.subr.mxu0 0.0
        %1368 = vmatpush1.msra.mxu0 0.0
        %1369 = vmatprep.subr.mxu0 0.0
        %1370 = vmatpush1.msra.mxu0 0.0
        %1371 = vmatprep.subr.mxu0 0.0
        %1372 = vmatpush1.msra.mxu0 0.0
        %1373 = vmatprep.subr.mxu0 0.0
        %1374 = vmatpush1.msra.mxu0 0.0
        %1375 = vmatprep.subr.mxu0 0.0
        %1376 = vmatpush1.msra.mxu0 0.0
        %1377 = vmatprep.subr.mxu0 0.0
        %1378 = vmatpush1.msra.mxu0 0.0
        %1379 = vmatprep.subr.mxu0 %v890
        %1380 = vmatpush1.msra.mxu0 %v887
        %1381 = vmatprep.subr.mxu0 0.0
        %1382 = vmatpush2.msra.mxu0 0.0
        %1383 = vmatprep.subr.mxu0 0.0
        %1384 = vmatpush2.msra.mxu0 0.0
        %1385 = vmatprep.subr.mxu0 0.0
        %1386 = vmatpush2.msra.mxu0 0.0
        %1387 = vmatprep.subr.mxu0 0.0
        %1388 = vmatpush2.msra.mxu0 0.0
        %1389 = vmatprep.subr.mxu0 0.0
        %1390 = vmatpush2.msra.mxu0 0.0
        %1391 = vmatprep.subr.mxu0 0.0
        %1392 = vmatpush2.msra.mxu0 0.0
        %1393 = vmatprep.subr.mxu0 0.0
        %1394 = vmatpush2.msra.mxu0 0.0
        %1395 = vmatprep.subr.mxu0 0.0
        %1396 = vmatpush2.msra.mxu0 0.0
        %1397 = vmatprep.subr.mxu0 0.0
        %1398 = vmatpush2.msra.mxu0 0.0
        %1399 = vmatprep.subr.mxu0 0.0
        %1400 = vmatpush2.msra.mxu0 0.0
        %1401 = vmatprep.subr.mxu0 0.0
        %1402 = vmatpush2.msra.mxu0 0.0
        %1403 = vmatprep.subr.mxu0 0.0
        %1404 = vmatpush2.msra.mxu0 0.0
        %1405 = vmatprep.subr.mxu0 0.0
        %1406 = vmatpush2.msra.mxu0 0.0
        %1407 = vmatprep.subr.mxu0 0.0
        %1408 = vmatpush2.msra.mxu0 0.0
        %1409 = vmatprep.subr.mxu0 0.0
        %1410 = vmatpush2.msra.mxu0 0.0
        %1411 = vmatprep.subr.mxu0 0.0
        %1412 = vmatpush2.msra.mxu0 0.0
        %1413 = vmatprep.mubr.f32.mxu0 0.0
        %1414 = vmatmul.mubr.f32.gmra.mxu0 %v845
        %v1415 = vpop.f32.mrf.mxu0
        %v1416 = vadd.f32 %v826, %v1415
        %v1417 = vpop.f32.mrf.mxu0
        %v1418 = vadd.f32 %v826, %v1417
        %1419 = vmatprep.mubr.f32.mxu0 0.0
        %1420 = vmatmul.mubr.f32.gmra.mxu0 %v848
        %v1421 = vpop.f32.mrf.mxu0
        %v1422 = vadd.f32 %v831, %v1421
        %v1423 = vpop.f32.mrf.mxu0
        %v1424 = vadd.f32 %v831, %v1423
        %1425 = vmatprep.mubr.f32.mxu0 0.0
        %1426 = vmatmul.mubr.f32.gmra.mxu0 %v851
        %v1427 = vpop.f32.mrf.mxu0
        %v1428 = vadd.f32 %v836, %v1427
        %v1429 = vpop.f32.mrf.mxu0
        %v1430 = vadd.f32 %v836, %v1429
        %1431 = vmatprep.mubr.f32.mxu0 0.0
        %1432 = vmatmul.mubr.f32.gmra.mxu0 %v854
        %v1433 = vpop.f32.mrf.mxu0
        %v1434 = vadd.f32 %v841, %v1433
        %v1435 = vpop.f32.mrf.mxu0
        %v1436 = vadd.f32 %v841, %v1435
        %1437 = vdwg.mxu0
        %1438 = vmatprep.subr.mxu0 0.0
        %1439 = vmatpush1.msra.mxu0 0.0
        %1440 = vmatprep.subr.mxu0 0.0
        %1441 = vmatpush1.msra.mxu0 0.0
        %1442 = vmatprep.subr.mxu0 0.0
        %1443 = vmatpush1.msra.mxu0 0.0
        %1444 = vmatprep.subr.mxu0 0.0
        %1445 = vmatpush1.msra.mxu0 0.0
        %1446 = vmatprep.subr.mxu0 0.0
        %1447 = vmatpush1.msra.mxu0 0.0
        %1448 = vmatprep.subr.mxu0 0.0
        %1449 = vmatpush1.msra.mxu0 0.0
        %1450 = vmatprep.subr.mxu0 0.0
        %1451 = vmatpush1.msra.mxu0 0.0
        %1452 = vmatprep.subr.mxu0 0.0
        %1453 = vmatpush1.msra.mxu0 0.0
        %1454 = vmatprep.subr.mxu0 0.0
        %1455 = vmatpush1.msra.mxu0 0.0
        %1456 = vmatprep.subr.mxu0 0.0
        %1457 = vmatpush1.msra.mxu0 0.0
        %1458 = vmatprep.subr.mxu0 0.0
        %1459 = vmatpush1.msra.mxu0 0.0
        %1460 = vmatprep.subr.mxu0 0.0
        %1461 = vmatpush1.msra.mxu0 0.0
        %1462 = vmatprep.subr.mxu0 0.0
        %1463 = vmatpush1.msra.mxu0 0.0
        %1464 = vmatprep.subr.mxu0 0.0
        %1465 = vmatpush1.msra.mxu0 0.0
        %1466 = vmatprep.subr.mxu0 0.0
        %1467 = vmatpush1.msra.mxu0 0.0
        %1468 = vmatprep.subr.mxu0 %v896
        %1469 = vmatpush1.msra.mxu0 %v893
        %1470 = vmatprep.subr.mxu0 0.0
        %1471 = vmatpush2.msra.mxu0 0.0
        %1472 = vmatprep.subr.mxu0 0.0
        %1473 = vmatpush2.msra.mxu0 0.0
        %1474 = vmatprep.subr.mxu0 0.0
        %1475 = vmatpush2.msra.mxu0 0.0
        %1476 = vmatprep.subr.mxu0 0.0
        %1477 = vmatpush2.msra.mxu0 0.0
        %1478 = vmatprep.subr.mxu0 0.0
        %1479 = vmatpush2.msra.mxu0 0.0
        %1480 = vmatprep.subr.mxu0 0.0
        %1481 = vmatpush2.msra.mxu0 0.0
        %1482 = vmatprep.subr.mxu0 0.0
        %1483 = vmatpush2.msra.mxu0 0.0
        %1484 = vmatprep.subr.mxu0 0.0
        %1485 = vmatpush2.msra.mxu0 0.0
        %1486 = vmatprep.subr.mxu0 0.0
        %1487 = vmatpush2.msra.mxu0 0.0
        %1488 = vmatprep.subr.mxu0 0.0
        %1489 = vmatpush2.msra.mxu0 0.0
        %1490 = vmatprep.subr.mxu0 0.0
        %1491 = vmatpush2.msra.mxu0 0.0
        %1492 = vmatprep.subr.mxu0 0.0
        %1493 = vmatpush2.msra.mxu0 0.0
        %1494 = vmatprep.subr.mxu0 0.0
        %1495 = vmatpush2.msra.mxu0 0.0
        %1496 = vmatprep.subr.mxu0 0.0
        %1497 = vmatpush2.msra.mxu0 0.0
        %1498 = vmatprep.subr.mxu0 0.0
        %1499 = vmatpush2.msra.mxu0 0.0
        %1500 = vmatprep.subr.mxu0 0.0
        %1501 = vmatpush2.msra.mxu0 0.0
        %1502 = vmatprep.mubr.f32.mxu0 0.0
        %1503 = vmatmul.mubr.f32.gmra.mxu0 %v845
        %v1504 = vpop.f32.mrf.mxu0
        %v1505 = vadd.f32 %v826, %v1504
        %v1506 = vpop.f32.mrf.mxu0
        %v1507 = vadd.f32 %v826, %v1506
        %1508 = vmatprep.mubr.f32.mxu0 0.0
        %1509 = vmatmul.mubr.f32.gmra.mxu0 %v848
        %v1510 = vpop.f32.mrf.mxu0
        %v1511 = vadd.f32 %v831, %v1510
        %v1512 = vpop.f32.mrf.mxu0
        %v1513 = vadd.f32 %v831, %v1512
        %1514 = vmatprep.mubr.f32.mxu0 0.0
        %1515 = vmatmul.mubr.f32.gmra.mxu0 %v851
        %v1516 = vpop.f32.mrf.mxu0
        %v1517 = vadd.f32 %v836, %v1516
        %v1518 = vpop.f32.mrf.mxu0
        %v1519 = vadd.f32 %v836, %v1518
        %1520 = vmatprep.mubr.f32.mxu0 0.0
        %1521 = vmatmul.mubr.f32.gmra.mxu0 %v854
        %v1522 = vpop.f32.mrf.mxu0
        %v1523 = vadd.f32 %v841, %v1522
        %v1524 = vpop.f32.mrf.mxu0
        %v1525 = vadd.f32 %v841, %v1524
        %1526 = vdwg.mxu0
        %1527 = vmatprep.subr.mxu0 0.0
        %1528 = vmatpush1.msra.mxu0 0.0
        %1529 = vmatprep.subr.mxu0 0.0
        %1530 = vmatpush1.msra.mxu0 0.0
        %1531 = vmatprep.subr.mxu0 0.0
        %1532 = vmatpush1.msra.mxu0 0.0
        %1533 = vmatprep.subr.mxu0 0.0
        %1534 = vmatpush1.msra.mxu0 0.0
        %1535 = vmatprep.subr.mxu0 0.0
        %1536 = vmatpush1.msra.mxu0 0.0
        %1537 = vmatprep.subr.mxu0 0.0
        %1538 = vmatpush1.msra.mxu0 0.0
        %1539 = vmatprep.subr.mxu0 0.0
        %1540 = vmatpush1.msra.mxu0 0.0
        %1541 = vmatprep.subr.mxu0 0.0
        %1542 = vmatpush1.msra.mxu0 0.0
        %1543 = vmatprep.subr.mxu0 0.0
        %1544 = vmatpush1.msra.mxu0 0.0
        %1545 = vmatprep.subr.mxu0 0.0
        %1546 = vmatpush1.msra.mxu0 0.0
        %1547 = vmatprep.subr.mxu0 0.0
        %1548 = vmatpush1.msra.mxu0 0.0
        %1549 = vmatprep.subr.mxu0 0.0
        %1550 = vmatpush1.msra.mxu0 0.0
        %1551 = vmatprep.subr.mxu0 0.0
        %1552 = vmatpush1.msra.mxu0 0.0
        %1553 = vmatprep.subr.mxu0 0.0
        %1554 = vmatpush1.msra.mxu0 0.0
        %1555 = vmatprep.subr.mxu0 0.0
        %1556 = vmatpush1.msra.mxu0 0.0
        %1557 = vmatprep.subr.mxu0 %v902
        %1558 = vmatpush1.msra.mxu0 %v899
        %1559 = vmatprep.subr.mxu0 0.0
        %1560 = vmatpush2.msra.mxu0 0.0
        %1561 = vmatprep.subr.mxu0 0.0
        %1562 = vmatpush2.msra.mxu0 0.0
        %1563 = vmatprep.subr.mxu0 0.0
        %1564 = vmatpush2.msra.mxu0 0.0
        %1565 = vmatprep.subr.mxu0 0.0
        %1566 = vmatpush2.msra.mxu0 0.0
        %1567 = vmatprep.subr.mxu0 0.0
        %1568 = vmatpush2.msra.mxu0 0.0
        %1569 = vmatprep.subr.mxu0 0.0
        %1570 = vmatpush2.msra.mxu0 0.0
        %1571 = vmatprep.subr.mxu0 0.0
        %1572 = vmatpush2.msra.mxu0 0.0
        %1573 = vmatprep.subr.mxu0 0.0
        %1574 = vmatpush2.msra.mxu0 0.0
        %1575 = vmatprep.subr.mxu0 0.0
        %1576 = vmatpush2.msra.mxu0 0.0
        %1577 = vmatprep.subr.mxu0 0.0
        %1578 = vmatpush2.msra.mxu0 0.0
        %1579 = vmatprep.subr.mxu0 0.0
        %1580 = vmatpush2.msra.mxu0 0.0
        %1581 = vmatprep.subr.mxu0 0.0
        %1582 = vmatpush2.msra.mxu0 0.0
        %1583 = vmatprep.subr.mxu0 0.0
        %1584 = vmatpush2.msra.mxu0 0.0
        %1585 = vmatprep.subr.mxu0 0.0
        %1586 = vmatpush2.msra.mxu0 0.0
        %1587 = vmatprep.subr.mxu0 0.0
        %1588 = vmatpush2.msra.mxu0 0.0
        %1589 = vmatprep.subr.mxu0 0.0
        %1590 = vmatpush2.msra.mxu0 0.0
        %1591 = vmatprep.mubr.f32.mxu0 0.0
        %1592 = vmatmul.mubr.f32.gmra.mxu0 %v845
        %v1593 = vpop.f32.mrf.mxu0
        %v1594 = vadd.f32 %v826, %v1593
        %v1595 = vpop.f32.mrf.mxu0
        %v1596 = vadd.f32 %v826, %v1595
        %1597 = vmatprep.mubr.f32.mxu0 0.0
        %1598 = vmatmul.mubr.f32.gmra.mxu0 %v848
        %v1599 = vpop.f32.mrf.mxu0
        %v1600 = vadd.f32 %v831, %v1599
        %v1601 = vpop.f32.mrf.mxu0
        %v1602 = vadd.f32 %v831, %v1601
        %1603 = vmatprep.mubr.f32.mxu0 0.0
        %1604 = vmatmul.mubr.f32.gmra.mxu0 %v851
        %v1605 = vpop.f32.mrf.mxu0
        %v1606 = vadd.f32 %v836, %v1605
        %v1607 = vpop.f32.mrf.mxu0
        %v1608 = vadd.f32 %v836, %v1607
        %1609 = vmatprep.mubr.f32.mxu0 0.0
        %1610 = vmatmul.mubr.f32.gmra.mxu0 %v854
        %v1611 = vpop.f32.mrf.mxu0
        %v1612 = vadd.f32 %v841, %v1611
        %v1613 = vpop.f32.mrf.mxu0
        %v1614 = vadd.f32 %v841, %v1613
        %1615 = vdwg.mxu0
        %v1616 = vand.u32 2147483647, %v971
        %v1617 = vand.u32 2147483647, %v973
        %v1618 = vand.u32 2147483647, %v1060
        %v1619 = vand.u32 2147483647, %v1062
        %v1620 = vand.u32 2147483647, %v1149
        %v1621 = vand.u32 2147483647, %v1151
        %v1622 = vand.u32 2147483647, %v1238
        %v1623 = vand.u32 2147483647, %v1240
        %v1624 = vand.u32 2147483647, %v1327
        %v1625 = vand.u32 2147483647, %v1329
        %v1626 = vand.u32 2147483647, %v1416
        %v1627 = vand.u32 2147483647, %v1418
        %v1628 = vand.u32 2147483647, %v1505
        %v1629 = vand.u32 2147483647, %v1507
        %v1630 = vand.u32 2147483647, %v1594
        %v1631 = vand.u32 2147483647, %v1596
        %v1632 = vand.u32 2147483647, %v977
        %v1633 = vand.u32 2147483647, %v979
        %v1634 = vand.u32 2147483647, %v1066
        %v1635 = vand.u32 2147483647, %v1068
        %v1636 = vand.u32 2147483647, %v1155
        %v1637 = vand.u32 2147483647, %v1157
        %v1638 = vand.u32 2147483647, %v1244
        %v1639 = vand.u32 2147483647, %v1246
        %v1640 = vand.u32 2147483647, %v1333
        %v1641 = vand.u32 2147483647, %v1335
        %v1642 = vand.u32 2147483647, %v1422
        %v1643 = vand.u32 2147483647, %v1424
        %v1644 = vand.u32 2147483647, %v1511
        %v1645 = vand.u32 2147483647, %v1513
        %v1646 = vand.u32 2147483647, %v1600
        %v1647 = vand.u32 2147483647, %v1602
        %v1648 = vand.u32 2147483647, %v983
        %v1649 = vand.u32 2147483647, %v985
        %v1650 = vand.u32 2147483647, %v1072
        %v1651 = vand.u32 2147483647, %v1074
        %v1652 = vand.u32 2147483647, %v1161
        %v1653 = vand.u32 2147483647, %v1163
        %v1654 = vand.u32 2147483647, %v1250
        %v1655 = vand.u32 2147483647, %v1252
        %v1656 = vand.u32 2147483647, %v1339
        %v1657 = vand.u32 2147483647, %v1341
        %v1658 = vand.u32 2147483647, %v1428
        %v1659 = vand.u32 2147483647, %v1430
        %v1660 = vand.u32 2147483647, %v1517
        %v1661 = vand.u32 2147483647, %v1519
        %v1662 = vand.u32 2147483647, %v1606
        %v1663 = vand.u32 2147483647, %v1608
        %v1664 = vand.u32 2147483647, %v989
        %v1665 = vand.u32 2147483647, %v991
        %v1666 = vand.u32 2147483647, %v1078
        %v1667 = vand.u32 2147483647, %v1080
        %v1668 = vand.u32 2147483647, %v1167
        %v1669 = vand.u32 2147483647, %v1169
        %v1670 = vand.u32 2147483647, %v1256
        %v1671 = vand.u32 2147483647, %v1258
        %v1672 = vand.u32 2147483647, %v1345
        %v1673 = vand.u32 2147483647, %v1347
        %v1674 = vand.u32 2147483647, %v1434
        %v1675 = vand.u32 2147483647, %v1436
        %v1676 = vand.u32 2147483647, %v1523
        %v1677 = vand.u32 2147483647, %v1525
        %v1678 = vand.u32 2147483647, %v1612
        %v1679 = vand.u32 2147483647, %v1614
        %v1680 = vsub.f32 0.0, %v1616
        %v1681 = vsub.f32 0.0, %v1617
        %v1682 = vsub.f32 0.0, %v1618
        %v1683 = vsub.f32 0.0, %v1619
        %v1684 = vsub.f32 0.0, %v1620
        %v1685 = vsub.f32 0.0, %v1621
        %v1686 = vsub.f32 0.0, %v1622
        %v1687 = vsub.f32 0.0, %v1623
        %v1688 = vsub.f32 0.0, %v1624
        %v1689 = vsub.f32 0.0, %v1625
        %v1690 = vsub.f32 0.0, %v1626
        %v1691 = vsub.f32 0.0, %v1627
        %v1692 = vsub.f32 0.0, %v1628
        %v1693 = vsub.f32 0.0, %v1629
        %v1694 = vsub.f32 0.0, %v1630
        %v1695 = vsub.f32 0.0, %v1631
        %v1696 = vsub.f32 0.0, %v1632
        %v1697 = vsub.f32 0.0, %v1633
        %v1698 = vsub.f32 0.0, %v1634
        %v1699 = vsub.f32 0.0, %v1635
        %v1700 = vsub.f32 0.0, %v1636
        %v1701 = vsub.f32 0.0, %v1637
        %v1702 = vsub.f32 0.0, %v1638
        %v1703 = vsub.f32 0.0, %v1639
        %v1704 = vsub.f32 0.0, %v1640
        %v1705 = vsub.f32 0.0, %v1641
        %v1706 = vsub.f32 0.0, %v1642
        %v1707 = vsub.f32 0.0, %v1643
        %v1708 = vsub.f32 0.0, %v1644
        %v1709 = vsub.f32 0.0, %v1645
        %v1710 = vsub.f32 0.0, %v1646
        %v1711 = vsub.f32 0.0, %v1647
        %v1712 = vsub.f32 0.0, %v1648
        %v1713 = vsub.f32 0.0, %v1649
        %v1714 = vsub.f32 0.0, %v1650
        %v1715 = vsub.f32 0.0, %v1651
        %v1716 = vsub.f32 0.0, %v1652
        %v1717 = vsub.f32 0.0, %v1653
        %v1718 = vsub.f32 0.0, %v1654
        %v1719 = vsub.f32 0.0, %v1655
        %v1720 = vsub.f32 0.0, %v1656
        %v1721 = vsub.f32 0.0, %v1657
        %v1722 = vsub.f32 0.0, %v1658
        %v1723 = vsub.f32 0.0, %v1659
        %v1724 = vsub.f32 0.0, %v1660
        %v1725 = vsub.f32 0.0, %v1661
        %v1726 = vsub.f32 0.0, %v1662
        %v1727 = vsub.f32 0.0, %v1663
        %v1728 = vsub.f32 0.0, %v1664
        %v1729 = vsub.f32 0.0, %v1665
        %v1730 = vsub.f32 0.0, %v1666
        %v1731 = vsub.f32 0.0, %v1667
        %v1732 = vsub.f32 0.0, %v1668
        %v1733 = vsub.f32 0.0, %v1669
        %v1734 = vsub.f32 0.0, %v1670
        %v1735 = vsub.f32 0.0, %v1671
        %v1736 = vsub.f32 0.0, %v1672
        %v1737 = vsub.f32 0.0, %v1673
        %v1738 = vsub.f32 0.0, %v1674
        %v1739 = vsub.f32 0.0, %v1675
        %v1740 = vsub.f32 0.0, %v1676
        %v1741 = vsub.f32 0.0, %v1677
        %v1742 = vsub.f32 0.0, %v1678
        %v1743 = vsub.f32 0.0, %v1679
        %v1744 = vmul.f32 %v1680, 1.442695
        %v1745 = vpow.pop %v1744
        %v1746 = vmul.f32 %v1681, 1.442695
        %v1747 = vpow.pop %v1746
        %v1748 = vmul.f32 %v1682, 1.442695
        %v1749 = vpow.pop %v1748
        %v1750 = vmul.f32 %v1683, 1.442695
        %v1751 = vpow.pop %v1750
        %v1752 = vmul.f32 %v1684, 1.442695
        %v1753 = vpow.pop %v1752
        %v1754 = vmul.f32 %v1685, 1.442695
        %v1755 = vpow.pop %v1754
        %v1756 = vmul.f32 %v1686, 1.442695
        %v1757 = vpow.pop %v1756
        %v1758 = vmul.f32 %v1687, 1.442695
        %v1759 = vpow.pop %v1758
        %v1760 = vmul.f32 %v1688, 1.442695
        %v1761 = vpow.pop %v1760
        %v1762 = vmul.f32 %v1689, 1.442695
        %v1763 = vpow.pop %v1762
        %v1764 = vmul.f32 %v1690, 1.442695
        %v1765 = vpow.pop %v1764
        %v1766 = vmul.f32 %v1691, 1.442695
        %v1767 = vpow.pop %v1766
        %v1768 = vmul.f32 %v1692, 1.442695
        %v1769 = vpow.pop %v1768
        %v1770 = vmul.f32 %v1693, 1.442695
        %v1771 = vpow.pop %v1770
        %v1772 = vmul.f32 %v1694, 1.442695
        %v1773 = vpow.pop %v1772
        %v1774 = vmul.f32 %v1695, 1.442695
        %v1775 = vpow.pop %v1774
        %v1776 = vmul.f32 %v1696, 1.442695
        %v1777 = vpow.pop %v1776
        %v1778 = vmul.f32 %v1697, 1.442695
        %v1779 = vpow.pop %v1778
        %v1780 = vmul.f32 %v1698, 1.442695
        %v1781 = vpow.pop %v1780
        %v1782 = vmul.f32 %v1699, 1.442695
        %v1783 = vpow.pop %v1782
        %v1784 = vmul.f32 %v1700, 1.442695
        %v1785 = vpow.pop %v1784
        %v1786 = vmul.f32 %v1701, 1.442695
        %v1787 = vpow.pop %v1786
        %v1788 = vmul.f32 %v1702, 1.442695
        %v1789 = vpow.pop %v1788
        %v1790 = vmul.f32 %v1703, 1.442695
        %v1791 = vpow.pop %v1790
        %v1792 = vmul.f32 %v1704, 1.442695
        %v1793 = vpow.pop %v1792
        %v1794 = vmul.f32 %v1705, 1.442695
        %v1795 = vpow.pop %v1794
        %v1796 = vmul.f32 %v1706, 1.442695
        %v1797 = vpow.pop %v1796
        %v1798 = vmul.f32 %v1707, 1.442695
        %v1799 = vpow.pop %v1798
        %v1800 = vmul.f32 %v1708, 1.442695
        %v1801 = vpow.pop %v1800
        %v1802 = vmul.f32 %v1709, 1.442695
        %v1803 = vpow.pop %v1802
        %v1804 = vmul.f32 %v1710, 1.442695
        %v1805 = vpow.pop %v1804
        %v1806 = vmul.f32 %v1711, 1.442695
        %v1807 = vpow.pop %v1806
        %v1808 = vmul.f32 %v1712, 1.442695
        %v1809 = vpow.pop %v1808
        %v1810 = vmul.f32 %v1713, 1.442695
        %v1811 = vpow.pop %v1810
        %v1812 = vmul.f32 %v1714, 1.442695
        %v1813 = vpow.pop %v1812
        %v1814 = vmul.f32 %v1715, 1.442695
        %v1815 = vpow.pop %v1814
        %v1816 = vmul.f32 %v1716, 1.442695
        %v1817 = vpow.pop %v1816
        %v1818 = vmul.f32 %v1717, 1.442695
        %v1819 = vpow.pop %v1818
        %v1820 = vmul.f32 %v1718, 1.442695
        %v1821 = vpow.pop %v1820
        %v1822 = vmul.f32 %v1719, 1.442695
        %v1823 = vpow.pop %v1822
        %v1824 = vmul.f32 %v1720, 1.442695
        %v1825 = vpow.pop %v1824
        %v1826 = vmul.f32 %v1721, 1.442695
        %v1827 = vpow.pop %v1826
        %v1828 = vmul.f32 %v1722, 1.442695
        %v1829 = vpow.pop %v1828
        %v1830 = vmul.f32 %v1723, 1.442695
        %v1831 = vpow.pop %v1830
        %v1832 = vmul.f32 %v1724, 1.442695
        %v1833 = vpow.pop %v1832
        %v1834 = vmul.f32 %v1725, 1.442695
        %v1835 = vpow.pop %v1834
        %v1836 = vmul.f32 %v1726, 1.442695
        %v1837 = vpow.pop %v1836
        %v1838 = vmul.f32 %v1727, 1.442695
        %v1839 = vpow.pop %v1838
        %v1840 = vmul.f32 %v1728, 1.442695
        %v1841 = vpow.pop %v1840
        %v1842 = vmul.f32 %v1729, 1.442695
        %v1843 = vpow.pop %v1842
        %v1844 = vmul.f32 %v1730, 1.442695
        %v1845 = vpow.pop %v1844
        %v1846 = vmul.f32 %v1731, 1.442695
        %v1847 = vpow.pop %v1846
        %v1848 = vmul.f32 %v1732, 1.442695
        %v1849 = vpow.pop %v1848
        %v1850 = vmul.f32 %v1733, 1.442695
        %v1851 = vpow.pop %v1850
        %v1852 = vmul.f32 %v1734, 1.442695
        %v1853 = vpow.pop %v1852
        %v1854 = vmul.f32 %v1735, 1.442695
        %v1855 = vpow.pop %v1854
        %v1856 = vmul.f32 %v1736, 1.442695
        %v1857 = vpow.pop %v1856
        %v1858 = vmul.f32 %v1737, 1.442695
        %v1859 = vpow.pop %v1858
        %v1860 = vmul.f32 %v1738, 1.442695
        %v1861 = vpow.pop %v1860
        %v1862 = vmul.f32 %v1739, 1.442695
        %v1863 = vpow.pop %v1862
        %v1864 = vmul.f32 %v1740, 1.442695
        %v1865 = vpow.pop %v1864
        %v1866 = vmul.f32 %v1741, 1.442695
        %v1867 = vpow.pop %v1866
        %v1868 = vmul.f32 %v1742, 1.442695
        %v1869 = vpow.pop %v1868
        %v1870 = vmul.f32 %v1743, 1.442695
        %v1871 = vpow.pop %v1870
        %v1872 = vadd.f32 %v1745, 1.0
        %v1873 = vadd.f32 %v1747, 1.0
        %v1874 = vadd.f32 %v1749, 1.0
        %v1875 = vadd.f32 %v1751, 1.0
        %v1876 = vadd.f32 %v1753, 1.0
        %v1877 = vadd.f32 %v1755, 1.0
        %v1878 = vadd.f32 %v1757, 1.0
        %v1879 = vadd.f32 %v1759, 1.0
        %v1880 = vadd.f32 %v1761, 1.0
        %v1881 = vadd.f32 %v1763, 1.0
        %v1882 = vadd.f32 %v1765, 1.0
        %v1883 = vadd.f32 %v1767, 1.0
        %v1884 = vadd.f32 %v1769, 1.0
        %v1885 = vadd.f32 %v1771, 1.0
        %v1886 = vadd.f32 %v1773, 1.0
        %v1887 = vadd.f32 %v1775, 1.0
        %v1888 = vadd.f32 %v1777, 1.0
        %v1889 = vadd.f32 %v1779, 1.0
        %v1890 = vadd.f32 %v1781, 1.0
        %v1891 = vadd.f32 %v1783, 1.0
        %v1892 = vadd.f32 %v1785, 1.0
        %v1893 = vadd.f32 %v1787, 1.0
        %v1894 = vadd.f32 %v1789, 1.0
        %v1895 = vadd.f32 %v1791, 1.0
        %v1896 = vadd.f32 %v1793, 1.0
        %v1897 = vadd.f32 %v1795, 1.0
        %v1898 = vadd.f32 %v1797, 1.0
        %v1899 = vadd.f32 %v1799, 1.0
        %v1900 = vadd.f32 %v1801, 1.0
        %v1901 = vadd.f32 %v1803, 1.0
        %v1902 = vadd.f32 %v1805, 1.0
        %v1903 = vadd.f32 %v1807, 1.0
        %v1904 = vadd.f32 %v1809, 1.0
        %v1905 = vadd.f32 %v1811, 1.0
        %v1906 = vadd.f32 %v1813, 1.0
        %v1907 = vadd.f32 %v1815, 1.0
        %v1908 = vadd.f32 %v1817, 1.0
        %v1909 = vadd.f32 %v1819, 1.0
        %v1910 = vadd.f32 %v1821, 1.0
        %v1911 = vadd.f32 %v1823, 1.0
        %v1912 = vadd.f32 %v1825, 1.0
        %v1913 = vadd.f32 %v1827, 1.0
        %v1914 = vadd.f32 %v1829, 1.0
        %v1915 = vadd.f32 %v1831, 1.0
        %v1916 = vadd.f32 %v1833, 1.0
        %v1917 = vadd.f32 %v1835, 1.0
        %v1918 = vadd.f32 %v1837, 1.0
        %v1919 = vadd.f32 %v1839, 1.0
        %v1920 = vadd.f32 %v1841, 1.0
        %v1921 = vadd.f32 %v1843, 1.0
        %v1922 = vadd.f32 %v1845, 1.0
        %v1923 = vadd.f32 %v1847, 1.0
        %v1924 = vadd.f32 %v1849, 1.0
        %v1925 = vadd.f32 %v1851, 1.0
        %v1926 = vadd.f32 %v1853, 1.0
        %v1927 = vadd.f32 %v1855, 1.0
        %v1928 = vadd.f32 %v1857, 1.0
        %v1929 = vadd.f32 %v1859, 1.0
        %v1930 = vadd.f32 %v1861, 1.0
        %v1931 = vadd.f32 %v1863, 1.0
        %v1932 = vadd.f32 %v1865, 1.0
        %v1933 = vadd.f32 %v1867, 1.0
        %v1934 = vadd.f32 %v1869, 1.0
        %v1935 = vadd.f32 %v1871, 1.0
        %vm1936 = vcmp.ge.f32.partialorder %v971, 0.0
        %vm1937 = vcmp.ge.f32.partialorder %v973, 0.0
        %vm1938 = vcmp.ge.f32.partialorder %v1060, 0.0
        %vm1939 = vcmp.ge.f32.partialorder %v1062, 0.0
        %vm1940 = vcmp.ge.f32.partialorder %v1149, 0.0
        %vm1941 = vcmp.ge.f32.partialorder %v1151, 0.0
        %vm1942 = vcmp.ge.f32.partialorder %v1238, 0.0
        %vm1943 = vcmp.ge.f32.partialorder %v1240, 0.0
        %vm1944 = vcmp.ge.f32.partialorder %v1327, 0.0
        %vm1945 = vcmp.ge.f32.partialorder %v1329, 0.0
        %vm1946 = vcmp.ge.f32.partialorder %v1416, 0.0
        %vm1947 = vcmp.ge.f32.partialorder %v1418, 0.0
        %vm1948 = vcmp.ge.f32.partialorder %v1505, 0.0
        %vm1949 = vcmp.ge.f32.partialorder %v1507, 0.0
        %vm1950 = vcmp.ge.f32.partialorder %v1594, 0.0
        %vm1951 = vcmp.ge.f32.partialorder %v1596, 0.0
        %vm1952 = vcmp.ge.f32.partialorder %v977, 0.0
        %vm1953 = vcmp.ge.f32.partialorder %v979, 0.0
        %vm1954 = vcmp.ge.f32.partialorder %v1066, 0.0
        %vm1955 = vcmp.ge.f32.partialorder %v1068, 0.0
        %vm1956 = vcmp.ge.f32.partialorder %v1155, 0.0
        %vm1957 = vcmp.ge.f32.partialorder %v1157, 0.0
        %vm1958 = vcmp.ge.f32.partialorder %v1244, 0.0
        %vm1959 = vcmp.ge.f32.partialorder %v1246, 0.0
        %vm1960 = vcmp.ge.f32.partialorder %v1333, 0.0
        %vm1961 = vcmp.ge.f32.partialorder %v1335, 0.0
        %vm1962 = vcmp.ge.f32.partialorder %v1422, 0.0
        %vm1963 = vcmp.ge.f32.partialorder %v1424, 0.0
        %vm1964 = vcmp.ge.f32.partialorder %v1511, 0.0
        %vm1965 = vcmp.ge.f32.partialorder %v1513, 0.0
        %vm1966 = vcmp.ge.f32.partialorder %v1600, 0.0
        %vm1967 = vcmp.ge.f32.partialorder %v1602, 0.0
        %vm1968 = vcmp.ge.f32.partialorder %v983, 0.0
        %vm1969 = vcmp.ge.f32.partialorder %v985, 0.0
        %vm1970 = vcmp.ge.f32.partialorder %v1072, 0.0
        %vm1971 = vcmp.ge.f32.partialorder %v1074, 0.0
        %vm1972 = vcmp.ge.f32.partialorder %v1161, 0.0
        %vm1973 = vcmp.ge.f32.partialorder %v1163, 0.0
        %vm1974 = vcmp.ge.f32.partialorder %v1250, 0.0
        %vm1975 = vcmp.ge.f32.partialorder %v1252, 0.0
        %vm1976 = vcmp.ge.f32.partialorder %v1339, 0.0
        %vm1977 = vcmp.ge.f32.partialorder %v1341, 0.0
        %vm1978 = vcmp.ge.f32.partialorder %v1428, 0.0
        %vm1979 = vcmp.ge.f32.partialorder %v1430, 0.0
        %vm1980 = vcmp.ge.f32.partialorder %v1517, 0.0
        %vm1981 = vcmp.ge.f32.partialorder %v1519, 0.0
        %vm1982 = vcmp.ge.f32.partialorder %v1606, 0.0
        %vm1983 = vcmp.ge.f32.partialorder %v1608, 0.0
        %vm1984 = vcmp.ge.f32.partialorder %v989, 0.0
        %vm1985 = vcmp.ge.f32.partialorder %v991, 0.0
        %vm1986 = vcmp.ge.f32.partialorder %v1078, 0.0
        %vm1987 = vcmp.ge.f32.partialorder %v1080, 0.0
        %vm1988 = vcmp.ge.f32.partialorder %v1167, 0.0
        %vm1989 = vcmp.ge.f32.partialorder %v1169, 0.0
        %vm1990 = vcmp.ge.f32.partialorder %v1256, 0.0
        %vm1991 = vcmp.ge.f32.partialorder %v1258, 0.0
        %vm1992 = vcmp.ge.f32.partialorder %v1345, 0.0
        %vm1993 = vcmp.ge.f32.partialorder %v1347, 0.0
        %vm1994 = vcmp.ge.f32.partialorder %v1434, 0.0
        %vm1995 = vcmp.ge.f32.partialorder %v1436, 0.0
        %vm1996 = vcmp.ge.f32.partialorder %v1523, 0.0
        %vm1997 = vcmp.ge.f32.partialorder %v1525, 0.0
        %vm1998 = vcmp.ge.f32.partialorder %v1612, 0.0
        %vm1999 = vcmp.ge.f32.partialorder %v1614, 0.0
        %v2000 = vsel %vm1936, 1.0, %v1745
        %v2001 = vsel %vm1937, 1.0, %v1747
        %v2002 = vsel %vm1938, 1.0, %v1749
        %v2003 = vsel %vm1939, 1.0, %v1751
        %v2004 = vsel %vm1940, 1.0, %v1753
        %v2005 = vsel %vm1941, 1.0, %v1755
        %v2006 = vsel %vm1942, 1.0, %v1757
        %v2007 = vsel %vm1943, 1.0, %v1759
        %v2008 = vsel %vm1944, 1.0, %v1761
        %v2009 = vsel %vm1945, 1.0, %v1763
        %v2010 = vsel %vm1946, 1.0, %v1765
        %v2011 = vsel %vm1947, 1.0, %v1767
        %v2012 = vsel %vm1948, 1.0, %v1769
        %v2013 = vsel %vm1949, 1.0, %v1771
        %v2014 = vsel %vm1950, 1.0, %v1773
        %v2015 = vsel %vm1951, 1.0, %v1775
        %v2016 = vsel %vm1952, 1.0, %v1777
        %v2017 = vsel %vm1953, 1.0, %v1779
        %v2018 = vsel %vm1954, 1.0, %v1781
        %v2019 = vsel %vm1955, 1.0, %v1783
        %v2020 = vsel %vm1956, 1.0, %v1785
        %v2021 = vsel %vm1957, 1.0, %v1787
        %v2022 = vsel %vm1958, 1.0, %v1789
        %v2023 = vsel %vm1959, 1.0, %v1791
        %v2024 = vsel %vm1960, 1.0, %v1793
        %v2025 = vsel %vm1961, 1.0, %v1795
        %v2026 = vsel %vm1962, 1.0, %v1797
        %v2027 = vsel %vm1963, 1.0, %v1799
        %v2028 = vsel %vm1964, 1.0, %v1801
        %v2029 = vsel %vm1965, 1.0, %v1803
        %v2030 = vsel %vm1966, 1.0, %v1805
        %v2031 = vsel %vm1967, 1.0, %v1807
        %v2032 = vsel %vm1968, 1.0, %v1809
        %v2033 = vsel %vm1969, 1.0, %v1811
        %v2034 = vsel %vm1970, 1.0, %v1813
        %v2035 = vsel %vm1971, 1.0, %v1815
        %v2036 = vsel %vm1972, 1.0, %v1817
        %v2037 = vsel %vm1973, 1.0, %v1819
        %v2038 = vsel %vm1974, 1.0, %v1821
        %v2039 = vsel %vm1975, 1.0, %v1823
        %v2040 = vsel %vm1976, 1.0, %v1825
        %v2041 = vsel %vm1977, 1.0, %v1827
        %v2042 = vsel %vm1978, 1.0, %v1829
        %v2043 = vsel %vm1979, 1.0, %v1831
        %v2044 = vsel %vm1980, 1.0, %v1833
        %v2045 = vsel %vm1981, 1.0, %v1835
        %v2046 = vsel %vm1982, 1.0, %v1837
        %v2047 = vsel %vm1983, 1.0, %v1839
        %v2048 = vsel %vm1984, 1.0, %v1841
        %v2049 = vsel %vm1985, 1.0, %v1843
        %v2050 = vsel %vm1986, 1.0, %v1845
        %v2051 = vsel %vm1987, 1.0, %v1847
        %v2052 = vsel %vm1988, 1.0, %v1849
        %v2053 = vsel %vm1989, 1.0, %v1851
        %v2054 = vsel %vm1990, 1.0, %v1853
        %v2055 = vsel %vm1991, 1.0, %v1855
        %v2056 = vsel %vm1992, 1.0, %v1857
        %v2057 = vsel %vm1993, 1.0, %v1859
        %v2058 = vsel %vm1994, 1.0, %v1861
        %v2059 = vsel %vm1995, 1.0, %v1863
        %v2060 = vsel %vm1996, 1.0, %v1865
        %v2061 = vsel %vm1997, 1.0, %v1867
        %v2062 = vsel %vm1998, 1.0, %v1869
        %v2063 = vsel %vm1999, 1.0, %v1871
        %v2064 = vrcp.pop %v1872
        %v2065 = vmul.f32 %v2000, %v2064
        %v2066 = vrcp.pop %v1873
        %v2067 = vmul.f32 %v2001, %v2066
        %v2068 = vrcp.pop %v1874
        %v2069 = vmul.f32 %v2002, %v2068
        %v2070 = vrcp.pop %v1875
        %v2071 = vmul.f32 %v2003, %v2070
        %v2072 = vrcp.pop %v1876
        %v2073 = vmul.f32 %v2004, %v2072
        %v2074 = vrcp.pop %v1877
        %v2075 = vmul.f32 %v2005, %v2074
        %v2076 = vrcp.pop %v1878
        %v2077 = vmul.f32 %v2006, %v2076
        %v2078 = vrcp.pop %v1879
        %v2079 = vmul.f32 %v2007, %v2078
        %v2080 = vrcp.pop %v1880
        %v2081 = vmul.f32 %v2008, %v2080
        %v2082 = vrcp.pop %v1881
        %v2083 = vmul.f32 %v2009, %v2082
        %v2084 = vrcp.pop %v1882
        %v2085 = vmul.f32 %v2010, %v2084
        %v2086 = vrcp.pop %v1883
        %v2087 = vmul.f32 %v2011, %v2086
        %v2088 = vrcp.pop %v1884
        %v2089 = vmul.f32 %v2012, %v2088
        %v2090 = vrcp.pop %v1885
        %v2091 = vmul.f32 %v2013, %v2090
        %v2092 = vrcp.pop %v1886
        %v2093 = vmul.f32 %v2014, %v2092
        %v2094 = vrcp.pop %v1887
        %v2095 = vmul.f32 %v2015, %v2094
        %v2096 = vrcp.pop %v1888
        %v2097 = vmul.f32 %v2016, %v2096
        %v2098 = vrcp.pop %v1889
        %v2099 = vmul.f32 %v2017, %v2098
        %v2100 = vrcp.pop %v1890
        %v2101 = vmul.f32 %v2018, %v2100
        %v2102 = vrcp.pop %v1891
        %v2103 = vmul.f32 %v2019, %v2102
        %v2104 = vrcp.pop %v1892
        %v2105 = vmul.f32 %v2020, %v2104
        %v2106 = vrcp.pop %v1893
        %v2107 = vmul.f32 %v2021, %v2106
        %v2108 = vrcp.pop %v1894
        %v2109 = vmul.f32 %v2022, %v2108
        %v2110 = vrcp.pop %v1895
        %v2111 = vmul.f32 %v2023, %v2110
        %v2112 = vrcp.pop %v1896
        %v2113 = vmul.f32 %v2024, %v2112
        %v2114 = vrcp.pop %v1897
        %v2115 = vmul.f32 %v2025, %v2114
        %v2116 = vrcp.pop %v1898
        %v2117 = vmul.f32 %v2026, %v2116
        %v2118 = vrcp.pop %v1899
        %v2119 = vmul.f32 %v2027, %v2118
        %v2120 = vrcp.pop %v1900
        %v2121 = vmul.f32 %v2028, %v2120
        %v2122 = vrcp.pop %v1901
        %v2123 = vmul.f32 %v2029, %v2122
        %v2124 = vrcp.pop %v1902
        %v2125 = vmul.f32 %v2030, %v2124
        %v2126 = vrcp.pop %v1903
        %v2127 = vmul.f32 %v2031, %v2126
        %v2128 = vrcp.pop %v1904
        %v2129 = vmul.f32 %v2032, %v2128
        %v2130 = vrcp.pop %v1905
        %v2131 = vmul.f32 %v2033, %v2130
        %v2132 = vrcp.pop %v1906
        %v2133 = vmul.f32 %v2034, %v2132
        %v2134 = vrcp.pop %v1907
        %v2135 = vmul.f32 %v2035, %v2134
        %v2136 = vrcp.pop %v1908
        %v2137 = vmul.f32 %v2036, %v2136
        %v2138 = vrcp.pop %v1909
        %v2139 = vmul.f32 %v2037, %v2138
        %v2140 = vrcp.pop %v1910
        %v2141 = vmul.f32 %v2038, %v2140
        %v2142 = vrcp.pop %v1911
        %v2143 = vmul.f32 %v2039, %v2142
        %v2144 = vrcp.pop %v1912
        %v2145 = vmul.f32 %v2040, %v2144
        %v2146 = vrcp.pop %v1913
        %v2147 = vmul.f32 %v2041, %v2146
        %v2148 = vrcp.pop %v1914
        %v2149 = vmul.f32 %v2042, %v2148
        %v2150 = vrcp.pop %v1915
        %v2151 = vmul.f32 %v2043, %v2150
        %v2152 = vrcp.pop %v1916
        %v2153 = vmul.f32 %v2044, %v2152
        %v2154 = vrcp.pop %v1917
        %v2155 = vmul.f32 %v2045, %v2154
        %v2156 = vrcp.pop %v1918
        %v2157 = vmul.f32 %v2046, %v2156
        %v2158 = vrcp.pop %v1919
        %v2159 = vmul.f32 %v2047, %v2158
        %v2160 = vrcp.pop %v1920
        %v2161 = vmul.f32 %v2048, %v2160
        %v2162 = vrcp.pop %v1921
        %v2163 = vmul.f32 %v2049, %v2162
        %v2164 = vrcp.pop %v1922
        %v2165 = vmul.f32 %v2050, %v2164
        %v2166 = vrcp.pop %v1923
        %v2167 = vmul.f32 %v2051, %v2166
        %v2168 = vrcp.pop %v1924
        %v2169 = vmul.f32 %v2052, %v2168
        %v2170 = vrcp.pop %v1925
        %v2171 = vmul.f32 %v2053, %v2170
        %v2172 = vrcp.pop %v1926
        %v2173 = vmul.f32 %v2054, %v2172
        %v2174 = vrcp.pop %v1927
        %v2175 = vmul.f32 %v2055, %v2174
        %v2176 = vrcp.pop %v1928
        %v2177 = vmul.f32 %v2056, %v2176
        %v2178 = vrcp.pop %v1929
        %v2179 = vmul.f32 %v2057, %v2178
        %v2180 = vrcp.pop %v1930
        %v2181 = vmul.f32 %v2058, %v2180
        %v2182 = vrcp.pop %v1931
        %v2183 = vmul.f32 %v2059, %v2182
        %v2184 = vrcp.pop %v1932
        %v2185 = vmul.f32 %v2060, %v2184
        %v2186 = vrcp.pop %v1933
        %v2187 = vmul.f32 %v2061, %v2186
        %v2188 = vrcp.pop %v1934
        %v2189 = vmul.f32 %v2062, %v2188
        %v2190 = vrcp.pop %v1935
        %v2191 = vmul.f32 %v2063, %v2190
        %v2192 = vmax.f32 %v971, 0.0
        %v2193 = vmax.f32 %v973, 0.0
        %v2194 = vmax.f32 %v1060, 0.0
        %v2195 = vmax.f32 %v1062, 0.0
        %v2196 = vmax.f32 %v1149, 0.0
        %v2197 = vmax.f32 %v1151, 0.0
        %v2198 = vmax.f32 %v1238, 0.0
        %v2199 = vmax.f32 %v1240, 0.0
        %v2200 = vmax.f32 %v1327, 0.0
        %v2201 = vmax.f32 %v1329, 0.0
        %v2202 = vmax.f32 %v1416, 0.0
        %v2203 = vmax.f32 %v1418, 0.0
        %v2204 = vmax.f32 %v1505, 0.0
        %v2205 = vmax.f32 %v1507, 0.0
        %v2206 = vmax.f32 %v1594, 0.0
        %v2207 = vmax.f32 %v1596, 0.0
        %v2208 = vmax.f32 %v977, 0.0
        %v2209 = vmax.f32 %v979, 0.0
        %v2210 = vmax.f32 %v1066, 0.0
        %v2211 = vmax.f32 %v1068, 0.0
        %v2212 = vmax.f32 %v1155, 0.0
        %v2213 = vmax.f32 %v1157, 0.0
        %v2214 = vmax.f32 %v1244, 0.0
        %v2215 = vmax.f32 %v1246, 0.0
        %v2216 = vmax.f32 %v1333, 0.0
        %v2217 = vmax.f32 %v1335, 0.0
        %v2218 = vmax.f32 %v1422, 0.0
        %v2219 = vmax.f32 %v1424, 0.0
        %v2220 = vmax.f32 %v1511, 0.0
        %v2221 = vmax.f32 %v1513, 0.0
        %v2222 = vmax.f32 %v1600, 0.0
        %v2223 = vmax.f32 %v1602, 0.0
        %v2224 = vmax.f32 %v983, 0.0
        %v2225 = vmax.f32 %v985, 0.0
        %v2226 = vmax.f32 %v1072, 0.0
        %v2227 = vmax.f32 %v1074, 0.0
        %v2228 = vmax.f32 %v1161, 0.0
        %v2229 = vmax.f32 %v1163, 0.0
        %v2230 = vmax.f32 %v1250, 0.0
        %v2231 = vmax.f32 %v1252, 0.0
        %v2232 = vmax.f32 %v1339, 0.0
        %v2233 = vmax.f32 %v1341, 0.0
        %v2234 = vmax.f32 %v1428, 0.0
        %v2235 = vmax.f32 %v1430, 0.0
        %v2236 = vmax.f32 %v1517, 0.0
        %v2237 = vmax.f32 %v1519, 0.0
        %v2238 = vmax.f32 %v1606, 0.0
        %v2239 = vmax.f32 %v1608, 0.0
        %v2240 = vmax.f32 %v989, 0.0
        %v2241 = vmax.f32 %v991, 0.0
        %v2242 = vmax.f32 %v1078, 0.0
        %v2243 = vmax.f32 %v1080, 0.0
        %v2244 = vmax.f32 %v1167, 0.0
        %v2245 = vmax.f32 %v1169, 0.0
        %v2246 = vmax.f32 %v1256, 0.0
        %v2247 = vmax.f32 %v1258, 0.0
        %v2248 = vmax.f32 %v1345, 0.0
        %v2249 = vmax.f32 %v1347, 0.0
        %v2250 = vmax.f32 %v1434, 0.0
        %v2251 = vmax.f32 %v1436, 0.0
        %v2252 = vmax.f32 %v1523, 0.0
        %v2253 = vmax.f32 %v1525, 0.0
        %v2254 = vmax.f32 %v1612, 0.0
        %v2255 = vmax.f32 %v1614, 0.0
        %v2256 = vlog2.pop %v1872
        %v2257 = vmul.f32 %v2256, 0.6931472
        %v2258 = vlog2.pop %v1873
        %v2259 = vmul.f32 %v2258, 0.6931472
        %v2260 = vlog2.pop %v1874
        %v2261 = vmul.f32 %v2260, 0.6931472
        %v2262 = vlog2.pop %v1875
        %v2263 = vmul.f32 %v2262, 0.6931472
        %v2264 = vlog2.pop %v1876
        %v2265 = vmul.f32 %v2264, 0.6931472
        %v2266 = vlog2.pop %v1877
        %v2267 = vmul.f32 %v2266, 0.6931472
        %v2268 = vlog2.pop %v1878
        %v2269 = vmul.f32 %v2268, 0.6931472
        %v2270 = vlog2.pop %v1879
        %v2271 = vmul.f32 %v2270, 0.6931472
        %v2272 = vlog2.pop %v1880
        %v2273 = vmul.f32 %v2272, 0.6931472
        %v2274 = vlog2.pop %v1881
        %v2275 = vmul.f32 %v2274, 0.6931472
        %v2276 = vlog2.pop %v1882
        %v2277 = vmul.f32 %v2276, 0.6931472
        %v2278 = vlog2.pop %v1883
        %v2279 = vmul.f32 %v2278, 0.6931472
        %v2280 = vlog2.pop %v1884
        %v2281 = vmul.f32 %v2280, 0.6931472
        %v2282 = vlog2.pop %v1885
        %v2283 = vmul.f32 %v2282, 0.6931472
        %v2284 = vlog2.pop %v1886
        %v2285 = vmul.f32 %v2284, 0.6931472
        %v2286 = vlog2.pop %v1887
        %v2287 = vmul.f32 %v2286, 0.6931472
        %v2288 = vlog2.pop %v1888
        %v2289 = vmul.f32 %v2288, 0.6931472
        %v2290 = vlog2.pop %v1889
        %v2291 = vmul.f32 %v2290, 0.6931472
        %v2292 = vlog2.pop %v1890
        %v2293 = vmul.f32 %v2292, 0.6931472
        %v2294 = vlog2.pop %v1891
        %v2295 = vmul.f32 %v2294, 0.6931472
        %v2296 = vlog2.pop %v1892
        %v2297 = vmul.f32 %v2296, 0.6931472
        %v2298 = vlog2.pop %v1893
        %v2299 = vmul.f32 %v2298, 0.6931472
        %v2300 = vlog2.pop %v1894
        %v2301 = vmul.f32 %v2300, 0.6931472
        %v2302 = vlog2.pop %v1895
        %v2303 = vmul.f32 %v2302, 0.6931472
        %v2304 = vlog2.pop %v1896
        %v2305 = vmul.f32 %v2304, 0.6931472
        %v2306 = vlog2.pop %v1897
        %v2307 = vmul.f32 %v2306, 0.6931472
        %v2308 = vlog2.pop %v1898
        %v2309 = vmul.f32 %v2308, 0.6931472
        %v2310 = vlog2.pop %v1899
        %v2311 = vmul.f32 %v2310, 0.6931472
        %v2312 = vlog2.pop %v1900
        %v2313 = vmul.f32 %v2312, 0.6931472
        %v2314 = vlog2.pop %v1901
        %v2315 = vmul.f32 %v2314, 0.6931472
        %v2316 = vlog2.pop %v1902
        %v2317 = vmul.f32 %v2316, 0.6931472
        %v2318 = vlog2.pop %v1903
        %v2319 = vmul.f32 %v2318, 0.6931472
        %v2320 = vlog2.pop %v1904
        %v2321 = vmul.f32 %v2320, 0.6931472
        %v2322 = vlog2.pop %v1905
        %v2323 = vmul.f32 %v2322, 0.6931472
        %v2324 = vlog2.pop %v1906
        %v2325 = vmul.f32 %v2324, 0.6931472
        %v2326 = vlog2.pop %v1907
        %v2327 = vmul.f32 %v2326, 0.6931472
        %v2328 = vlog2.pop %v1908
        %v2329 = vmul.f32 %v2328, 0.6931472
        %v2330 = vlog2.pop %v1909
        %v2331 = vmul.f32 %v2330, 0.6931472
        %v2332 = vlog2.pop %v1910
        %v2333 = vmul.f32 %v2332, 0.6931472
        %v2334 = vlog2.pop %v1911
        %v2335 = vmul.f32 %v2334, 0.6931472
        %v2336 = vlog2.pop %v1912
        %v2337 = vmul.f32 %v2336, 0.6931472
        %v2338 = vlog2.pop %v1913
        %v2339 = vmul.f32 %v2338, 0.6931472
        %v2340 = vlog2.pop %v1914
        %v2341 = vmul.f32 %v2340, 0.6931472
        %v2342 = vlog2.pop %v1915
        %v2343 = vmul.f32 %v2342, 0.6931472
        %v2344 = vlog2.pop %v1916
        %v2345 = vmul.f32 %v2344, 0.6931472
        %v2346 = vlog2.pop %v1917
        %v2347 = vmul.f32 %v2346, 0.6931472
        %v2348 = vlog2.pop %v1918
        %v2349 = vmul.f32 %v2348, 0.6931472
        %v2350 = vlog2.pop %v1919
        %v2351 = vmul.f32 %v2350, 0.6931472
        %v2352 = vlog2.pop %v1920
        %v2353 = vmul.f32 %v2352, 0.6931472
        %v2354 = vlog2.pop %v1921
        %v2355 = vmul.f32 %v2354, 0.6931472
        %v2356 = vlog2.pop %v1922
        %v2357 = vmul.f32 %v2356, 0.6931472
        %v2358 = vlog2.pop %v1923
        %v2359 = vmul.f32 %v2358, 0.6931472
        %v2360 = vlog2.pop %v1924
        %v2361 = vmul.f32 %v2360, 0.6931472
        %v2362 = vlog2.pop %v1925
        %v2363 = vmul.f32 %v2362, 0.6931472
        %v2364 = vlog2.pop %v1926
        %v2365 = vmul.f32 %v2364, 0.6931472
        %v2366 = vlog2.pop %v1927
        %v2367 = vmul.f32 %v2366, 0.6931472
        %v2368 = vlog2.pop %v1928
        %v2369 = vmul.f32 %v2368, 0.6931472
        %v2370 = vlog2.pop %v1929
        %v2371 = vmul.f32 %v2370, 0.6931472
        %v2372 = vlog2.pop %v1930
        %v2373 = vmul.f32 %v2372, 0.6931472
        %v2374 = vlog2.pop %v1931
        %v2375 = vmul.f32 %v2374, 0.6931472
        %v2376 = vlog2.pop %v1932
        %v2377 = vmul.f32 %v2376, 0.6931472
        %v2378 = vlog2.pop %v1933
        %v2379 = vmul.f32 %v2378, 0.6931472
        %v2380 = vlog2.pop %v1934
        %v2381 = vmul.f32 %v2380, 0.6931472
        %v2382 = vlog2.pop %v1935
        %v2383 = vmul.f32 %v2382, 0.6931472
        %v2384 = vadd.f32 %v2192, %v2257
        %v2385 = vadd.f32 %v2193, %v2259
        %v2386 = vadd.f32 %v2194, %v2261
        %v2387 = vadd.f32 %v2195, %v2263
        %v2388 = vadd.f32 %v2196, %v2265
        %v2389 = vadd.f32 %v2197, %v2267
        %v2390 = vadd.f32 %v2198, %v2269
        %v2391 = vadd.f32 %v2199, %v2271
        %v2392 = vadd.f32 %v2200, %v2273
        %v2393 = vadd.f32 %v2201, %v2275
        %v2394 = vadd.f32 %v2202, %v2277
        %v2395 = vadd.f32 %v2203, %v2279
        %v2396 = vadd.f32 %v2204, %v2281
        %v2397 = vadd.f32 %v2205, %v2283
        %v2398 = vadd.f32 %v2206, %v2285
        %v2399 = vadd.f32 %v2207, %v2287
        %v2400 = vadd.f32 %v2208, %v2289
        %v2401 = vadd.f32 %v2209, %v2291
        %v2402 = vadd.f32 %v2210, %v2293
        %v2403 = vadd.f32 %v2211, %v2295
        %v2404 = vadd.f32 %v2212, %v2297
        %v2405 = vadd.f32 %v2213, %v2299
        %v2406 = vadd.f32 %v2214, %v2301
        %v2407 = vadd.f32 %v2215, %v2303
        %v2408 = vadd.f32 %v2216, %v2305
        %v2409 = vadd.f32 %v2217, %v2307
        %v2410 = vadd.f32 %v2218, %v2309
        %v2411 = vadd.f32 %v2219, %v2311
        %v2412 = vadd.f32 %v2220, %v2313
        %v2413 = vadd.f32 %v2221, %v2315
        %v2414 = vadd.f32 %v2222, %v2317
        %v2415 = vadd.f32 %v2223, %v2319
        %v2416 = vadd.f32 %v2224, %v2321
        %v2417 = vadd.f32 %v2225, %v2323
        %v2418 = vadd.f32 %v2226, %v2325
        %v2419 = vadd.f32 %v2227, %v2327
        %v2420 = vadd.f32 %v2228, %v2329
        %v2421 = vadd.f32 %v2229, %v2331
        %v2422 = vadd.f32 %v2230, %v2333
        %v2423 = vadd.f32 %v2231, %v2335
        %v2424 = vadd.f32 %v2232, %v2337
        %v2425 = vadd.f32 %v2233, %v2339
        %v2426 = vadd.f32 %v2234, %v2341
        %v2427 = vadd.f32 %v2235, %v2343
        %v2428 = vadd.f32 %v2236, %v2345
        %v2429 = vadd.f32 %v2237, %v2347
        %v2430 = vadd.f32 %v2238, %v2349
        %v2431 = vadd.f32 %v2239, %v2351
        %v2432 = vadd.f32 %v2240, %v2353
        %v2433 = vadd.f32 %v2241, %v2355
        %v2434 = vadd.f32 %v2242, %v2357
        %v2435 = vadd.f32 %v2243, %v2359
        %v2436 = vadd.f32 %v2244, %v2361
        %v2437 = vadd.f32 %v2245, %v2363
        %v2438 = vadd.f32 %v2246, %v2365
        %v2439 = vadd.f32 %v2247, %v2367
        %v2440 = vadd.f32 %v2248, %v2369
        %v2441 = vadd.f32 %v2249, %v2371
        %v2442 = vadd.f32 %v2250, %v2373
        %v2443 = vadd.f32 %v2251, %v2375
        %v2444 = vadd.f32 %v2252, %v2377
        %v2445 = vadd.f32 %v2253, %v2379
        %v2446 = vadd.f32 %v2254, %v2381
        %v2447 = vadd.f32 %v2255, %v2383
        %2449 = vset.pattern.permute.xlu0 0
        %2450 = vperm.xlu0 %2449, %v579
        %v2451 = vpop.permute.xlu0 %2450
        %2454 = vset.pattern.permute.xlu0 0
        %2455 = vperm.xlu0 %2454, %v580
        %v2456 = vpop.permute.xlu0 %2455
        %2459 = vset.pattern.permute.xlu0 0
        %2460 = vperm.xlu0 %2459, %v581
        %v2461 = vpop.permute.xlu0 %2460
        %2464 = vset.pattern.permute.xlu0 0
        %2465 = vperm.xlu0 %2464, %v582
        %v2466 = vpop.permute.xlu0 %2465
        %vm2468 = vcmask 261120
        %v2470 = vsel %vm2468, %v575, 0
        %v2473 = vsel %vm2468, %v576, 0
        %v2476 = vsel %vm2468, %v577, 0
        %v2479 = vsel %vm2468, %v578, 0
        %2481 = vmatprep.subr.mxu0 0.0
        %2482 = vmatpush1.msra.mxu0 0.0
        %2483 = vmatprep.subr.mxu0 0.0
        %2484 = vmatpush1.msra.mxu0 0.0
        %2485 = vmatprep.subr.mxu0 0.0
        %2486 = vmatpush1.msra.mxu0 0.0
        %2487 = vmatprep.subr.mxu0 0.0
        %2488 = vmatpush1.msra.mxu0 0.0
        %2489 = vmatprep.subr.mxu0 0.0
        %2490 = vmatpush1.msra.mxu0 0.0
        %2491 = vmatprep.subr.mxu0 0.0
        %2492 = vmatpush1.msra.mxu0 0.0
        %2493 = vmatprep.subr.mxu0 0.0
        %2494 = vmatpush1.msra.mxu0 0.0
        %2495 = vmatprep.subr.mxu0 0.0
        %2496 = vmatpush1.msra.mxu0 0.0
        %2497 = vmatprep.subr.mxu0 0.0
        %2498 = vmatpush1.msra.mxu0 0.0
        %2499 = vmatprep.subr.mxu0 0.0
        %2500 = vmatpush1.msra.mxu0 0.0
        %2501 = vmatprep.subr.mxu0 0.0
        %2502 = vmatpush1.msra.mxu0 0.0
        %2503 = vmatprep.subr.mxu0 0.0
        %2504 = vmatpush1.msra.mxu0 0.0
        %2505 = vmatprep.subr.mxu0 %v2433
        %2506 = vmatpush1.msra.mxu0 %v2432
        %2507 = vmatprep.subr.mxu0 %v2417
        %2508 = vmatpush1.msra.mxu0 %v2416
        %2509 = vmatprep.subr.mxu0 %v2401
        %2510 = vmatpush1.msra.mxu0 %v2400
        %2511 = vmatprep.subr.mxu0 %v2385
        %2512 = vmatpush1.msra.mxu0 %v2384
        %2513 = vmatprep.subr.mxu0 0.0
        %2514 = vmatpush2.msra.mxu0 0.0
        %2515 = vmatprep.subr.mxu0 0.0
        %2516 = vmatpush2.msra.mxu0 0.0
        %2517 = vmatprep.subr.mxu0 0.0
        %2518 = vmatpush2.msra.mxu0 0.0
        %2519 = vmatprep.subr.mxu0 0.0
        %2520 = vmatpush2.msra.mxu0 0.0
        %2521 = vmatprep.subr.mxu0 0.0
        %2522 = vmatpush2.msra.mxu0 0.0
        %2523 = vmatprep.subr.mxu0 0.0
        %2524 = vmatpush2.msra.mxu0 0.0
        %2525 = vmatprep.subr.mxu0 0.0
        %2526 = vmatpush2.msra.mxu0 0.0
        %2527 = vmatprep.subr.mxu0 0.0
        %2528 = vmatpush2.msra.mxu0 0.0
        %2529 = vmatprep.subr.mxu0 0.0
        %2530 = vmatpush2.msra.mxu0 0.0
        %2531 = vmatprep.subr.mxu0 0.0
        %2532 = vmatpush2.msra.mxu0 0.0
        %2533 = vmatprep.subr.mxu0 0.0
        %2534 = vmatpush2.msra.mxu0 0.0
        %2535 = vmatprep.subr.mxu0 0.0
        %2536 = vmatpush2.msra.mxu0 0.0
        %2537 = vmatprep.subr.mxu0 0.0
        %2538 = vmatpush2.msra.mxu0 0.0
        %2539 = vmatprep.subr.mxu0 0.0
        %2540 = vmatpush2.msra.mxu0 0.0
        %2541 = vmatprep.subr.mxu0 0.0
        %2542 = vmatpush2.msra.mxu0 0.0
        %2543 = vmatprep.subr.mxu0 0.0
        %2544 = vmatpush2.msra.mxu0 0.0
        %2545 = vmatprep.mubr.f32.mxu0 0.0
        %2546 = vmatmul.mubr.f32.gmra.mxu0 %v2470
        %v2547 = vpop.f32.mrf.mxu0
        %v2548 = vadd.f32 %v2451, %v2547
        %v2549 = vpop.f32.mrf.mxu0
        %v2550 = vadd.f32 %v2451, %v2549
        %2551 = vmatprep.mubr.f32.mxu0 0.0
        %2552 = vmatmul.mubr.f32.gmra.mxu0 %v2473
        %v2553 = vpop.f32.mrf.mxu0
        %v2554 = vadd.f32 %v2456, %v2553
        %v2555 = vpop.f32.mrf.mxu0
        %v2556 = vadd.f32 %v2456, %v2555
        %2557 = vmatprep.mubr.f32.mxu0 0.0
        %2558 = vmatmul.mubr.f32.gmra.mxu0 %v2476
        %v2559 = vpop.f32.mrf.mxu0
        %v2560 = vadd.f32 %v2461, %v2559
        %v2561 = vpop.f32.mrf.mxu0
        %v2562 = vadd.f32 %v2461, %v2561
        %2563 = vmatprep.mubr.f32.mxu0 0.0
        %2564 = vmatmul.mubr.f32.gmra.mxu0 %v2479
        %v2565 = vpop.f32.mrf.mxu0
        %v2566 = vadd.f32 %v2466, %v2565
        %v2567 = vpop.f32.mrf.mxu0
        %v2568 = vadd.f32 %v2466, %v2567
        %2569 = vdwg.mxu0
        %2570 = vmatprep.subr.mxu0 0.0
        %2571 = vmatpush1.msra.mxu0 0.0
        %2572 = vmatprep.subr.mxu0 0.0
        %2573 = vmatpush1.msra.mxu0 0.0
        %2574 = vmatprep.subr.mxu0 0.0
        %2575 = vmatpush1.msra.mxu0 0.0
        %2576 = vmatprep.subr.mxu0 0.0
        %2577 = vmatpush1.msra.mxu0 0.0
        %2578 = vmatprep.subr.mxu0 0.0
        %2579 = vmatpush1.msra.mxu0 0.0
        %2580 = vmatprep.subr.mxu0 0.0
        %2581 = vmatpush1.msra.mxu0 0.0
        %2582 = vmatprep.subr.mxu0 0.0
        %2583 = vmatpush1.msra.mxu0 0.0
        %2584 = vmatprep.subr.mxu0 0.0
        %2585 = vmatpush1.msra.mxu0 0.0
        %2586 = vmatprep.subr.mxu0 0.0
        %2587 = vmatpush1.msra.mxu0 0.0
        %2588 = vmatprep.subr.mxu0 0.0
        %2589 = vmatpush1.msra.mxu0 0.0
        %2590 = vmatprep.subr.mxu0 0.0
        %2591 = vmatpush1.msra.mxu0 0.0
        %2592 = vmatprep.subr.mxu0 0.0
        %2593 = vmatpush1.msra.mxu0 0.0
        %2594 = vmatprep.subr.mxu0 %v2435
        %2595 = vmatpush1.msra.mxu0 %v2434
        %2596 = vmatprep.subr.mxu0 %v2419
        %2597 = vmatpush1.msra.mxu0 %v2418
        %2598 = vmatprep.subr.mxu0 %v2403
        %2599 = vmatpush1.msra.mxu0 %v2402
        %2600 = vmatprep.subr.mxu0 %v2387
        %2601 = vmatpush1.msra.mxu0 %v2386
        %2602 = vmatprep.subr.mxu0 0.0
        %2603 = vmatpush2.msra.mxu0 0.0
        %2604 = vmatprep.subr.mxu0 0.0
        %2605 = vmatpush2.msra.mxu0 0.0
        %2606 = vmatprep.subr.mxu0 0.0
        %2607 = vmatpush2.msra.mxu0 0.0
        %2608 = vmatprep.subr.mxu0 0.0
        %2609 = vmatpush2.msra.mxu0 0.0
        %2610 = vmatprep.subr.mxu0 0.0
        %2611 = vmatpush2.msra.mxu0 0.0
        %2612 = vmatprep.subr.mxu0 0.0
        %2613 = vmatpush2.msra.mxu0 0.0
        %2614 = vmatprep.subr.mxu0 0.0
        %2615 = vmatpush2.msra.mxu0 0.0
        %2616 = vmatprep.subr.mxu0 0.0
        %2617 = vmatpush2.msra.mxu0 0.0
        %2618 = vmatprep.subr.mxu0 0.0
        %2619 = vmatpush2.msra.mxu0 0.0
        %2620 = vmatprep.subr.mxu0 0.0
        %2621 = vmatpush2.msra.mxu0 0.0
        %2622 = vmatprep.subr.mxu0 0.0
        %2623 = vmatpush2.msra.mxu0 0.0
        %2624 = vmatprep.subr.mxu0 0.0
        %2625 = vmatpush2.msra.mxu0 0.0
        %2626 = vmatprep.subr.mxu0 0.0
        %2627 = vmatpush2.msra.mxu0 0.0
        %2628 = vmatprep.subr.mxu0 0.0
        %2629 = vmatpush2.msra.mxu0 0.0
        %2630 = vmatprep.subr.mxu0 0.0
        %2631 = vmatpush2.msra.mxu0 0.0
        %2632 = vmatprep.subr.mxu0 0.0
        %2633 = vmatpush2.msra.mxu0 0.0
        %2634 = vmatprep.mubr.f32.mxu0 0.0
        %2635 = vmatmul.mubr.f32.gmra.mxu0 %v2470
        %v2636 = vpop.f32.mrf.mxu0
        %v2637 = vadd.f32 %v2451, %v2636
        %v2638 = vpop.f32.mrf.mxu0
        %v2639 = vadd.f32 %v2451, %v2638
        %2640 = vmatprep.mubr.f32.mxu0 0.0
        %2641 = vmatmul.mubr.f32.gmra.mxu0 %v2473
        %v2642 = vpop.f32.mrf.mxu0
        %v2643 = vadd.f32 %v2456, %v2642
        %v2644 = vpop.f32.mrf.mxu0
        %v2645 = vadd.f32 %v2456, %v2644
        %2646 = vmatprep.mubr.f32.mxu0 0.0
        %2647 = vmatmul.mubr.f32.gmra.mxu0 %v2476
        %v2648 = vpop.f32.mrf.mxu0
        %v2649 = vadd.f32 %v2461, %v2648
        %v2650 = vpop.f32.mrf.mxu0
        %v2651 = vadd.f32 %v2461, %v2650
        %2652 = vmatprep.mubr.f32.mxu0 0.0
        %2653 = vmatmul.mubr.f32.gmra.mxu0 %v2479
        %v2654 = vpop.f32.mrf.mxu0
        %v2655 = vadd.f32 %v2466, %v2654
        %v2656 = vpop.f32.mrf.mxu0
        %v2657 = vadd.f32 %v2466, %v2656
        %2658 = vdwg.mxu0
        %2659 = vmatprep.subr.mxu0 0.0
        %2660 = vmatpush1.msra.mxu0 0.0
        %2661 = vmatprep.subr.mxu0 0.0
        %2662 = vmatpush1.msra.mxu0 0.0
        %2663 = vmatprep.subr.mxu0 0.0
        %2664 = vmatpush1.msra.mxu0 0.0
        %2665 = vmatprep.subr.mxu0 0.0
        %2666 = vmatpush1.msra.mxu0 0.0
        %2667 = vmatprep.subr.mxu0 0.0
        %2668 = vmatpush1.msra.mxu0 0.0
        %2669 = vmatprep.subr.mxu0 0.0
        %2670 = vmatpush1.msra.mxu0 0.0
        %2671 = vmatprep.subr.mxu0 0.0
        %2672 = vmatpush1.msra.mxu0 0.0
        %2673 = vmatprep.subr.mxu0 0.0
        %2674 = vmatpush1.msra.mxu0 0.0
        %2675 = vmatprep.subr.mxu0 0.0
        %2676 = vmatpush1.msra.mxu0 0.0
        %2677 = vmatprep.subr.mxu0 0.0
        %2678 = vmatpush1.msra.mxu0 0.0
        %2679 = vmatprep.subr.mxu0 0.0
        %2680 = vmatpush1.msra.mxu0 0.0
        %2681 = vmatprep.subr.mxu0 0.0
        %2682 = vmatpush1.msra.mxu0 0.0
        %2683 = vmatprep.subr.mxu0 %v2437
        %2684 = vmatpush1.msra.mxu0 %v2436
        %2685 = vmatprep.subr.mxu0 %v2421
        %2686 = vmatpush1.msra.mxu0 %v2420
        %2687 = vmatprep.subr.mxu0 %v2405
        %2688 = vmatpush1.msra.mxu0 %v2404
        %2689 = vmatprep.subr.mxu0 %v2389
        %2690 = vmatpush1.msra.mxu0 %v2388
        %2691 = vmatprep.subr.mxu0 0.0
        %2692 = vmatpush2.msra.mxu0 0.0
        %2693 = vmatprep.subr.mxu0 0.0
        %2694 = vmatpush2.msra.mxu0 0.0
        %2695 = vmatprep.subr.mxu0 0.0
        %2696 = vmatpush2.msra.mxu0 0.0
        %2697 = vmatprep.subr.mxu0 0.0
        %2698 = vmatpush2.msra.mxu0 0.0
        %2699 = vmatprep.subr.mxu0 0.0
        %2700 = vmatpush2.msra.mxu0 0.0
        %2701 = vmatprep.subr.mxu0 0.0
        %2702 = vmatpush2.msra.mxu0 0.0
        %2703 = vmatprep.subr.mxu0 0.0
        %2704 = vmatpush2.msra.mxu0 0.0
        %2705 = vmatprep.subr.mxu0 0.0
        %2706 = vmatpush2.msra.mxu0 0.0
        %2707 = vmatprep.subr.mxu0 0.0
        %2708 = vmatpush2.msra.mxu0 0.0
        %2709 = vmatprep.subr.mxu0 0.0
        %2710 = vmatpush2.msra.mxu0 0.0
        %2711 = vmatprep.subr.mxu0 0.0
        %2712 = vmatpush2.msra.mxu0 0.0
        %2713 = vmatprep.subr.mxu0 0.0
        %2714 = vmatpush2.msra.mxu0 0.0
        %2715 = vmatprep.subr.mxu0 0.0
        %2716 = vmatpush2.msra.mxu0 0.0
        %2717 = vmatprep.subr.mxu0 0.0
        %2718 = vmatpush2.msra.mxu0 0.0
        %2719 = vmatprep.subr.mxu0 0.0
        %2720 = vmatpush2.msra.mxu0 0.0
        %2721 = vmatprep.subr.mxu0 0.0
        %2722 = vmatpush2.msra.mxu0 0.0
        %2723 = vmatprep.mubr.f32.mxu0 0.0
        %2724 = vmatmul.mubr.f32.gmra.mxu0 %v2470
        %v2725 = vpop.f32.mrf.mxu0
        %v2726 = vadd.f32 %v2451, %v2725
        %v2727 = vpop.f32.mrf.mxu0
        %v2728 = vadd.f32 %v2451, %v2727
        %2729 = vmatprep.mubr.f32.mxu0 0.0
        %2730 = vmatmul.mubr.f32.gmra.mxu0 %v2473
        %v2731 = vpop.f32.mrf.mxu0
        %v2732 = vadd.f32 %v2456, %v2731
        %v2733 = vpop.f32.mrf.mxu0
        %v2734 = vadd.f32 %v2456, %v2733
        %2735 = vmatprep.mubr.f32.mxu0 0.0
        %2736 = vmatmul.mubr.f32.gmra.mxu0 %v2476
        %v2737 = vpop.f32.mrf.mxu0
        %v2738 = vadd.f32 %v2461, %v2737
        %v2739 = vpop.f32.mrf.mxu0
        %v2740 = vadd.f32 %v2461, %v2739
        %2741 = vmatprep.mubr.f32.mxu0 0.0
        %2742 = vmatmul.mubr.f32.gmra.mxu0 %v2479
        %v2743 = vpop.f32.mrf.mxu0
        %v2744 = vadd.f32 %v2466, %v2743
        %v2745 = vpop.f32.mrf.mxu0
        %v2746 = vadd.f32 %v2466, %v2745
        %2747 = vdwg.mxu0
        %2748 = vmatprep.subr.mxu0 0.0
        %2749 = vmatpush1.msra.mxu0 0.0
        %2750 = vmatprep.subr.mxu0 0.0
        %2751 = vmatpush1.msra.mxu0 0.0
        %2752 = vmatprep.subr.mxu0 0.0
        %2753 = vmatpush1.msra.mxu0 0.0
        %2754 = vmatprep.subr.mxu0 0.0
        %2755 = vmatpush1.msra.mxu0 0.0
        %2756 = vmatprep.subr.mxu0 0.0
        %2757 = vmatpush1.msra.mxu0 0.0
        %2758 = vmatprep.subr.mxu0 0.0
        %2759 = vmatpush1.msra.mxu0 0.0
        %2760 = vmatprep.subr.mxu0 0.0
        %2761 = vmatpush1.msra.mxu0 0.0
        %2762 = vmatprep.subr.mxu0 0.0
        %2763 = vmatpush1.msra.mxu0 0.0
        %2764 = vmatprep.subr.mxu0 0.0
        %2765 = vmatpush1.msra.mxu0 0.0
        %2766 = vmatprep.subr.mxu0 0.0
        %2767 = vmatpush1.msra.mxu0 0.0
        %2768 = vmatprep.subr.mxu0 0.0
        %2769 = vmatpush1.msra.mxu0 0.0
        %2770 = vmatprep.subr.mxu0 0.0
        %2771 = vmatpush1.msra.mxu0 0.0
        %2772 = vmatprep.subr.mxu0 %v2439
        %2773 = vmatpush1.msra.mxu0 %v2438
        %2774 = vmatprep.subr.mxu0 %v2423
        %2775 = vmatpush1.msra.mxu0 %v2422
        %2776 = vmatprep.subr.mxu0 %v2407
        %2777 = vmatpush1.msra.mxu0 %v2406
        %2778 = vmatprep.subr.mxu0 %v2391
        %2779 = vmatpush1.msra.mxu0 %v2390
        %2780 = vmatprep.subr.mxu0 0.0
        %2781 = vmatpush2.msra.mxu0 0.0
        %2782 = vmatprep.subr.mxu0 0.0
        %2783 = vmatpush2.msra.mxu0 0.0
        %2784 = vmatprep.subr.mxu0 0.0
        %2785 = vmatpush2.msra.mxu0 0.0
        %2786 = vmatprep.subr.mxu0 0.0
        %2787 = vmatpush2.msra.mxu0 0.0
        %2788 = vmatprep.subr.mxu0 0.0
        %2789 = vmatpush2.msra.mxu0 0.0
        %2790 = vmatprep.subr.mxu0 0.0
        %2791 = vmatpush2.msra.mxu0 0.0
        %2792 = vmatprep.subr.mxu0 0.0
        %2793 = vmatpush2.msra.mxu0 0.0
        %2794 = vmatprep.subr.mxu0 0.0
        %2795 = vmatpush2.msra.mxu0 0.0
        %2796 = vmatprep.subr.mxu0 0.0
        %2797 = vmatpush2.msra.mxu0 0.0
        %2798 = vmatprep.subr.mxu0 0.0
        %2799 = vmatpush2.msra.mxu0 0.0
        %2800 = vmatprep.subr.mxu0 0.0
        %2801 = vmatpush2.msra.mxu0 0.0
        %2802 = vmatprep.subr.mxu0 0.0
        %2803 = vmatpush2.msra.mxu0 0.0
        %2804 = vmatprep.subr.mxu0 0.0
        %2805 = vmatpush2.msra.mxu0 0.0
        %2806 = vmatprep.subr.mxu0 0.0
        %2807 = vmatpush2.msra.mxu0 0.0
        %2808 = vmatprep.subr.mxu0 0.0
        %2809 = vmatpush2.msra.mxu0 0.0
        %2810 = vmatprep.subr.mxu0 0.0
        %2811 = vmatpush2.msra.mxu0 0.0
        %2812 = vmatprep.mubr.f32.mxu0 0.0
        %2813 = vmatmul.mubr.f32.gmra.mxu0 %v2470
        %v2814 = vpop.f32.mrf.mxu0
        %v2815 = vadd.f32 %v2451, %v2814
        %v2816 = vpop.f32.mrf.mxu0
        %v2817 = vadd.f32 %v2451, %v2816
        %2818 = vmatprep.mubr.f32.mxu0 0.0
        %2819 = vmatmul.mubr.f32.gmra.mxu0 %v2473
        %v2820 = vpop.f32.mrf.mxu0
        %v2821 = vadd.f32 %v2456, %v2820
        %v2822 = vpop.f32.mrf.mxu0
        %v2823 = vadd.f32 %v2456, %v2822
        %2824 = vmatprep.mubr.f32.mxu0 0.0
        %2825 = vmatmul.mubr.f32.gmra.mxu0 %v2476
        %v2826 = vpop.f32.mrf.mxu0
        %v2827 = vadd.f32 %v2461, %v2826
        %v2828 = vpop.f32.mrf.mxu0
        %v2829 = vadd.f32 %v2461, %v2828
        %2830 = vmatprep.mubr.f32.mxu0 0.0
        %2831 = vmatmul.mubr.f32.gmra.mxu0 %v2479
        %v2832 = vpop.f32.mrf.mxu0
        %v2833 = vadd.f32 %v2466, %v2832
        %v2834 = vpop.f32.mrf.mxu0
        %v2835 = vadd.f32 %v2466, %v2834
        %2836 = vdwg.mxu0
        %2837 = vmatprep.subr.mxu0 0.0
        %2838 = vmatpush1.msra.mxu0 0.0
        %2839 = vmatprep.subr.mxu0 0.0
        %2840 = vmatpush1.msra.mxu0 0.0
        %2841 = vmatprep.subr.mxu0 0.0
        %2842 = vmatpush1.msra.mxu0 0.0
        %2843 = vmatprep.subr.mxu0 0.0
        %2844 = vmatpush1.msra.mxu0 0.0
        %2845 = vmatprep.subr.mxu0 0.0
        %2846 = vmatpush1.msra.mxu0 0.0
        %2847 = vmatprep.subr.mxu0 0.0
        %2848 = vmatpush1.msra.mxu0 0.0
        %2849 = vmatprep.subr.mxu0 0.0
        %2850 = vmatpush1.msra.mxu0 0.0
        %2851 = vmatprep.subr.mxu0 0.0
        %2852 = vmatpush1.msra.mxu0 0.0
        %2853 = vmatprep.subr.mxu0 0.0
        %2854 = vmatpush1.msra.mxu0 0.0
        %2855 = vmatprep.subr.mxu0 0.0
        %2856 = vmatpush1.msra.mxu0 0.0
        %2857 = vmatprep.subr.mxu0 0.0
        %2858 = vmatpush1.msra.mxu0 0.0
        %2859 = vmatprep.subr.mxu0 0.0
        %2860 = vmatpush1.msra.mxu0 0.0
        %2861 = vmatprep.subr.mxu0 %v2441
        %2862 = vmatpush1.msra.mxu0 %v2440
        %2863 = vmatprep.subr.mxu0 %v2425
        %2864 = vmatpush1.msra.mxu0 %v2424
        %2865 = vmatprep.subr.mxu0 %v2409
        %2866 = vmatpush1.msra.mxu0 %v2408
        %2867 = vmatprep.subr.mxu0 %v2393
        %2868 = vmatpush1.msra.mxu0 %v2392
        %2869 = vmatprep.subr.mxu0 0.0
        %2870 = vmatpush2.msra.mxu0 0.0
        %2871 = vmatprep.subr.mxu0 0.0
        %2872 = vmatpush2.msra.mxu0 0.0
        %2873 = vmatprep.subr.mxu0 0.0
        %2874 = vmatpush2.msra.mxu0 0.0
        %2875 = vmatprep.subr.mxu0 0.0
        %2876 = vmatpush2.msra.mxu0 0.0
        %2877 = vmatprep.subr.mxu0 0.0
        %2878 = vmatpush2.msra.mxu0 0.0
        %2879 = vmatprep.subr.mxu0 0.0
        %2880 = vmatpush2.msra.mxu0 0.0
        %2881 = vmatprep.subr.mxu0 0.0
        %2882 = vmatpush2.msra.mxu0 0.0
        %2883 = vmatprep.subr.mxu0 0.0
        %2884 = vmatpush2.msra.mxu0 0.0
        %2885 = vmatprep.subr.mxu0 0.0
        %2886 = vmatpush2.msra.mxu0 0.0
        %2887 = vmatprep.subr.mxu0 0.0
        %2888 = vmatpush2.msra.mxu0 0.0
        %2889 = vmatprep.subr.mxu0 0.0
        %2890 = vmatpush2.msra.mxu0 0.0
        %2891 = vmatprep.subr.mxu0 0.0
        %2892 = vmatpush2.msra.mxu0 0.0
        %2893 = vmatprep.subr.mxu0 0.0
        %2894 = vmatpush2.msra.mxu0 0.0
        %2895 = vmatprep.subr.mxu0 0.0
        %2896 = vmatpush2.msra.mxu0 0.0
        %2897 = vmatprep.subr.mxu0 0.0
        %2898 = vmatpush2.msra.mxu0 0.0
        %2899 = vmatprep.subr.mxu0 0.0
        %2900 = vmatpush2.msra.mxu0 0.0
        %2901 = vmatprep.mubr.f32.mxu0 0.0
        %2902 = vmatmul.mubr.f32.gmra.mxu0 %v2470
        %v2903 = vpop.f32.mrf.mxu0
        %v2904 = vadd.f32 %v2451, %v2903
        %v2905 = vpop.f32.mrf.mxu0
        %v2906 = vadd.f32 %v2451, %v2905
        %2907 = vmatprep.mubr.f32.mxu0 0.0
        %2908 = vmatmul.mubr.f32.gmra.mxu0 %v2473
        %v2909 = vpop.f32.mrf.mxu0
        %v2910 = vadd.f32 %v2456, %v2909
        %v2911 = vpop.f32.mrf.mxu0
        %v2912 = vadd.f32 %v2456, %v2911
        %2913 = vmatprep.mubr.f32.mxu0 0.0
        %2914 = vmatmul.mubr.f32.gmra.mxu0 %v2476
        %v2915 = vpop.f32.mrf.mxu0
        %v2916 = vadd.f32 %v2461, %v2915
        %v2917 = vpop.f32.mrf.mxu0
        %v2918 = vadd.f32 %v2461, %v2917
        %2919 = vmatprep.mubr.f32.mxu0 0.0
        %2920 = vmatmul.mubr.f32.gmra.mxu0 %v2479
        %v2921 = vpop.f32.mrf.mxu0
        %v2922 = vadd.f32 %v2466, %v2921
        %v2923 = vpop.f32.mrf.mxu0
        %v2924 = vadd.f32 %v2466, %v2923
        %2925 = vdwg.mxu0
        %2926 = vmatprep.subr.mxu0 0.0
        %2927 = vmatpush1.msra.mxu0 0.0
        %2928 = vmatprep.subr.mxu0 0.0
        %2929 = vmatpush1.msra.mxu0 0.0
        %2930 = vmatprep.subr.mxu0 0.0
        %2931 = vmatpush1.msra.mxu0 0.0
        %2932 = vmatprep.subr.mxu0 0.0
        %2933 = vmatpush1.msra.mxu0 0.0
        %2934 = vmatprep.subr.mxu0 0.0
        %2935 = vmatpush1.msra.mxu0 0.0
        %2936 = vmatprep.subr.mxu0 0.0
        %2937 = vmatpush1.msra.mxu0 0.0
        %2938 = vmatprep.subr.mxu0 0.0
        %2939 = vmatpush1.msra.mxu0 0.0
        %2940 = vmatprep.subr.mxu0 0.0
        %2941 = vmatpush1.msra.mxu0 0.0
        %2942 = vmatprep.subr.mxu0 0.0
        %2943 = vmatpush1.msra.mxu0 0.0
        %2944 = vmatprep.subr.mxu0 0.0
        %2945 = vmatpush1.msra.mxu0 0.0
        %2946 = vmatprep.subr.mxu0 0.0
        %2947 = vmatpush1.msra.mxu0 0.0
        %2948 = vmatprep.subr.mxu0 0.0
        %2949 = vmatpush1.msra.mxu0 0.0
        %2950 = vmatprep.subr.mxu0 %v2443
        %2951 = vmatpush1.msra.mxu0 %v2442
        %2952 = vmatprep.subr.mxu0 %v2427
        %2953 = vmatpush1.msra.mxu0 %v2426
        %2954 = vmatprep.subr.mxu0 %v2411
        %2955 = vmatpush1.msra.mxu0 %v2410
        %2956 = vmatprep.subr.mxu0 %v2395
        %2957 = vmatpush1.msra.mxu0 %v2394
        %2958 = vmatprep.subr.mxu0 0.0
        %2959 = vmatpush2.msra.mxu0 0.0
        %2960 = vmatprep.subr.mxu0 0.0
        %2961 = vmatpush2.msra.mxu0 0.0
        %2962 = vmatprep.subr.mxu0 0.0
        %2963 = vmatpush2.msra.mxu0 0.0
        %2964 = vmatprep.subr.mxu0 0.0
        %2965 = vmatpush2.msra.mxu0 0.0
        %2966 = vmatprep.subr.mxu0 0.0
        %2967 = vmatpush2.msra.mxu0 0.0
        %2968 = vmatprep.subr.mxu0 0.0
        %2969 = vmatpush2.msra.mxu0 0.0
        %2970 = vmatprep.subr.mxu0 0.0
        %2971 = vmatpush2.msra.mxu0 0.0
        %2972 = vmatprep.subr.mxu0 0.0
        %2973 = vmatpush2.msra.mxu0 0.0
        %2974 = vmatprep.subr.mxu0 0.0
        %2975 = vmatpush2.msra.mxu0 0.0
        %2976 = vmatprep.subr.mxu0 0.0
        %2977 = vmatpush2.msra.mxu0 0.0
        %2978 = vmatprep.subr.mxu0 0.0
        %2979 = vmatpush2.msra.mxu0 0.0
        %2980 = vmatprep.subr.mxu0 0.0
        %2981 = vmatpush2.msra.mxu0 0.0
        %2982 = vmatprep.subr.mxu0 0.0
        %2983 = vmatpush2.msra.mxu0 0.0
        %2984 = vmatprep.subr.mxu0 0.0
        %2985 = vmatpush2.msra.mxu0 0.0
        %2986 = vmatprep.subr.mxu0 0.0
        %2987 = vmatpush2.msra.mxu0 0.0
        %2988 = vmatprep.subr.mxu0 0.0
        %2989 = vmatpush2.msra.mxu0 0.0
        %2990 = vmatprep.mubr.f32.mxu0 0.0
        %2991 = vmatmul.mubr.f32.gmra.mxu0 %v2470
        %v2992 = vpop.f32.mrf.mxu0
        %v2993 = vadd.f32 %v2451, %v2992
        %v2994 = vpop.f32.mrf.mxu0
        %v2995 = vadd.f32 %v2451, %v2994
        %2996 = vmatprep.mubr.f32.mxu0 0.0
        %2997 = vmatmul.mubr.f32.gmra.mxu0 %v2473
        %v2998 = vpop.f32.mrf.mxu0
        %v2999 = vadd.f32 %v2456, %v2998
        %v3000 = vpop.f32.mrf.mxu0
        %v3001 = vadd.f32 %v2456, %v3000
        %3002 = vmatprep.mubr.f32.mxu0 0.0
        %3003 = vmatmul.mubr.f32.gmra.mxu0 %v2476
        %v3004 = vpop.f32.mrf.mxu0
        %v3005 = vadd.f32 %v2461, %v3004
        %v3006 = vpop.f32.mrf.mxu0
        %v3007 = vadd.f32 %v2461, %v3006
        %3008 = vmatprep.mubr.f32.mxu0 0.0
        %3009 = vmatmul.mubr.f32.gmra.mxu0 %v2479
        %v3010 = vpop.f32.mrf.mxu0
        %v3011 = vadd.f32 %v2466, %v3010
        %v3012 = vpop.f32.mrf.mxu0
        %v3013 = vadd.f32 %v2466, %v3012
        %3014 = vdwg.mxu0
        %3015 = vmatprep.subr.mxu0 0.0
        %3016 = vmatpush1.msra.mxu0 0.0
        %3017 = vmatprep.subr.mxu0 0.0
        %3018 = vmatpush1.msra.mxu0 0.0
        %3019 = vmatprep.subr.mxu0 0.0
        %3020 = vmatpush1.msra.mxu0 0.0
        %3021 = vmatprep.subr.mxu0 0.0
        %3022 = vmatpush1.msra.mxu0 0.0
        %3023 = vmatprep.subr.mxu0 0.0
        %3024 = vmatpush1.msra.mxu0 0.0
        %3025 = vmatprep.subr.mxu0 0.0
        %3026 = vmatpush1.msra.mxu0 0.0
        %3027 = vmatprep.subr.mxu0 0.0
        %3028 = vmatpush1.msra.mxu0 0.0
        %3029 = vmatprep.subr.mxu0 0.0
        %3030 = vmatpush1.msra.mxu0 0.0
        %3031 = vmatprep.subr.mxu0 0.0
        %3032 = vmatpush1.msra.mxu0 0.0
        %3033 = vmatprep.subr.mxu0 0.0
        %3034 = vmatpush1.msra.mxu0 0.0
        %3035 = vmatprep.subr.mxu0 0.0
        %3036 = vmatpush1.msra.mxu0 0.0
        %3037 = vmatprep.subr.mxu0 0.0
        %3038 = vmatpush1.msra.mxu0 0.0
        %3039 = vmatprep.subr.mxu0 %v2445
        %3040 = vmatpush1.msra.mxu0 %v2444
        %3041 = vmatprep.subr.mxu0 %v2429
        %3042 = vmatpush1.msra.mxu0 %v2428
        %3043 = vmatprep.subr.mxu0 %v2413
        %3044 = vmatpush1.msra.mxu0 %v2412
        %3045 = vmatprep.subr.mxu0 %v2397
        %3046 = vmatpush1.msra.mxu0 %v2396
        %3047 = vmatprep.subr.mxu0 0.0
        %3048 = vmatpush2.msra.mxu0 0.0
        %3049 = vmatprep.subr.mxu0 0.0
        %3050 = vmatpush2.msra.mxu0 0.0
        %3051 = vmatprep.subr.mxu0 0.0
        %3052 = vmatpush2.msra.mxu0 0.0
        %3053 = vmatprep.subr.mxu0 0.0
        %3054 = vmatpush2.msra.mxu0 0.0
        %3055 = vmatprep.subr.mxu0 0.0
        %3056 = vmatpush2.msra.mxu0 0.0
        %3057 = vmatprep.subr.mxu0 0.0
        %3058 = vmatpush2.msra.mxu0 0.0
        %3059 = vmatprep.subr.mxu0 0.0
        %3060 = vmatpush2.msra.mxu0 0.0
        %3061 = vmatprep.subr.mxu0 0.0
        %3062 = vmatpush2.msra.mxu0 0.0
        %3063 = vmatprep.subr.mxu0 0.0
        %3064 = vmatpush2.msra.mxu0 0.0
        %3065 = vmatprep.subr.mxu0 0.0
        %3066 = vmatpush2.msra.mxu0 0.0
        %3067 = vmatprep.subr.mxu0 0.0
        %3068 = vmatpush2.msra.mxu0 0.0
        %3069 = vmatprep.subr.mxu0 0.0
        %3070 = vmatpush2.msra.mxu0 0.0
        %3071 = vmatprep.subr.mxu0 0.0
        %3072 = vmatpush2.msra.mxu0 0.0
        %3073 = vmatprep.subr.mxu0 0.0
        %3074 = vmatpush2.msra.mxu0 0.0
        %3075 = vmatprep.subr.mxu0 0.0
        %3076 = vmatpush2.msra.mxu0 0.0
        %3077 = vmatprep.subr.mxu0 0.0
        %3078 = vmatpush2.msra.mxu0 0.0
        %3079 = vmatprep.mubr.f32.mxu0 0.0
        %3080 = vmatmul.mubr.f32.gmra.mxu0 %v2470
        %v3081 = vpop.f32.mrf.mxu0
        %v3082 = vadd.f32 %v2451, %v3081
        %v3083 = vpop.f32.mrf.mxu0
        %v3084 = vadd.f32 %v2451, %v3083
        %3085 = vmatprep.mubr.f32.mxu0 0.0
        %3086 = vmatmul.mubr.f32.gmra.mxu0 %v2473
        %v3087 = vpop.f32.mrf.mxu0
        %v3088 = vadd.f32 %v2456, %v3087
        %v3089 = vpop.f32.mrf.mxu0
        %v3090 = vadd.f32 %v2456, %v3089
        %3091 = vmatprep.mubr.f32.mxu0 0.0
        %3092 = vmatmul.mubr.f32.gmra.mxu0 %v2476
        %v3093 = vpop.f32.mrf.mxu0
        %v3094 = vadd.f32 %v2461, %v3093
        %v3095 = vpop.f32.mrf.mxu0
        %v3096 = vadd.f32 %v2461, %v3095
        %3097 = vmatprep.mubr.f32.mxu0 0.0
        %3098 = vmatmul.mubr.f32.gmra.mxu0 %v2479
        %v3099 = vpop.f32.mrf.mxu0
        %v3100 = vadd.f32 %v2466, %v3099
        %v3101 = vpop.f32.mrf.mxu0
        %v3102 = vadd.f32 %v2466, %v3101
        %3103 = vdwg.mxu0
        %3104 = vmatprep.subr.mxu0 0.0
        %3105 = vmatpush1.msra.mxu0 0.0
        %3106 = vmatprep.subr.mxu0 0.0
        %3107 = vmatpush1.msra.mxu0 0.0
        %3108 = vmatprep.subr.mxu0 0.0
        %3109 = vmatpush1.msra.mxu0 0.0
        %3110 = vmatprep.subr.mxu0 0.0
        %3111 = vmatpush1.msra.mxu0 0.0
        %3112 = vmatprep.subr.mxu0 0.0
        %3113 = vmatpush1.msra.mxu0 0.0
        %3114 = vmatprep.subr.mxu0 0.0
        %3115 = vmatpush1.msra.mxu0 0.0
        %3116 = vmatprep.subr.mxu0 0.0
        %3117 = vmatpush1.msra.mxu0 0.0
        %3118 = vmatprep.subr.mxu0 0.0
        %3119 = vmatpush1.msra.mxu0 0.0
        %3120 = vmatprep.subr.mxu0 0.0
        %3121 = vmatpush1.msra.mxu0 0.0
        %3122 = vmatprep.subr.mxu0 0.0
        %3123 = vmatpush1.msra.mxu0 0.0
        %3124 = vmatprep.subr.mxu0 0.0
        %3125 = vmatpush1.msra.mxu0 0.0
        %3126 = vmatprep.subr.mxu0 0.0
        %3127 = vmatpush1.msra.mxu0 0.0
        %3128 = vmatprep.subr.mxu0 %v2447
        %3129 = vmatpush1.msra.mxu0 %v2446
        %3130 = vmatprep.subr.mxu0 %v2431
        %3131 = vmatpush1.msra.mxu0 %v2430
        %3132 = vmatprep.subr.mxu0 %v2415
        %3133 = vmatpush1.msra.mxu0 %v2414
        %3134 = vmatprep.subr.mxu0 %v2399
        %3135 = vmatpush1.msra.mxu0 %v2398
        %3136 = vmatprep.subr.mxu0 0.0
        %3137 = vmatpush2.msra.mxu0 0.0
        %3138 = vmatprep.subr.mxu0 0.0
        %3139 = vmatpush2.msra.mxu0 0.0
        %3140 = vmatprep.subr.mxu0 0.0
        %3141 = vmatpush2.msra.mxu0 0.0
        %3142 = vmatprep.subr.mxu0 0.0
        %3143 = vmatpush2.msra.mxu0 0.0
        %3144 = vmatprep.subr.mxu0 0.0
        %3145 = vmatpush2.msra.mxu0 0.0
        %3146 = vmatprep.subr.mxu0 0.0
        %3147 = vmatpush2.msra.mxu0 0.0
        %3148 = vmatprep.subr.mxu0 0.0
        %3149 = vmatpush2.msra.mxu0 0.0
        %3150 = vmatprep.subr.mxu0 0.0
        %3151 = vmatpush2.msra.mxu0 0.0
        %3152 = vmatprep.subr.mxu0 0.0
        %3153 = vmatpush2.msra.mxu0 0.0
        %3154 = vmatprep.subr.mxu0 0.0
        %3155 = vmatpush2.msra.mxu0 0.0
        %3156 = vmatprep.subr.mxu0 0.0
        %3157 = vmatpush2.msra.mxu0 0.0
        %3158 = vmatprep.subr.mxu0 0.0
        %3159 = vmatpush2.msra.mxu0 0.0
        %3160 = vmatprep.subr.mxu0 0.0
        %3161 = vmatpush2.msra.mxu0 0.0
        %3162 = vmatprep.subr.mxu0 0.0
        %3163 = vmatpush2.msra.mxu0 0.0
        %3164 = vmatprep.subr.mxu0 0.0
        %3165 = vmatpush2.msra.mxu0 0.0
        %3166 = vmatprep.subr.mxu0 0.0
        %3167 = vmatpush2.msra.mxu0 0.0
        %3168 = vmatprep.mubr.f32.mxu0 0.0
        %3169 = vmatmul.mubr.f32.gmra.mxu0 %v2470
        %v3170 = vpop.f32.mrf.mxu0
        %v3171 = vadd.f32 %v2451, %v3170
        %v3172 = vpop.f32.mrf.mxu0
        %v3173 = vadd.f32 %v2451, %v3172
        %3174 = vmatprep.mubr.f32.mxu0 0.0
        %3175 = vmatmul.mubr.f32.gmra.mxu0 %v2473
        %v3176 = vpop.f32.mrf.mxu0
        %v3177 = vadd.f32 %v2456, %v3176
        %v3178 = vpop.f32.mrf.mxu0
        %v3179 = vadd.f32 %v2456, %v3178
        %3180 = vmatprep.mubr.f32.mxu0 0.0
        %3181 = vmatmul.mubr.f32.gmra.mxu0 %v2476
        %v3182 = vpop.f32.mrf.mxu0
        %v3183 = vadd.f32 %v2461, %v3182
        %v3184 = vpop.f32.mrf.mxu0
        %v3185 = vadd.f32 %v2461, %v3184
        %3186 = vmatprep.mubr.f32.mxu0 0.0
        %3187 = vmatmul.mubr.f32.gmra.mxu0 %v2479
        %v3188 = vpop.f32.mrf.mxu0
        %v3189 = vadd.f32 %v2466, %v3188
        %v3190 = vpop.f32.mrf.mxu0
        %v3191 = vadd.f32 %v2466, %v3190
        %3192 = vdwg.mxu0
        %v3193 = vand.u32 2147483647, %v2548
        %v3194 = vand.u32 2147483647, %v2550
        %v3195 = vand.u32 2147483647, %v2637
        %v3196 = vand.u32 2147483647, %v2639
        %v3197 = vand.u32 2147483647, %v2726
        %v3198 = vand.u32 2147483647, %v2728
        %v3199 = vand.u32 2147483647, %v2815
        %v3200 = vand.u32 2147483647, %v2817
        %v3201 = vand.u32 2147483647, %v2904
        %v3202 = vand.u32 2147483647, %v2906
        %v3203 = vand.u32 2147483647, %v2993
        %v3204 = vand.u32 2147483647, %v2995
        %v3205 = vand.u32 2147483647, %v3082
        %v3206 = vand.u32 2147483647, %v3084
        %v3207 = vand.u32 2147483647, %v3171
        %v3208 = vand.u32 2147483647, %v3173
        %v3209 = vand.u32 2147483647, %v2554
        %v3210 = vand.u32 2147483647, %v2556
        %v3211 = vand.u32 2147483647, %v2643
        %v3212 = vand.u32 2147483647, %v2645
        %v3213 = vand.u32 2147483647, %v2732
        %v3214 = vand.u32 2147483647, %v2734
        %v3215 = vand.u32 2147483647, %v2821
        %v3216 = vand.u32 2147483647, %v2823
        %v3217 = vand.u32 2147483647, %v2910
        %v3218 = vand.u32 2147483647, %v2912
        %v3219 = vand.u32 2147483647, %v2999
        %v3220 = vand.u32 2147483647, %v3001
        %v3221 = vand.u32 2147483647, %v3088
        %v3222 = vand.u32 2147483647, %v3090
        %v3223 = vand.u32 2147483647, %v3177
        %v3224 = vand.u32 2147483647, %v3179
        %v3225 = vand.u32 2147483647, %v2560
        %v3226 = vand.u32 2147483647, %v2562
        %v3227 = vand.u32 2147483647, %v2649
        %v3228 = vand.u32 2147483647, %v2651
        %v3229 = vand.u32 2147483647, %v2738
        %v3230 = vand.u32 2147483647, %v2740
        %v3231 = vand.u32 2147483647, %v2827
        %v3232 = vand.u32 2147483647, %v2829
        %v3233 = vand.u32 2147483647, %v2916
        %v3234 = vand.u32 2147483647, %v2918
        %v3235 = vand.u32 2147483647, %v3005
        %v3236 = vand.u32 2147483647, %v3007
        %v3237 = vand.u32 2147483647, %v3094
        %v3238 = vand.u32 2147483647, %v3096
        %v3239 = vand.u32 2147483647, %v3183
        %v3240 = vand.u32 2147483647, %v3185
        %v3241 = vand.u32 2147483647, %v2566
        %v3242 = vand.u32 2147483647, %v2568
        %v3243 = vand.u32 2147483647, %v2655
        %v3244 = vand.u32 2147483647, %v2657
        %v3245 = vand.u32 2147483647, %v2744
        %v3246 = vand.u32 2147483647, %v2746
        %v3247 = vand.u32 2147483647, %v2833
        %v3248 = vand.u32 2147483647, %v2835
        %v3249 = vand.u32 2147483647, %v2922
        %v3250 = vand.u32 2147483647, %v2924
        %v3251 = vand.u32 2147483647, %v3011
        %v3252 = vand.u32 2147483647, %v3013
        %v3253 = vand.u32 2147483647, %v3100
        %v3254 = vand.u32 2147483647, %v3102
        %v3255 = vand.u32 2147483647, %v3189
        %v3256 = vand.u32 2147483647, %v3191
        %v3257 = vsub.f32 0.0, %v3193
        %v3258 = vsub.f32 0.0, %v3194
        %v3259 = vsub.f32 0.0, %v3195
        %v3260 = vsub.f32 0.0, %v3196
        %v3261 = vsub.f32 0.0, %v3197
        %v3262 = vsub.f32 0.0, %v3198
        %v3263 = vsub.f32 0.0, %v3199
        %v3264 = vsub.f32 0.0, %v3200
        %v3265 = vsub.f32 0.0, %v3201
        %v3266 = vsub.f32 0.0, %v3202
        %v3267 = vsub.f32 0.0, %v3203
        %v3268 = vsub.f32 0.0, %v3204
        %v3269 = vsub.f32 0.0, %v3205
        %v3270 = vsub.f32 0.0, %v3206
        %v3271 = vsub.f32 0.0, %v3207
        %v3272 = vsub.f32 0.0, %v3208
        %v3273 = vsub.f32 0.0, %v3209
        %v3274 = vsub.f32 0.0, %v3210
        %v3275 = vsub.f32 0.0, %v3211
        %v3276 = vsub.f32 0.0, %v3212
        %v3277 = vsub.f32 0.0, %v3213
        %v3278 = vsub.f32 0.0, %v3214
        %v3279 = vsub.f32 0.0, %v3215
        %v3280 = vsub.f32 0.0, %v3216
        %v3281 = vsub.f32 0.0, %v3217
        %v3282 = vsub.f32 0.0, %v3218
        %v3283 = vsub.f32 0.0, %v3219
        %v3284 = vsub.f32 0.0, %v3220
        %v3285 = vsub.f32 0.0, %v3221
        %v3286 = vsub.f32 0.0, %v3222
        %v3287 = vsub.f32 0.0, %v3223
        %v3288 = vsub.f32 0.0, %v3224
        %v3289 = vsub.f32 0.0, %v3225
        %v3290 = vsub.f32 0.0, %v3226
        %v3291 = vsub.f32 0.0, %v3227
        %v3292 = vsub.f32 0.0, %v3228
        %v3293 = vsub.f32 0.0, %v3229
        %v3294 = vsub.f32 0.0, %v3230
        %v3295 = vsub.f32 0.0, %v3231
        %v3296 = vsub.f32 0.0, %v3232
        %v3297 = vsub.f32 0.0, %v3233
        %v3298 = vsub.f32 0.0, %v3234
        %v3299 = vsub.f32 0.0, %v3235
        %v3300 = vsub.f32 0.0, %v3236
        %v3301 = vsub.f32 0.0, %v3237
        %v3302 = vsub.f32 0.0, %v3238
        %v3303 = vsub.f32 0.0, %v3239
        %v3304 = vsub.f32 0.0, %v3240
        %v3305 = vsub.f32 0.0, %v3241
        %v3306 = vsub.f32 0.0, %v3242
        %v3307 = vsub.f32 0.0, %v3243
        %v3308 = vsub.f32 0.0, %v3244
        %v3309 = vsub.f32 0.0, %v3245
        %v3310 = vsub.f32 0.0, %v3246
        %v3311 = vsub.f32 0.0, %v3247
        %v3312 = vsub.f32 0.0, %v3248
        %v3313 = vsub.f32 0.0, %v3249
        %v3314 = vsub.f32 0.0, %v3250
        %v3315 = vsub.f32 0.0, %v3251
        %v3316 = vsub.f32 0.0, %v3252
        %v3317 = vsub.f32 0.0, %v3253
        %v3318 = vsub.f32 0.0, %v3254
        %v3319 = vsub.f32 0.0, %v3255
        %v3320 = vsub.f32 0.0, %v3256
        %v3321 = vmul.f32 %v3257, 1.442695
        %v3322 = vpow.pop %v3321
        %v3323 = vmul.f32 %v3258, 1.442695
        %v3324 = vpow.pop %v3323
        %v3325 = vmul.f32 %v3259, 1.442695
        %v3326 = vpow.pop %v3325
        %v3327 = vmul.f32 %v3260, 1.442695
        %v3328 = vpow.pop %v3327
        %v3329 = vmul.f32 %v3261, 1.442695
        %v3330 = vpow.pop %v3329
        %v3331 = vmul.f32 %v3262, 1.442695
        %v3332 = vpow.pop %v3331
        %v3333 = vmul.f32 %v3263, 1.442695
        %v3334 = vpow.pop %v3333
        %v3335 = vmul.f32 %v3264, 1.442695
        %v3336 = vpow.pop %v3335
        %v3337 = vmul.f32 %v3265, 1.442695
        %v3338 = vpow.pop %v3337
        %v3339 = vmul.f32 %v3266, 1.442695
        %v3340 = vpow.pop %v3339
        %v3341 = vmul.f32 %v3267, 1.442695
        %v3342 = vpow.pop %v3341
        %v3343 = vmul.f32 %v3268, 1.442695
        %v3344 = vpow.pop %v3343
        %v3345 = vmul.f32 %v3269, 1.442695
        %v3346 = vpow.pop %v3345
        %v3347 = vmul.f32 %v3270, 1.442695
        %v3348 = vpow.pop %v3347
        %v3349 = vmul.f32 %v3271, 1.442695
        %v3350 = vpow.pop %v3349
        %v3351 = vmul.f32 %v3272, 1.442695
        %v3352 = vpow.pop %v3351
        %v3353 = vmul.f32 %v3273, 1.442695
        %v3354 = vpow.pop %v3353
        %v3355 = vmul.f32 %v3274, 1.442695
        %v3356 = vpow.pop %v3355
        %v3357 = vmul.f32 %v3275, 1.442695
        %v3358 = vpow.pop %v3357
        %v3359 = vmul.f32 %v3276, 1.442695
        %v3360 = vpow.pop %v3359
        %v3361 = vmul.f32 %v3277, 1.442695
        %v3362 = vpow.pop %v3361
        %v3363 = vmul.f32 %v3278, 1.442695
        %v3364 = vpow.pop %v3363
        %v3365 = vmul.f32 %v3279, 1.442695
        %v3366 = vpow.pop %v3365
        %v3367 = vmul.f32 %v3280, 1.442695
        %v3368 = vpow.pop %v3367
        %v3369 = vmul.f32 %v3281, 1.442695
        %v3370 = vpow.pop %v3369
        %v3371 = vmul.f32 %v3282, 1.442695
        %v3372 = vpow.pop %v3371
        %v3373 = vmul.f32 %v3283, 1.442695
        %v3374 = vpow.pop %v3373
        %v3375 = vmul.f32 %v3284, 1.442695
        %v3376 = vpow.pop %v3375
        %v3377 = vmul.f32 %v3285, 1.442695
        %v3378 = vpow.pop %v3377
        %v3379 = vmul.f32 %v3286, 1.442695
        %v3380 = vpow.pop %v3379
        %v3381 = vmul.f32 %v3287, 1.442695
        %v3382 = vpow.pop %v3381
        %v3383 = vmul.f32 %v3288, 1.442695
        %v3384 = vpow.pop %v3383
        %v3385 = vmul.f32 %v3289, 1.442695
        %v3386 = vpow.pop %v3385
        %v3387 = vmul.f32 %v3290, 1.442695
        %v3388 = vpow.pop %v3387
        %v3389 = vmul.f32 %v3291, 1.442695
        %v3390 = vpow.pop %v3389
        %v3391 = vmul.f32 %v3292, 1.442695
        %v3392 = vpow.pop %v3391
        %v3393 = vmul.f32 %v3293, 1.442695
        %v3394 = vpow.pop %v3393
        %v3395 = vmul.f32 %v3294, 1.442695
        %v3396 = vpow.pop %v3395
        %v3397 = vmul.f32 %v3295, 1.442695
        %v3398 = vpow.pop %v3397
        %v3399 = vmul.f32 %v3296, 1.442695
        %v3400 = vpow.pop %v3399
        %v3401 = vmul.f32 %v3297, 1.442695
        %v3402 = vpow.pop %v3401
        %v3403 = vmul.f32 %v3298, 1.442695
        %v3404 = vpow.pop %v3403
        %v3405 = vmul.f32 %v3299, 1.442695
        %v3406 = vpow.pop %v3405
        %v3407 = vmul.f32 %v3300, 1.442695
        %v3408 = vpow.pop %v3407
        %v3409 = vmul.f32 %v3301, 1.442695
        %v3410 = vpow.pop %v3409
        %v3411 = vmul.f32 %v3302, 1.442695
        %v3412 = vpow.pop %v3411
        %v3413 = vmul.f32 %v3303, 1.442695
        %v3414 = vpow.pop %v3413
        %v3415 = vmul.f32 %v3304, 1.442695
        %v3416 = vpow.pop %v3415
        %v3417 = vmul.f32 %v3305, 1.442695
        %v3418 = vpow.pop %v3417
        %v3419 = vmul.f32 %v3306, 1.442695
        %v3420 = vpow.pop %v3419
        %v3421 = vmul.f32 %v3307, 1.442695
        %v3422 = vpow.pop %v3421
        %v3423 = vmul.f32 %v3308, 1.442695
        %v3424 = vpow.pop %v3423
        %v3425 = vmul.f32 %v3309, 1.442695
        %v3426 = vpow.pop %v3425
        %v3427 = vmul.f32 %v3310, 1.442695
        %v3428 = vpow.pop %v3427
        %v3429 = vmul.f32 %v3311, 1.442695
        %v3430 = vpow.pop %v3429
        %v3431 = vmul.f32 %v3312, 1.442695
        %v3432 = vpow.pop %v3431
        %v3433 = vmul.f32 %v3313, 1.442695
        %v3434 = vpow.pop %v3433
        %v3435 = vmul.f32 %v3314, 1.442695
        %v3436 = vpow.pop %v3435
        %v3437 = vmul.f32 %v3315, 1.442695
        %v3438 = vpow.pop %v3437
        %v3439 = vmul.f32 %v3316, 1.442695
        %v3440 = vpow.pop %v3439
        %v3441 = vmul.f32 %v3317, 1.442695
        %v3442 = vpow.pop %v3441
        %v3443 = vmul.f32 %v3318, 1.442695
        %v3444 = vpow.pop %v3443
        %v3445 = vmul.f32 %v3319, 1.442695
        %v3446 = vpow.pop %v3445
        %v3447 = vmul.f32 %v3320, 1.442695
        %v3448 = vpow.pop %v3447
        %v3449 = vadd.f32 %v3322, 1.0
        %v3450 = vadd.f32 %v3324, 1.0
        %v3451 = vadd.f32 %v3326, 1.0
        %v3452 = vadd.f32 %v3328, 1.0
        %v3453 = vadd.f32 %v3330, 1.0
        %v3454 = vadd.f32 %v3332, 1.0
        %v3455 = vadd.f32 %v3334, 1.0
        %v3456 = vadd.f32 %v3336, 1.0
        %v3457 = vadd.f32 %v3338, 1.0
        %v3458 = vadd.f32 %v3340, 1.0
        %v3459 = vadd.f32 %v3342, 1.0
        %v3460 = vadd.f32 %v3344, 1.0
        %v3461 = vadd.f32 %v3346, 1.0
        %v3462 = vadd.f32 %v3348, 1.0
        %v3463 = vadd.f32 %v3350, 1.0
        %v3464 = vadd.f32 %v3352, 1.0
        %v3465 = vadd.f32 %v3354, 1.0
        %v3466 = vadd.f32 %v3356, 1.0
        %v3467 = vadd.f32 %v3358, 1.0
        %v3468 = vadd.f32 %v3360, 1.0
        %v3469 = vadd.f32 %v3362, 1.0
        %v3470 = vadd.f32 %v3364, 1.0
        %v3471 = vadd.f32 %v3366, 1.0
        %v3472 = vadd.f32 %v3368, 1.0
        %v3473 = vadd.f32 %v3370, 1.0
        %v3474 = vadd.f32 %v3372, 1.0
        %v3475 = vadd.f32 %v3374, 1.0
        %v3476 = vadd.f32 %v3376, 1.0
        %v3477 = vadd.f32 %v3378, 1.0
        %v3478 = vadd.f32 %v3380, 1.0
        %v3479 = vadd.f32 %v3382, 1.0
        %v3480 = vadd.f32 %v3384, 1.0
        %v3481 = vadd.f32 %v3386, 1.0
        %v3482 = vadd.f32 %v3388, 1.0
        %v3483 = vadd.f32 %v3390, 1.0
        %v3484 = vadd.f32 %v3392, 1.0
        %v3485 = vadd.f32 %v3394, 1.0
        %v3486 = vadd.f32 %v3396, 1.0
        %v3487 = vadd.f32 %v3398, 1.0
        %v3488 = vadd.f32 %v3400, 1.0
        %v3489 = vadd.f32 %v3402, 1.0
        %v3490 = vadd.f32 %v3404, 1.0
        %v3491 = vadd.f32 %v3406, 1.0
        %v3492 = vadd.f32 %v3408, 1.0
        %v3493 = vadd.f32 %v3410, 1.0
        %v3494 = vadd.f32 %v3412, 1.0
        %v3495 = vadd.f32 %v3414, 1.0
        %v3496 = vadd.f32 %v3416, 1.0
        %v3497 = vadd.f32 %v3418, 1.0
        %v3498 = vadd.f32 %v3420, 1.0
        %v3499 = vadd.f32 %v3422, 1.0
        %v3500 = vadd.f32 %v3424, 1.0
        %v3501 = vadd.f32 %v3426, 1.0
        %v3502 = vadd.f32 %v3428, 1.0
        %v3503 = vadd.f32 %v3430, 1.0
        %v3504 = vadd.f32 %v3432, 1.0
        %v3505 = vadd.f32 %v3434, 1.0
        %v3506 = vadd.f32 %v3436, 1.0
        %v3507 = vadd.f32 %v3438, 1.0
        %v3508 = vadd.f32 %v3440, 1.0
        %v3509 = vadd.f32 %v3442, 1.0
        %v3510 = vadd.f32 %v3444, 1.0
        %v3511 = vadd.f32 %v3446, 1.0
        %v3512 = vadd.f32 %v3448, 1.0
        %vm3513 = vcmp.ge.f32.partialorder %v2548, 0.0
        %vm3514 = vcmp.ge.f32.partialorder %v2550, 0.0
        %vm3515 = vcmp.ge.f32.partialorder %v2637, 0.0
        %vm3516 = vcmp.ge.f32.partialorder %v2639, 0.0
        %vm3517 = vcmp.ge.f32.partialorder %v2726, 0.0
        %vm3518 = vcmp.ge.f32.partialorder %v2728, 0.0
        %vm3519 = vcmp.ge.f32.partialorder %v2815, 0.0
        %vm3520 = vcmp.ge.f32.partialorder %v2817, 0.0
        %vm3521 = vcmp.ge.f32.partialorder %v2904, 0.0
        %vm3522 = vcmp.ge.f32.partialorder %v2906, 0.0
        %vm3523 = vcmp.ge.f32.partialorder %v2993, 0.0
        %vm3524 = vcmp.ge.f32.partialorder %v2995, 0.0
        %vm3525 = vcmp.ge.f32.partialorder %v3082, 0.0
        %vm3526 = vcmp.ge.f32.partialorder %v3084, 0.0
        %vm3527 = vcmp.ge.f32.partialorder %v3171, 0.0
        %vm3528 = vcmp.ge.f32.partialorder %v3173, 0.0
        %vm3529 = vcmp.ge.f32.partialorder %v2554, 0.0
        %vm3530 = vcmp.ge.f32.partialorder %v2556, 0.0
        %vm3531 = vcmp.ge.f32.partialorder %v2643, 0.0
        %vm3532 = vcmp.ge.f32.partialorder %v2645, 0.0
        %vm3533 = vcmp.ge.f32.partialorder %v2732, 0.0
        %vm3534 = vcmp.ge.f32.partialorder %v2734, 0.0
        %vm3535 = vcmp.ge.f32.partialorder %v2821, 0.0
        %vm3536 = vcmp.ge.f32.partialorder %v2823, 0.0
        %vm3537 = vcmp.ge.f32.partialorder %v2910, 0.0
        %vm3538 = vcmp.ge.f32.partialorder %v2912, 0.0
        %vm3539 = vcmp.ge.f32.partialorder %v2999, 0.0
        %vm3540 = vcmp.ge.f32.partialorder %v3001, 0.0
        %vm3541 = vcmp.ge.f32.partialorder %v3088, 0.0
        %vm3542 = vcmp.ge.f32.partialorder %v3090, 0.0
        %vm3543 = vcmp.ge.f32.partialorder %v3177, 0.0
        %vm3544 = vcmp.ge.f32.partialorder %v3179, 0.0
        %vm3545 = vcmp.ge.f32.partialorder %v2560, 0.0
        %vm3546 = vcmp.ge.f32.partialorder %v2562, 0.0
        %vm3547 = vcmp.ge.f32.partialorder %v2649, 0.0
        %vm3548 = vcmp.ge.f32.partialorder %v2651, 0.0
        %vm3549 = vcmp.ge.f32.partialorder %v2738, 0.0
        %vm3550 = vcmp.ge.f32.partialorder %v2740, 0.0
        %vm3551 = vcmp.ge.f32.partialorder %v2827, 0.0
        %vm3552 = vcmp.ge.f32.partialorder %v2829, 0.0
        %vm3553 = vcmp.ge.f32.partialorder %v2916, 0.0
        %vm3554 = vcmp.ge.f32.partialorder %v2918, 0.0
        %vm3555 = vcmp.ge.f32.partialorder %v3005, 0.0
        %vm3556 = vcmp.ge.f32.partialorder %v3007, 0.0
        %vm3557 = vcmp.ge.f32.partialorder %v3094, 0.0
        %vm3558 = vcmp.ge.f32.partialorder %v3096, 0.0
        %vm3559 = vcmp.ge.f32.partialorder %v3183, 0.0
        %vm3560 = vcmp.ge.f32.partialorder %v3185, 0.0
        %vm3561 = vcmp.ge.f32.partialorder %v2566, 0.0
        %vm3562 = vcmp.ge.f32.partialorder %v2568, 0.0
        %vm3563 = vcmp.ge.f32.partialorder %v2655, 0.0
        %vm3564 = vcmp.ge.f32.partialorder %v2657, 0.0
        %vm3565 = vcmp.ge.f32.partialorder %v2744, 0.0
        %vm3566 = vcmp.ge.f32.partialorder %v2746, 0.0
        %vm3567 = vcmp.ge.f32.partialorder %v2833, 0.0
        %vm3568 = vcmp.ge.f32.partialorder %v2835, 0.0
        %vm3569 = vcmp.ge.f32.partialorder %v2922, 0.0
        %vm3570 = vcmp.ge.f32.partialorder %v2924, 0.0
        %vm3571 = vcmp.ge.f32.partialorder %v3011, 0.0
        %vm3572 = vcmp.ge.f32.partialorder %v3013, 0.0
        %vm3573 = vcmp.ge.f32.partialorder %v3100, 0.0
        %vm3574 = vcmp.ge.f32.partialorder %v3102, 0.0
        %vm3575 = vcmp.ge.f32.partialorder %v3189, 0.0
        %vm3576 = vcmp.ge.f32.partialorder %v3191, 0.0
        %v3577 = vsel %vm3513, 1.0, %v3322
        %v3578 = vsel %vm3514, 1.0, %v3324
        %v3579 = vsel %vm3515, 1.0, %v3326
        %v3580 = vsel %vm3516, 1.0, %v3328
        %v3581 = vsel %vm3517, 1.0, %v3330
        %v3582 = vsel %vm3518, 1.0, %v3332
        %v3583 = vsel %vm3519, 1.0, %v3334
        %v3584 = vsel %vm3520, 1.0, %v3336
        %v3585 = vsel %vm3521, 1.0, %v3338
        %v3586 = vsel %vm3522, 1.0, %v3340
        %v3587 = vsel %vm3523, 1.0, %v3342
        %v3588 = vsel %vm3524, 1.0, %v3344
        %v3589 = vsel %vm3525, 1.0, %v3346
        %v3590 = vsel %vm3526, 1.0, %v3348
        %v3591 = vsel %vm3527, 1.0, %v3350
        %v3592 = vsel %vm3528, 1.0, %v3352
        %v3593 = vsel %vm3529, 1.0, %v3354
        %v3594 = vsel %vm3530, 1.0, %v3356
        %v3595 = vsel %vm3531, 1.0, %v3358
        %v3596 = vsel %vm3532, 1.0, %v3360
        %v3597 = vsel %vm3533, 1.0, %v3362
        %v3598 = vsel %vm3534, 1.0, %v3364
        %v3599 = vsel %vm3535, 1.0, %v3366
        %v3600 = vsel %vm3536, 1.0, %v3368
        %v3601 = vsel %vm3537, 1.0, %v3370
        %v3602 = vsel %vm3538, 1.0, %v3372
        %v3603 = vsel %vm3539, 1.0, %v3374
        %v3604 = vsel %vm3540, 1.0, %v3376
        %v3605 = vsel %vm3541, 1.0, %v3378
        %v3606 = vsel %vm3542, 1.0, %v3380
        %v3607 = vsel %vm3543, 1.0, %v3382
        %v3608 = vsel %vm3544, 1.0, %v3384
        %v3609 = vsel %vm3545, 1.0, %v3386
        %v3610 = vsel %vm3546, 1.0, %v3388
        %v3611 = vsel %vm3547, 1.0, %v3390
        %v3612 = vsel %vm3548, 1.0, %v3392
        %v3613 = vsel %vm3549, 1.0, %v3394
        %v3614 = vsel %vm3550, 1.0, %v3396
        %v3615 = vsel %vm3551, 1.0, %v3398
        %v3616 = vsel %vm3552, 1.0, %v3400
        %v3617 = vsel %vm3553, 1.0, %v3402
        %v3618 = vsel %vm3554, 1.0, %v3404
        %v3619 = vsel %vm3555, 1.0, %v3406
        %v3620 = vsel %vm3556, 1.0, %v3408
        %v3621 = vsel %vm3557, 1.0, %v3410
        %v3622 = vsel %vm3558, 1.0, %v3412
        %v3623 = vsel %vm3559, 1.0, %v3414
        %v3624 = vsel %vm3560, 1.0, %v3416
        %v3625 = vsel %vm3561, 1.0, %v3418
        %v3626 = vsel %vm3562, 1.0, %v3420
        %v3627 = vsel %vm3563, 1.0, %v3422
        %v3628 = vsel %vm3564, 1.0, %v3424
        %v3629 = vsel %vm3565, 1.0, %v3426
        %v3630 = vsel %vm3566, 1.0, %v3428
        %v3631 = vsel %vm3567, 1.0, %v3430
        %v3632 = vsel %vm3568, 1.0, %v3432
        %v3633 = vsel %vm3569, 1.0, %v3434
        %v3634 = vsel %vm3570, 1.0, %v3436
        %v3635 = vsel %vm3571, 1.0, %v3438
        %v3636 = vsel %vm3572, 1.0, %v3440
        %v3637 = vsel %vm3573, 1.0, %v3442
        %v3638 = vsel %vm3574, 1.0, %v3444
        %v3639 = vsel %vm3575, 1.0, %v3446
        %v3640 = vsel %vm3576, 1.0, %v3448
        %v3641 = vrcp.pop %v3449
        %v3642 = vmul.f32 %v3577, %v3641
        %v3643 = vrcp.pop %v3450
        %v3644 = vmul.f32 %v3578, %v3643
        %v3645 = vrcp.pop %v3451
        %v3646 = vmul.f32 %v3579, %v3645
        %v3647 = vrcp.pop %v3452
        %v3648 = vmul.f32 %v3580, %v3647
        %v3649 = vrcp.pop %v3453
        %v3650 = vmul.f32 %v3581, %v3649
        %v3651 = vrcp.pop %v3454
        %v3652 = vmul.f32 %v3582, %v3651
        %v3653 = vrcp.pop %v3455
        %v3654 = vmul.f32 %v3583, %v3653
        %v3655 = vrcp.pop %v3456
        %v3656 = vmul.f32 %v3584, %v3655
        %v3657 = vrcp.pop %v3457
        %v3658 = vmul.f32 %v3585, %v3657
        %v3659 = vrcp.pop %v3458
        %v3660 = vmul.f32 %v3586, %v3659
        %v3661 = vrcp.pop %v3459
        %v3662 = vmul.f32 %v3587, %v3661
        %v3663 = vrcp.pop %v3460
        %v3664 = vmul.f32 %v3588, %v3663
        %v3665 = vrcp.pop %v3461
        %v3666 = vmul.f32 %v3589, %v3665
        %v3667 = vrcp.pop %v3462
        %v3668 = vmul.f32 %v3590, %v3667
        %v3669 = vrcp.pop %v3463
        %v3670 = vmul.f32 %v3591, %v3669
        %v3671 = vrcp.pop %v3464
        %v3672 = vmul.f32 %v3592, %v3671
        %v3673 = vrcp.pop %v3465
        %v3674 = vmul.f32 %v3593, %v3673
        %v3675 = vrcp.pop %v3466
        %v3676 = vmul.f32 %v3594, %v3675
        %v3677 = vrcp.pop %v3467
        %v3678 = vmul.f32 %v3595, %v3677
        %v3679 = vrcp.pop %v3468
        %v3680 = vmul.f32 %v3596, %v3679
        %v3681 = vrcp.pop %v3469
        %v3682 = vmul.f32 %v3597, %v3681
        %v3683 = vrcp.pop %v3470
        %v3684 = vmul.f32 %v3598, %v3683
        %v3685 = vrcp.pop %v3471
        %v3686 = vmul.f32 %v3599, %v3685
        %v3687 = vrcp.pop %v3472
        %v3688 = vmul.f32 %v3600, %v3687
        %v3689 = vrcp.pop %v3473
        %v3690 = vmul.f32 %v3601, %v3689
        %v3691 = vrcp.pop %v3474
        %v3692 = vmul.f32 %v3602, %v3691
        %v3693 = vrcp.pop %v3475
        %v3694 = vmul.f32 %v3603, %v3693
        %v3695 = vrcp.pop %v3476
        %v3696 = vmul.f32 %v3604, %v3695
        %v3697 = vrcp.pop %v3477
        %v3698 = vmul.f32 %v3605, %v3697
        %v3699 = vrcp.pop %v3478
        %v3700 = vmul.f32 %v3606, %v3699
        %v3701 = vrcp.pop %v3479
        %v3702 = vmul.f32 %v3607, %v3701
        %v3703 = vrcp.pop %v3480
        %v3704 = vmul.f32 %v3608, %v3703
        %v3705 = vrcp.pop %v3481
        %v3706 = vmul.f32 %v3609, %v3705
        %v3707 = vrcp.pop %v3482
        %v3708 = vmul.f32 %v3610, %v3707
        %v3709 = vrcp.pop %v3483
        %v3710 = vmul.f32 %v3611, %v3709
        %v3711 = vrcp.pop %v3484
        %v3712 = vmul.f32 %v3612, %v3711
        %v3713 = vrcp.pop %v3485
        %v3714 = vmul.f32 %v3613, %v3713
        %v3715 = vrcp.pop %v3486
        %v3716 = vmul.f32 %v3614, %v3715
        %v3717 = vrcp.pop %v3487
        %v3718 = vmul.f32 %v3615, %v3717
        %v3719 = vrcp.pop %v3488
        %v3720 = vmul.f32 %v3616, %v3719
        %v3721 = vrcp.pop %v3489
        %v3722 = vmul.f32 %v3617, %v3721
        %v3723 = vrcp.pop %v3490
        %v3724 = vmul.f32 %v3618, %v3723
        %v3725 = vrcp.pop %v3491
        %v3726 = vmul.f32 %v3619, %v3725
        %v3727 = vrcp.pop %v3492
        %v3728 = vmul.f32 %v3620, %v3727
        %v3729 = vrcp.pop %v3493
        %v3730 = vmul.f32 %v3621, %v3729
        %v3731 = vrcp.pop %v3494
        %v3732 = vmul.f32 %v3622, %v3731
        %v3733 = vrcp.pop %v3495
        %v3734 = vmul.f32 %v3623, %v3733
        %v3735 = vrcp.pop %v3496
        %v3736 = vmul.f32 %v3624, %v3735
        %v3737 = vrcp.pop %v3497
        %v3738 = vmul.f32 %v3625, %v3737
        %v3739 = vrcp.pop %v3498
        %v3740 = vmul.f32 %v3626, %v3739
        %v3741 = vrcp.pop %v3499
        %v3742 = vmul.f32 %v3627, %v3741
        %v3743 = vrcp.pop %v3500
        %v3744 = vmul.f32 %v3628, %v3743
        %v3745 = vrcp.pop %v3501
        %v3746 = vmul.f32 %v3629, %v3745
        %v3747 = vrcp.pop %v3502
        %v3748 = vmul.f32 %v3630, %v3747
        %v3749 = vrcp.pop %v3503
        %v3750 = vmul.f32 %v3631, %v3749
        %v3751 = vrcp.pop %v3504
        %v3752 = vmul.f32 %v3632, %v3751
        %v3753 = vrcp.pop %v3505
        %v3754 = vmul.f32 %v3633, %v3753
        %v3755 = vrcp.pop %v3506
        %v3756 = vmul.f32 %v3634, %v3755
        %v3757 = vrcp.pop %v3507
        %v3758 = vmul.f32 %v3635, %v3757
        %v3759 = vrcp.pop %v3508
        %v3760 = vmul.f32 %v3636, %v3759
        %v3761 = vrcp.pop %v3509
        %v3762 = vmul.f32 %v3637, %v3761
        %v3763 = vrcp.pop %v3510
        %v3764 = vmul.f32 %v3638, %v3763
        %v3765 = vrcp.pop %v3511
        %v3766 = vmul.f32 %v3639, %v3765
        %v3767 = vrcp.pop %v3512
        %v3768 = vmul.f32 %v3640, %v3767
        %v3769 = vmax.f32 %v2548, 0.0
        %v3770 = vmax.f32 %v2550, 0.0
        %v3771 = vmax.f32 %v2637, 0.0
        %v3772 = vmax.f32 %v2639, 0.0
        %v3773 = vmax.f32 %v2726, 0.0
        %v3774 = vmax.f32 %v2728, 0.0
        %v3775 = vmax.f32 %v2815, 0.0
        %v3776 = vmax.f32 %v2817, 0.0
        %v3777 = vmax.f32 %v2904, 0.0
        %v3778 = vmax.f32 %v2906, 0.0
        %v3779 = vmax.f32 %v2993, 0.0
        %v3780 = vmax.f32 %v2995, 0.0
        %v3781 = vmax.f32 %v3082, 0.0
        %v3782 = vmax.f32 %v3084, 0.0
        %v3783 = vmax.f32 %v3171, 0.0
        %v3784 = vmax.f32 %v3173, 0.0
        %v3785 = vmax.f32 %v2554, 0.0
        %v3786 = vmax.f32 %v2556, 0.0
        %v3787 = vmax.f32 %v2643, 0.0
        %v3788 = vmax.f32 %v2645, 0.0
        %v3789 = vmax.f32 %v2732, 0.0
        %v3790 = vmax.f32 %v2734, 0.0
        %v3791 = vmax.f32 %v2821, 0.0
        %v3792 = vmax.f32 %v2823, 0.0
        %v3793 = vmax.f32 %v2910, 0.0
        %v3794 = vmax.f32 %v2912, 0.0
        %v3795 = vmax.f32 %v2999, 0.0
        %v3796 = vmax.f32 %v3001, 0.0
        %v3797 = vmax.f32 %v3088, 0.0
        %v3798 = vmax.f32 %v3090, 0.0
        %v3799 = vmax.f32 %v3177, 0.0
        %v3800 = vmax.f32 %v3179, 0.0
        %v3801 = vmax.f32 %v2560, 0.0
        %v3802 = vmax.f32 %v2562, 0.0
        %v3803 = vmax.f32 %v2649, 0.0
        %v3804 = vmax.f32 %v2651, 0.0
        %v3805 = vmax.f32 %v2738, 0.0
        %v3806 = vmax.f32 %v2740, 0.0
        %v3807 = vmax.f32 %v2827, 0.0
        %v3808 = vmax.f32 %v2829, 0.0
        %v3809 = vmax.f32 %v2916, 0.0
        %v3810 = vmax.f32 %v2918, 0.0
        %v3811 = vmax.f32 %v3005, 0.0
        %v3812 = vmax.f32 %v3007, 0.0
        %v3813 = vmax.f32 %v3094, 0.0
        %v3814 = vmax.f32 %v3096, 0.0
        %v3815 = vmax.f32 %v3183, 0.0
        %v3816 = vmax.f32 %v3185, 0.0
        %v3817 = vmax.f32 %v2566, 0.0
        %v3818 = vmax.f32 %v2568, 0.0
        %v3819 = vmax.f32 %v2655, 0.0
        %v3820 = vmax.f32 %v2657, 0.0
        %v3821 = vmax.f32 %v2744, 0.0
        %v3822 = vmax.f32 %v2746, 0.0
        %v3823 = vmax.f32 %v2833, 0.0
        %v3824 = vmax.f32 %v2835, 0.0
        %v3825 = vmax.f32 %v2922, 0.0
        %v3826 = vmax.f32 %v2924, 0.0
        %v3827 = vmax.f32 %v3011, 0.0
        %v3828 = vmax.f32 %v3013, 0.0
        %v3829 = vmax.f32 %v3100, 0.0
        %v3830 = vmax.f32 %v3102, 0.0
        %v3831 = vmax.f32 %v3189, 0.0
        %v3832 = vmax.f32 %v3191, 0.0
        %v3833 = vlog2.pop %v3449
        %v3834 = vmul.f32 %v3833, 0.6931472
        %v3835 = vlog2.pop %v3450
        %v3836 = vmul.f32 %v3835, 0.6931472
        %v3837 = vlog2.pop %v3451
        %v3838 = vmul.f32 %v3837, 0.6931472
        %v3839 = vlog2.pop %v3452
        %v3840 = vmul.f32 %v3839, 0.6931472
        %v3841 = vlog2.pop %v3453
        %v3842 = vmul.f32 %v3841, 0.6931472
        %v3843 = vlog2.pop %v3454
        %v3844 = vmul.f32 %v3843, 0.6931472
        %v3845 = vlog2.pop %v3455
        %v3846 = vmul.f32 %v3845, 0.6931472
        %v3847 = vlog2.pop %v3456
        %v3848 = vmul.f32 %v3847, 0.6931472
        %v3849 = vlog2.pop %v3457
        %v3850 = vmul.f32 %v3849, 0.6931472
        %v3851 = vlog2.pop %v3458
        %v3852 = vmul.f32 %v3851, 0.6931472
        %v3853 = vlog2.pop %v3459
        %v3854 = vmul.f32 %v3853, 0.6931472
        %v3855 = vlog2.pop %v3460
        %v3856 = vmul.f32 %v3855, 0.6931472
        %v3857 = vlog2.pop %v3461
        %v3858 = vmul.f32 %v3857, 0.6931472
        %v3859 = vlog2.pop %v3462
        %v3860 = vmul.f32 %v3859, 0.6931472
        %v3861 = vlog2.pop %v3463
        %v3862 = vmul.f32 %v3861, 0.6931472
        %v3863 = vlog2.pop %v3464
        %v3864 = vmul.f32 %v3863, 0.6931472
        %v3865 = vlog2.pop %v3465
        %v3866 = vmul.f32 %v3865, 0.6931472
        %v3867 = vlog2.pop %v3466
        %v3868 = vmul.f32 %v3867, 0.6931472
        %v3869 = vlog2.pop %v3467
        %v3870 = vmul.f32 %v3869, 0.6931472
        %v3871 = vlog2.pop %v3468
        %v3872 = vmul.f32 %v3871, 0.6931472
        %v3873 = vlog2.pop %v3469
        %v3874 = vmul.f32 %v3873, 0.6931472
        %v3875 = vlog2.pop %v3470
        %v3876 = vmul.f32 %v3875, 0.6931472
        %v3877 = vlog2.pop %v3471
        %v3878 = vmul.f32 %v3877, 0.6931472
        %v3879 = vlog2.pop %v3472
        %v3880 = vmul.f32 %v3879, 0.6931472
        %v3881 = vlog2.pop %v3473
        %v3882 = vmul.f32 %v3881, 0.6931472
        %v3883 = vlog2.pop %v3474
        %v3884 = vmul.f32 %v3883, 0.6931472
        %v3885 = vlog2.pop %v3475
        %v3886 = vmul.f32 %v3885, 0.6931472
        %v3887 = vlog2.pop %v3476
        %v3888 = vmul.f32 %v3887, 0.6931472
        %v3889 = vlog2.pop %v3477
        %v3890 = vmul.f32 %v3889, 0.6931472
        %v3891 = vlog2.pop %v3478
        %v3892 = vmul.f32 %v3891, 0.6931472
        %v3893 = vlog2.pop %v3479
        %v3894 = vmul.f32 %v3893, 0.6931472
        %v3895 = vlog2.pop %v3480
        %v3896 = vmul.f32 %v3895, 0.6931472
        %v3897 = vlog2.pop %v3481
        %v3898 = vmul.f32 %v3897, 0.6931472
        %v3899 = vlog2.pop %v3482
        %v3900 = vmul.f32 %v3899, 0.6931472
        %v3901 = vlog2.pop %v3483
        %v3902 = vmul.f32 %v3901, 0.6931472
        %v3903 = vlog2.pop %v3484
        %v3904 = vmul.f32 %v3903, 0.6931472
        %v3905 = vlog2.pop %v3485
        %v3906 = vmul.f32 %v3905, 0.6931472
        %v3907 = vlog2.pop %v3486
        %v3908 = vmul.f32 %v3907, 0.6931472
        %v3909 = vlog2.pop %v3487
        %v3910 = vmul.f32 %v3909, 0.6931472
        %v3911 = vlog2.pop %v3488
        %v3912 = vmul.f32 %v3911, 0.6931472
        %v3913 = vlog2.pop %v3489
        %v3914 = vmul.f32 %v3913, 0.6931472
        %v3915 = vlog2.pop %v3490
        %v3916 = vmul.f32 %v3915, 0.6931472
        %v3917 = vlog2.pop %v3491
        %v3918 = vmul.f32 %v3917, 0.6931472
        %v3919 = vlog2.pop %v3492
        %v3920 = vmul.f32 %v3919, 0.6931472
        %v3921 = vlog2.pop %v3493
        %v3922 = vmul.f32 %v3921, 0.6931472
        %v3923 = vlog2.pop %v3494
        %v3924 = vmul.f32 %v3923, 0.6931472
        %v3925 = vlog2.pop %v3495
        %v3926 = vmul.f32 %v3925, 0.6931472
        %v3927 = vlog2.pop %v3496
        %v3928 = vmul.f32 %v3927, 0.6931472
        %v3929 = vlog2.pop %v3497
        %v3930 = vmul.f32 %v3929, 0.6931472
        %v3931 = vlog2.pop %v3498
        %v3932 = vmul.f32 %v3931, 0.6931472
        %v3933 = vlog2.pop %v3499
        %v3934 = vmul.f32 %v3933, 0.6931472
        %v3935 = vlog2.pop %v3500
        %v3936 = vmul.f32 %v3935, 0.6931472
        %v3937 = vlog2.pop %v3501
        %v3938 = vmul.f32 %v3937, 0.6931472
        %v3939 = vlog2.pop %v3502
        %v3940 = vmul.f32 %v3939, 0.6931472
        %v3941 = vlog2.pop %v3503
        %v3942 = vmul.f32 %v3941, 0.6931472
        %v3943 = vlog2.pop %v3504
        %v3944 = vmul.f32 %v3943, 0.6931472
        %v3945 = vlog2.pop %v3505
        %v3946 = vmul.f32 %v3945, 0.6931472
        %v3947 = vlog2.pop %v3506
        %v3948 = vmul.f32 %v3947, 0.6931472
        %v3949 = vlog2.pop %v3507
        %v3950 = vmul.f32 %v3949, 0.6931472
        %v3951 = vlog2.pop %v3508
        %v3952 = vmul.f32 %v3951, 0.6931472
        %v3953 = vlog2.pop %v3509
        %v3954 = vmul.f32 %v3953, 0.6931472
        %v3955 = vlog2.pop %v3510
        %v3956 = vmul.f32 %v3955, 0.6931472
        %v3957 = vlog2.pop %v3511
        %v3958 = vmul.f32 %v3957, 0.6931472
        %v3959 = vlog2.pop %v3512
        %v3960 = vmul.f32 %v3959, 0.6931472
        %v3961 = vadd.f32 %v3769, %v3834
        %v3962 = vadd.f32 %v3770, %v3836
        %v3963 = vadd.f32 %v3771, %v3838
        %v3964 = vadd.f32 %v3772, %v3840
        %v3965 = vadd.f32 %v3773, %v3842
        %v3966 = vadd.f32 %v3774, %v3844
        %v3967 = vadd.f32 %v3775, %v3846
        %v3968 = vadd.f32 %v3776, %v3848
        %v3969 = vadd.f32 %v3777, %v3850
        %v3970 = vadd.f32 %v3778, %v3852
        %v3971 = vadd.f32 %v3779, %v3854
        %v3972 = vadd.f32 %v3780, %v3856
        %v3973 = vadd.f32 %v3781, %v3858
        %v3974 = vadd.f32 %v3782, %v3860
        %v3975 = vadd.f32 %v3783, %v3862
        %v3976 = vadd.f32 %v3784, %v3864
        %v3977 = vadd.f32 %v3785, %v3866
        %v3978 = vadd.f32 %v3786, %v3868
        %v3979 = vadd.f32 %v3787, %v3870
        %v3980 = vadd.f32 %v3788, %v3872
        %v3981 = vadd.f32 %v3789, %v3874
        %v3982 = vadd.f32 %v3790, %v3876
        %v3983 = vadd.f32 %v3791, %v3878
        %v3984 = vadd.f32 %v3792, %v3880
        %v3985 = vadd.f32 %v3793, %v3882
        %v3986 = vadd.f32 %v3794, %v3884
        %v3987 = vadd.f32 %v3795, %v3886
        %v3988 = vadd.f32 %v3796, %v3888
        %v3989 = vadd.f32 %v3797, %v3890
        %v3990 = vadd.f32 %v3798, %v3892
        %v3991 = vadd.f32 %v3799, %v3894
        %v3992 = vadd.f32 %v3800, %v3896
        %v3993 = vadd.f32 %v3801, %v3898
        %v3994 = vadd.f32 %v3802, %v3900
        %v3995 = vadd.f32 %v3803, %v3902
        %v3996 = vadd.f32 %v3804, %v3904
        %v3997 = vadd.f32 %v3805, %v3906
        %v3998 = vadd.f32 %v3806, %v3908
        %v3999 = vadd.f32 %v3807, %v3910
        %v4000 = vadd.f32 %v3808, %v3912
        %v4001 = vadd.f32 %v3809, %v3914
        %v4002 = vadd.f32 %v3810, %v3916
        %v4003 = vadd.f32 %v3811, %v3918
        %v4004 = vadd.f32 %v3812, %v3920
        %v4005 = vadd.f32 %v3813, %v3922
        %v4006 = vadd.f32 %v3814, %v3924
        %v4007 = vadd.f32 %v3815, %v3926
        %v4008 = vadd.f32 %v3816, %v3928
        %v4009 = vadd.f32 %v3817, %v3930
        %v4010 = vadd.f32 %v3818, %v3932
        %v4011 = vadd.f32 %v3819, %v3934
        %v4012 = vadd.f32 %v3820, %v3936
        %v4013 = vadd.f32 %v3821, %v3938
        %v4014 = vadd.f32 %v3822, %v3940
        %v4015 = vadd.f32 %v3823, %v3942
        %v4016 = vadd.f32 %v3824, %v3944
        %v4017 = vadd.f32 %v3825, %v3946
        %v4018 = vadd.f32 %v3826, %v3948
        %v4019 = vadd.f32 %v3827, %v3950
        %v4020 = vadd.f32 %v3828, %v3952
        %v4021 = vadd.f32 %v3829, %v3954
        %v4022 = vadd.f32 %v3830, %v3956
        %v4023 = vadd.f32 %v3831, %v3958
        %v4024 = vadd.f32 %v3832, %v3960
        %4026 = vset.pattern.permute.xlu0 0
        %4027 = vperm.xlu0 %4026, %v586
        %v4028 = vpop.permute.xlu0 %4027
        %4031 = vset.pattern.permute.xlu0 0
        %4032 = vperm.xlu0 %4031, %v587
        %v4033 = vpop.permute.xlu0 %4032
        %4036 = vset.pattern.permute.xlu0 0
        %4037 = vperm.xlu0 %4036, %v588
        %v4038 = vpop.permute.xlu0 %4037
        %v4041 = vsel %vm2468, %v583, 0
        %v4044 = vsel %vm2468, %v584, 0
        %v4047 = vsel %vm2468, %v585, 0
        %4049 = vmatprep.subr.mxu0 0.0
        %4050 = vmatpush1.msra.mxu0 0.0
        %4051 = vmatprep.subr.mxu0 0.0
        %4052 = vmatpush1.msra.mxu0 0.0
        %4053 = vmatprep.subr.mxu0 0.0
        %4054 = vmatpush1.msra.mxu0 0.0
        %4055 = vmatprep.subr.mxu0 0.0
        %4056 = vmatpush1.msra.mxu0 0.0
        %4057 = vmatprep.subr.mxu0 0.0
        %4058 = vmatpush1.msra.mxu0 0.0
        %4059 = vmatprep.subr.mxu0 0.0
        %4060 = vmatpush1.msra.mxu0 0.0
        %4061 = vmatprep.subr.mxu0 0.0
        %4062 = vmatpush1.msra.mxu0 0.0
        %4063 = vmatprep.subr.mxu0 0.0
        %4064 = vmatpush1.msra.mxu0 0.0
        %4065 = vmatprep.subr.mxu0 0.0
        %4066 = vmatpush1.msra.mxu0 0.0
        %4067 = vmatprep.subr.mxu0 0.0
        %4068 = vmatpush1.msra.mxu0 0.0
        %4069 = vmatprep.subr.mxu0 0.0
        %4070 = vmatpush1.msra.mxu0 0.0
        %4071 = vmatprep.subr.mxu0 0.0
        %4072 = vmatpush1.msra.mxu0 0.0
        %4073 = vmatprep.subr.mxu0 %v4010
        %4074 = vmatpush1.msra.mxu0 %v4009
        %4075 = vmatprep.subr.mxu0 %v3994
        %4076 = vmatpush1.msra.mxu0 %v3993
        %4077 = vmatprep.subr.mxu0 %v3978
        %4078 = vmatpush1.msra.mxu0 %v3977
        %4079 = vmatprep.subr.mxu0 %v3962
        %4080 = vmatpush1.msra.mxu0 %v3961
        %4081 = vmatprep.subr.mxu0 0.0
        %4082 = vmatpush2.msra.mxu0 0.0
        %4083 = vmatprep.subr.mxu0 0.0
        %4084 = vmatpush2.msra.mxu0 0.0
        %4085 = vmatprep.subr.mxu0 0.0
        %4086 = vmatpush2.msra.mxu0 0.0
        %4087 = vmatprep.subr.mxu0 0.0
        %4088 = vmatpush2.msra.mxu0 0.0
        %4089 = vmatprep.subr.mxu0 0.0
        %4090 = vmatpush2.msra.mxu0 0.0
        %4091 = vmatprep.subr.mxu0 0.0
        %4092 = vmatpush2.msra.mxu0 0.0
        %4093 = vmatprep.subr.mxu0 0.0
        %4094 = vmatpush2.msra.mxu0 0.0
        %4095 = vmatprep.subr.mxu0 0.0
        %4096 = vmatpush2.msra.mxu0 0.0
        %4097 = vmatprep.subr.mxu0 0.0
        %4098 = vmatpush2.msra.mxu0 0.0
        %4099 = vmatprep.subr.mxu0 0.0
        %4100 = vmatpush2.msra.mxu0 0.0
        %4101 = vmatprep.subr.mxu0 0.0
        %4102 = vmatpush2.msra.mxu0 0.0
        %4103 = vmatprep.subr.mxu0 0.0
        %4104 = vmatpush2.msra.mxu0 0.0
        %4105 = vmatprep.subr.mxu0 0.0
        %4106 = vmatpush2.msra.mxu0 0.0
        %4107 = vmatprep.subr.mxu0 0.0
        %4108 = vmatpush2.msra.mxu0 0.0
        %4109 = vmatprep.subr.mxu0 0.0
        %4110 = vmatpush2.msra.mxu0 0.0
        %4111 = vmatprep.subr.mxu0 0.0
        %4112 = vmatpush2.msra.mxu0 0.0
        %4113 = vmatprep.mubr.f32.mxu0 0.0
        %4114 = vmatmul.mubr.f32.gmra.mxu0 %v4041
        %v4115 = vpop.f32.mrf.mxu0
        %v4116 = vadd.f32 %v4028, %v4115
        %v4117 = vpop.f32.mrf.mxu0
        %v4118 = vadd.f32 %v4028, %v4117
        %4119 = vmatprep.mubr.f32.mxu0 0.0
        %4120 = vmatmul.mubr.f32.gmra.mxu0 %v4044
        %v4121 = vpop.f32.mrf.mxu0
        %v4122 = vadd.f32 %v4033, %v4121
        %v4123 = vpop.f32.mrf.mxu0
        %v4124 = vadd.f32 %v4033, %v4123
        %4125 = vmatprep.mubr.f32.mxu0 0.0
        %4126 = vmatmul.mubr.f32.gmra.mxu0 %v4047
        %v4127 = vpop.f32.mrf.mxu0
        %v4128 = vadd.f32 %v4038, %v4127
        %v4129 = vpop.f32.mrf.mxu0
        %v4130 = vadd.f32 %v4038, %v4129
        %4131 = vdwg.mxu0
        %4132 = vmatprep.subr.mxu0 0.0
        %4133 = vmatpush1.msra.mxu0 0.0
        %4134 = vmatprep.subr.mxu0 0.0
        %4135 = vmatpush1.msra.mxu0 0.0
        %4136 = vmatprep.subr.mxu0 0.0
        %4137 = vmatpush1.msra.mxu0 0.0
        %4138 = vmatprep.subr.mxu0 0.0
        %4139 = vmatpush1.msra.mxu0 0.0
        %4140 = vmatprep.subr.mxu0 0.0
        %4141 = vmatpush1.msra.mxu0 0.0
        %4142 = vmatprep.subr.mxu0 0.0
        %4143 = vmatpush1.msra.mxu0 0.0
        %4144 = vmatprep.subr.mxu0 0.0
        %4145 = vmatpush1.msra.mxu0 0.0
        %4146 = vmatprep.subr.mxu0 0.0
        %4147 = vmatpush1.msra.mxu0 0.0
        %4148 = vmatprep.subr.mxu0 0.0
        %4149 = vmatpush1.msra.mxu0 0.0
        %4150 = vmatprep.subr.mxu0 0.0
        %4151 = vmatpush1.msra.mxu0 0.0
        %4152 = vmatprep.subr.mxu0 0.0
        %4153 = vmatpush1.msra.mxu0 0.0
        %4154 = vmatprep.subr.mxu0 0.0
        %4155 = vmatpush1.msra.mxu0 0.0
        %4156 = vmatprep.subr.mxu0 %v4012
        %4157 = vmatpush1.msra.mxu0 %v4011
        %4158 = vmatprep.subr.mxu0 %v3996
        %4159 = vmatpush1.msra.mxu0 %v3995
        %4160 = vmatprep.subr.mxu0 %v3980
        %4161 = vmatpush1.msra.mxu0 %v3979
        %4162 = vmatprep.subr.mxu0 %v3964
        %4163 = vmatpush1.msra.mxu0 %v3963
        %4164 = vmatprep.subr.mxu0 0.0
        %4165 = vmatpush2.msra.mxu0 0.0
        %4166 = vmatprep.subr.mxu0 0.0
        %4167 = vmatpush2.msra.mxu0 0.0
        %4168 = vmatprep.subr.mxu0 0.0
        %4169 = vmatpush2.msra.mxu0 0.0
        %4170 = vmatprep.subr.mxu0 0.0
        %4171 = vmatpush2.msra.mxu0 0.0
        %4172 = vmatprep.subr.mxu0 0.0
        %4173 = vmatpush2.msra.mxu0 0.0
        %4174 = vmatprep.subr.mxu0 0.0
        %4175 = vmatpush2.msra.mxu0 0.0
        %4176 = vmatprep.subr.mxu0 0.0
        %4177 = vmatpush2.msra.mxu0 0.0
        %4178 = vmatprep.subr.mxu0 0.0
        %4179 = vmatpush2.msra.mxu0 0.0
        %4180 = vmatprep.subr.mxu0 0.0
        %4181 = vmatpush2.msra.mxu0 0.0
        %4182 = vmatprep.subr.mxu0 0.0
        %4183 = vmatpush2.msra.mxu0 0.0
        %4184 = vmatprep.subr.mxu0 0.0
        %4185 = vmatpush2.msra.mxu0 0.0
        %4186 = vmatprep.subr.mxu0 0.0
        %4187 = vmatpush2.msra.mxu0 0.0
        %4188 = vmatprep.subr.mxu0 0.0
        %4189 = vmatpush2.msra.mxu0 0.0
        %4190 = vmatprep.subr.mxu0 0.0
        %4191 = vmatpush2.msra.mxu0 0.0
        %4192 = vmatprep.subr.mxu0 0.0
        %4193 = vmatpush2.msra.mxu0 0.0
        %4194 = vmatprep.subr.mxu0 0.0
        %4195 = vmatpush2.msra.mxu0 0.0
        %4196 = vmatprep.mubr.f32.mxu0 0.0
        %4197 = vmatmul.mubr.f32.gmra.mxu0 %v4041
        %v4198 = vpop.f32.mrf.mxu0
        %v4199 = vadd.f32 %v4028, %v4198
        %v4200 = vpop.f32.mrf.mxu0
        %v4201 = vadd.f32 %v4028, %v4200
        %4202 = vmatprep.mubr.f32.mxu0 0.0
        %4203 = vmatmul.mubr.f32.gmra.mxu0 %v4044
        %v4204 = vpop.f32.mrf.mxu0
        %v4205 = vadd.f32 %v4033, %v4204
        %v4206 = vpop.f32.mrf.mxu0
        %v4207 = vadd.f32 %v4033, %v4206
        %4208 = vmatprep.mubr.f32.mxu0 0.0
        %4209 = vmatmul.mubr.f32.gmra.mxu0 %v4047
        %v4210 = vpop.f32.mrf.mxu0
        %v4211 = vadd.f32 %v4038, %v4210
        %v4212 = vpop.f32.mrf.mxu0
        %v4213 = vadd.f32 %v4038, %v4212
        %4214 = vdwg.mxu0
        %4215 = vmatprep.subr.mxu0 0.0
        %4216 = vmatpush1.msra.mxu0 0.0
        %4217 = vmatprep.subr.mxu0 0.0
        %4218 = vmatpush1.msra.mxu0 0.0
        %4219 = vmatprep.subr.mxu0 0.0
        %4220 = vmatpush1.msra.mxu0 0.0
        %4221 = vmatprep.subr.mxu0 0.0
        %4222 = vmatpush1.msra.mxu0 0.0
        %4223 = vmatprep.subr.mxu0 0.0
        %4224 = vmatpush1.msra.mxu0 0.0
        %4225 = vmatprep.subr.mxu0 0.0
        %4226 = vmatpush1.msra.mxu0 0.0
        %4227 = vmatprep.subr.mxu0 0.0
        %4228 = vmatpush1.msra.mxu0 0.0
        %4229 = vmatprep.subr.mxu0 0.0
        %4230 = vmatpush1.msra.mxu0 0.0
        %4231 = vmatprep.subr.mxu0 0.0
        %4232 = vmatpush1.msra.mxu0 0.0
        %4233 = vmatprep.subr.mxu0 0.0
        %4234 = vmatpush1.msra.mxu0 0.0
        %4235 = vmatprep.subr.mxu0 0.0
        %4236 = vmatpush1.msra.mxu0 0.0
        %4237 = vmatprep.subr.mxu0 0.0
        %4238 = vmatpush1.msra.mxu0 0.0
        %4239 = vmatprep.subr.mxu0 %v4014
        %4240 = vmatpush1.msra.mxu0 %v4013
        %4241 = vmatprep.subr.mxu0 %v3998
        %4242 = vmatpush1.msra.mxu0 %v3997
        %4243 = vmatprep.subr.mxu0 %v3982
        %4244 = vmatpush1.msra.mxu0 %v3981
        %4245 = vmatprep.subr.mxu0 %v3966
        %4246 = vmatpush1.msra.mxu0 %v3965
        %4247 = vmatprep.subr.mxu0 0.0
        %4248 = vmatpush2.msra.mxu0 0.0
        %4249 = vmatprep.subr.mxu0 0.0
        %4250 = vmatpush2.msra.mxu0 0.0
        %4251 = vmatprep.subr.mxu0 0.0
        %4252 = vmatpush2.msra.mxu0 0.0
        %4253 = vmatprep.subr.mxu0 0.0
        %4254 = vmatpush2.msra.mxu0 0.0
        %4255 = vmatprep.subr.mxu0 0.0
        %4256 = vmatpush2.msra.mxu0 0.0
        %4257 = vmatprep.subr.mxu0 0.0
        %4258 = vmatpush2.msra.mxu0 0.0
        %4259 = vmatprep.subr.mxu0 0.0
        %4260 = vmatpush2.msra.mxu0 0.0
        %4261 = vmatprep.subr.mxu0 0.0
        %4262 = vmatpush2.msra.mxu0 0.0
        %4263 = vmatprep.subr.mxu0 0.0
        %4264 = vmatpush2.msra.mxu0 0.0
        %4265 = vmatprep.subr.mxu0 0.0
        %4266 = vmatpush2.msra.mxu0 0.0
        %4267 = vmatprep.subr.mxu0 0.0
        %4268 = vmatpush2.msra.mxu0 0.0
        %4269 = vmatprep.subr.mxu0 0.0
        %4270 = vmatpush2.msra.mxu0 0.0
        %4271 = vmatprep.subr.mxu0 0.0
        %4272 = vmatpush2.msra.mxu0 0.0
        %4273 = vmatprep.subr.mxu0 0.0
        %4274 = vmatpush2.msra.mxu0 0.0
        %4275 = vmatprep.subr.mxu0 0.0
        %4276 = vmatpush2.msra.mxu0 0.0
        %4277 = vmatprep.subr.mxu0 0.0
        %4278 = vmatpush2.msra.mxu0 0.0
        %4279 = vmatprep.mubr.f32.mxu0 0.0
        %4280 = vmatmul.mubr.f32.gmra.mxu0 %v4041
        %v4281 = vpop.f32.mrf.mxu0
        %v4282 = vadd.f32 %v4028, %v4281
        %v4283 = vpop.f32.mrf.mxu0
        %v4284 = vadd.f32 %v4028, %v4283
        %4285 = vmatprep.mubr.f32.mxu0 0.0
        %4286 = vmatmul.mubr.f32.gmra.mxu0 %v4044
        %v4287 = vpop.f32.mrf.mxu0
        %v4288 = vadd.f32 %v4033, %v4287
        %v4289 = vpop.f32.mrf.mxu0
        %v4290 = vadd.f32 %v4033, %v4289
        %4291 = vmatprep.mubr.f32.mxu0 0.0
        %4292 = vmatmul.mubr.f32.gmra.mxu0 %v4047
        %v4293 = vpop.f32.mrf.mxu0
        %v4294 = vadd.f32 %v4038, %v4293
        %v4295 = vpop.f32.mrf.mxu0
        %v4296 = vadd.f32 %v4038, %v4295
        %4297 = vdwg.mxu0
        %4298 = vmatprep.subr.mxu0 0.0
        %4299 = vmatpush1.msra.mxu0 0.0
        %4300 = vmatprep.subr.mxu0 0.0
        %4301 = vmatpush1.msra.mxu0 0.0
        %4302 = vmatprep.subr.mxu0 0.0
        %4303 = vmatpush1.msra.mxu0 0.0
        %4304 = vmatprep.subr.mxu0 0.0
        %4305 = vmatpush1.msra.mxu0 0.0
        %4306 = vmatprep.subr.mxu0 0.0
        %4307 = vmatpush1.msra.mxu0 0.0
        %4308 = vmatprep.subr.mxu0 0.0
        %4309 = vmatpush1.msra.mxu0 0.0
        %4310 = vmatprep.subr.mxu0 0.0
        %4311 = vmatpush1.msra.mxu0 0.0
        %4312 = vmatprep.subr.mxu0 0.0
        %4313 = vmatpush1.msra.mxu0 0.0
        %4314 = vmatprep.subr.mxu0 0.0
        %4315 = vmatpush1.msra.mxu0 0.0
        %4316 = vmatprep.subr.mxu0 0.0
        %4317 = vmatpush1.msra.mxu0 0.0
        %4318 = vmatprep.subr.mxu0 0.0
        %4319 = vmatpush1.msra.mxu0 0.0
        %4320 = vmatprep.subr.mxu0 0.0
        %4321 = vmatpush1.msra.mxu0 0.0
        %4322 = vmatprep.subr.mxu0 %v4016
        %4323 = vmatpush1.msra.mxu0 %v4015
        %4324 = vmatprep.subr.mxu0 %v4000
        %4325 = vmatpush1.msra.mxu0 %v3999
        %4326 = vmatprep.subr.mxu0 %v3984
        %4327 = vmatpush1.msra.mxu0 %v3983
        %4328 = vmatprep.subr.mxu0 %v3968
        %4329 = vmatpush1.msra.mxu0 %v3967
        %4330 = vmatprep.subr.mxu0 0.0
        %4331 = vmatpush2.msra.mxu0 0.0
        %4332 = vmatprep.subr.mxu0 0.0
        %4333 = vmatpush2.msra.mxu0 0.0
        %4334 = vmatprep.subr.mxu0 0.0
        %4335 = vmatpush2.msra.mxu0 0.0
        %4336 = vmatprep.subr.mxu0 0.0
        %4337 = vmatpush2.msra.mxu0 0.0
        %4338 = vmatprep.subr.mxu0 0.0
        %4339 = vmatpush2.msra.mxu0 0.0
        %4340 = vmatprep.subr.mxu0 0.0
        %4341 = vmatpush2.msra.mxu0 0.0
        %4342 = vmatprep.subr.mxu0 0.0
        %4343 = vmatpush2.msra.mxu0 0.0
        %4344 = vmatprep.subr.mxu0 0.0
        %4345 = vmatpush2.msra.mxu0 0.0
        %4346 = vmatprep.subr.mxu0 0.0
        %4347 = vmatpush2.msra.mxu0 0.0
        %4348 = vmatprep.subr.mxu0 0.0
        %4349 = vmatpush2.msra.mxu0 0.0
        %4350 = vmatprep.subr.mxu0 0.0
        %4351 = vmatpush2.msra.mxu0 0.0
        %4352 = vmatprep.subr.mxu0 0.0
        %4353 = vmatpush2.msra.mxu0 0.0
        %4354 = vmatprep.subr.mxu0 0.0
        %4355 = vmatpush2.msra.mxu0 0.0
        %4356 = vmatprep.subr.mxu0 0.0
        %4357 = vmatpush2.msra.mxu0 0.0
        %4358 = vmatprep.subr.mxu0 0.0
        %4359 = vmatpush2.msra.mxu0 0.0
        %4360 = vmatprep.subr.mxu0 0.0
        %4361 = vmatpush2.msra.mxu0 0.0
        %4362 = vmatprep.mubr.f32.mxu0 0.0
        %4363 = vmatmul.mubr.f32.gmra.mxu0 %v4041
        %v4364 = vpop.f32.mrf.mxu0
        %v4365 = vadd.f32 %v4028, %v4364
        %v4366 = vpop.f32.mrf.mxu0
        %v4367 = vadd.f32 %v4028, %v4366
        %4368 = vmatprep.mubr.f32.mxu0 0.0
        %4369 = vmatmul.mubr.f32.gmra.mxu0 %v4044
        %v4370 = vpop.f32.mrf.mxu0
        %v4371 = vadd.f32 %v4033, %v4370
        %v4372 = vpop.f32.mrf.mxu0
        %v4373 = vadd.f32 %v4033, %v4372
        %4374 = vmatprep.mubr.f32.mxu0 0.0
        %4375 = vmatmul.mubr.f32.gmra.mxu0 %v4047
        %v4376 = vpop.f32.mrf.mxu0
        %v4377 = vadd.f32 %v4038, %v4376
        %v4378 = vpop.f32.mrf.mxu0
        %v4379 = vadd.f32 %v4038, %v4378
        %4380 = vdwg.mxu0
        %4381 = vmatprep.subr.mxu0 0.0
        %4382 = vmatpush1.msra.mxu0 0.0
        %4383 = vmatprep.subr.mxu0 0.0
        %4384 = vmatpush1.msra.mxu0 0.0
        %4385 = vmatprep.subr.mxu0 0.0
        %4386 = vmatpush1.msra.mxu0 0.0
        %4387 = vmatprep.subr.mxu0 0.0
        %4388 = vmatpush1.msra.mxu0 0.0
        %4389 = vmatprep.subr.mxu0 0.0
        %4390 = vmatpush1.msra.mxu0 0.0
        %4391 = vmatprep.subr.mxu0 0.0
        %4392 = vmatpush1.msra.mxu0 0.0
        %4393 = vmatprep.subr.mxu0 0.0
        %4394 = vmatpush1.msra.mxu0 0.0
        %4395 = vmatprep.subr.mxu0 0.0
        %4396 = vmatpush1.msra.mxu0 0.0
        %4397 = vmatprep.subr.mxu0 0.0
        %4398 = vmatpush1.msra.mxu0 0.0
        %4399 = vmatprep.subr.mxu0 0.0
        %4400 = vmatpush1.msra.mxu0 0.0
        %4401 = vmatprep.subr.mxu0 0.0
        %4402 = vmatpush1.msra.mxu0 0.0
        %4403 = vmatprep.subr.mxu0 0.0
        %4404 = vmatpush1.msra.mxu0 0.0
        %4405 = vmatprep.subr.mxu0 %v4018
        %4406 = vmatpush1.msra.mxu0 %v4017
        %4407 = vmatprep.subr.mxu0 %v4002
        %4408 = vmatpush1.msra.mxu0 %v4001
        %4409 = vmatprep.subr.mxu0 %v3986
        %4410 = vmatpush1.msra.mxu0 %v3985
        %4411 = vmatprep.subr.mxu0 %v3970
        %4412 = vmatpush1.msra.mxu0 %v3969
        %4413 = vmatprep.subr.mxu0 0.0
        %4414 = vmatpush2.msra.mxu0 0.0
        %4415 = vmatprep.subr.mxu0 0.0
        %4416 = vmatpush2.msra.mxu0 0.0
        %4417 = vmatprep.subr.mxu0 0.0
        %4418 = vmatpush2.msra.mxu0 0.0
        %4419 = vmatprep.subr.mxu0 0.0
        %4420 = vmatpush2.msra.mxu0 0.0
        %4421 = vmatprep.subr.mxu0 0.0
        %4422 = vmatpush2.msra.mxu0 0.0
        %4423 = vmatprep.subr.mxu0 0.0
        %4424 = vmatpush2.msra.mxu0 0.0
        %4425 = vmatprep.subr.mxu0 0.0
        %4426 = vmatpush2.msra.mxu0 0.0
        %4427 = vmatprep.subr.mxu0 0.0
        %4428 = vmatpush2.msra.mxu0 0.0
        %4429 = vmatprep.subr.mxu0 0.0
        %4430 = vmatpush2.msra.mxu0 0.0
        %4431 = vmatprep.subr.mxu0 0.0
        %4432 = vmatpush2.msra.mxu0 0.0
        %4433 = vmatprep.subr.mxu0 0.0
        %4434 = vmatpush2.msra.mxu0 0.0
        %4435 = vmatprep.subr.mxu0 0.0
        %4436 = vmatpush2.msra.mxu0 0.0
        %4437 = vmatprep.subr.mxu0 0.0
        %4438 = vmatpush2.msra.mxu0 0.0
        %4439 = vmatprep.subr.mxu0 0.0
        %4440 = vmatpush2.msra.mxu0 0.0
        %4441 = vmatprep.subr.mxu0 0.0
        %4442 = vmatpush2.msra.mxu0 0.0
        %4443 = vmatprep.subr.mxu0 0.0
        %4444 = vmatpush2.msra.mxu0 0.0
        %4445 = vmatprep.mubr.f32.mxu0 0.0
        %4446 = vmatmul.mubr.f32.gmra.mxu0 %v4041
        %v4447 = vpop.f32.mrf.mxu0
        %v4448 = vadd.f32 %v4028, %v4447
        %v4449 = vpop.f32.mrf.mxu0
        %v4450 = vadd.f32 %v4028, %v4449
        %4451 = vmatprep.mubr.f32.mxu0 0.0
        %4452 = vmatmul.mubr.f32.gmra.mxu0 %v4044
        %v4453 = vpop.f32.mrf.mxu0
        %v4454 = vadd.f32 %v4033, %v4453
        %v4455 = vpop.f32.mrf.mxu0
        %v4456 = vadd.f32 %v4033, %v4455
        %4457 = vmatprep.mubr.f32.mxu0 0.0
        %4458 = vmatmul.mubr.f32.gmra.mxu0 %v4047
        %v4459 = vpop.f32.mrf.mxu0
        %v4460 = vadd.f32 %v4038, %v4459
        %v4461 = vpop.f32.mrf.mxu0
        %v4462 = vadd.f32 %v4038, %v4461
        %4463 = vdwg.mxu0
        %4464 = vmatprep.subr.mxu0 0.0
        %4465 = vmatpush1.msra.mxu0 0.0
        %4466 = vmatprep.subr.mxu0 0.0
        %4467 = vmatpush1.msra.mxu0 0.0
        %4468 = vmatprep.subr.mxu0 0.0
        %4469 = vmatpush1.msra.mxu0 0.0
        %4470 = vmatprep.subr.mxu0 0.0
        %4471 = vmatpush1.msra.mxu0 0.0
        %4472 = vmatprep.subr.mxu0 0.0
        %4473 = vmatpush1.msra.mxu0 0.0
        %4474 = vmatprep.subr.mxu0 0.0
        %4475 = vmatpush1.msra.mxu0 0.0
        %4476 = vmatprep.subr.mxu0 0.0
        %4477 = vmatpush1.msra.mxu0 0.0
        %4478 = vmatprep.subr.mxu0 0.0
        %4479 = vmatpush1.msra.mxu0 0.0
        %4480 = vmatprep.subr.mxu0 0.0
        %4481 = vmatpush1.msra.mxu0 0.0
        %4482 = vmatprep.subr.mxu0 0.0
        %4483 = vmatpush1.msra.mxu0 0.0
        %4484 = vmatprep.subr.mxu0 0.0
        %4485 = vmatpush1.msra.mxu0 0.0
        %4486 = vmatprep.subr.mxu0 0.0
        %4487 = vmatpush1.msra.mxu0 0.0
        %4488 = vmatprep.subr.mxu0 %v4020
        %4489 = vmatpush1.msra.mxu0 %v4019
        %4490 = vmatprep.subr.mxu0 %v4004
        %4491 = vmatpush1.msra.mxu0 %v4003
        %4492 = vmatprep.subr.mxu0 %v3988
        %4493 = vmatpush1.msra.mxu0 %v3987
        %4494 = vmatprep.subr.mxu0 %v3972
        %4495 = vmatpush1.msra.mxu0 %v3971
        %4496 = vmatprep.subr.mxu0 0.0
        %4497 = vmatpush2.msra.mxu0 0.0
        %4498 = vmatprep.subr.mxu0 0.0
        %4499 = vmatpush2.msra.mxu0 0.0
        %4500 = vmatprep.subr.mxu0 0.0
        %4501 = vmatpush2.msra.mxu0 0.0
        %4502 = vmatprep.subr.mxu0 0.0
        %4503 = vmatpush2.msra.mxu0 0.0
        %4504 = vmatprep.subr.mxu0 0.0
        %4505 = vmatpush2.msra.mxu0 0.0
        %4506 = vmatprep.subr.mxu0 0.0
        %4507 = vmatpush2.msra.mxu0 0.0
        %4508 = vmatprep.subr.mxu0 0.0
        %4509 = vmatpush2.msra.mxu0 0.0
        %4510 = vmatprep.subr.mxu0 0.0
        %4511 = vmatpush2.msra.mxu0 0.0
        %4512 = vmatprep.subr.mxu0 0.0
        %4513 = vmatpush2.msra.mxu0 0.0
        %4514 = vmatprep.subr.mxu0 0.0
        %4515 = vmatpush2.msra.mxu0 0.0
        %4516 = vmatprep.subr.mxu0 0.0
        %4517 = vmatpush2.msra.mxu0 0.0
        %4518 = vmatprep.subr.mxu0 0.0
        %4519 = vmatpush2.msra.mxu0 0.0
        %4520 = vmatprep.subr.mxu0 0.0
        %4521 = vmatpush2.msra.mxu0 0.0
        %4522 = vmatprep.subr.mxu0 0.0
        %4523 = vmatpush2.msra.mxu0 0.0
        %4524 = vmatprep.subr.mxu0 0.0
        %4525 = vmatpush2.msra.mxu0 0.0
        %4526 = vmatprep.subr.mxu0 0.0
        %4527 = vmatpush2.msra.mxu0 0.0
        %4528 = vmatprep.mubr.f32.mxu0 0.0
        %4529 = vmatmul.mubr.f32.gmra.mxu0 %v4041
        %v4530 = vpop.f32.mrf.mxu0
        %v4531 = vadd.f32 %v4028, %v4530
        %v4532 = vpop.f32.mrf.mxu0
        %v4533 = vadd.f32 %v4028, %v4532
        %4534 = vmatprep.mubr.f32.mxu0 0.0
        %4535 = vmatmul.mubr.f32.gmra.mxu0 %v4044
        %v4536 = vpop.f32.mrf.mxu0
        %v4537 = vadd.f32 %v4033, %v4536
        %v4538 = vpop.f32.mrf.mxu0
        %v4539 = vadd.f32 %v4033, %v4538
        %4540 = vmatprep.mubr.f32.mxu0 0.0
        %4541 = vmatmul.mubr.f32.gmra.mxu0 %v4047
        %v4542 = vpop.f32.mrf.mxu0
        %v4543 = vadd.f32 %v4038, %v4542
        %v4544 = vpop.f32.mrf.mxu0
        %v4545 = vadd.f32 %v4038, %v4544
        %4546 = vdwg.mxu0
        %4547 = vmatprep.subr.mxu0 0.0
        %4548 = vmatpush1.msra.mxu0 0.0
        %4549 = vmatprep.subr.mxu0 0.0
        %4550 = vmatpush1.msra.mxu0 0.0
        %4551 = vmatprep.subr.mxu0 0.0
        %4552 = vmatpush1.msra.mxu0 0.0
        %4553 = vmatprep.subr.mxu0 0.0
        %4554 = vmatpush1.msra.mxu0 0.0
        %4555 = vmatprep.subr.mxu0 0.0
        %4556 = vmatpush1.msra.mxu0 0.0
        %4557 = vmatprep.subr.mxu0 0.0
        %4558 = vmatpush1.msra.mxu0 0.0
        %4559 = vmatprep.subr.mxu0 0.0
        %4560 = vmatpush1.msra.mxu0 0.0
        %4561 = vmatprep.subr.mxu0 0.0
        %4562 = vmatpush1.msra.mxu0 0.0
        %4563 = vmatprep.subr.mxu0 0.0
        %4564 = vmatpush1.msra.mxu0 0.0
        %4565 = vmatprep.subr.mxu0 0.0
        %4566 = vmatpush1.msra.mxu0 0.0
        %4567 = vmatprep.subr.mxu0 0.0
        %4568 = vmatpush1.msra.mxu0 0.0
        %4569 = vmatprep.subr.mxu0 0.0
        %4570 = vmatpush1.msra.mxu0 0.0
        %4571 = vmatprep.subr.mxu0 %v4022
        %4572 = vmatpush1.msra.mxu0 %v4021
        %4573 = vmatprep.subr.mxu0 %v4006
        %4574 = vmatpush1.msra.mxu0 %v4005
        %4575 = vmatprep.subr.mxu0 %v3990
        %4576 = vmatpush1.msra.mxu0 %v3989
        %4577 = vmatprep.subr.mxu0 %v3974
        %4578 = vmatpush1.msra.mxu0 %v3973
        %4579 = vmatprep.subr.mxu0 0.0
        %4580 = vmatpush2.msra.mxu0 0.0
        %4581 = vmatprep.subr.mxu0 0.0
        %4582 = vmatpush2.msra.mxu0 0.0
        %4583 = vmatprep.subr.mxu0 0.0
        %4584 = vmatpush2.msra.mxu0 0.0
        %4585 = vmatprep.subr.mxu0 0.0
        %4586 = vmatpush2.msra.mxu0 0.0
        %4587 = vmatprep.subr.mxu0 0.0
        %4588 = vmatpush2.msra.mxu0 0.0
        %4589 = vmatprep.subr.mxu0 0.0
        %4590 = vmatpush2.msra.mxu0 0.0
        %4591 = vmatprep.subr.mxu0 0.0
        %4592 = vmatpush2.msra.mxu0 0.0
        %4593 = vmatprep.subr.mxu0 0.0
        %4594 = vmatpush2.msra.mxu0 0.0
        %4595 = vmatprep.subr.mxu0 0.0
        %4596 = vmatpush2.msra.mxu0 0.0
        %4597 = vmatprep.subr.mxu0 0.0
        %4598 = vmatpush2.msra.mxu0 0.0
        %4599 = vmatprep.subr.mxu0 0.0
        %4600 = vmatpush2.msra.mxu0 0.0
        %4601 = vmatprep.subr.mxu0 0.0
        %4602 = vmatpush2.msra.mxu0 0.0
        %4603 = vmatprep.subr.mxu0 0.0
        %4604 = vmatpush2.msra.mxu0 0.0
        %4605 = vmatprep.subr.mxu0 0.0
        %4606 = vmatpush2.msra.mxu0 0.0
        %4607 = vmatprep.subr.mxu0 0.0
        %4608 = vmatpush2.msra.mxu0 0.0
        %4609 = vmatprep.subr.mxu0 0.0
        %4610 = vmatpush2.msra.mxu0 0.0
        %4611 = vmatprep.mubr.f32.mxu0 0.0
        %4612 = vmatmul.mubr.f32.gmra.mxu0 %v4041
        %v4613 = vpop.f32.mrf.mxu0
        %v4614 = vadd.f32 %v4028, %v4613
        %v4615 = vpop.f32.mrf.mxu0
        %v4616 = vadd.f32 %v4028, %v4615
        %4617 = vmatprep.mubr.f32.mxu0 0.0
        %4618 = vmatmul.mubr.f32.gmra.mxu0 %v4044
        %v4619 = vpop.f32.mrf.mxu0
        %v4620 = vadd.f32 %v4033, %v4619
        %v4621 = vpop.f32.mrf.mxu0
        %v4622 = vadd.f32 %v4033, %v4621
        %4623 = vmatprep.mubr.f32.mxu0 0.0
        %4624 = vmatmul.mubr.f32.gmra.mxu0 %v4047
        %v4625 = vpop.f32.mrf.mxu0
        %v4626 = vadd.f32 %v4038, %v4625
        %v4627 = vpop.f32.mrf.mxu0
        %v4628 = vadd.f32 %v4038, %v4627
        %4629 = vdwg.mxu0
        %4630 = vmatprep.subr.mxu0 0.0
        %4631 = vmatpush1.msra.mxu0 0.0
        %4632 = vmatprep.subr.mxu0 0.0
        %4633 = vmatpush1.msra.mxu0 0.0
        %4634 = vmatprep.subr.mxu0 0.0
        %4635 = vmatpush1.msra.mxu0 0.0
        %4636 = vmatprep.subr.mxu0 0.0
        %4637 = vmatpush1.msra.mxu0 0.0
        %4638 = vmatprep.subr.mxu0 0.0
        %4639 = vmatpush1.msra.mxu0 0.0
        %4640 = vmatprep.subr.mxu0 0.0
        %4641 = vmatpush1.msra.mxu0 0.0
        %4642 = vmatprep.subr.mxu0 0.0
        %4643 = vmatpush1.msra.mxu0 0.0
        %4644 = vmatprep.subr.mxu0 0.0
        %4645 = vmatpush1.msra.mxu0 0.0
        %4646 = vmatprep.subr.mxu0 0.0
        %4647 = vmatpush1.msra.mxu0 0.0
        %4648 = vmatprep.subr.mxu0 0.0
        %4649 = vmatpush1.msra.mxu0 0.0
        %4650 = vmatprep.subr.mxu0 0.0
        %4651 = vmatpush1.msra.mxu0 0.0
        %4652 = vmatprep.subr.mxu0 0.0
        %4653 = vmatpush1.msra.mxu0 0.0
        %4654 = vmatprep.subr.mxu0 %v4024
        %4655 = vmatpush1.msra.mxu0 %v4023
        %4656 = vmatprep.subr.mxu0 %v4008
        %4657 = vmatpush1.msra.mxu0 %v4007
        %4658 = vmatprep.subr.mxu0 %v3992
        %4659 = vmatpush1.msra.mxu0 %v3991
        %4660 = vmatprep.subr.mxu0 %v3976
        %4661 = vmatpush1.msra.mxu0 %v3975
        %4662 = vmatprep.subr.mxu0 0.0
        %4663 = vmatpush2.msra.mxu0 0.0
        %4664 = vmatprep.subr.mxu0 0.0
        %4665 = vmatpush2.msra.mxu0 0.0
        %4666 = vmatprep.subr.mxu0 0.0
        %4667 = vmatpush2.msra.mxu0 0.0
        %4668 = vmatprep.subr.mxu0 0.0
        %4669 = vmatpush2.msra.mxu0 0.0
        %4670 = vmatprep.subr.mxu0 0.0
        %4671 = vmatpush2.msra.mxu0 0.0
        %4672 = vmatprep.subr.mxu0 0.0
        %4673 = vmatpush2.msra.mxu0 0.0
        %4674 = vmatprep.subr.mxu0 0.0
        %4675 = vmatpush2.msra.mxu0 0.0
        %4676 = vmatprep.subr.mxu0 0.0
        %4677 = vmatpush2.msra.mxu0 0.0
        %4678 = vmatprep.subr.mxu0 0.0
        %4679 = vmatpush2.msra.mxu0 0.0
        %4680 = vmatprep.subr.mxu0 0.0
        %4681 = vmatpush2.msra.mxu0 0.0
        %4682 = vmatprep.subr.mxu0 0.0
        %4683 = vmatpush2.msra.mxu0 0.0
        %4684 = vmatprep.subr.mxu0 0.0
        %4685 = vmatpush2.msra.mxu0 0.0
        %4686 = vmatprep.subr.mxu0 0.0
        %4687 = vmatpush2.msra.mxu0 0.0
        %4688 = vmatprep.subr.mxu0 0.0
        %4689 = vmatpush2.msra.mxu0 0.0
        %4690 = vmatprep.subr.mxu0 0.0
        %4691 = vmatpush2.msra.mxu0 0.0
        %4692 = vmatprep.subr.mxu0 0.0
        %4693 = vmatpush2.msra.mxu0 0.0
        %4694 = vmatprep.mubr.f32.mxu0 0.0
        %4695 = vmatmul.mubr.f32.gmra.mxu0 %v4041
        %v4696 = vpop.f32.mrf.mxu0
        %v4697 = vadd.f32 %v4028, %v4696
        %v4698 = vpop.f32.mrf.mxu0
        %v4699 = vadd.f32 %v4028, %v4698
        %4700 = vmatprep.mubr.f32.mxu0 0.0
        %4701 = vmatmul.mubr.f32.gmra.mxu0 %v4044
        %v4702 = vpop.f32.mrf.mxu0
        %v4703 = vadd.f32 %v4033, %v4702
        %v4704 = vpop.f32.mrf.mxu0
        %v4705 = vadd.f32 %v4033, %v4704
        %4706 = vmatprep.mubr.f32.mxu0 0.0
        %4707 = vmatmul.mubr.f32.gmra.mxu0 %v4047
        %v4708 = vpop.f32.mrf.mxu0
        %v4709 = vadd.f32 %v4038, %v4708
        %v4710 = vpop.f32.mrf.mxu0
        %v4711 = vadd.f32 %v4038, %v4710
        %4712 = vdwg.mxu0
        %4714 = vset.pattern.permute.xlu0 0
        %4715 = vperm.xlu0 %4714, %v594
        %v4716 = vpop.permute.xlu0 %4715
        %4719 = vset.pattern.permute.xlu0 0
        %4720 = vperm.xlu0 %4719, %v595
        %v4721 = vpop.permute.xlu0 %4720
        %4724 = vset.pattern.permute.xlu0 0
        %4725 = vperm.xlu0 %4724, %v596
        %v4726 = vpop.permute.xlu0 %4725
        %4729 = vset.pattern.permute.xlu0 0
        %4730 = vperm.xlu0 %4729, %v597
        %v4731 = vpop.permute.xlu0 %4730
        %v4733 = vmul.f32 %v3642, %v4716
        %v4734 = vmul.f32 %v3644, %v4716
        %v4735 = vmul.f32 %v3646, %v4716
        %v4736 = vmul.f32 %v3648, %v4716
        %v4737 = vmul.f32 %v3650, %v4716
        %v4738 = vmul.f32 %v3652, %v4716
        %v4739 = vmul.f32 %v3654, %v4716
        %v4740 = vmul.f32 %v3656, %v4716
        %v4741 = vmul.f32 %v3658, %v4716
        %v4742 = vmul.f32 %v3660, %v4716
        %v4743 = vmul.f32 %v3662, %v4716
        %v4744 = vmul.f32 %v3664, %v4716
        %v4745 = vmul.f32 %v3666, %v4716
        %v4746 = vmul.f32 %v3668, %v4716
        %v4747 = vmul.f32 %v3670, %v4716
        %v4748 = vmul.f32 %v3672, %v4716
        %v4749 = vmul.f32 %v3674, %v4721
        %v4750 = vmul.f32 %v3676, %v4721
        %v4751 = vmul.f32 %v3678, %v4721
        %v4752 = vmul.f32 %v3680, %v4721
        %v4753 = vmul.f32 %v3682, %v4721
        %v4754 = vmul.f32 %v3684, %v4721
        %v4755 = vmul.f32 %v3686, %v4721
        %v4756 = vmul.f32 %v3688, %v4721
        %v4757 = vmul.f32 %v3690, %v4721
        %v4758 = vmul.f32 %v3692, %v4721
        %v4759 = vmul.f32 %v3694, %v4721
        %v4760 = vmul.f32 %v3696, %v4721
        %v4761 = vmul.f32 %v3698, %v4721
        %v4762 = vmul.f32 %v3700, %v4721
        %v4763 = vmul.f32 %v3702, %v4721
        %v4764 = vmul.f32 %v3704, %v4721
        %v4765 = vmul.f32 %v3706, %v4726
        %v4766 = vmul.f32 %v3708, %v4726
        %v4767 = vmul.f32 %v3710, %v4726
        %v4768 = vmul.f32 %v3712, %v4726
        %v4769 = vmul.f32 %v3714, %v4726
        %v4770 = vmul.f32 %v3716, %v4726
        %v4771 = vmul.f32 %v3718, %v4726
        %v4772 = vmul.f32 %v3720, %v4726
        %v4773 = vmul.f32 %v3722, %v4726
        %v4774 = vmul.f32 %v3724, %v4726
        %v4775 = vmul.f32 %v3726, %v4726
        %v4776 = vmul.f32 %v3728, %v4726
        %v4777 = vmul.f32 %v3730, %v4726
        %v4778 = vmul.f32 %v3732, %v4726
        %v4779 = vmul.f32 %v3734, %v4726
        %v4780 = vmul.f32 %v3736, %v4726
        %v4781 = vmul.f32 %v3738, %v4731
        %v4782 = vmul.f32 %v3740, %v4731
        %v4783 = vmul.f32 %v3742, %v4731
        %v4784 = vmul.f32 %v3744, %v4731
        %v4785 = vmul.f32 %v3746, %v4731
        %v4786 = vmul.f32 %v3748, %v4731
        %v4787 = vmul.f32 %v3750, %v4731
        %v4788 = vmul.f32 %v3752, %v4731
        %v4789 = vmul.f32 %v3754, %v4731
        %v4790 = vmul.f32 %v3756, %v4731
        %v4791 = vmul.f32 %v3758, %v4731
        %v4792 = vmul.f32 %v3760, %v4731
        %v4793 = vmul.f32 %v3762, %v4731
        %v4794 = vmul.f32 %v3764, %v4731
        %v4795 = vmul.f32 %v3766, %v4731
        %v4796 = vmul.f32 %v3768, %v4731
        %v4798 = vsel %vm2468, %v590, 0
        %v4801 = vsel %vm2468, %v591, 0
        %v4804 = vsel %vm2468, %v592, 0
        %v4807 = vsel %vm2468, %v593, 0
        %4809 = vmatprep.subr.mxu0 0.0
        %4810 = vmatpush1.msra.mxu0 0.0
        %4811 = vmatprep.subr.mxu0 0.0
        %4812 = vmatpush1.msra.mxu0 0.0
        %4813 = vmatprep.subr.mxu0 0.0
        %4814 = vmatpush1.msra.mxu0 0.0
        %4815 = vmatprep.subr.mxu0 0.0
        %4816 = vmatpush1.msra.mxu0 0.0
        %4817 = vmatprep.subr.mxu0 0.0
        %4818 = vmatpush1.msra.mxu0 0.0
        %4819 = vmatprep.subr.mxu0 0.0
        %4820 = vmatpush1.msra.mxu0 0.0
        %4821 = vmatprep.subr.mxu0 0.0
        %4822 = vmatpush1.msra.mxu0 0.0
        %4823 = vmatprep.subr.mxu0 0.0
        %4824 = vmatpush1.msra.mxu0 0.0
        %4825 = vmatprep.subr.mxu0 0.0
        %4826 = vmatpush1.msra.mxu0 0.0
        %4827 = vmatprep.subr.mxu0 0.0
        %4828 = vmatpush1.msra.mxu0 0.0
        %4829 = vmatprep.subr.mxu0 0.0
        %4830 = vmatpush1.msra.mxu0 0.0
        %4831 = vmatprep.subr.mxu0 0.0
        %4832 = vmatpush1.msra.mxu0 0.0
        %4833 = vmatprep.subr.mxu0 %v4782
        %4834 = vmatpush1.msra.mxu0 %v4781
        %4835 = vmatprep.subr.mxu0 %v4766
        %4836 = vmatpush1.msra.mxu0 %v4765
        %4837 = vmatprep.subr.mxu0 %v4750
        %4838 = vmatpush1.msra.mxu0 %v4749
        %4839 = vmatprep.subr.mxu0 %v4734
        %4840 = vmatpush1.msra.mxu0 %v4733
        %4841 = vmatprep.subr.mxu0 0.0
        %4842 = vmatpush2.msra.mxu0 0.0
        %4843 = vmatprep.subr.mxu0 0.0
        %4844 = vmatpush2.msra.mxu0 0.0
        %4845 = vmatprep.subr.mxu0 0.0
        %4846 = vmatpush2.msra.mxu0 0.0
        %4847 = vmatprep.subr.mxu0 0.0
        %4848 = vmatpush2.msra.mxu0 0.0
        %4849 = vmatprep.subr.mxu0 0.0
        %4850 = vmatpush2.msra.mxu0 0.0
        %4851 = vmatprep.subr.mxu0 0.0
        %4852 = vmatpush2.msra.mxu0 0.0
        %4853 = vmatprep.subr.mxu0 0.0
        %4854 = vmatpush2.msra.mxu0 0.0
        %4855 = vmatprep.subr.mxu0 0.0
        %4856 = vmatpush2.msra.mxu0 0.0
        %4857 = vmatprep.subr.mxu0 0.0
        %4858 = vmatpush2.msra.mxu0 0.0
        %4859 = vmatprep.subr.mxu0 0.0
        %4860 = vmatpush2.msra.mxu0 0.0
        %4861 = vmatprep.subr.mxu0 0.0
        %4862 = vmatpush2.msra.mxu0 0.0
        %4863 = vmatprep.subr.mxu0 0.0
        %4864 = vmatpush2.msra.mxu0 0.0
        %4865 = vmatprep.subr.mxu0 0.0
        %4866 = vmatpush2.msra.mxu0 0.0
        %4867 = vmatprep.subr.mxu0 0.0
        %4868 = vmatpush2.msra.mxu0 0.0
        %4869 = vmatprep.subr.mxu0 0.0
        %4870 = vmatpush2.msra.mxu0 0.0
        %4871 = vmatprep.subr.mxu0 0.0
        %4872 = vmatpush2.msra.mxu0 0.0
        %4873 = vmatprep.mubr.f32.mxu0 0.0
        %4874 = vmatmul.mubr.f32.gmra.mxu0 %v4798
        %v4875 = vpop.f32.mrf.mxu0
        %v4876 = vadd.f32 0.0, %v4875
        %v4877 = vpop.f32.mrf.mxu0
        %v4878 = vadd.f32 0.0, %v4877
        %4879 = vmatprep.mubr.f32.mxu0 0.0
        %4880 = vmatmul.mubr.f32.gmra.mxu0 %v4801
        %v4881 = vpop.f32.mrf.mxu0
        %v4882 = vadd.f32 0.0, %v4881
        %v4883 = vpop.f32.mrf.mxu0
        %v4884 = vadd.f32 0.0, %v4883
        %4885 = vmatprep.mubr.f32.mxu0 0.0
        %4886 = vmatmul.mubr.f32.gmra.mxu0 %v4804
        %v4887 = vpop.f32.mrf.mxu0
        %v4888 = vadd.f32 0.0, %v4887
        %v4889 = vpop.f32.mrf.mxu0
        %v4890 = vadd.f32 0.0, %v4889
        %4891 = vmatprep.mubr.f32.mxu0 0.0
        %4892 = vmatmul.mubr.f32.gmra.mxu0 %v4807
        %v4893 = vpop.f32.mrf.mxu0
        %v4894 = vadd.f32 0.0, %v4893
        %v4895 = vpop.f32.mrf.mxu0
        %v4896 = vadd.f32 0.0, %v4895
        %4897 = vdwg.mxu0
        %4898 = vmatprep.subr.mxu0 0.0
        %4899 = vmatpush1.msra.mxu0 0.0
        %4900 = vmatprep.subr.mxu0 0.0
        %4901 = vmatpush1.msra.mxu0 0.0
        %4902 = vmatprep.subr.mxu0 0.0
        %4903 = vmatpush1.msra.mxu0 0.0
        %4904 = vmatprep.subr.mxu0 0.0
        %4905 = vmatpush1.msra.mxu0 0.0
        %4906 = vmatprep.subr.mxu0 0.0
        %4907 = vmatpush1.msra.mxu0 0.0
        %4908 = vmatprep.subr.mxu0 0.0
        %4909 = vmatpush1.msra.mxu0 0.0
        %4910 = vmatprep.subr.mxu0 0.0
        %4911 = vmatpush1.msra.mxu0 0.0
        %4912 = vmatprep.subr.mxu0 0.0
        %4913 = vmatpush1.msra.mxu0 0.0
        %4914 = vmatprep.subr.mxu0 0.0
        %4915 = vmatpush1.msra.mxu0 0.0
        %4916 = vmatprep.subr.mxu0 0.0
        %4917 = vmatpush1.msra.mxu0 0.0
        %4918 = vmatprep.subr.mxu0 0.0
        %4919 = vmatpush1.msra.mxu0 0.0
        %4920 = vmatprep.subr.mxu0 0.0
        %4921 = vmatpush1.msra.mxu0 0.0
        %4922 = vmatprep.subr.mxu0 %v4784
        %4923 = vmatpush1.msra.mxu0 %v4783
        %4924 = vmatprep.subr.mxu0 %v4768
        %4925 = vmatpush1.msra.mxu0 %v4767
        %4926 = vmatprep.subr.mxu0 %v4752
        %4927 = vmatpush1.msra.mxu0 %v4751
        %4928 = vmatprep.subr.mxu0 %v4736
        %4929 = vmatpush1.msra.mxu0 %v4735
        %4930 = vmatprep.subr.mxu0 0.0
        %4931 = vmatpush2.msra.mxu0 0.0
        %4932 = vmatprep.subr.mxu0 0.0
        %4933 = vmatpush2.msra.mxu0 0.0
        %4934 = vmatprep.subr.mxu0 0.0
        %4935 = vmatpush2.msra.mxu0 0.0
        %4936 = vmatprep.subr.mxu0 0.0
        %4937 = vmatpush2.msra.mxu0 0.0
        %4938 = vmatprep.subr.mxu0 0.0
        %4939 = vmatpush2.msra.mxu0 0.0
        %4940 = vmatprep.subr.mxu0 0.0
        %4941 = vmatpush2.msra.mxu0 0.0
        %4942 = vmatprep.subr.mxu0 0.0
        %4943 = vmatpush2.msra.mxu0 0.0
        %4944 = vmatprep.subr.mxu0 0.0
        %4945 = vmatpush2.msra.mxu0 0.0
        %4946 = vmatprep.subr.mxu0 0.0
        %4947 = vmatpush2.msra.mxu0 0.0
        %4948 = vmatprep.subr.mxu0 0.0
        %4949 = vmatpush2.msra.mxu0 0.0
        %4950 = vmatprep.subr.mxu0 0.0
        %4951 = vmatpush2.msra.mxu0 0.0
        %4952 = vmatprep.subr.mxu0 0.0
        %4953 = vmatpush2.msra.mxu0 0.0
        %4954 = vmatprep.subr.mxu0 0.0
        %4955 = vmatpush2.msra.mxu0 0.0
        %4956 = vmatprep.subr.mxu0 0.0
        %4957 = vmatpush2.msra.mxu0 0.0
        %4958 = vmatprep.subr.mxu0 0.0
        %4959 = vmatpush2.msra.mxu0 0.0
        %4960 = vmatprep.subr.mxu0 0.0
        %4961 = vmatpush2.msra.mxu0 0.0
        %4962 = vmatprep.mubr.f32.mxu0 0.0
        %4963 = vmatmul.mubr.f32.gmra.mxu0 %v4798
        %v4964 = vpop.f32.mrf.mxu0
        %v4965 = vadd.f32 0.0, %v4964
        %v4966 = vpop.f32.mrf.mxu0
        %v4967 = vadd.f32 0.0, %v4966
        %4968 = vmatprep.mubr.f32.mxu0 0.0
        %4969 = vmatmul.mubr.f32.gmra.mxu0 %v4801
        %v4970 = vpop.f32.mrf.mxu0
        %v4971 = vadd.f32 0.0, %v4970
        %v4972 = vpop.f32.mrf.mxu0
        %v4973 = vadd.f32 0.0, %v4972
        %4974 = vmatprep.mubr.f32.mxu0 0.0
        %4975 = vmatmul.mubr.f32.gmra.mxu0 %v4804
        %v4976 = vpop.f32.mrf.mxu0
        %v4977 = vadd.f32 0.0, %v4976
        %v4978 = vpop.f32.mrf.mxu0
        %v4979 = vadd.f32 0.0, %v4978
        %4980 = vmatprep.mubr.f32.mxu0 0.0
        %4981 = vmatmul.mubr.f32.gmra.mxu0 %v4807
        %v4982 = vpop.f32.mrf.mxu0
        %v4983 = vadd.f32 0.0, %v4982
        %v4984 = vpop.f32.mrf.mxu0
        %v4985 = vadd.f32 0.0, %v4984
        %4986 = vdwg.mxu0
        %4987 = vmatprep.subr.mxu0 0.0
        %4988 = vmatpush1.msra.mxu0 0.0
        %4989 = vmatprep.subr.mxu0 0.0
        %4990 = vmatpush1.msra.mxu0 0.0
        %4991 = vmatprep.subr.mxu0 0.0
        %4992 = vmatpush1.msra.mxu0 0.0
        %4993 = vmatprep.subr.mxu0 0.0
        %4994 = vmatpush1.msra.mxu0 0.0
        %4995 = vmatprep.subr.mxu0 0.0
        %4996 = vmatpush1.msra.mxu0 0.0
        %4997 = vmatprep.subr.mxu0 0.0
        %4998 = vmatpush1.msra.mxu0 0.0
        %4999 = vmatprep.subr.mxu0 0.0
        %5000 = vmatpush1.msra.mxu0 0.0
        %5001 = vmatprep.subr.mxu0 0.0
        %5002 = vmatpush1.msra.mxu0 0.0
        %5003 = vmatprep.subr.mxu0 0.0
        %5004 = vmatpush1.msra.mxu0 0.0
        %5005 = vmatprep.subr.mxu0 0.0
        %5006 = vmatpush1.msra.mxu0 0.0
        %5007 = vmatprep.subr.mxu0 0.0
        %5008 = vmatpush1.msra.mxu0 0.0
        %5009 = vmatprep.subr.mxu0 0.0
        %5010 = vmatpush1.msra.mxu0 0.0
        %5011 = vmatprep.subr.mxu0 %v4786
        %5012 = vmatpush1.msra.mxu0 %v4785
        %5013 = vmatprep.subr.mxu0 %v4770
        %5014 = vmatpush1.msra.mxu0 %v4769
        %5015 = vmatprep.subr.mxu0 %v4754
        %5016 = vmatpush1.msra.mxu0 %v4753
        %5017 = vmatprep.subr.mxu0 %v4738
        %5018 = vmatpush1.msra.mxu0 %v4737
        %5019 = vmatprep.subr.mxu0 0.0
        %5020 = vmatpush2.msra.mxu0 0.0
        %5021 = vmatprep.subr.mxu0 0.0
        %5022 = vmatpush2.msra.mxu0 0.0
        %5023 = vmatprep.subr.mxu0 0.0
        %5024 = vmatpush2.msra.mxu0 0.0
        %5025 = vmatprep.subr.mxu0 0.0
        %5026 = vmatpush2.msra.mxu0 0.0
        %5027 = vmatprep.subr.mxu0 0.0
        %5028 = vmatpush2.msra.mxu0 0.0
        %5029 = vmatprep.subr.mxu0 0.0
        %5030 = vmatpush2.msra.mxu0 0.0
        %5031 = vmatprep.subr.mxu0 0.0
        %5032 = vmatpush2.msra.mxu0 0.0
        %5033 = vmatprep.subr.mxu0 0.0
        %5034 = vmatpush2.msra.mxu0 0.0
        %5035 = vmatprep.subr.mxu0 0.0
        %5036 = vmatpush2.msra.mxu0 0.0
        %5037 = vmatprep.subr.mxu0 0.0
        %5038 = vmatpush2.msra.mxu0 0.0
        %5039 = vmatprep.subr.mxu0 0.0
        %5040 = vmatpush2.msra.mxu0 0.0
        %5041 = vmatprep.subr.mxu0 0.0
        %5042 = vmatpush2.msra.mxu0 0.0
        %5043 = vmatprep.subr.mxu0 0.0
        %5044 = vmatpush2.msra.mxu0 0.0
        %5045 = vmatprep.subr.mxu0 0.0
        %5046 = vmatpush2.msra.mxu0 0.0
        %5047 = vmatprep.subr.mxu0 0.0
        %5048 = vmatpush2.msra.mxu0 0.0
        %5049 = vmatprep.subr.mxu0 0.0
        %5050 = vmatpush2.msra.mxu0 0.0
        %5051 = vmatprep.mubr.f32.mxu0 0.0
        %5052 = vmatmul.mubr.f32.gmra.mxu0 %v4798
        %v5053 = vpop.f32.mrf.mxu0
        %v5054 = vadd.f32 0.0, %v5053
        %v5055 = vpop.f32.mrf.mxu0
        %v5056 = vadd.f32 0.0, %v5055
        %5057 = vmatprep.mubr.f32.mxu0 0.0
        %5058 = vmatmul.mubr.f32.gmra.mxu0 %v4801
        %v5059 = vpop.f32.mrf.mxu0
        %v5060 = vadd.f32 0.0, %v5059
        %v5061 = vpop.f32.mrf.mxu0
        %v5062 = vadd.f32 0.0, %v5061
        %5063 = vmatprep.mubr.f32.mxu0 0.0
        %5064 = vmatmul.mubr.f32.gmra.mxu0 %v4804
        %v5065 = vpop.f32.mrf.mxu0
        %v5066 = vadd.f32 0.0, %v5065
        %v5067 = vpop.f32.mrf.mxu0
        %v5068 = vadd.f32 0.0, %v5067
        %5069 = vmatprep.mubr.f32.mxu0 0.0
        %5070 = vmatmul.mubr.f32.gmra.mxu0 %v4807
        %v5071 = vpop.f32.mrf.mxu0
        %v5072 = vadd.f32 0.0, %v5071
        %v5073 = vpop.f32.mrf.mxu0
        %v5074 = vadd.f32 0.0, %v5073
        %5075 = vdwg.mxu0
        %5076 = vmatprep.subr.mxu0 0.0
        %5077 = vmatpush1.msra.mxu0 0.0
        %5078 = vmatprep.subr.mxu0 0.0
        %5079 = vmatpush1.msra.mxu0 0.0
        %5080 = vmatprep.subr.mxu0 0.0
        %5081 = vmatpush1.msra.mxu0 0.0
        %5082 = vmatprep.subr.mxu0 0.0
        %5083 = vmatpush1.msra.mxu0 0.0
        %5084 = vmatprep.subr.mxu0 0.0
        %5085 = vmatpush1.msra.mxu0 0.0
        %5086 = vmatprep.subr.mxu0 0.0
        %5087 = vmatpush1.msra.mxu0 0.0
        %5088 = vmatprep.subr.mxu0 0.0
        %5089 = vmatpush1.msra.mxu0 0.0
        %5090 = vmatprep.subr.mxu0 0.0
        %5091 = vmatpush1.msra.mxu0 0.0
        %5092 = vmatprep.subr.mxu0 0.0
        %5093 = vmatpush1.msra.mxu0 0.0
        %5094 = vmatprep.subr.mxu0 0.0
        %5095 = vmatpush1.msra.mxu0 0.0
        %5096 = vmatprep.subr.mxu0 0.0
        %5097 = vmatpush1.msra.mxu0 0.0
        %5098 = vmatprep.subr.mxu0 0.0
        %5099 = vmatpush1.msra.mxu0 0.0
        %5100 = vmatprep.subr.mxu0 %v4788
        %5101 = vmatpush1.msra.mxu0 %v4787
        %5102 = vmatprep.subr.mxu0 %v4772
        %5103 = vmatpush1.msra.mxu0 %v4771
        %5104 = vmatprep.subr.mxu0 %v4756
        %5105 = vmatpush1.msra.mxu0 %v4755
        %5106 = vmatprep.subr.mxu0 %v4740
        %5107 = vmatpush1.msra.mxu0 %v4739
        %5108 = vmatprep.subr.mxu0 0.0
        %5109 = vmatpush2.msra.mxu0 0.0
        %5110 = vmatprep.subr.mxu0 0.0
        %5111 = vmatpush2.msra.mxu0 0.0
        %5112 = vmatprep.subr.mxu0 0.0
        %5113 = vmatpush2.msra.mxu0 0.0
        %5114 = vmatprep.subr.mxu0 0.0
        %5115 = vmatpush2.msra.mxu0 0.0
        %5116 = vmatprep.subr.mxu0 0.0
        %5117 = vmatpush2.msra.mxu0 0.0
        %5118 = vmatprep.subr.mxu0 0.0
        %5119 = vmatpush2.msra.mxu0 0.0
        %5120 = vmatprep.subr.mxu0 0.0
        %5121 = vmatpush2.msra.mxu0 0.0
        %5122 = vmatprep.subr.mxu0 0.0
        %5123 = vmatpush2.msra.mxu0 0.0
        %5124 = vmatprep.subr.mxu0 0.0
        %5125 = vmatpush2.msra.mxu0 0.0
        %5126 = vmatprep.subr.mxu0 0.0
        %5127 = vmatpush2.msra.mxu0 0.0
        %5128 = vmatprep.subr.mxu0 0.0
        %5129 = vmatpush2.msra.mxu0 0.0
        %5130 = vmatprep.subr.mxu0 0.0
        %5131 = vmatpush2.msra.mxu0 0.0
        %5132 = vmatprep.subr.mxu0 0.0
        %5133 = vmatpush2.msra.mxu0 0.0
        %5134 = vmatprep.subr.mxu0 0.0
        %5135 = vmatpush2.msra.mxu0 0.0
        %5136 = vmatprep.subr.mxu0 0.0
        %5137 = vmatpush2.msra.mxu0 0.0
        %5138 = vmatprep.subr.mxu0 0.0
        %5139 = vmatpush2.msra.mxu0 0.0
        %5140 = vmatprep.mubr.f32.mxu0 0.0
        %5141 = vmatmul.mubr.f32.gmra.mxu0 %v4798
        %v5142 = vpop.f32.mrf.mxu0
        %v5143 = vadd.f32 0.0, %v5142
        %v5144 = vpop.f32.mrf.mxu0
        %v5145 = vadd.f32 0.0, %v5144
        %5146 = vmatprep.mubr.f32.mxu0 0.0
        %5147 = vmatmul.mubr.f32.gmra.mxu0 %v4801
        %v5148 = vpop.f32.mrf.mxu0
        %v5149 = vadd.f32 0.0, %v5148
        %v5150 = vpop.f32.mrf.mxu0
        %v5151 = vadd.f32 0.0, %v5150
        %5152 = vmatprep.mubr.f32.mxu0 0.0
        %5153 = vmatmul.mubr.f32.gmra.mxu0 %v4804
        %v5154 = vpop.f32.mrf.mxu0
        %v5155 = vadd.f32 0.0, %v5154
        %v5156 = vpop.f32.mrf.mxu0
        %v5157 = vadd.f32 0.0, %v5156
        %5158 = vmatprep.mubr.f32.mxu0 0.0
        %5159 = vmatmul.mubr.f32.gmra.mxu0 %v4807
        %v5160 = vpop.f32.mrf.mxu0
        %v5161 = vadd.f32 0.0, %v5160
        %v5162 = vpop.f32.mrf.mxu0
        %v5163 = vadd.f32 0.0, %v5162
        %5164 = vdwg.mxu0
        %5165 = vmatprep.subr.mxu0 0.0
        %5166 = vmatpush1.msra.mxu0 0.0
        %5167 = vmatprep.subr.mxu0 0.0
        %5168 = vmatpush1.msra.mxu0 0.0
        %5169 = vmatprep.subr.mxu0 0.0
        %5170 = vmatpush1.msra.mxu0 0.0
        %5171 = vmatprep.subr.mxu0 0.0
        %5172 = vmatpush1.msra.mxu0 0.0
        %5173 = vmatprep.subr.mxu0 0.0
        %5174 = vmatpush1.msra.mxu0 0.0
        %5175 = vmatprep.subr.mxu0 0.0
        %5176 = vmatpush1.msra.mxu0 0.0
        %5177 = vmatprep.subr.mxu0 0.0
        %5178 = vmatpush1.msra.mxu0 0.0
        %5179 = vmatprep.subr.mxu0 0.0
        %5180 = vmatpush1.msra.mxu0 0.0
        %5181 = vmatprep.subr.mxu0 0.0
        %5182 = vmatpush1.msra.mxu0 0.0
        %5183 = vmatprep.subr.mxu0 0.0
        %5184 = vmatpush1.msra.mxu0 0.0
        %5185 = vmatprep.subr.mxu0 0.0
        %5186 = vmatpush1.msra.mxu0 0.0
        %5187 = vmatprep.subr.mxu0 0.0
        %5188 = vmatpush1.msra.mxu0 0.0
        %5189 = vmatprep.subr.mxu0 %v4790
        %5190 = vmatpush1.msra.mxu0 %v4789
        %5191 = vmatprep.subr.mxu0 %v4774
        %5192 = vmatpush1.msra.mxu0 %v4773
        %5193 = vmatprep.subr.mxu0 %v4758
        %5194 = vmatpush1.msra.mxu0 %v4757
        %5195 = vmatprep.subr.mxu0 %v4742
        %5196 = vmatpush1.msra.mxu0 %v4741
        %5197 = vmatprep.subr.mxu0 0.0
        %5198 = vmatpush2.msra.mxu0 0.0
        %5199 = vmatprep.subr.mxu0 0.0
        %5200 = vmatpush2.msra.mxu0 0.0
        %5201 = vmatprep.subr.mxu0 0.0
        %5202 = vmatpush2.msra.mxu0 0.0
        %5203 = vmatprep.subr.mxu0 0.0
        %5204 = vmatpush2.msra.mxu0 0.0
        %5205 = vmatprep.subr.mxu0 0.0
        %5206 = vmatpush2.msra.mxu0 0.0
        %5207 = vmatprep.subr.mxu0 0.0
        %5208 = vmatpush2.msra.mxu0 0.0
        %5209 = vmatprep.subr.mxu0 0.0
        %5210 = vmatpush2.msra.mxu0 0.0
        %5211 = vmatprep.subr.mxu0 0.0
        %5212 = vmatpush2.msra.mxu0 0.0
        %5213 = vmatprep.subr.mxu0 0.0
        %5214 = vmatpush2.msra.mxu0 0.0
        %5215 = vmatprep.subr.mxu0 0.0
        %5216 = vmatpush2.msra.mxu0 0.0
        %5217 = vmatprep.subr.mxu0 0.0
        %5218 = vmatpush2.msra.mxu0 0.0
        %5219 = vmatprep.subr.mxu0 0.0
        %5220 = vmatpush2.msra.mxu0 0.0
        %5221 = vmatprep.subr.mxu0 0.0
        %5222 = vmatpush2.msra.mxu0 0.0
        %5223 = vmatprep.subr.mxu0 0.0
        %5224 = vmatpush2.msra.mxu0 0.0
        %5225 = vmatprep.subr.mxu0 0.0
        %5226 = vmatpush2.msra.mxu0 0.0
        %5227 = vmatprep.subr.mxu0 0.0
        %5228 = vmatpush2.msra.mxu0 0.0
        %5229 = vmatprep.mubr.f32.mxu0 0.0
        %5230 = vmatmul.mubr.f32.gmra.mxu0 %v4798
        %v5231 = vpop.f32.mrf.mxu0
        %v5232 = vadd.f32 0.0, %v5231
        %v5233 = vpop.f32.mrf.mxu0
        %v5234 = vadd.f32 0.0, %v5233
        %5235 = vmatprep.mubr.f32.mxu0 0.0
        %5236 = vmatmul.mubr.f32.gmra.mxu0 %v4801
        %v5237 = vpop.f32.mrf.mxu0
        %v5238 = vadd.f32 0.0, %v5237
        %v5239 = vpop.f32.mrf.mxu0
        %v5240 = vadd.f32 0.0, %v5239
        %5241 = vmatprep.mubr.f32.mxu0 0.0
        %5242 = vmatmul.mubr.f32.gmra.mxu0 %v4804
        %v5243 = vpop.f32.mrf.mxu0
        %v5244 = vadd.f32 0.0, %v5243
        %v5245 = vpop.f32.mrf.mxu0
        %v5246 = vadd.f32 0.0, %v5245
        %5247 = vmatprep.mubr.f32.mxu0 0.0
        %5248 = vmatmul.mubr.f32.gmra.mxu0 %v4807
        %v5249 = vpop.f32.mrf.mxu0
        %v5250 = vadd.f32 0.0, %v5249
        %v5251 = vpop.f32.mrf.mxu0
        %v5252 = vadd.f32 0.0, %v5251
        %5253 = vdwg.mxu0
        %5254 = vmatprep.subr.mxu0 0.0
        %5255 = vmatpush1.msra.mxu0 0.0
        %5256 = vmatprep.subr.mxu0 0.0
        %5257 = vmatpush1.msra.mxu0 0.0
        %5258 = vmatprep.subr.mxu0 0.0
        %5259 = vmatpush1.msra.mxu0 0.0
        %5260 = vmatprep.subr.mxu0 0.0
        %5261 = vmatpush1.msra.mxu0 0.0
        %5262 = vmatprep.subr.mxu0 0.0
        %5263 = vmatpush1.msra.mxu0 0.0
        %5264 = vmatprep.subr.mxu0 0.0
        %5265 = vmatpush1.msra.mxu0 0.0
        %5266 = vmatprep.subr.mxu0 0.0
        %5267 = vmatpush1.msra.mxu0 0.0
        %5268 = vmatprep.subr.mxu0 0.0
        %5269 = vmatpush1.msra.mxu0 0.0
        %5270 = vmatprep.subr.mxu0 0.0
        %5271 = vmatpush1.msra.mxu0 0.0
        %5272 = vmatprep.subr.mxu0 0.0
        %5273 = vmatpush1.msra.mxu0 0.0
        %5274 = vmatprep.subr.mxu0 0.0
        %5275 = vmatpush1.msra.mxu0 0.0
        %5276 = vmatprep.subr.mxu0 0.0
        %5277 = vmatpush1.msra.mxu0 0.0
        %5278 = vmatprep.subr.mxu0 %v4792
        %5279 = vmatpush1.msra.mxu0 %v4791
        %5280 = vmatprep.subr.mxu0 %v4776
        %5281 = vmatpush1.msra.mxu0 %v4775
        %5282 = vmatprep.subr.mxu0 %v4760
        %5283 = vmatpush1.msra.mxu0 %v4759
        %5284 = vmatprep.subr.mxu0 %v4744
        %5285 = vmatpush1.msra.mxu0 %v4743
        %5286 = vmatprep.subr.mxu0 0.0
        %5287 = vmatpush2.msra.mxu0 0.0
        %5288 = vmatprep.subr.mxu0 0.0
        %5289 = vmatpush2.msra.mxu0 0.0
        %5290 = vmatprep.subr.mxu0 0.0
        %5291 = vmatpush2.msra.mxu0 0.0
        %5292 = vmatprep.subr.mxu0 0.0
        %5293 = vmatpush2.msra.mxu0 0.0
        %5294 = vmatprep.subr.mxu0 0.0
        %5295 = vmatpush2.msra.mxu0 0.0
        %5296 = vmatprep.subr.mxu0 0.0
        %5297 = vmatpush2.msra.mxu0 0.0
        %5298 = vmatprep.subr.mxu0 0.0
        %5299 = vmatpush2.msra.mxu0 0.0
        %5300 = vmatprep.subr.mxu0 0.0
        %5301 = vmatpush2.msra.mxu0 0.0
        %5302 = vmatprep.subr.mxu0 0.0
        %5303 = vmatpush2.msra.mxu0 0.0
        %5304 = vmatprep.subr.mxu0 0.0
        %5305 = vmatpush2.msra.mxu0 0.0
        %5306 = vmatprep.subr.mxu0 0.0
        %5307 = vmatpush2.msra.mxu0 0.0
        %5308 = vmatprep.subr.mxu0 0.0
        %5309 = vmatpush2.msra.mxu0 0.0
        %5310 = vmatprep.subr.mxu0 0.0
        %5311 = vmatpush2.msra.mxu0 0.0
        %5312 = vmatprep.subr.mxu0 0.0
        %5313 = vmatpush2.msra.mxu0 0.0
        %5314 = vmatprep.subr.mxu0 0.0
        %5315 = vmatpush2.msra.mxu0 0.0
        %5316 = vmatprep.subr.mxu0 0.0
        %5317 = vmatpush2.msra.mxu0 0.0
        %5318 = vmatprep.mubr.f32.mxu0 0.0
        %5319 = vmatmul.mubr.f32.gmra.mxu0 %v4798
        %v5320 = vpop.f32.mrf.mxu0
        %v5321 = vadd.f32 0.0, %v5320
        %v5322 = vpop.f32.mrf.mxu0
        %v5323 = vadd.f32 0.0, %v5322
        %5324 = vmatprep.mubr.f32.mxu0 0.0
        %5325 = vmatmul.mubr.f32.gmra.mxu0 %v4801
        %v5326 = vpop.f32.mrf.mxu0
        %v5327 = vadd.f32 0.0, %v5326
        %v5328 = vpop.f32.mrf.mxu0
        %v5329 = vadd.f32 0.0, %v5328
        %5330 = vmatprep.mubr.f32.mxu0 0.0
        %5331 = vmatmul.mubr.f32.gmra.mxu0 %v4804
        %v5332 = vpop.f32.mrf.mxu0
        %v5333 = vadd.f32 0.0, %v5332
        %v5334 = vpop.f32.mrf.mxu0
        %v5335 = vadd.f32 0.0, %v5334
        %5336 = vmatprep.mubr.f32.mxu0 0.0
        %5337 = vmatmul.mubr.f32.gmra.mxu0 %v4807
        %v5338 = vpop.f32.mrf.mxu0
        %v5339 = vadd.f32 0.0, %v5338
        %v5340 = vpop.f32.mrf.mxu0
        %v5341 = vadd.f32 0.0, %v5340
        %5342 = vdwg.mxu0
        %5343 = vmatprep.subr.mxu0 0.0
        %5344 = vmatpush1.msra.mxu0 0.0
        %5345 = vmatprep.subr.mxu0 0.0
        %5346 = vmatpush1.msra.mxu0 0.0
        %5347 = vmatprep.subr.mxu0 0.0
        %5348 = vmatpush1.msra.mxu0 0.0
        %5349 = vmatprep.subr.mxu0 0.0
        %5350 = vmatpush1.msra.mxu0 0.0
        %5351 = vmatprep.subr.mxu0 0.0
        %5352 = vmatpush1.msra.mxu0 0.0
        %5353 = vmatprep.subr.mxu0 0.0
        %5354 = vmatpush1.msra.mxu0 0.0
        %5355 = vmatprep.subr.mxu0 0.0
        %5356 = vmatpush1.msra.mxu0 0.0
        %5357 = vmatprep.subr.mxu0 0.0
        %5358 = vmatpush1.msra.mxu0 0.0
        %5359 = vmatprep.subr.mxu0 0.0
        %5360 = vmatpush1.msra.mxu0 0.0
        %5361 = vmatprep.subr.mxu0 0.0
        %5362 = vmatpush1.msra.mxu0 0.0
        %5363 = vmatprep.subr.mxu0 0.0
        %5364 = vmatpush1.msra.mxu0 0.0
        %5365 = vmatprep.subr.mxu0 0.0
        %5366 = vmatpush1.msra.mxu0 0.0
        %5367 = vmatprep.subr.mxu0 %v4794
        %5368 = vmatpush1.msra.mxu0 %v4793
        %5369 = vmatprep.subr.mxu0 %v4778
        %5370 = vmatpush1.msra.mxu0 %v4777
        %5371 = vmatprep.subr.mxu0 %v4762
        %5372 = vmatpush1.msra.mxu0 %v4761
        %5373 = vmatprep.subr.mxu0 %v4746
        %5374 = vmatpush1.msra.mxu0 %v4745
        %5375 = vmatprep.subr.mxu0 0.0
        %5376 = vmatpush2.msra.mxu0 0.0
        %5377 = vmatprep.subr.mxu0 0.0
        %5378 = vmatpush2.msra.mxu0 0.0
        %5379 = vmatprep.subr.mxu0 0.0
        %5380 = vmatpush2.msra.mxu0 0.0
        %5381 = vmatprep.subr.mxu0 0.0
        %5382 = vmatpush2.msra.mxu0 0.0
        %5383 = vmatprep.subr.mxu0 0.0
        %5384 = vmatpush2.msra.mxu0 0.0
        %5385 = vmatprep.subr.mxu0 0.0
        %5386 = vmatpush2.msra.mxu0 0.0
        %5387 = vmatprep.subr.mxu0 0.0
        %5388 = vmatpush2.msra.mxu0 0.0
        %5389 = vmatprep.subr.mxu0 0.0
        %5390 = vmatpush2.msra.mxu0 0.0
        %5391 = vmatprep.subr.mxu0 0.0
        %5392 = vmatpush2.msra.mxu0 0.0
        %5393 = vmatprep.subr.mxu0 0.0
        %5394 = vmatpush2.msra.mxu0 0.0
        %5395 = vmatprep.subr.mxu0 0.0
        %5396 = vmatpush2.msra.mxu0 0.0
        %5397 = vmatprep.subr.mxu0 0.0
        %5398 = vmatpush2.msra.mxu0 0.0
        %5399 = vmatprep.subr.mxu0 0.0
        %5400 = vmatpush2.msra.mxu0 0.0
        %5401 = vmatprep.subr.mxu0 0.0
        %5402 = vmatpush2.msra.mxu0 0.0
        %5403 = vmatprep.subr.mxu0 0.0
        %5404 = vmatpush2.msra.mxu0 0.0
        %5405 = vmatprep.subr.mxu0 0.0
        %5406 = vmatpush2.msra.mxu0 0.0
        %5407 = vmatprep.mubr.f32.mxu0 0.0
        %5408 = vmatmul.mubr.f32.gmra.mxu0 %v4798
        %v5409 = vpop.f32.mrf.mxu0
        %v5410 = vadd.f32 0.0, %v5409
        %v5411 = vpop.f32.mrf.mxu0
        %v5412 = vadd.f32 0.0, %v5411
        %5413 = vmatprep.mubr.f32.mxu0 0.0
        %5414 = vmatmul.mubr.f32.gmra.mxu0 %v4801
        %v5415 = vpop.f32.mrf.mxu0
        %v5416 = vadd.f32 0.0, %v5415
        %v5417 = vpop.f32.mrf.mxu0
        %v5418 = vadd.f32 0.0, %v5417
        %5419 = vmatprep.mubr.f32.mxu0 0.0
        %5420 = vmatmul.mubr.f32.gmra.mxu0 %v4804
        %v5421 = vpop.f32.mrf.mxu0
        %v5422 = vadd.f32 0.0, %v5421
        %v5423 = vpop.f32.mrf.mxu0
        %v5424 = vadd.f32 0.0, %v5423
        %5425 = vmatprep.mubr.f32.mxu0 0.0
        %5426 = vmatmul.mubr.f32.gmra.mxu0 %v4807
        %v5427 = vpop.f32.mrf.mxu0
        %v5428 = vadd.f32 0.0, %v5427
        %v5429 = vpop.f32.mrf.mxu0
        %v5430 = vadd.f32 0.0, %v5429
        %5431 = vdwg.mxu0
        %5432 = vmatprep.subr.mxu0 0.0
        %5433 = vmatpush1.msra.mxu0 0.0
        %5434 = vmatprep.subr.mxu0 0.0
        %5435 = vmatpush1.msra.mxu0 0.0
        %5436 = vmatprep.subr.mxu0 0.0
        %5437 = vmatpush1.msra.mxu0 0.0
        %5438 = vmatprep.subr.mxu0 0.0
        %5439 = vmatpush1.msra.mxu0 0.0
        %5440 = vmatprep.subr.mxu0 0.0
        %5441 = vmatpush1.msra.mxu0 0.0
        %5442 = vmatprep.subr.mxu0 0.0
        %5443 = vmatpush1.msra.mxu0 0.0
        %5444 = vmatprep.subr.mxu0 0.0
        %5445 = vmatpush1.msra.mxu0 0.0
        %5446 = vmatprep.subr.mxu0 0.0
        %5447 = vmatpush1.msra.mxu0 0.0
        %5448 = vmatprep.subr.mxu0 0.0
        %5449 = vmatpush1.msra.mxu0 0.0
        %5450 = vmatprep.subr.mxu0 0.0
        %5451 = vmatpush1.msra.mxu0 0.0
        %5452 = vmatprep.subr.mxu0 0.0
        %5453 = vmatpush1.msra.mxu0 0.0
        %5454 = vmatprep.subr.mxu0 0.0
        %5455 = vmatpush1.msra.mxu0 0.0
        %5456 = vmatprep.subr.mxu0 %v4796
        %5457 = vmatpush1.msra.mxu0 %v4795
        %5458 = vmatprep.subr.mxu0 %v4780
        %5459 = vmatpush1.msra.mxu0 %v4779
        %5460 = vmatprep.subr.mxu0 %v4764
        %5461 = vmatpush1.msra.mxu0 %v4763
        %5462 = vmatprep.subr.mxu0 %v4748
        %5463 = vmatpush1.msra.mxu0 %v4747
        %5464 = vmatprep.subr.mxu0 0.0
        %5465 = vmatpush2.msra.mxu0 0.0
        %5466 = vmatprep.subr.mxu0 0.0
        %5467 = vmatpush2.msra.mxu0 0.0
        %5468 = vmatprep.subr.mxu0 0.0
        %5469 = vmatpush2.msra.mxu0 0.0
        %5470 = vmatprep.subr.mxu0 0.0
        %5471 = vmatpush2.msra.mxu0 0.0
        %5472 = vmatprep.subr.mxu0 0.0
        %5473 = vmatpush2.msra.mxu0 0.0
        %5474 = vmatprep.subr.mxu0 0.0
        %5475 = vmatpush2.msra.mxu0 0.0
        %5476 = vmatprep.subr.mxu0 0.0
        %5477 = vmatpush2.msra.mxu0 0.0
        %5478 = vmatprep.subr.mxu0 0.0
        %5479 = vmatpush2.msra.mxu0 0.0
        %5480 = vmatprep.subr.mxu0 0.0
        %5481 = vmatpush2.msra.mxu0 0.0
        %5482 = vmatprep.subr.mxu0 0.0
        %5483 = vmatpush2.msra.mxu0 0.0
        %5484 = vmatprep.subr.mxu0 0.0
        %5485 = vmatpush2.msra.mxu0 0.0
        %5486 = vmatprep.subr.mxu0 0.0
        %5487 = vmatpush2.msra.mxu0 0.0
        %5488 = vmatprep.subr.mxu0 0.0
        %5489 = vmatpush2.msra.mxu0 0.0
        %5490 = vmatprep.subr.mxu0 0.0
        %5491 = vmatpush2.msra.mxu0 0.0
        %5492 = vmatprep.subr.mxu0 0.0
        %5493 = vmatpush2.msra.mxu0 0.0
        %5494 = vmatprep.subr.mxu0 0.0
        %5495 = vmatpush2.msra.mxu0 0.0
        %5496 = vmatprep.mubr.f32.mxu0 0.0
        %5497 = vmatmul.mubr.f32.gmra.mxu0 %v4798
        %v5498 = vpop.f32.mrf.mxu0
        %v5499 = vadd.f32 0.0, %v5498
        %v5500 = vpop.f32.mrf.mxu0
        %v5501 = vadd.f32 0.0, %v5500
        %5502 = vmatprep.mubr.f32.mxu0 0.0
        %5503 = vmatmul.mubr.f32.gmra.mxu0 %v4801
        %v5504 = vpop.f32.mrf.mxu0
        %v5505 = vadd.f32 0.0, %v5504
        %v5506 = vpop.f32.mrf.mxu0
        %v5507 = vadd.f32 0.0, %v5506
        %5508 = vmatprep.mubr.f32.mxu0 0.0
        %5509 = vmatmul.mubr.f32.gmra.mxu0 %v4804
        %v5510 = vpop.f32.mrf.mxu0
        %v5511 = vadd.f32 0.0, %v5510
        %v5512 = vpop.f32.mrf.mxu0
        %v5513 = vadd.f32 0.0, %v5512
        %5514 = vmatprep.mubr.f32.mxu0 0.0
        %5515 = vmatmul.mubr.f32.gmra.mxu0 %v4807
        %v5516 = vpop.f32.mrf.mxu0
        %v5517 = vadd.f32 0.0, %v5516
        %v5518 = vpop.f32.mrf.mxu0
        %v5519 = vadd.f32 0.0, %v5518
        %5520 = vdwg.mxu0
        %v5521 = vmul.f32 %v4876, %v2065
        %v5522 = vmul.f32 %v4878, %v2067
        %v5523 = vmul.f32 %v4965, %v2069
        %v5524 = vmul.f32 %v4967, %v2071
        %v5525 = vmul.f32 %v5054, %v2073
        %v5526 = vmul.f32 %v5056, %v2075
        %v5527 = vmul.f32 %v5143, %v2077
        %v5528 = vmul.f32 %v5145, %v2079
        %v5529 = vmul.f32 %v5232, %v2081
        %v5530 = vmul.f32 %v5234, %v2083
        %v5531 = vmul.f32 %v5321, %v2085
        %v5532 = vmul.f32 %v5323, %v2087
        %v5533 = vmul.f32 %v5410, %v2089
        %v5534 = vmul.f32 %v5412, %v2091
        %v5535 = vmul.f32 %v5499, %v2093
        %v5536 = vmul.f32 %v5501, %v2095
        %v5537 = vmul.f32 %v4882, %v2097
        %v5538 = vmul.f32 %v4884, %v2099
        %v5539 = vmul.f32 %v4971, %v2101
        %v5540 = vmul.f32 %v4973, %v2103
        %v5541 = vmul.f32 %v5060, %v2105
        %v5542 = vmul.f32 %v5062, %v2107
        %v5543 = vmul.f32 %v5149, %v2109
        %v5544 = vmul.f32 %v5151, %v2111
        %v5545 = vmul.f32 %v5238, %v2113
        %v5546 = vmul.f32 %v5240, %v2115
        %v5547 = vmul.f32 %v5327, %v2117
        %v5548 = vmul.f32 %v5329, %v2119
        %v5549 = vmul.f32 %v5416, %v2121
        %v5550 = vmul.f32 %v5418, %v2123
        %v5551 = vmul.f32 %v5505, %v2125
        %v5552 = vmul.f32 %v5507, %v2127
        %v5553 = vmul.f32 %v4888, %v2129
        %v5554 = vmul.f32 %v4890, %v2131
        %v5555 = vmul.f32 %v4977, %v2133
        %v5556 = vmul.f32 %v4979, %v2135
        %v5557 = vmul.f32 %v5066, %v2137
        %v5558 = vmul.f32 %v5068, %v2139
        %v5559 = vmul.f32 %v5155, %v2141
        %v5560 = vmul.f32 %v5157, %v2143
        %v5561 = vmul.f32 %v5244, %v2145
        %v5562 = vmul.f32 %v5246, %v2147
        %v5563 = vmul.f32 %v5333, %v2149
        %v5564 = vmul.f32 %v5335, %v2151
        %v5565 = vmul.f32 %v5422, %v2153
        %v5566 = vmul.f32 %v5424, %v2155
        %v5567 = vmul.f32 %v5511, %v2157
        %v5568 = vmul.f32 %v5513, %v2159
        %v5569 = vmul.f32 %v4894, %v2161
        %v5570 = vmul.f32 %v4896, %v2163
        %v5571 = vmul.f32 %v4983, %v2165
        %v5572 = vmul.f32 %v4985, %v2167
        %v5573 = vmul.f32 %v5072, %v2169
        %v5574 = vmul.f32 %v5074, %v2171
        %v5575 = vmul.f32 %v5161, %v2173
        %v5576 = vmul.f32 %v5163, %v2175
        %v5577 = vmul.f32 %v5250, %v2177
        %v5578 = vmul.f32 %v5252, %v2179
        %v5579 = vmul.f32 %v5339, %v2181
        %v5580 = vmul.f32 %v5341, %v2183
        %v5581 = vmul.f32 %v5428, %v2185
        %v5582 = vmul.f32 %v5430, %v2187
        %v5583 = vmul.f32 %v5517, %v2189
        %v5584 = vmul.f32 %v5519, %v2191
        %v5586 = vsel %vm2468, %v589, 0
        %5588 = vmatprep.subr.mxu0 0.0
        %5589 = vmatpush1.msra.mxu0 0.0
        %5590 = vmatprep.subr.mxu0 0.0
        %5591 = vmatpush1.msra.mxu0 0.0
        %5592 = vmatprep.subr.mxu0 0.0
        %5593 = vmatpush1.msra.mxu0 0.0
        %5594 = vmatprep.subr.mxu0 0.0
        %5595 = vmatpush1.msra.mxu0 0.0
        %5596 = vmatprep.subr.mxu0 0.0
        %5597 = vmatpush1.msra.mxu0 0.0
        %5598 = vmatprep.subr.mxu0 0.0
        %5599 = vmatpush1.msra.mxu0 0.0
        %5600 = vmatprep.subr.mxu0 0.0
        %5601 = vmatpush1.msra.mxu0 0.0
        %5602 = vmatprep.subr.mxu0 0.0
        %5603 = vmatpush1.msra.mxu0 0.0
        %5604 = vmatprep.subr.mxu0 0.0
        %5605 = vmatpush1.msra.mxu0 0.0
        %5606 = vmatprep.subr.mxu0 0.0
        %5607 = vmatpush1.msra.mxu0 0.0
        %5608 = vmatprep.subr.mxu0 0.0
        %5609 = vmatpush1.msra.mxu0 0.0
        %5610 = vmatprep.subr.mxu0 0.0
        %5611 = vmatpush1.msra.mxu0 0.0
        %5612 = vmatprep.subr.mxu0 %v5570
        %5613 = vmatpush1.msra.mxu0 %v5569
        %5614 = vmatprep.subr.mxu0 %v5554
        %5615 = vmatpush1.msra.mxu0 %v5553
        %5616 = vmatprep.subr.mxu0 %v5538
        %5617 = vmatpush1.msra.mxu0 %v5537
        %5618 = vmatprep.subr.mxu0 %v5522
        %5619 = vmatpush1.msra.mxu0 %v5521
        %5620 = vmatprep.subr.mxu0 0.0
        %5621 = vmatpush2.msra.mxu0 0.0
        %5622 = vmatprep.subr.mxu0 0.0
        %5623 = vmatpush2.msra.mxu0 0.0
        %5624 = vmatprep.subr.mxu0 0.0
        %5625 = vmatpush2.msra.mxu0 0.0
        %5626 = vmatprep.subr.mxu0 0.0
        %5627 = vmatpush2.msra.mxu0 0.0
        %5628 = vmatprep.subr.mxu0 0.0
        %5629 = vmatpush2.msra.mxu0 0.0
        %5630 = vmatprep.subr.mxu0 0.0
        %5631 = vmatpush2.msra.mxu0 0.0
        %5632 = vmatprep.subr.mxu0 0.0
        %5633 = vmatpush2.msra.mxu0 0.0
        %5634 = vmatprep.subr.mxu0 0.0
        %5635 = vmatpush2.msra.mxu0 0.0
        %5636 = vmatprep.subr.mxu0 0.0
        %5637 = vmatpush2.msra.mxu0 0.0
        %5638 = vmatprep.subr.mxu0 0.0
        %5639 = vmatpush2.msra.mxu0 0.0
        %5640 = vmatprep.subr.mxu0 0.0
        %5641 = vmatpush2.msra.mxu0 0.0
        %5642 = vmatprep.subr.mxu0 0.0
        %5643 = vmatpush2.msra.mxu0 0.0
        %5644 = vmatprep.subr.mxu0 0.0
        %5645 = vmatpush2.msra.mxu0 0.0
        %5646 = vmatprep.subr.mxu0 0.0
        %5647 = vmatpush2.msra.mxu0 0.0
        %5648 = vmatprep.subr.mxu0 0.0
        %5649 = vmatpush2.msra.mxu0 0.0
        %5650 = vmatprep.subr.mxu0 0.0
        %5651 = vmatpush2.msra.mxu0 0.0
        %5652 = vmatprep.mubr.f32.mxu0 0.0
        %5653 = vmatmul.mubr.f32.gmra.mxu0 %v5586
        %v5654 = vpop.f32.mrf.mxu0
        %v5655 = vadd.f32 0.0, %v5654
        %v5656 = vpop.f32.mrf.mxu0
        %v5657 = vadd.f32 0.0, %v5656
        %5658 = vdwg.mxu0
        %5659 = vmatprep.subr.mxu0 0.0
        %5660 = vmatpush1.msra.mxu0 0.0
        %5661 = vmatprep.subr.mxu0 0.0
        %5662 = vmatpush1.msra.mxu0 0.0
        %5663 = vmatprep.subr.mxu0 0.0
        %5664 = vmatpush1.msra.mxu0 0.0
        %5665 = vmatprep.subr.mxu0 0.0
        %5666 = vmatpush1.msra.mxu0 0.0
        %5667 = vmatprep.subr.mxu0 0.0
        %5668 = vmatpush1.msra.mxu0 0.0
        %5669 = vmatprep.subr.mxu0 0.0
        %5670 = vmatpush1.msra.mxu0 0.0
        %5671 = vmatprep.subr.mxu0 0.0
        %5672 = vmatpush1.msra.mxu0 0.0
        %5673 = vmatprep.subr.mxu0 0.0
        %5674 = vmatpush1.msra.mxu0 0.0
        %5675 = vmatprep.subr.mxu0 0.0
        %5676 = vmatpush1.msra.mxu0 0.0
        %5677 = vmatprep.subr.mxu0 0.0
        %5678 = vmatpush1.msra.mxu0 0.0
        %5679 = vmatprep.subr.mxu0 0.0
        %5680 = vmatpush1.msra.mxu0 0.0
        %5681 = vmatprep.subr.mxu0 0.0
        %5682 = vmatpush1.msra.mxu0 0.0
        %5683 = vmatprep.subr.mxu0 %v5572
        %5684 = vmatpush1.msra.mxu0 %v5571
        %5685 = vmatprep.subr.mxu0 %v5556
        %5686 = vmatpush1.msra.mxu0 %v5555
        %5687 = vmatprep.subr.mxu0 %v5540
        %5688 = vmatpush1.msra.mxu0 %v5539
        %5689 = vmatprep.subr.mxu0 %v5524
        %5690 = vmatpush1.msra.mxu0 %v5523
        %5691 = vmatprep.subr.mxu0 0.0
        %5692 = vmatpush2.msra.mxu0 0.0
        %5693 = vmatprep.subr.mxu0 0.0
        %5694 = vmatpush2.msra.mxu0 0.0
        %5695 = vmatprep.subr.mxu0 0.0
        %5696 = vmatpush2.msra.mxu0 0.0
        %5697 = vmatprep.subr.mxu0 0.0
        %5698 = vmatpush2.msra.mxu0 0.0
        %5699 = vmatprep.subr.mxu0 0.0
        %5700 = vmatpush2.msra.mxu0 0.0
        %5701 = vmatprep.subr.mxu0 0.0
        %5702 = vmatpush2.msra.mxu0 0.0
        %5703 = vmatprep.subr.mxu0 0.0
        %5704 = vmatpush2.msra.mxu0 0.0
        %5705 = vmatprep.subr.mxu0 0.0
        %5706 = vmatpush2.msra.mxu0 0.0
        %5707 = vmatprep.subr.mxu0 0.0
        %5708 = vmatpush2.msra.mxu0 0.0
        %5709 = vmatprep.subr.mxu0 0.0
        %5710 = vmatpush2.msra.mxu0 0.0
        %5711 = vmatprep.subr.mxu0 0.0
        %5712 = vmatpush2.msra.mxu0 0.0
        %5713 = vmatprep.subr.mxu0 0.0
        %5714 = vmatpush2.msra.mxu0 0.0
        %5715 = vmatprep.subr.mxu0 0.0
        %5716 = vmatpush2.msra.mxu0 0.0
        %5717 = vmatprep.subr.mxu0 0.0
        %5718 = vmatpush2.msra.mxu0 0.0
        %5719 = vmatprep.subr.mxu0 0.0
        %5720 = vmatpush2.msra.mxu0 0.0
        %5721 = vmatprep.subr.mxu0 0.0
        %5722 = vmatpush2.msra.mxu0 0.0
        %5723 = vmatprep.mubr.f32.mxu0 0.0
        %5724 = vmatmul.mubr.f32.gmra.mxu0 %v5586
        %v5725 = vpop.f32.mrf.mxu0
        %v5726 = vadd.f32 0.0, %v5725
        %v5727 = vpop.f32.mrf.mxu0
        %v5728 = vadd.f32 0.0, %v5727
        %5729 = vdwg.mxu0
        %5730 = vmatprep.subr.mxu0 0.0
        %5731 = vmatpush1.msra.mxu0 0.0
        %5732 = vmatprep.subr.mxu0 0.0
        %5733 = vmatpush1.msra.mxu0 0.0
        %5734 = vmatprep.subr.mxu0 0.0
        %5735 = vmatpush1.msra.mxu0 0.0
        %5736 = vmatprep.subr.mxu0 0.0
        %5737 = vmatpush1.msra.mxu0 0.0
        %5738 = vmatprep.subr.mxu0 0.0
        %5739 = vmatpush1.msra.mxu0 0.0
        %5740 = vmatprep.subr.mxu0 0.0
        %5741 = vmatpush1.msra.mxu0 0.0
        %5742 = vmatprep.subr.mxu0 0.0
        %5743 = vmatpush1.msra.mxu0 0.0
        %5744 = vmatprep.subr.mxu0 0.0
        %5745 = vmatpush1.msra.mxu0 0.0
        %5746 = vmatprep.subr.mxu0 0.0
        %5747 = vmatpush1.msra.mxu0 0.0
        %5748 = vmatprep.subr.mxu0 0.0
        %5749 = vmatpush1.msra.mxu0 0.0
        %5750 = vmatprep.subr.mxu0 0.0
        %5751 = vmatpush1.msra.mxu0 0.0
        %5752 = vmatprep.subr.mxu0 0.0
        %5753 = vmatpush1.msra.mxu0 0.0
        %5754 = vmatprep.subr.mxu0 %v5574
        %5755 = vmatpush1.msra.mxu0 %v5573
        %5756 = vmatprep.subr.mxu0 %v5558
        %5757 = vmatpush1.msra.mxu0 %v5557
        %5758 = vmatprep.subr.mxu0 %v5542
        %5759 = vmatpush1.msra.mxu0 %v5541
        %5760 = vmatprep.subr.mxu0 %v5526
        %5761 = vmatpush1.msra.mxu0 %v5525
        %5762 = vmatprep.subr.mxu0 0.0
        %5763 = vmatpush2.msra.mxu0 0.0
        %5764 = vmatprep.subr.mxu0 0.0
        %5765 = vmatpush2.msra.mxu0 0.0
        %5766 = vmatprep.subr.mxu0 0.0
        %5767 = vmatpush2.msra.mxu0 0.0
        %5768 = vmatprep.subr.mxu0 0.0
        %5769 = vmatpush2.msra.mxu0 0.0
        %5770 = vmatprep.subr.mxu0 0.0
        %5771 = vmatpush2.msra.mxu0 0.0
        %5772 = vmatprep.subr.mxu0 0.0
        %5773 = vmatpush2.msra.mxu0 0.0
        %5774 = vmatprep.subr.mxu0 0.0
        %5775 = vmatpush2.msra.mxu0 0.0
        %5776 = vmatprep.subr.mxu0 0.0
        %5777 = vmatpush2.msra.mxu0 0.0
        %5778 = vmatprep.subr.mxu0 0.0
        %5779 = vmatpush2.msra.mxu0 0.0
        %5780 = vmatprep.subr.mxu0 0.0
        %5781 = vmatpush2.msra.mxu0 0.0
        %5782 = vmatprep.subr.mxu0 0.0
        %5783 = vmatpush2.msra.mxu0 0.0
        %5784 = vmatprep.subr.mxu0 0.0
        %5785 = vmatpush2.msra.mxu0 0.0
        %5786 = vmatprep.subr.mxu0 0.0
        %5787 = vmatpush2.msra.mxu0 0.0
        %5788 = vmatprep.subr.mxu0 0.0
        %5789 = vmatpush2.msra.mxu0 0.0
        %5790 = vmatprep.subr.mxu0 0.0
        %5791 = vmatpush2.msra.mxu0 0.0
        %5792 = vmatprep.subr.mxu0 0.0
        %5793 = vmatpush2.msra.mxu0 0.0
        %5794 = vmatprep.mubr.f32.mxu0 0.0
        %5795 = vmatmul.mubr.f32.gmra.mxu0 %v5586
        %v5796 = vpop.f32.mrf.mxu0
        %v5797 = vadd.f32 0.0, %v5796
        %v5798 = vpop.f32.mrf.mxu0
        %v5799 = vadd.f32 0.0, %v5798
        %5800 = vdwg.mxu0
        %5801 = vmatprep.subr.mxu0 0.0
        %5802 = vmatpush1.msra.mxu0 0.0
        %5803 = vmatprep.subr.mxu0 0.0
        %5804 = vmatpush1.msra.mxu0 0.0
        %5805 = vmatprep.subr.mxu0 0.0
        %5806 = vmatpush1.msra.mxu0 0.0
        %5807 = vmatprep.subr.mxu0 0.0
        %5808 = vmatpush1.msra.mxu0 0.0
        %5809 = vmatprep.subr.mxu0 0.0
        %5810 = vmatpush1.msra.mxu0 0.0
        %5811 = vmatprep.subr.mxu0 0.0
        %5812 = vmatpush1.msra.mxu0 0.0
        %5813 = vmatprep.subr.mxu0 0.0
        %5814 = vmatpush1.msra.mxu0 0.0
        %5815 = vmatprep.subr.mxu0 0.0
        %5816 = vmatpush1.msra.mxu0 0.0
        %5817 = vmatprep.subr.mxu0 0.0
        %5818 = vmatpush1.msra.mxu0 0.0
        %5819 = vmatprep.subr.mxu0 0.0
        %5820 = vmatpush1.msra.mxu0 0.0
        %5821 = vmatprep.subr.mxu0 0.0
        %5822 = vmatpush1.msra.mxu0 0.0
        %5823 = vmatprep.subr.mxu0 0.0
        %5824 = vmatpush1.msra.mxu0 0.0
        %5825 = vmatprep.subr.mxu0 %v5576
        %5826 = vmatpush1.msra.mxu0 %v5575
        %5827 = vmatprep.subr.mxu0 %v5560
        %5828 = vmatpush1.msra.mxu0 %v5559
        %5829 = vmatprep.subr.mxu0 %v5544
        %5830 = vmatpush1.msra.mxu0 %v5543
        %5831 = vmatprep.subr.mxu0 %v5528
        %5832 = vmatpush1.msra.mxu0 %v5527
        %5833 = vmatprep.subr.mxu0 0.0
        %5834 = vmatpush2.msra.mxu0 0.0
        %5835 = vmatprep.subr.mxu0 0.0
        %5836 = vmatpush2.msra.mxu0 0.0
        %5837 = vmatprep.subr.mxu0 0.0
        %5838 = vmatpush2.msra.mxu0 0.0
        %5839 = vmatprep.subr.mxu0 0.0
        %5840 = vmatpush2.msra.mxu0 0.0
        %5841 = vmatprep.subr.mxu0 0.0
        %5842 = vmatpush2.msra.mxu0 0.0
        %5843 = vmatprep.subr.mxu0 0.0
        %5844 = vmatpush2.msra.mxu0 0.0
        %5845 = vmatprep.subr.mxu0 0.0
        %5846 = vmatpush2.msra.mxu0 0.0
        %5847 = vmatprep.subr.mxu0 0.0
        %5848 = vmatpush2.msra.mxu0 0.0
        %5849 = vmatprep.subr.mxu0 0.0
        %5850 = vmatpush2.msra.mxu0 0.0
        %5851 = vmatprep.subr.mxu0 0.0
        %5852 = vmatpush2.msra.mxu0 0.0
        %5853 = vmatprep.subr.mxu0 0.0
        %5854 = vmatpush2.msra.mxu0 0.0
        %5855 = vmatprep.subr.mxu0 0.0
        %5856 = vmatpush2.msra.mxu0 0.0
        %5857 = vmatprep.subr.mxu0 0.0
        %5858 = vmatpush2.msra.mxu0 0.0
        %5859 = vmatprep.subr.mxu0 0.0
        %5860 = vmatpush2.msra.mxu0 0.0
        %5861 = vmatprep.subr.mxu0 0.0
        %5862 = vmatpush2.msra.mxu0 0.0
        %5863 = vmatprep.subr.mxu0 0.0
        %5864 = vmatpush2.msra.mxu0 0.0
        %5865 = vmatprep.mubr.f32.mxu0 0.0
        %5866 = vmatmul.mubr.f32.gmra.mxu0 %v5586
        %v5867 = vpop.f32.mrf.mxu0
        %v5868 = vadd.f32 0.0, %v5867
        %v5869 = vpop.f32.mrf.mxu0
        %v5870 = vadd.f32 0.0, %v5869
        %5871 = vdwg.mxu0
        %5872 = vmatprep.subr.mxu0 0.0
        %5873 = vmatpush1.msra.mxu0 0.0
        %5874 = vmatprep.subr.mxu0 0.0
        %5875 = vmatpush1.msra.mxu0 0.0
        %5876 = vmatprep.subr.mxu0 0.0
        %5877 = vmatpush1.msra.mxu0 0.0
        %5878 = vmatprep.subr.mxu0 0.0
        %5879 = vmatpush1.msra.mxu0 0.0
        %5880 = vmatprep.subr.mxu0 0.0
        %5881 = vmatpush1.msra.mxu0 0.0
        %5882 = vmatprep.subr.mxu0 0.0
        %5883 = vmatpush1.msra.mxu0 0.0
        %5884 = vmatprep.subr.mxu0 0.0
        %5885 = vmatpush1.msra.mxu0 0.0
        %5886 = vmatprep.subr.mxu0 0.0
        %5887 = vmatpush1.msra.mxu0 0.0
        %5888 = vmatprep.subr.mxu0 0.0
        %5889 = vmatpush1.msra.mxu0 0.0
        %5890 = vmatprep.subr.mxu0 0.0
        %5891 = vmatpush1.msra.mxu0 0.0
        %5892 = vmatprep.subr.mxu0 0.0
        %5893 = vmatpush1.msra.mxu0 0.0
        %5894 = vmatprep.subr.mxu0 0.0
        %5895 = vmatpush1.msra.mxu0 0.0
        %5896 = vmatprep.subr.mxu0 %v5578
        %5897 = vmatpush1.msra.mxu0 %v5577
        %5898 = vmatprep.subr.mxu0 %v5562
        %5899 = vmatpush1.msra.mxu0 %v5561
        %5900 = vmatprep.subr.mxu0 %v5546
        %5901 = vmatpush1.msra.mxu0 %v5545
        %5902 = vmatprep.subr.mxu0 %v5530
        %5903 = vmatpush1.msra.mxu0 %v5529
        %5904 = vmatprep.subr.mxu0 0.0
        %5905 = vmatpush2.msra.mxu0 0.0
        %5906 = vmatprep.subr.mxu0 0.0
        %5907 = vmatpush2.msra.mxu0 0.0
        %5908 = vmatprep.subr.mxu0 0.0
        %5909 = vmatpush2.msra.mxu0 0.0
        %5910 = vmatprep.subr.mxu0 0.0
        %5911 = vmatpush2.msra.mxu0 0.0
        %5912 = vmatprep.subr.mxu0 0.0
        %5913 = vmatpush2.msra.mxu0 0.0
        %5914 = vmatprep.subr.mxu0 0.0
        %5915 = vmatpush2.msra.mxu0 0.0
        %5916 = vmatprep.subr.mxu0 0.0
        %5917 = vmatpush2.msra.mxu0 0.0
        %5918 = vmatprep.subr.mxu0 0.0
        %5919 = vmatpush2.msra.mxu0 0.0
        %5920 = vmatprep.subr.mxu0 0.0
        %5921 = vmatpush2.msra.mxu0 0.0
        %5922 = vmatprep.subr.mxu0 0.0
        %5923 = vmatpush2.msra.mxu0 0.0
        %5924 = vmatprep.subr.mxu0 0.0
        %5925 = vmatpush2.msra.mxu0 0.0
        %5926 = vmatprep.subr.mxu0 0.0
        %5927 = vmatpush2.msra.mxu0 0.0
        %5928 = vmatprep.subr.mxu0 0.0
        %5929 = vmatpush2.msra.mxu0 0.0
        %5930 = vmatprep.subr.mxu0 0.0
        %5931 = vmatpush2.msra.mxu0 0.0
        %5932 = vmatprep.subr.mxu0 0.0
        %5933 = vmatpush2.msra.mxu0 0.0
        %5934 = vmatprep.subr.mxu0 0.0
        %5935 = vmatpush2.msra.mxu0 0.0
        %5936 = vmatprep.mubr.f32.mxu0 0.0
        %5937 = vmatmul.mubr.f32.gmra.mxu0 %v5586
        %v5938 = vpop.f32.mrf.mxu0
        %v5939 = vadd.f32 0.0, %v5938
        %v5940 = vpop.f32.mrf.mxu0
        %v5941 = vadd.f32 0.0, %v5940
        %5942 = vdwg.mxu0
        %5943 = vmatprep.subr.mxu0 0.0
        %5944 = vmatpush1.msra.mxu0 0.0
        %5945 = vmatprep.subr.mxu0 0.0
        %5946 = vmatpush1.msra.mxu0 0.0
        %5947 = vmatprep.subr.mxu0 0.0
        %5948 = vmatpush1.msra.mxu0 0.0
        %5949 = vmatprep.subr.mxu0 0.0
        %5950 = vmatpush1.msra.mxu0 0.0
        %5951 = vmatprep.subr.mxu0 0.0
        %5952 = vmatpush1.msra.mxu0 0.0
        %5953 = vmatprep.subr.mxu0 0.0
        %5954 = vmatpush1.msra.mxu0 0.0
        %5955 = vmatprep.subr.mxu0 0.0
        %5956 = vmatpush1.msra.mxu0 0.0
        %5957 = vmatprep.subr.mxu0 0.0
        %5958 = vmatpush1.msra.mxu0 0.0
        %5959 = vmatprep.subr.mxu0 0.0
        %5960 = vmatpush1.msra.mxu0 0.0
        %5961 = vmatprep.subr.mxu0 0.0
        %5962 = vmatpush1.msra.mxu0 0.0
        %5963 = vmatprep.subr.mxu0 0.0
        %5964 = vmatpush1.msra.mxu0 0.0
        %5965 = vmatprep.subr.mxu0 0.0
        %5966 = vmatpush1.msra.mxu0 0.0
        %5967 = vmatprep.subr.mxu0 %v5580
        %5968 = vmatpush1.msra.mxu0 %v5579
        %5969 = vmatprep.subr.mxu0 %v5564
        %5970 = vmatpush1.msra.mxu0 %v5563
        %5971 = vmatprep.subr.mxu0 %v5548
        %5972 = vmatpush1.msra.mxu0 %v5547
        %5973 = vmatprep.subr.mxu0 %v5532
        %5974 = vmatpush1.msra.mxu0 %v5531
        %5975 = vmatprep.subr.mxu0 0.0
        %5976 = vmatpush2.msra.mxu0 0.0
        %5977 = vmatprep.subr.mxu0 0.0
        %5978 = vmatpush2.msra.mxu0 0.0
        %5979 = vmatprep.subr.mxu0 0.0
        %5980 = vmatpush2.msra.mxu0 0.0
        %5981 = vmatprep.subr.mxu0 0.0
        %5982 = vmatpush2.msra.mxu0 0.0
        %5983 = vmatprep.subr.mxu0 0.0
        %5984 = vmatpush2.msra.mxu0 0.0
        %5985 = vmatprep.subr.mxu0 0.0
        %5986 = vmatpush2.msra.mxu0 0.0
        %5987 = vmatprep.subr.mxu0 0.0
        %5988 = vmatpush2.msra.mxu0 0.0
        %5989 = vmatprep.subr.mxu0 0.0
        %5990 = vmatpush2.msra.mxu0 0.0
        %5991 = vmatprep.subr.mxu0 0.0
        %5992 = vmatpush2.msra.mxu0 0.0
        %5993 = vmatprep.subr.mxu0 0.0
        %5994 = vmatpush2.msra.mxu0 0.0
        %5995 = vmatprep.subr.mxu0 0.0
        %5996 = vmatpush2.msra.mxu0 0.0
        %5997 = vmatprep.subr.mxu0 0.0
        %5998 = vmatpush2.msra.mxu0 0.0
        %5999 = vmatprep.subr.mxu0 0.0
        %6000 = vmatpush2.msra.mxu0 0.0
        %6001 = vmatprep.subr.mxu0 0.0
        %6002 = vmatpush2.msra.mxu0 0.0
        %6003 = vmatprep.subr.mxu0 0.0
        %6004 = vmatpush2.msra.mxu0 0.0
        %6005 = vmatprep.subr.mxu0 0.0
        %6006 = vmatpush2.msra.mxu0 0.0
        %6007 = vmatprep.mubr.f32.mxu0 0.0
        %6008 = vmatmul.mubr.f32.gmra.mxu0 %v5586
        %v6009 = vpop.f32.mrf.mxu0
        %v6010 = vadd.f32 0.0, %v6009
        %v6011 = vpop.f32.mrf.mxu0
        %v6012 = vadd.f32 0.0, %v6011
        %6013 = vdwg.mxu0
        %6014 = vmatprep.subr.mxu0 0.0
        %6015 = vmatpush1.msra.mxu0 0.0
        %6016 = vmatprep.subr.mxu0 0.0
        %6017 = vmatpush1.msra.mxu0 0.0
        %6018 = vmatprep.subr.mxu0 0.0
        %6019 = vmatpush1.msra.mxu0 0.0
        %6020 = vmatprep.subr.mxu0 0.0
        %6021 = vmatpush1.msra.mxu0 0.0
        %6022 = vmatprep.subr.mxu0 0.0
        %6023 = vmatpush1.msra.mxu0 0.0
        %6024 = vmatprep.subr.mxu0 0.0
        %6025 = vmatpush1.msra.mxu0 0.0
        %6026 = vmatprep.subr.mxu0 0.0
        %6027 = vmatpush1.msra.mxu0 0.0
        %6028 = vmatprep.subr.mxu0 0.0
        %6029 = vmatpush1.msra.mxu0 0.0
        %6030 = vmatprep.subr.mxu0 0.0
        %6031 = vmatpush1.msra.mxu0 0.0
        %6032 = vmatprep.subr.mxu0 0.0
        %6033 = vmatpush1.msra.mxu0 0.0
        %6034 = vmatprep.subr.mxu0 0.0
        %6035 = vmatpush1.msra.mxu0 0.0
        %6036 = vmatprep.subr.mxu0 0.0
        %6037 = vmatpush1.msra.mxu0 0.0
        %6038 = vmatprep.subr.mxu0 %v5582
        %6039 = vmatpush1.msra.mxu0 %v5581
        %6040 = vmatprep.subr.mxu0 %v5566
        %6041 = vmatpush1.msra.mxu0 %v5565
        %6042 = vmatprep.subr.mxu0 %v5550
        %6043 = vmatpush1.msra.mxu0 %v5549
        %6044 = vmatprep.subr.mxu0 %v5534
        %6045 = vmatpush1.msra.mxu0 %v5533
        %6046 = vmatprep.subr.mxu0 0.0
        %6047 = vmatpush2.msra.mxu0 0.0
        %6048 = vmatprep.subr.mxu0 0.0
        %6049 = vmatpush2.msra.mxu0 0.0
        %6050 = vmatprep.subr.mxu0 0.0
        %6051 = vmatpush2.msra.mxu0 0.0
        %6052 = vmatprep.subr.mxu0 0.0
        %6053 = vmatpush2.msra.mxu0 0.0
        %6054 = vmatprep.subr.mxu0 0.0
        %6055 = vmatpush2.msra.mxu0 0.0
        %6056 = vmatprep.subr.mxu0 0.0
        %6057 = vmatpush2.msra.mxu0 0.0
        %6058 = vmatprep.subr.mxu0 0.0
        %6059 = vmatpush2.msra.mxu0 0.0
        %6060 = vmatprep.subr.mxu0 0.0
        %6061 = vmatpush2.msra.mxu0 0.0
        %6062 = vmatprep.subr.mxu0 0.0
        %6063 = vmatpush2.msra.mxu0 0.0
        %6064 = vmatprep.subr.mxu0 0.0
        %6065 = vmatpush2.msra.mxu0 0.0
        %6066 = vmatprep.subr.mxu0 0.0
        %6067 = vmatpush2.msra.mxu0 0.0
        %6068 = vmatprep.subr.mxu0 0.0
        %6069 = vmatpush2.msra.mxu0 0.0
        %6070 = vmatprep.subr.mxu0 0.0
        %6071 = vmatpush2.msra.mxu0 0.0
        %6072 = vmatprep.subr.mxu0 0.0
        %6073 = vmatpush2.msra.mxu0 0.0
        %6074 = vmatprep.subr.mxu0 0.0
        %6075 = vmatpush2.msra.mxu0 0.0
        %6076 = vmatprep.subr.mxu0 0.0
        %6077 = vmatpush2.msra.mxu0 0.0
        %6078 = vmatprep.mubr.f32.mxu0 0.0
        %6079 = vmatmul.mubr.f32.gmra.mxu0 %v5586
        %v6080 = vpop.f32.mrf.mxu0
        %v6081 = vadd.f32 0.0, %v6080
        %v6082 = vpop.f32.mrf.mxu0
        %v6083 = vadd.f32 0.0, %v6082
        %6084 = vdwg.mxu0
        %6085 = vmatprep.subr.mxu0 0.0
        %6086 = vmatpush1.msra.mxu0 0.0
        %6087 = vmatprep.subr.mxu0 0.0
        %6088 = vmatpush1.msra.mxu0 0.0
        %6089 = vmatprep.subr.mxu0 0.0
        %6090 = vmatpush1.msra.mxu0 0.0
        %6091 = vmatprep.subr.mxu0 0.0
        %6092 = vmatpush1.msra.mxu0 0.0
        %6093 = vmatprep.subr.mxu0 0.0
        %6094 = vmatpush1.msra.mxu0 0.0
        %6095 = vmatprep.subr.mxu0 0.0
        %6096 = vmatpush1.msra.mxu0 0.0
        %6097 = vmatprep.subr.mxu0 0.0
        %6098 = vmatpush1.msra.mxu0 0.0
        %6099 = vmatprep.subr.mxu0 0.0
        %6100 = vmatpush1.msra.mxu0 0.0
        %6101 = vmatprep.subr.mxu0 0.0
        %6102 = vmatpush1.msra.mxu0 0.0
        %6103 = vmatprep.subr.mxu0 0.0
        %6104 = vmatpush1.msra.mxu0 0.0
        %6105 = vmatprep.subr.mxu0 0.0
        %6106 = vmatpush1.msra.mxu0 0.0
        %6107 = vmatprep.subr.mxu0 0.0
        %6108 = vmatpush1.msra.mxu0 0.0
        %6109 = vmatprep.subr.mxu0 %v5584
        %6110 = vmatpush1.msra.mxu0 %v5583
        %6111 = vmatprep.subr.mxu0 %v5568
        %6112 = vmatpush1.msra.mxu0 %v5567
        %6113 = vmatprep.subr.mxu0 %v5552
        %6114 = vmatpush1.msra.mxu0 %v5551
        %6115 = vmatprep.subr.mxu0 %v5536
        %6116 = vmatpush1.msra.mxu0 %v5535
        %6117 = vmatprep.subr.mxu0 0.0
        %6118 = vmatpush2.msra.mxu0 0.0
        %6119 = vmatprep.subr.mxu0 0.0
        %6120 = vmatpush2.msra.mxu0 0.0
        %6121 = vmatprep.subr.mxu0 0.0
        %6122 = vmatpush2.msra.mxu0 0.0
        %6123 = vmatprep.subr.mxu0 0.0
        %6124 = vmatpush2.msra.mxu0 0.0
        %6125 = vmatprep.subr.mxu0 0.0
        %6126 = vmatpush2.msra.mxu0 0.0
        %6127 = vmatprep.subr.mxu0 0.0
        %6128 = vmatpush2.msra.mxu0 0.0
        %6129 = vmatprep.subr.mxu0 0.0
        %6130 = vmatpush2.msra.mxu0 0.0
        %6131 = vmatprep.subr.mxu0 0.0
        %6132 = vmatpush2.msra.mxu0 0.0
        %6133 = vmatprep.subr.mxu0 0.0
        %6134 = vmatpush2.msra.mxu0 0.0
        %6135 = vmatprep.subr.mxu0 0.0
        %6136 = vmatpush2.msra.mxu0 0.0
        %6137 = vmatprep.subr.mxu0 0.0
        %6138 = vmatpush2.msra.mxu0 0.0
        %6139 = vmatprep.subr.mxu0 0.0
        %6140 = vmatpush2.msra.mxu0 0.0
        %6141 = vmatprep.subr.mxu0 0.0
        %6142 = vmatpush2.msra.mxu0 0.0
        %6143 = vmatprep.subr.mxu0 0.0
        %6144 = vmatpush2.msra.mxu0 0.0
        %6145 = vmatprep.subr.mxu0 0.0
        %6146 = vmatpush2.msra.mxu0 0.0
        %6147 = vmatprep.subr.mxu0 0.0
        %6148 = vmatpush2.msra.mxu0 0.0
        %6149 = vmatprep.mubr.f32.mxu0 0.0
        %6150 = vmatmul.mubr.f32.gmra.mxu0 %v5586
        %v6151 = vpop.f32.mrf.mxu0
        %v6152 = vadd.f32 0.0, %v6151
        %v6153 = vpop.f32.mrf.mxu0
        %v6154 = vadd.f32 0.0, %v6153
        %6155 = vdwg.mxu0
        %v6156 = vmul.f32 %v5655, %v5655
        %v6157 = vmul.f32 %v5657, %v5657
        %v6158 = vmul.f32 %v5726, %v5726
        %v6159 = vmul.f32 %v5728, %v5728
        %v6160 = vmul.f32 %v5797, %v5797
        %v6161 = vmul.f32 %v5799, %v5799
        %v6162 = vmul.f32 %v5868, %v5868
        %v6163 = vmul.f32 %v5870, %v5870
        %v6164 = vmul.f32 %v5939, %v5939
        %v6165 = vmul.f32 %v5941, %v5941
        %v6166 = vmul.f32 %v6010, %v6010
        %v6167 = vmul.f32 %v6012, %v6012
        %v6168 = vmul.f32 %v6081, %v6081
        %v6169 = vmul.f32 %v6083, %v6083
        %v6170 = vmul.f32 %v6152, %v6152
        %v6171 = vmul.f32 %v6154, %v6154
        %v6172 = vsel %vm609, %v6156, 0.0
        %v6173 = vrot.slane %v6172, 4
        %v6174 = vadd.f32 %v6172, %v6173
        %v6175 = vrot.slane %v6174, 2
        %v6176 = vadd.f32 %v6174, %v6175
        %v6177 = vrot.slane %v6176, 1
        %v6178 = vadd.f32 %v6176, %v6177
        %v6179 = vsel %vm609, %v6157, 0.0
        %v6180 = vrot.slane %v6179, 4
        %v6181 = vadd.f32 %v6179, %v6180
        %v6182 = vrot.slane %v6181, 2
        %v6183 = vadd.f32 %v6181, %v6182
        %v6184 = vrot.slane %v6183, 1
        %v6185 = vadd.f32 %v6183, %v6184
        %v6186 = vsel %vm609, %v6158, 0.0
        %v6187 = vrot.slane %v6186, 4
        %v6188 = vadd.f32 %v6186, %v6187
        %v6189 = vrot.slane %v6188, 2
        %v6190 = vadd.f32 %v6188, %v6189
        %v6191 = vrot.slane %v6190, 1
        %v6192 = vadd.f32 %v6190, %v6191
        %v6193 = vsel %vm609, %v6159, 0.0
        %v6194 = vrot.slane %v6193, 4
        %v6195 = vadd.f32 %v6193, %v6194
        %v6196 = vrot.slane %v6195, 2
        %v6197 = vadd.f32 %v6195, %v6196
        %v6198 = vrot.slane %v6197, 1
        %v6199 = vadd.f32 %v6197, %v6198
        %v6200 = vsel %vm609, %v6160, 0.0
        %v6201 = vrot.slane %v6200, 4
        %v6202 = vadd.f32 %v6200, %v6201
        %v6203 = vrot.slane %v6202, 2
        %v6204 = vadd.f32 %v6202, %v6203
        %v6205 = vrot.slane %v6204, 1
        %v6206 = vadd.f32 %v6204, %v6205
        %v6207 = vsel %vm609, %v6161, 0.0
        %v6208 = vrot.slane %v6207, 4
        %v6209 = vadd.f32 %v6207, %v6208
        %v6210 = vrot.slane %v6209, 2
        %v6211 = vadd.f32 %v6209, %v6210
        %v6212 = vrot.slane %v6211, 1
        %v6213 = vadd.f32 %v6211, %v6212
        %v6214 = vsel %vm609, %v6162, 0.0
        %v6215 = vrot.slane %v6214, 4
        %v6216 = vadd.f32 %v6214, %v6215
        %v6217 = vrot.slane %v6216, 2
        %v6218 = vadd.f32 %v6216, %v6217
        %v6219 = vrot.slane %v6218, 1
        %v6220 = vadd.f32 %v6218, %v6219
        %v6221 = vsel %vm609, %v6163, 0.0
        %v6222 = vrot.slane %v6221, 4
        %v6223 = vadd.f32 %v6221, %v6222
        %v6224 = vrot.slane %v6223, 2
        %v6225 = vadd.f32 %v6223, %v6224
        %v6226 = vrot.slane %v6225, 1
        %v6227 = vadd.f32 %v6225, %v6226
        %v6228 = vsel %vm609, %v6164, 0.0
        %v6229 = vrot.slane %v6228, 4
        %v6230 = vadd.f32 %v6228, %v6229
        %v6231 = vrot.slane %v6230, 2
        %v6232 = vadd.f32 %v6230, %v6231
        %v6233 = vrot.slane %v6232, 1
        %v6234 = vadd.f32 %v6232, %v6233
        %v6235 = vsel %vm609, %v6165, 0.0
        %v6236 = vrot.slane %v6235, 4
        %v6237 = vadd.f32 %v6235, %v6236
        %v6238 = vrot.slane %v6237, 2
        %v6239 = vadd.f32 %v6237, %v6238
        %v6240 = vrot.slane %v6239, 1
        %v6241 = vadd.f32 %v6239, %v6240
        %v6242 = vsel %vm609, %v6166, 0.0
        %v6243 = vrot.slane %v6242, 4
        %v6244 = vadd.f32 %v6242, %v6243
        %v6245 = vrot.slane %v6244, 2
        %v6246 = vadd.f32 %v6244, %v6245
        %v6247 = vrot.slane %v6246, 1
        %v6248 = vadd.f32 %v6246, %v6247
        %v6249 = vsel %vm609, %v6167, 0.0
        %v6250 = vrot.slane %v6249, 4
        %v6251 = vadd.f32 %v6249, %v6250
        %v6252 = vrot.slane %v6251, 2
        %v6253 = vadd.f32 %v6251, %v6252
        %v6254 = vrot.slane %v6253, 1
        %v6255 = vadd.f32 %v6253, %v6254
        %v6256 = vsel %vm609, %v6168, 0.0
        %v6257 = vrot.slane %v6256, 4
        %v6258 = vadd.f32 %v6256, %v6257
        %v6259 = vrot.slane %v6258, 2
        %v6260 = vadd.f32 %v6258, %v6259
        %v6261 = vrot.slane %v6260, 1
        %v6262 = vadd.f32 %v6260, %v6261
        %v6263 = vsel %vm609, %v6169, 0.0
        %v6264 = vrot.slane %v6263, 4
        %v6265 = vadd.f32 %v6263, %v6264
        %v6266 = vrot.slane %v6265, 2
        %v6267 = vadd.f32 %v6265, %v6266
        %v6268 = vrot.slane %v6267, 1
        %v6269 = vadd.f32 %v6267, %v6268
        %v6270 = vsel %vm609, %v6170, 0.0
        %v6271 = vrot.slane %v6270, 4
        %v6272 = vadd.f32 %v6270, %v6271
        %v6273 = vrot.slane %v6272, 2
        %v6274 = vadd.f32 %v6272, %v6273
        %v6275 = vrot.slane %v6274, 1
        %v6276 = vadd.f32 %v6274, %v6275
        %v6277 = vsel %vm609, %v6171, 0.0
        %v6278 = vrot.slane %v6277, 4
        %v6279 = vadd.f32 %v6277, %v6278
        %v6280 = vrot.slane %v6279, 2
        %v6281 = vadd.f32 %v6279, %v6280
        %v6282 = vrot.slane %v6281, 1
        %v6283 = vadd.f32 %v6281, %v6282
        %v6284 = vadd.f32 %v6178, 1e-08
        %v6285 = vadd.f32 %v6185, 1e-08
        %v6286 = vadd.f32 %v6192, 1e-08
        %v6287 = vadd.f32 %v6199, 1e-08
        %v6288 = vadd.f32 %v6206, 1e-08
        %v6289 = vadd.f32 %v6213, 1e-08
        %v6290 = vadd.f32 %v6220, 1e-08
        %v6291 = vadd.f32 %v6227, 1e-08
        %v6292 = vadd.f32 %v6234, 1e-08
        %v6293 = vadd.f32 %v6241, 1e-08
        %v6294 = vadd.f32 %v6248, 1e-08
        %v6295 = vadd.f32 %v6255, 1e-08
        %v6296 = vadd.f32 %v6262, 1e-08
        %v6297 = vadd.f32 %v6269, 1e-08
        %v6298 = vadd.f32 %v6276, 1e-08
        %v6299 = vadd.f32 %v6283, 1e-08
        %v6300 = vrsqrt.pop %v6284
        %v6301 = vrsqrt.pop %v6285
        %v6302 = vrsqrt.pop %v6286
        %v6303 = vrsqrt.pop %v6287
        %v6304 = vrsqrt.pop %v6288
        %v6305 = vrsqrt.pop %v6289
        %v6306 = vrsqrt.pop %v6290
        %v6307 = vrsqrt.pop %v6291
        %v6308 = vrsqrt.pop %v6292
        %v6309 = vrsqrt.pop %v6293
        %v6310 = vrsqrt.pop %v6294
        %v6311 = vrsqrt.pop %v6295
        %v6312 = vrsqrt.pop %v6296
        %v6313 = vrsqrt.pop %v6297
        %v6314 = vrsqrt.pop %v6298
        %v6315 = vrsqrt.pop %v6299
        %v6316 = vmul.f32 %v6284, %v6300
        %v6317 = vmul.f32 %v6285, %v6301
        %v6318 = vmul.f32 %v6286, %v6302
        %v6319 = vmul.f32 %v6287, %v6303
        %v6320 = vmul.f32 %v6288, %v6304
        %v6321 = vmul.f32 %v6289, %v6305
        %v6322 = vmul.f32 %v6290, %v6306
        %v6323 = vmul.f32 %v6291, %v6307
        %v6324 = vmul.f32 %v6292, %v6308
        %v6325 = vmul.f32 %v6293, %v6309
        %v6326 = vmul.f32 %v6294, %v6310
        %v6327 = vmul.f32 %v6295, %v6311
        %v6328 = vmul.f32 %v6296, %v6312
        %v6329 = vmul.f32 %v6297, %v6313
        %v6330 = vmul.f32 %v6298, %v6314
        %v6331 = vmul.f32 %v6299, %v6315
        %v6332 = vsub.f32 %v6316, 1.0
        %v6333 = vsub.f32 %v6317, 1.0
        %v6334 = vsub.f32 %v6318, 1.0
        %v6335 = vsub.f32 %v6319, 1.0
        %v6336 = vsub.f32 %v6320, 1.0
        %v6337 = vsub.f32 %v6321, 1.0
        %v6338 = vsub.f32 %v6322, 1.0
        %v6339 = vsub.f32 %v6323, 1.0
        %v6340 = vsub.f32 %v6324, 1.0
        %v6341 = vsub.f32 %v6325, 1.0
        %v6342 = vsub.f32 %v6326, 1.0
        %v6343 = vsub.f32 %v6327, 1.0
        %v6344 = vsub.f32 %v6328, 1.0
        %v6345 = vsub.f32 %v6329, 1.0
        %v6346 = vsub.f32 %v6330, 1.0
        %v6347 = vsub.f32 %v6331, 1.0
        %v6348 = vmul.f32 %v6332, %v6332
        %v6349 = vmul.f32 %v6333, %v6333
        %v6350 = vmul.f32 %v6334, %v6334
        %v6351 = vmul.f32 %v6335, %v6335
        %v6352 = vmul.f32 %v6336, %v6336
        %v6353 = vmul.f32 %v6337, %v6337
        %v6354 = vmul.f32 %v6338, %v6338
        %v6355 = vmul.f32 %v6339, %v6339
        %v6356 = vmul.f32 %v6340, %v6340
        %v6357 = vmul.f32 %v6341, %v6341
        %v6358 = vmul.f32 %v6342, %v6342
        %v6359 = vmul.f32 %v6343, %v6343
        %v6360 = vmul.f32 %v6344, %v6344
        %v6361 = vmul.f32 %v6345, %v6345
        %v6362 = vmul.f32 %v6346, %v6346
        %v6363 = vmul.f32 %v6347, %v6347
        %v6364 = vmul.f32 %v563, %v5655
        %v6365 = vmul.f32 %v563, %v5657
        %v6366 = vmul.f32 %v563, %v5726
        %v6367 = vmul.f32 %v563, %v5728
        %v6368 = vmul.f32 %v563, %v5797
        %v6369 = vmul.f32 %v563, %v5799
        %v6370 = vmul.f32 %v563, %v5868
        %v6371 = vmul.f32 %v563, %v5870
        %v6372 = vmul.f32 %v563, %v5939
        %v6373 = vmul.f32 %v563, %v5941
        %v6374 = vmul.f32 %v563, %v6010
        %v6375 = vmul.f32 %v563, %v6012
        %v6376 = vmul.f32 %v563, %v6081
        %v6377 = vmul.f32 %v563, %v6083
        %v6378 = vmul.f32 %v563, %v6152
        %v6379 = vmul.f32 %v563, %v6154
        %v6380 = vsel %vm609, %v6364, 0.0
        %v6381 = vrot.slane %v6380, 4
        %v6382 = vadd.f32 %v6380, %v6381
        %v6383 = vrot.slane %v6382, 2
        %v6384 = vadd.f32 %v6382, %v6383
        %v6385 = vrot.slane %v6384, 1
        %v6386 = vadd.f32 %v6384, %v6385
        %v6387 = vsel %vm609, %v6365, 0.0
        %v6388 = vrot.slane %v6387, 4
        %v6389 = vadd.f32 %v6387, %v6388
        %v6390 = vrot.slane %v6389, 2
        %v6391 = vadd.f32 %v6389, %v6390
        %v6392 = vrot.slane %v6391, 1
        %v6393 = vadd.f32 %v6391, %v6392
        %v6394 = vsel %vm609, %v6366, 0.0
        %v6395 = vrot.slane %v6394, 4
        %v6396 = vadd.f32 %v6394, %v6395
        %v6397 = vrot.slane %v6396, 2
        %v6398 = vadd.f32 %v6396, %v6397
        %v6399 = vrot.slane %v6398, 1
        %v6400 = vadd.f32 %v6398, %v6399
        %v6401 = vsel %vm609, %v6367, 0.0
        %v6402 = vrot.slane %v6401, 4
        %v6403 = vadd.f32 %v6401, %v6402
        %v6404 = vrot.slane %v6403, 2
        %v6405 = vadd.f32 %v6403, %v6404
        %v6406 = vrot.slane %v6405, 1
        %v6407 = vadd.f32 %v6405, %v6406
        %v6408 = vsel %vm609, %v6368, 0.0
        %v6409 = vrot.slane %v6408, 4
        %v6410 = vadd.f32 %v6408, %v6409
        %v6411 = vrot.slane %v6410, 2
        %v6412 = vadd.f32 %v6410, %v6411
        %v6413 = vrot.slane %v6412, 1
        %v6414 = vadd.f32 %v6412, %v6413
        %v6415 = vsel %vm609, %v6369, 0.0
        %v6416 = vrot.slane %v6415, 4
        %v6417 = vadd.f32 %v6415, %v6416
        %v6418 = vrot.slane %v6417, 2
        %v6419 = vadd.f32 %v6417, %v6418
        %v6420 = vrot.slane %v6419, 1
        %v6421 = vadd.f32 %v6419, %v6420
        %v6422 = vsel %vm609, %v6370, 0.0
        %v6423 = vrot.slane %v6422, 4
        %v6424 = vadd.f32 %v6422, %v6423
        %v6425 = vrot.slane %v6424, 2
        %v6426 = vadd.f32 %v6424, %v6425
        %v6427 = vrot.slane %v6426, 1
        %v6428 = vadd.f32 %v6426, %v6427
        %v6429 = vsel %vm609, %v6371, 0.0
        %v6430 = vrot.slane %v6429, 4
        %v6431 = vadd.f32 %v6429, %v6430
        %v6432 = vrot.slane %v6431, 2
        %v6433 = vadd.f32 %v6431, %v6432
        %v6434 = vrot.slane %v6433, 1
        %v6435 = vadd.f32 %v6433, %v6434
        %v6436 = vsel %vm609, %v6372, 0.0
        %v6437 = vrot.slane %v6436, 4
        %v6438 = vadd.f32 %v6436, %v6437
        %v6439 = vrot.slane %v6438, 2
        %v6440 = vadd.f32 %v6438, %v6439
        %v6441 = vrot.slane %v6440, 1
        %v6442 = vadd.f32 %v6440, %v6441
        %v6443 = vsel %vm609, %v6373, 0.0
        %v6444 = vrot.slane %v6443, 4
        %v6445 = vadd.f32 %v6443, %v6444
        %v6446 = vrot.slane %v6445, 2
        %v6447 = vadd.f32 %v6445, %v6446
        %v6448 = vrot.slane %v6447, 1
        %v6449 = vadd.f32 %v6447, %v6448
        %v6450 = vsel %vm609, %v6374, 0.0
        %v6451 = vrot.slane %v6450, 4
        %v6452 = vadd.f32 %v6450, %v6451
        %v6453 = vrot.slane %v6452, 2
        %v6454 = vadd.f32 %v6452, %v6453
        %v6455 = vrot.slane %v6454, 1
        %v6456 = vadd.f32 %v6454, %v6455
        %v6457 = vsel %vm609, %v6375, 0.0
        %v6458 = vrot.slane %v6457, 4
        %v6459 = vadd.f32 %v6457, %v6458
        %v6460 = vrot.slane %v6459, 2
        %v6461 = vadd.f32 %v6459, %v6460
        %v6462 = vrot.slane %v6461, 1
        %v6463 = vadd.f32 %v6461, %v6462
        %v6464 = vsel %vm609, %v6376, 0.0
        %v6465 = vrot.slane %v6464, 4
        %v6466 = vadd.f32 %v6464, %v6465
        %v6467 = vrot.slane %v6466, 2
        %v6468 = vadd.f32 %v6466, %v6467
        %v6469 = vrot.slane %v6468, 1
        %v6470 = vadd.f32 %v6468, %v6469
        %v6471 = vsel %vm609, %v6377, 0.0
        %v6472 = vrot.slane %v6471, 4
        %v6473 = vadd.f32 %v6471, %v6472
        %v6474 = vrot.slane %v6473, 2
        %v6475 = vadd.f32 %v6473, %v6474
        %v6476 = vrot.slane %v6475, 1
        %v6477 = vadd.f32 %v6475, %v6476
        %v6478 = vsel %vm609, %v6378, 0.0
        %v6479 = vrot.slane %v6478, 4
        %v6480 = vadd.f32 %v6478, %v6479
        %v6481 = vrot.slane %v6480, 2
        %v6482 = vadd.f32 %v6480, %v6481
        %v6483 = vrot.slane %v6482, 1
        %v6484 = vadd.f32 %v6482, %v6483
        %v6485 = vsel %vm609, %v6379, 0.0
        %v6486 = vrot.slane %v6485, 4
        %v6487 = vadd.f32 %v6485, %v6486
        %v6488 = vrot.slane %v6487, 2
        %v6489 = vadd.f32 %v6487, %v6488
        %v6490 = vrot.slane %v6489, 1
        %v6491 = vadd.f32 %v6489, %v6490
        %v6492 = vand.u32 2147483647, %v6386
        %v6493 = vand.u32 2147483647, %v6393
        %v6494 = vand.u32 2147483647, %v6400
        %v6495 = vand.u32 2147483647, %v6407
        %v6496 = vand.u32 2147483647, %v6414
        %v6497 = vand.u32 2147483647, %v6421
        %v6498 = vand.u32 2147483647, %v6428
        %v6499 = vand.u32 2147483647, %v6435
        %v6500 = vand.u32 2147483647, %v6442
        %v6501 = vand.u32 2147483647, %v6449
        %v6502 = vand.u32 2147483647, %v6456
        %v6503 = vand.u32 2147483647, %v6463
        %v6504 = vand.u32 2147483647, %v6470
        %v6505 = vand.u32 2147483647, %v6477
        %v6506 = vand.u32 2147483647, %v6484
        %v6507 = vand.u32 2147483647, %v6491
        %v6508 = vsub.f32 0.0, %v6492
        %v6509 = vsub.f32 0.0, %v6493
        %v6510 = vsub.f32 0.0, %v6494
        %v6511 = vsub.f32 0.0, %v6495
        %v6512 = vsub.f32 0.0, %v6496
        %v6513 = vsub.f32 0.0, %v6497
        %v6514 = vsub.f32 0.0, %v6498
        %v6515 = vsub.f32 0.0, %v6499
        %v6516 = vsub.f32 0.0, %v6500
        %v6517 = vsub.f32 0.0, %v6501
        %v6518 = vsub.f32 0.0, %v6502
        %v6519 = vsub.f32 0.0, %v6503
        %v6520 = vsub.f32 0.0, %v6504
        %v6521 = vsub.f32 0.0, %v6505
        %v6522 = vsub.f32 0.0, %v6506
        %v6523 = vsub.f32 0.0, %v6507
        %v6524 = vmul.f32 %v6508, 0.06666667
        %v6525 = vmul.f32 %v6509, 0.06666667
        %v6526 = vmul.f32 %v6510, 0.06666667
        %v6527 = vmul.f32 %v6511, 0.06666667
        %v6528 = vmul.f32 %v6512, 0.06666667
        %v6529 = vmul.f32 %v6513, 0.06666667
        %v6530 = vmul.f32 %v6514, 0.06666667
        %v6531 = vmul.f32 %v6515, 0.06666667
        %v6532 = vmul.f32 %v6516, 0.06666667
        %v6533 = vmul.f32 %v6517, 0.06666667
        %v6534 = vmul.f32 %v6518, 0.06666667
        %v6535 = vmul.f32 %v6519, 0.06666667
        %v6536 = vmul.f32 %v6520, 0.06666667
        %v6537 = vmul.f32 %v6521, 0.06666667
        %v6538 = vmul.f32 %v6522, 0.06666667
        %v6539 = vmul.f32 %v6523, 0.06666667
        %v6540 = vsub.f32 %v4116, %v6524
        %v6541 = vsub.f32 %v4118, %v6525
        %v6542 = vsub.f32 %v4199, %v6526
        %v6543 = vsub.f32 %v4201, %v6527
        %v6544 = vsub.f32 %v4282, %v6528
        %v6545 = vsub.f32 %v4284, %v6529
        %v6546 = vsub.f32 %v4365, %v6530
        %v6547 = vsub.f32 %v4367, %v6531
        %v6548 = vsub.f32 %v4448, %v6532
        %v6549 = vsub.f32 %v4450, %v6533
        %v6550 = vsub.f32 %v4531, %v6534
        %v6551 = vsub.f32 %v4533, %v6535
        %v6552 = vsub.f32 %v4614, %v6536
        %v6553 = vsub.f32 %v4616, %v6537
        %v6554 = vsub.f32 %v4697, %v6538
        %v6555 = vsub.f32 %v4699, %v6539
        %v6556 = vstv %s564
        %v6557 = vmul.f32 %v6540, %v6556
        %v6558 = vmul.f32 %v6541, %v6556
        %v6559 = vmul.f32 %v6542, %v6556
        %v6560 = vmul.f32 %v6543, %v6556
        %v6561 = vmul.f32 %v6544, %v6556
        %v6562 = vmul.f32 %v6545, %v6556
        %v6563 = vmul.f32 %v6546, %v6556
        %v6564 = vmul.f32 %v6547, %v6556
        %v6565 = vmul.f32 %v6548, %v6556
        %v6566 = vmul.f32 %v6549, %v6556
        %v6567 = vmul.f32 %v6550, %v6556
        %v6568 = vmul.f32 %v6551, %v6556
        %v6569 = vmul.f32 %v6552, %v6556
        %v6570 = vmul.f32 %v6553, %v6556
        %v6571 = vmul.f32 %v6554, %v6556
        %v6572 = vmul.f32 %v6555, %v6556
        %v6573 = vand.u32 2147483647, %v6557
        %v6574 = vand.u32 2147483647, %v6558
        %v6575 = vand.u32 2147483647, %v6559
        %v6576 = vand.u32 2147483647, %v6560
        %v6577 = vand.u32 2147483647, %v6561
        %v6578 = vand.u32 2147483647, %v6562
        %v6579 = vand.u32 2147483647, %v6563
        %v6580 = vand.u32 2147483647, %v6564
        %v6581 = vand.u32 2147483647, %v6565
        %v6582 = vand.u32 2147483647, %v6566
        %v6583 = vand.u32 2147483647, %v6567
        %v6584 = vand.u32 2147483647, %v6568
        %v6585 = vand.u32 2147483647, %v6569
        %v6586 = vand.u32 2147483647, %v6570
        %v6587 = vand.u32 2147483647, %v6571
        %v6588 = vand.u32 2147483647, %v6572
        %v6589 = vsub.f32 0.0, %v6573
        %v6590 = vsub.f32 0.0, %v6574
        %v6591 = vsub.f32 0.0, %v6575
        %v6592 = vsub.f32 0.0, %v6576
        %v6593 = vsub.f32 0.0, %v6577
        %v6594 = vsub.f32 0.0, %v6578
        %v6595 = vsub.f32 0.0, %v6579
        %v6596 = vsub.f32 0.0, %v6580
        %v6597 = vsub.f32 0.0, %v6581
        %v6598 = vsub.f32 0.0, %v6582
        %v6599 = vsub.f32 0.0, %v6583
        %v6600 = vsub.f32 0.0, %v6584
        %v6601 = vsub.f32 0.0, %v6585
        %v6602 = vsub.f32 0.0, %v6586
        %v6603 = vsub.f32 0.0, %v6587
        %v6604 = vsub.f32 0.0, %v6588
        %v6605 = vmul.f32 %v6589, 1.442695
        %v6606 = vpow.pop %v6605
        %v6607 = vmul.f32 %v6590, 1.442695
        %v6608 = vpow.pop %v6607
        %v6609 = vmul.f32 %v6591, 1.442695
        %v6610 = vpow.pop %v6609
        %v6611 = vmul.f32 %v6592, 1.442695
        %v6612 = vpow.pop %v6611
        %v6613 = vmul.f32 %v6593, 1.442695
        %v6614 = vpow.pop %v6613
        %v6615 = vmul.f32 %v6594, 1.442695
        %v6616 = vpow.pop %v6615
        %v6617 = vmul.f32 %v6595, 1.442695
        %v6618 = vpow.pop %v6617
        %v6619 = vmul.f32 %v6596, 1.442695
        %v6620 = vpow.pop %v6619
        %v6621 = vmul.f32 %v6597, 1.442695
        %v6622 = vpow.pop %v6621
        %v6623 = vmul.f32 %v6598, 1.442695
        %v6624 = vpow.pop %v6623
        %v6625 = vmul.f32 %v6599, 1.442695
        %v6626 = vpow.pop %v6625
        %v6627 = vmul.f32 %v6600, 1.442695
        %v6628 = vpow.pop %v6627
        %v6629 = vmul.f32 %v6601, 1.442695
        %v6630 = vpow.pop %v6629
        %v6631 = vmul.f32 %v6602, 1.442695
        %v6632 = vpow.pop %v6631
        %v6633 = vmul.f32 %v6603, 1.442695
        %v6634 = vpow.pop %v6633
        %v6635 = vmul.f32 %v6604, 1.442695
        %v6636 = vpow.pop %v6635
        %vm6637 = vcmp.ge.f32.partialorder %v6557, 0.0
        %vm6638 = vcmp.ge.f32.partialorder %v6558, 0.0
        %vm6639 = vcmp.ge.f32.partialorder %v6559, 0.0
        %vm6640 = vcmp.ge.f32.partialorder %v6560, 0.0
        %vm6641 = vcmp.ge.f32.partialorder %v6561, 0.0
        %vm6642 = vcmp.ge.f32.partialorder %v6562, 0.0
        %vm6643 = vcmp.ge.f32.partialorder %v6563, 0.0
        %vm6644 = vcmp.ge.f32.partialorder %v6564, 0.0
        %vm6645 = vcmp.ge.f32.partialorder %v6565, 0.0
        %vm6646 = vcmp.ge.f32.partialorder %v6566, 0.0
        %vm6647 = vcmp.ge.f32.partialorder %v6567, 0.0
        %vm6648 = vcmp.ge.f32.partialorder %v6568, 0.0
        %vm6649 = vcmp.ge.f32.partialorder %v6569, 0.0
        %vm6650 = vcmp.ge.f32.partialorder %v6570, 0.0
        %vm6651 = vcmp.ge.f32.partialorder %v6571, 0.0
        %vm6652 = vcmp.ge.f32.partialorder %v6572, 0.0
        %v6653 = vsel %vm6637, 1.0, %v6606
        %v6654 = vsel %vm6638, 1.0, %v6608
        %v6655 = vsel %vm6639, 1.0, %v6610
        %v6656 = vsel %vm6640, 1.0, %v6612
        %v6657 = vsel %vm6641, 1.0, %v6614
        %v6658 = vsel %vm6642, 1.0, %v6616
        %v6659 = vsel %vm6643, 1.0, %v6618
        %v6660 = vsel %vm6644, 1.0, %v6620
        %v6661 = vsel %vm6645, 1.0, %v6622
        %v6662 = vsel %vm6646, 1.0, %v6624
        %v6663 = vsel %vm6647, 1.0, %v6626
        %v6664 = vsel %vm6648, 1.0, %v6628
        %v6665 = vsel %vm6649, 1.0, %v6630
        %v6666 = vsel %vm6650, 1.0, %v6632
        %v6667 = vsel %vm6651, 1.0, %v6634
        %v6668 = vsel %vm6652, 1.0, %v6636
        %v6669 = vadd.f32 %v6606, 1.0
        %v6670 = vadd.f32 %v6608, 1.0
        %v6671 = vadd.f32 %v6610, 1.0
        %v6672 = vadd.f32 %v6612, 1.0
        %v6673 = vadd.f32 %v6614, 1.0
        %v6674 = vadd.f32 %v6616, 1.0
        %v6675 = vadd.f32 %v6618, 1.0
        %v6676 = vadd.f32 %v6620, 1.0
        %v6677 = vadd.f32 %v6622, 1.0
        %v6678 = vadd.f32 %v6624, 1.0
        %v6679 = vadd.f32 %v6626, 1.0
        %v6680 = vadd.f32 %v6628, 1.0
        %v6681 = vadd.f32 %v6630, 1.0
        %v6682 = vadd.f32 %v6632, 1.0
        %v6683 = vadd.f32 %v6634, 1.0
        %v6684 = vadd.f32 %v6636, 1.0
        %v6685 = vrcp.pop %v6669
        %v6686 = vmul.f32 %v6653, %v6685
        %v6687 = vrcp.pop %v6670
        %v6688 = vmul.f32 %v6654, %v6687
        %v6689 = vrcp.pop %v6671
        %v6690 = vmul.f32 %v6655, %v6689
        %v6691 = vrcp.pop %v6672
        %v6692 = vmul.f32 %v6656, %v6691
        %v6693 = vrcp.pop %v6673
        %v6694 = vmul.f32 %v6657, %v6693
        %v6695 = vrcp.pop %v6674
        %v6696 = vmul.f32 %v6658, %v6695
        %v6697 = vrcp.pop %v6675
        %v6698 = vmul.f32 %v6659, %v6697
        %v6699 = vrcp.pop %v6676
        %v6700 = vmul.f32 %v6660, %v6699
        %v6701 = vrcp.pop %v6677
        %v6702 = vmul.f32 %v6661, %v6701
        %v6703 = vrcp.pop %v6678
        %v6704 = vmul.f32 %v6662, %v6703
        %v6705 = vrcp.pop %v6679
        %v6706 = vmul.f32 %v6663, %v6705
        %v6707 = vrcp.pop %v6680
        %v6708 = vmul.f32 %v6664, %v6707
        %v6709 = vrcp.pop %v6681
        %v6710 = vmul.f32 %v6665, %v6709
        %v6711 = vrcp.pop %v6682
        %v6712 = vmul.f32 %v6666, %v6711
        %v6713 = vrcp.pop %v6683
        %v6714 = vmul.f32 %v6667, %v6713
        %v6715 = vrcp.pop %v6684
        %v6716 = vmul.f32 %v6668, %v6715
        %v6717 = vadd.f32 %v4116, %v6524
        %v6718 = vadd.f32 %v4118, %v6525
        %v6719 = vadd.f32 %v4199, %v6526
        %v6720 = vadd.f32 %v4201, %v6527
        %v6721 = vadd.f32 %v4282, %v6528
        %v6722 = vadd.f32 %v4284, %v6529
        %v6723 = vadd.f32 %v4365, %v6530
        %v6724 = vadd.f32 %v4367, %v6531
        %v6725 = vadd.f32 %v4448, %v6532
        %v6726 = vadd.f32 %v4450, %v6533
        %v6727 = vadd.f32 %v4531, %v6534
        %v6728 = vadd.f32 %v4533, %v6535
        %v6729 = vadd.f32 %v4614, %v6536
        %v6730 = vadd.f32 %v4616, %v6537
        %v6731 = vadd.f32 %v4697, %v6538
        %v6732 = vadd.f32 %v4699, %v6539
        %v6733 = vmul.f32 %v6717, %v6556
        %v6734 = vmul.f32 %v6718, %v6556
        %v6735 = vmul.f32 %v6719, %v6556
        %v6736 = vmul.f32 %v6720, %v6556
        %v6737 = vmul.f32 %v6721, %v6556
        %v6738 = vmul.f32 %v6722, %v6556
        %v6739 = vmul.f32 %v6723, %v6556
        %v6740 = vmul.f32 %v6724, %v6556
        %v6741 = vmul.f32 %v6725, %v6556
        %v6742 = vmul.f32 %v6726, %v6556
        %v6743 = vmul.f32 %v6727, %v6556
        %v6744 = vmul.f32 %v6728, %v6556
        %v6745 = vmul.f32 %v6729, %v6556
        %v6746 = vmul.f32 %v6730, %v6556
        %v6747 = vmul.f32 %v6731, %v6556
        %v6748 = vmul.f32 %v6732, %v6556
        %v6749 = vand.u32 2147483647, %v6733
        %v6750 = vand.u32 2147483647, %v6734
        %v6751 = vand.u32 2147483647, %v6735
        %v6752 = vand.u32 2147483647, %v6736
        %v6753 = vand.u32 2147483647, %v6737
        %v6754 = vand.u32 2147483647, %v6738
        %v6755 = vand.u32 2147483647, %v6739
        %v6756 = vand.u32 2147483647, %v6740
        %v6757 = vand.u32 2147483647, %v6741
        %v6758 = vand.u32 2147483647, %v6742
        %v6759 = vand.u32 2147483647, %v6743
        %v6760 = vand.u32 2147483647, %v6744
        %v6761 = vand.u32 2147483647, %v6745
        %v6762 = vand.u32 2147483647, %v6746
        %v6763 = vand.u32 2147483647, %v6747
        %v6764 = vand.u32 2147483647, %v6748
        %v6765 = vsub.f32 0.0, %v6749
        %v6766 = vsub.f32 0.0, %v6750
        %v6767 = vsub.f32 0.0, %v6751
        %v6768 = vsub.f32 0.0, %v6752
        %v6769 = vsub.f32 0.0, %v6753
        %v6770 = vsub.f32 0.0, %v6754
        %v6771 = vsub.f32 0.0, %v6755
        %v6772 = vsub.f32 0.0, %v6756
        %v6773 = vsub.f32 0.0, %v6757
        %v6774 = vsub.f32 0.0, %v6758
        %v6775 = vsub.f32 0.0, %v6759
        %v6776 = vsub.f32 0.0, %v6760
        %v6777 = vsub.f32 0.0, %v6761
        %v6778 = vsub.f32 0.0, %v6762
        %v6779 = vsub.f32 0.0, %v6763
        %v6780 = vsub.f32 0.0, %v6764
        %v6781 = vmul.f32 %v6765, 1.442695
        %v6782 = vpow.pop %v6781
        %v6783 = vmul.f32 %v6766, 1.442695
        %v6784 = vpow.pop %v6783
        %v6785 = vmul.f32 %v6767, 1.442695
        %v6786 = vpow.pop %v6785
        %v6787 = vmul.f32 %v6768, 1.442695
        %v6788 = vpow.pop %v6787
        %v6789 = vmul.f32 %v6769, 1.442695
        %v6790 = vpow.pop %v6789
        %v6791 = vmul.f32 %v6770, 1.442695
        %v6792 = vpow.pop %v6791
        %v6793 = vmul.f32 %v6771, 1.442695
        %v6794 = vpow.pop %v6793
        %v6795 = vmul.f32 %v6772, 1.442695
        %v6796 = vpow.pop %v6795
        %v6797 = vmul.f32 %v6773, 1.442695
        %v6798 = vpow.pop %v6797
        %v6799 = vmul.f32 %v6774, 1.442695
        %v6800 = vpow.pop %v6799
        %v6801 = vmul.f32 %v6775, 1.442695
        %v6802 = vpow.pop %v6801
        %v6803 = vmul.f32 %v6776, 1.442695
        %v6804 = vpow.pop %v6803
        %v6805 = vmul.f32 %v6777, 1.442695
        %v6806 = vpow.pop %v6805
        %v6807 = vmul.f32 %v6778, 1.442695
        %v6808 = vpow.pop %v6807
        %v6809 = vmul.f32 %v6779, 1.442695
        %v6810 = vpow.pop %v6809
        %v6811 = vmul.f32 %v6780, 1.442695
        %v6812 = vpow.pop %v6811
        %vm6813 = vcmp.ge.f32.partialorder %v6733, 0.0
        %vm6814 = vcmp.ge.f32.partialorder %v6734, 0.0
        %vm6815 = vcmp.ge.f32.partialorder %v6735, 0.0
        %vm6816 = vcmp.ge.f32.partialorder %v6736, 0.0
        %vm6817 = vcmp.ge.f32.partialorder %v6737, 0.0
        %vm6818 = vcmp.ge.f32.partialorder %v6738, 0.0
        %vm6819 = vcmp.ge.f32.partialorder %v6739, 0.0
        %vm6820 = vcmp.ge.f32.partialorder %v6740, 0.0
        %vm6821 = vcmp.ge.f32.partialorder %v6741, 0.0
        %vm6822 = vcmp.ge.f32.partialorder %v6742, 0.0
        %vm6823 = vcmp.ge.f32.partialorder %v6743, 0.0
        %vm6824 = vcmp.ge.f32.partialorder %v6744, 0.0
        %vm6825 = vcmp.ge.f32.partialorder %v6745, 0.0
        %vm6826 = vcmp.ge.f32.partialorder %v6746, 0.0
        %vm6827 = vcmp.ge.f32.partialorder %v6747, 0.0
        %vm6828 = vcmp.ge.f32.partialorder %v6748, 0.0
        %v6829 = vsel %vm6813, 1.0, %v6782
        %v6830 = vsel %vm6814, 1.0, %v6784
        %v6831 = vsel %vm6815, 1.0, %v6786
        %v6832 = vsel %vm6816, 1.0, %v6788
        %v6833 = vsel %vm6817, 1.0, %v6790
        %v6834 = vsel %vm6818, 1.0, %v6792
        %v6835 = vsel %vm6819, 1.0, %v6794
        %v6836 = vsel %vm6820, 1.0, %v6796
        %v6837 = vsel %vm6821, 1.0, %v6798
        %v6838 = vsel %vm6822, 1.0, %v6800
        %v6839 = vsel %vm6823, 1.0, %v6802
        %v6840 = vsel %vm6824, 1.0, %v6804
        %v6841 = vsel %vm6825, 1.0, %v6806
        %v6842 = vsel %vm6826, 1.0, %v6808
        %v6843 = vsel %vm6827, 1.0, %v6810
        %v6844 = vsel %vm6828, 1.0, %v6812
        %v6845 = vadd.f32 %v6782, 1.0
        %v6846 = vadd.f32 %v6784, 1.0
        %v6847 = vadd.f32 %v6786, 1.0
        %v6848 = vadd.f32 %v6788, 1.0
        %v6849 = vadd.f32 %v6790, 1.0
        %v6850 = vadd.f32 %v6792, 1.0
        %v6851 = vadd.f32 %v6794, 1.0
        %v6852 = vadd.f32 %v6796, 1.0
        %v6853 = vadd.f32 %v6798, 1.0
        %v6854 = vadd.f32 %v6800, 1.0
        %v6855 = vadd.f32 %v6802, 1.0
        %v6856 = vadd.f32 %v6804, 1.0
        %v6857 = vadd.f32 %v6806, 1.0
        %v6858 = vadd.f32 %v6808, 1.0
        %v6859 = vadd.f32 %v6810, 1.0
        %v6860 = vadd.f32 %v6812, 1.0
        %v6861 = vrcp.pop %v6845
        %v6862 = vmul.f32 %v6829, %v6861
        %v6863 = vrcp.pop %v6846
        %v6864 = vmul.f32 %v6830, %v6863
        %v6865 = vrcp.pop %v6847
        %v6866 = vmul.f32 %v6831, %v6865
        %v6867 = vrcp.pop %v6848
        %v6868 = vmul.f32 %v6832, %v6867
        %v6869 = vrcp.pop %v6849
        %v6870 = vmul.f32 %v6833, %v6869
        %v6871 = vrcp.pop %v6850
        %v6872 = vmul.f32 %v6834, %v6871
        %v6873 = vrcp.pop %v6851
        %v6874 = vmul.f32 %v6835, %v6873
        %v6875 = vrcp.pop %v6852
        %v6876 = vmul.f32 %v6836, %v6875
        %v6877 = vrcp.pop %v6853
        %v6878 = vmul.f32 %v6837, %v6877
        %v6879 = vrcp.pop %v6854
        %v6880 = vmul.f32 %v6838, %v6879
        %v6881 = vrcp.pop %v6855
        %v6882 = vmul.f32 %v6839, %v6881
        %v6883 = vrcp.pop %v6856
        %v6884 = vmul.f32 %v6840, %v6883
        %v6885 = vrcp.pop %v6857
        %v6886 = vmul.f32 %v6841, %v6885
        %v6887 = vrcp.pop %v6858
        %v6888 = vmul.f32 %v6842, %v6887
        %v6889 = vrcp.pop %v6859
        %v6890 = vmul.f32 %v6843, %v6889
        %v6891 = vrcp.pop %v6860
        %v6892 = vmul.f32 %v6844, %v6891
        %v6893 = vsub.f32 %v6686, %v6862
        %v6894 = vsub.f32 %v6688, %v6864
        %v6895 = vsub.f32 %v6690, %v6866
        %v6896 = vsub.f32 %v6692, %v6868
        %v6897 = vsub.f32 %v6694, %v6870
        %v6898 = vsub.f32 %v6696, %v6872
        %v6899 = vsub.f32 %v6698, %v6874
        %v6900 = vsub.f32 %v6700, %v6876
        %v6901 = vsub.f32 %v6702, %v6878
        %v6902 = vsub.f32 %v6704, %v6880
        %v6903 = vsub.f32 %v6706, %v6882
        %v6904 = vsub.f32 %v6708, %v6884
        %v6905 = vsub.f32 %v6710, %v6886
        %v6906 = vsub.f32 %v6712, %v6888
        %v6907 = vsub.f32 %v6714, %v6890
        %v6908 = vsub.f32 %v6716, %v6892
        %v6909 = vadd.f32 %v6893, 1e-05
        %v6910 = vadd.f32 %v6894, 1e-05
        %v6911 = vadd.f32 %v6895, 1e-05
        %v6912 = vadd.f32 %v6896, 1e-05
        %v6913 = vadd.f32 %v6897, 1e-05
        %v6914 = vadd.f32 %v6898, 1e-05
        %v6915 = vadd.f32 %v6899, 1e-05
        %v6916 = vadd.f32 %v6900, 1e-05
        %v6917 = vadd.f32 %v6901, 1e-05
        %v6918 = vadd.f32 %v6902, 1e-05
        %v6919 = vadd.f32 %v6903, 1e-05
        %v6920 = vadd.f32 %v6904, 1e-05
        %v6921 = vadd.f32 %v6905, 1e-05
        %v6922 = vadd.f32 %v6906, 1e-05
        %v6923 = vadd.f32 %v6907, 1e-05
        %v6924 = vadd.f32 %v6908, 1e-05
        %v6925 = vadd.f32 %v6686, 1e-05
        %v6926 = vadd.f32 %v6688, 1e-05
        %v6927 = vadd.f32 %v6690, 1e-05
        %v6928 = vadd.f32 %v6692, 1e-05
        %v6929 = vadd.f32 %v6694, 1e-05
        %v6930 = vadd.f32 %v6696, 1e-05
        %v6931 = vadd.f32 %v6698, 1e-05
        %v6932 = vadd.f32 %v6700, 1e-05
        %v6933 = vadd.f32 %v6702, 1e-05
        %v6934 = vadd.f32 %v6704, 1e-05
        %v6935 = vadd.f32 %v6706, 1e-05
        %v6936 = vadd.f32 %v6708, 1e-05
        %v6937 = vadd.f32 %v6710, 1e-05
        %v6938 = vadd.f32 %v6712, 1e-05
        %v6939 = vadd.f32 %v6714, 1e-05
        %v6940 = vadd.f32 %v6716, 1e-05
        %v6941 = vrcp.pop %v6925
        %v6942 = vmul.f32 %v6909, %v6941
        %v6943 = vrcp.pop %v6926
        %v6944 = vmul.f32 %v6910, %v6943
        %v6945 = vrcp.pop %v6927
        %v6946 = vmul.f32 %v6911, %v6945
        %v6947 = vrcp.pop %v6928
        %v6948 = vmul.f32 %v6912, %v6947
        %v6949 = vrcp.pop %v6929
        %v6950 = vmul.f32 %v6913, %v6949
        %v6951 = vrcp.pop %v6930
        %v6952 = vmul.f32 %v6914, %v6951
        %v6953 = vrcp.pop %v6931
        %v6954 = vmul.f32 %v6915, %v6953
        %v6955 = vrcp.pop %v6932
        %v6956 = vmul.f32 %v6916, %v6955
        %v6957 = vrcp.pop %v6933
        %v6958 = vmul.f32 %v6917, %v6957
        %v6959 = vrcp.pop %v6934
        %v6960 = vmul.f32 %v6918, %v6959
        %v6961 = vrcp.pop %v6935
        %v6962 = vmul.f32 %v6919, %v6961
        %v6963 = vrcp.pop %v6936
        %v6964 = vmul.f32 %v6920, %v6963
        %v6965 = vrcp.pop %v6937
        %v6966 = vmul.f32 %v6921, %v6965
        %v6967 = vrcp.pop %v6938
        %v6968 = vmul.f32 %v6922, %v6967
        %v6969 = vrcp.pop %v6939
        %v6970 = vmul.f32 %v6923, %v6969
        %v6971 = vrcp.pop %v6940
        %v6972 = vmul.f32 %v6924, %v6971
        %v6973 = vmax.f32 %v6942, 0.0
        %v6974 = vmax.f32 %v6944, 0.0
        %v6975 = vmax.f32 %v6946, 0.0
        %v6976 = vmax.f32 %v6948, 0.0
        %v6977 = vmax.f32 %v6950, 0.0
        %v6978 = vmax.f32 %v6952, 0.0
        %v6979 = vmax.f32 %v6954, 0.0
        %v6980 = vmax.f32 %v6956, 0.0
        %v6981 = vmax.f32 %v6958, 0.0
        %v6982 = vmax.f32 %v6960, 0.0
        %v6983 = vmax.f32 %v6962, 0.0
        %v6984 = vmax.f32 %v6964, 0.0
        %v6985 = vmax.f32 %v6966, 0.0
        %v6986 = vmax.f32 %v6968, 0.0
        %v6987 = vmax.f32 %v6970, 0.0
        %v6988 = vmax.f32 %v6972, 0.0
        %v6989 = vmin.f32 %v6973, 1.0
        %v6990 = vmin.f32 %v6974, 1.0
        %v6991 = vmin.f32 %v6975, 1.0
        %v6992 = vmin.f32 %v6976, 1.0
        %v6993 = vmin.f32 %v6977, 1.0
        %v6994 = vmin.f32 %v6978, 1.0
        %v6995 = vmin.f32 %v6979, 1.0
        %v6996 = vmin.f32 %v6980, 1.0
        %v6997 = vmin.f32 %v6981, 1.0
        %v6998 = vmin.f32 %v6982, 1.0
        %v6999 = vmin.f32 %v6983, 1.0
        %v7000 = vmin.f32 %v6984, 1.0
        %v7001 = vmin.f32 %v6985, 1.0
        %v7002 = vmin.f32 %v6986, 1.0
        %v7003 = vmin.f32 %v6987, 1.0
        %v7004 = vmin.f32 %v6988, 1.0
        %v7005 = vmul.f32 %v5655, %v6300
        %v7006 = vmul.f32 %v5657, %v6301
        %v7007 = vmul.f32 %v5726, %v6302
        %v7008 = vmul.f32 %v5728, %v6303
        %v7009 = vmul.f32 %v5797, %v6304
        %v7010 = vmul.f32 %v5799, %v6305
        %v7011 = vmul.f32 %v5868, %v6306
        %v7012 = vmul.f32 %v5870, %v6307
        %v7013 = vmul.f32 %v5939, %v6308
        %v7014 = vmul.f32 %v5941, %v6309
        %v7015 = vmul.f32 %v6010, %v6310
        %v7016 = vmul.f32 %v6012, %v6311
        %v7017 = vmul.f32 %v6081, %v6312
        %v7018 = vmul.f32 %v6083, %v6313
        %v7019 = vmul.f32 %v6152, %v6314
        %v7020 = vmul.f32 %v6154, %v6315
        %v7022 = vrot.slane %v563, 5
        %v7040 = vrot.slane %v7005, 2
        %v7041 = vrot.slane %v7006, 2
        %v7042 = vrot.slane %v7007, 2
        %v7043 = vrot.slane %v7008, 2
        %v7044 = vrot.slane %v7009, 2
        %v7045 = vrot.slane %v7010, 2
        %v7046 = vrot.slane %v7011, 2
        %v7047 = vrot.slane %v7012, 2
        %v7048 = vrot.slane %v7013, 2
        %v7049 = vrot.slane %v7014, 2
        %v7050 = vrot.slane %v7015, 2
        %v7051 = vrot.slane %v7016, 2
        %v7052 = vrot.slane %v7017, 2
        %v7053 = vrot.slane %v7018, 2
        %v7054 = vrot.slane %v7019, 2
        %v7055 = vrot.slane %v7020, 2
        %v7072 = vsel %vm609, %v807, %v7022
        %v7073 = vsel %vm609, %v808, %v7022
        %v7074 = vsel %vm609, %v809, %v7022
        %v7075 = vsel %vm609, %v810, %v7022
        %v7076 = vsel %vm609, %v811, %v7022
        %v7077 = vsel %vm609, %v812, %v7022
        %v7078 = vsel %vm609, %v813, %v7022
        %v7079 = vsel %vm609, %v814, %v7022
        %v7080 = vsel %vm609, %v815, %v7022
        %v7081 = vsel %vm609, %v816, %v7022
        %v7082 = vsel %vm609, %v817, %v7022
        %v7083 = vsel %vm609, %v818, %v7022
        %v7084 = vsel %vm609, %v819, %v7022
        %v7085 = vsel %vm609, %v820, %v7022
        %v7086 = vsel %vm609, %v821, %v7022
        %v7087 = vsel %vm609, %v822, %v7022
        %vm7088 = vcmask 1045504
        %v7089 = vsel %vm7088, %v7072, %v7040
        %v7090 = vsel %vm7088, %v7073, %v7041
        %v7091 = vsel %vm7088, %v7074, %v7042
        %v7092 = vsel %vm7088, %v7075, %v7043
        %v7093 = vsel %vm7088, %v7076, %v7044
        %v7094 = vsel %vm7088, %v7077, %v7045
        %v7095 = vsel %vm7088, %v7078, %v7046
        %v7096 = vsel %vm7088, %v7079, %v7047
        %v7097 = vsel %vm7088, %v7080, %v7048
        %v7098 = vsel %vm7088, %v7081, %v7049
        %v7099 = vsel %vm7088, %v7082, %v7050
        %v7100 = vsel %vm7088, %v7083, %v7051
        %v7101 = vsel %vm7088, %v7084, %v7052
        %v7102 = vsel %vm7088, %v7085, %v7053
        %v7103 = vsel %vm7088, %v7086, %v7054
        %v7104 = vsel %vm7088, %v7087, %v7055
        %vm7105 = vcmask 1040384
        %v7106 = vsel %vm7105, %v7040, %v4116
        %v7107 = vsel %vm7105, %v7041, %v4118
        %v7108 = vsel %vm7105, %v7042, %v4199
        %v7109 = vsel %vm7105, %v7043, %v4201
        %v7110 = vsel %vm7105, %v7044, %v4282
        %v7111 = vsel %vm7105, %v7045, %v4284
        %v7112 = vsel %vm7105, %v7046, %v4365
        %v7113 = vsel %vm7105, %v7047, %v4367
        %v7114 = vsel %vm7105, %v7048, %v4448
        %v7115 = vsel %vm7105, %v7049, %v4450
        %v7116 = vsel %vm7105, %v7050, %v4531
        %v7117 = vsel %vm7105, %v7051, %v4533
        %v7118 = vsel %vm7105, %v7052, %v4614
        %v7119 = vsel %vm7105, %v7053, %v4616
        %v7120 = vsel %vm7105, %v7054, %v4697
        %v7121 = vsel %vm7105, %v7055, %v4699
        %7123 = vset.pattern.permute.xlu0 0
        %7124 = vperm.xlu0 %7123, %v602
        %v7125 = vpop.permute.xlu0 %7124
        %7128 = vset.pattern.permute.xlu0 0
        %7129 = vperm.xlu0 %7128, %v603
        %v7130 = vpop.permute.xlu0 %7129
        %7133 = vset.pattern.permute.xlu0 0
        %7134 = vperm.xlu0 %7133, %v604
        %v7135 = vpop.permute.xlu0 %7134
        %7138 = vset.pattern.permute.xlu0 0
        %7139 = vperm.xlu0 %7138, %v605
        %v7140 = vpop.permute.xlu0 %7139
        %vm7142 = vcmask 203776
        %v7144 = vsel %vm7142, %v598, 0
        %v7147 = vsel %vm7142, %v599, 0
        %v7150 = vsel %vm7142, %v600, 0
        %v7153 = vsel %vm7142, %v601, 0
        %v7156 = vsel %vm7105, %v4128, 0
        %v7159 = vsel %vm7105, %v4130, 0
        %v7162 = vsel %vm7105, %v4211, 0
        %v7165 = vsel %vm7105, %v4213, 0
        %v7168 = vsel %vm7105, %v4294, 0
        %v7171 = vsel %vm7105, %v4296, 0
        %v7174 = vsel %vm7105, %v4377, 0
        %v7177 = vsel %vm7105, %v4379, 0
        %v7180 = vsel %vm7105, %v4460, 0
        %v7183 = vsel %vm7105, %v4462, 0
        %v7186 = vsel %vm7105, %v4543, 0
        %v7189 = vsel %vm7105, %v4545, 0
        %v7192 = vsel %vm7105, %v4626, 0
        %v7195 = vsel %vm7105, %v4628, 0
        %v7198 = vsel %vm7105, %v4709, 0
        %v7201 = vsel %vm7105, %v4711, 0
        %7203 = vmatprep.subr.mxu0 0.0
        %7204 = vmatpush1.msra.mxu0 0.0
        %7205 = vmatprep.subr.mxu0 0.0
        %7206 = vmatpush1.msra.mxu0 0.0
        %7207 = vmatprep.subr.mxu0 0.0
        %7208 = vmatpush1.msra.mxu0 0.0
        %7209 = vmatprep.subr.mxu0 0.0
        %7210 = vmatpush1.msra.mxu0 0.0
        %7211 = vmatprep.subr.mxu0 0.0
        %7212 = vmatpush1.msra.mxu0 0.0
        %7213 = vmatprep.subr.mxu0 0.0
        %7214 = vmatpush1.msra.mxu0 0.0
        %7215 = vmatprep.subr.mxu0 0.0
        %7216 = vmatpush1.msra.mxu0 0.0
        %7217 = vmatprep.subr.mxu0 0.0
        %7218 = vmatpush1.msra.mxu0 0.0
        %7219 = vmatprep.subr.mxu0 0.0
        %7220 = vmatpush1.msra.mxu0 0.0
        %7221 = vmatprep.subr.mxu0 0.0
        %7222 = vmatpush1.msra.mxu0 0.0
        %7223 = vmatprep.subr.mxu0 0.0
        %7224 = vmatpush1.msra.mxu0 0.0
        %7225 = vmatprep.subr.mxu0 0.0
        %7226 = vmatpush1.msra.mxu0 0.0
        %7227 = vmatprep.subr.mxu0 %v7159
        %7228 = vmatpush1.msra.mxu0 %v7156
        %7229 = vmatprep.subr.mxu0 %v4124
        %7230 = vmatpush1.msra.mxu0 %v4122
        %7231 = vmatprep.subr.mxu0 %v7107
        %7232 = vmatpush1.msra.mxu0 %v7106
        %7233 = vmatprep.subr.mxu0 %v7090
        %7234 = vmatpush1.msra.mxu0 %v7089
        %7235 = vmatprep.subr.mxu0 0.0
        %7236 = vmatpush2.msra.mxu0 0.0
        %7237 = vmatprep.subr.mxu0 0.0
        %7238 = vmatpush2.msra.mxu0 0.0
        %7239 = vmatprep.subr.mxu0 0.0
        %7240 = vmatpush2.msra.mxu0 0.0
        %7241 = vmatprep.subr.mxu0 0.0
        %7242 = vmatpush2.msra.mxu0 0.0
        %7243 = vmatprep.subr.mxu0 0.0
        %7244 = vmatpush2.msra.mxu0 0.0
        %7245 = vmatprep.subr.mxu0 0.0
        %7246 = vmatpush2.msra.mxu0 0.0
        %7247 = vmatprep.subr.mxu0 0.0
        %7248 = vmatpush2.msra.mxu0 0.0
        %7249 = vmatprep.subr.mxu0 0.0
        %7250 = vmatpush2.msra.mxu0 0.0
        %7251 = vmatprep.subr.mxu0 0.0
        %7252 = vmatpush2.msra.mxu0 0.0
        %7253 = vmatprep.subr.mxu0 0.0
        %7254 = vmatpush2.msra.mxu0 0.0
        %7255 = vmatprep.subr.mxu0 0.0
        %7256 = vmatpush2.msra.mxu0 0.0
        %7257 = vmatprep.subr.mxu0 0.0
        %7258 = vmatpush2.msra.mxu0 0.0
        %7259 = vmatprep.subr.mxu0 0.0
        %7260 = vmatpush2.msra.mxu0 0.0
        %7261 = vmatprep.subr.mxu0 0.0
        %7262 = vmatpush2.msra.mxu0 0.0
        %7263 = vmatprep.subr.mxu0 0.0
        %7264 = vmatpush2.msra.mxu0 0.0
        %7265 = vmatprep.subr.mxu0 0.0
        %7266 = vmatpush2.msra.mxu0 0.0
        %7267 = vmatprep.mubr.f32.mxu0 0.0
        %7268 = vmatmul.mubr.f32.gmra.mxu0 %v7144
        %v7269 = vpop.f32.mrf.mxu0
        %v7270 = vadd.f32 %v7125, %v7269
        %v7271 = vpop.f32.mrf.mxu0
        %v7272 = vadd.f32 %v7125, %v7271
        %7273 = vmatprep.mubr.f32.mxu0 0.0
        %7274 = vmatmul.mubr.f32.gmra.mxu0 %v7147
        %v7275 = vpop.f32.mrf.mxu0
        %v7276 = vadd.f32 %v7130, %v7275
        %v7277 = vpop.f32.mrf.mxu0
        %v7278 = vadd.f32 %v7130, %v7277
        %7279 = vmatprep.mubr.f32.mxu0 0.0
        %7280 = vmatmul.mubr.f32.gmra.mxu0 %v7150
        %v7281 = vpop.f32.mrf.mxu0
        %v7282 = vadd.f32 %v7135, %v7281
        %v7283 = vpop.f32.mrf.mxu0
        %v7284 = vadd.f32 %v7135, %v7283
        %7285 = vmatprep.mubr.f32.mxu0 0.0
        %7286 = vmatmul.mubr.f32.gmra.mxu0 %v7153
        %v7287 = vpop.f32.mrf.mxu0
        %v7288 = vadd.f32 %v7140, %v7287
        %v7289 = vpop.f32.mrf.mxu0
        %v7290 = vadd.f32 %v7140, %v7289
        %7291 = vdwg.mxu0
        %7292 = vmatprep.subr.mxu0 0.0
        %7293 = vmatpush1.msra.mxu0 0.0
        %7294 = vmatprep.subr.mxu0 0.0
        %7295 = vmatpush1.msra.mxu0 0.0
        %7296 = vmatprep.subr.mxu0 0.0
        %7297 = vmatpush1.msra.mxu0 0.0
        %7298 = vmatprep.subr.mxu0 0.0
        %7299 = vmatpush1.msra.mxu0 0.0
        %7300 = vmatprep.subr.mxu0 0.0
        %7301 = vmatpush1.msra.mxu0 0.0
        %7302 = vmatprep.subr.mxu0 0.0
        %7303 = vmatpush1.msra.mxu0 0.0
        %7304 = vmatprep.subr.mxu0 0.0
        %7305 = vmatpush1.msra.mxu0 0.0
        %7306 = vmatprep.subr.mxu0 0.0
        %7307 = vmatpush1.msra.mxu0 0.0
        %7308 = vmatprep.subr.mxu0 0.0
        %7309 = vmatpush1.msra.mxu0 0.0
        %7310 = vmatprep.subr.mxu0 0.0
        %7311 = vmatpush1.msra.mxu0 0.0
        %7312 = vmatprep.subr.mxu0 0.0
        %7313 = vmatpush1.msra.mxu0 0.0
        %7314 = vmatprep.subr.mxu0 0.0
        %7315 = vmatpush1.msra.mxu0 0.0
        %7316 = vmatprep.subr.mxu0 %v7165
        %7317 = vmatpush1.msra.mxu0 %v7162
        %7318 = vmatprep.subr.mxu0 %v4207
        %7319 = vmatpush1.msra.mxu0 %v4205
        %7320 = vmatprep.subr.mxu0 %v7109
        %7321 = vmatpush1.msra.mxu0 %v7108
        %7322 = vmatprep.subr.mxu0 %v7092
        %7323 = vmatpush1.msra.mxu0 %v7091
        %7324 = vmatprep.subr.mxu0 0.0
        %7325 = vmatpush2.msra.mxu0 0.0
        %7326 = vmatprep.subr.mxu0 0.0
        %7327 = vmatpush2.msra.mxu0 0.0
        %7328 = vmatprep.subr.mxu0 0.0
        %7329 = vmatpush2.msra.mxu0 0.0
        %7330 = vmatprep.subr.mxu0 0.0
        %7331 = vmatpush2.msra.mxu0 0.0
        %7332 = vmatprep.subr.mxu0 0.0
        %7333 = vmatpush2.msra.mxu0 0.0
        %7334 = vmatprep.subr.mxu0 0.0
        %7335 = vmatpush2.msra.mxu0 0.0
        %7336 = vmatprep.subr.mxu0 0.0
        %7337 = vmatpush2.msra.mxu0 0.0
        %7338 = vmatprep.subr.mxu0 0.0
        %7339 = vmatpush2.msra.mxu0 0.0
        %7340 = vmatprep.subr.mxu0 0.0
        %7341 = vmatpush2.msra.mxu0 0.0
        %7342 = vmatprep.subr.mxu0 0.0
        %7343 = vmatpush2.msra.mxu0 0.0
        %7344 = vmatprep.subr.mxu0 0.0
        %7345 = vmatpush2.msra.mxu0 0.0
        %7346 = vmatprep.subr.mxu0 0.0
        %7347 = vmatpush2.msra.mxu0 0.0
        %7348 = vmatprep.subr.mxu0 0.0
        %7349 = vmatpush2.msra.mxu0 0.0
        %7350 = vmatprep.subr.mxu0 0.0
        %7351 = vmatpush2.msra.mxu0 0.0
        %7352 = vmatprep.subr.mxu0 0.0
        %7353 = vmatpush2.msra.mxu0 0.0
        %7354 = vmatprep.subr.mxu0 0.0
        %7355 = vmatpush2.msra.mxu0 0.0
        %7356 = vmatprep.mubr.f32.mxu0 0.0
        %7357 = vmatmul.mubr.f32.gmra.mxu0 %v7144
        %v7358 = vpop.f32.mrf.mxu0
        %v7359 = vadd.f32 %v7125, %v7358
        %v7360 = vpop.f32.mrf.mxu0
        %v7361 = vadd.f32 %v7125, %v7360
        %7362 = vmatprep.mubr.f32.mxu0 0.0
        %7363 = vmatmul.mubr.f32.gmra.mxu0 %v7147
        %v7364 = vpop.f32.mrf.mxu0
        %v7365 = vadd.f32 %v7130, %v7364
        %v7366 = vpop.f32.mrf.mxu0
        %v7367 = vadd.f32 %v7130, %v7366
        %7368 = vmatprep.mubr.f32.mxu0 0.0
        %7369 = vmatmul.mubr.f32.gmra.mxu0 %v7150
        %v7370 = vpop.f32.mrf.mxu0
        %v7371 = vadd.f32 %v7135, %v7370
        %v7372 = vpop.f32.mrf.mxu0
        %v7373 = vadd.f32 %v7135, %v7372
        %7374 = vmatprep.mubr.f32.mxu0 0.0
        %7375 = vmatmul.mubr.f32.gmra.mxu0 %v7153
        %v7376 = vpop.f32.mrf.mxu0
        %v7377 = vadd.f32 %v7140, %v7376
        %v7378 = vpop.f32.mrf.mxu0
        %v7379 = vadd.f32 %v7140, %v7378
        %7380 = vdwg.mxu0
        %7381 = vmatprep.subr.mxu0 0.0
        %7382 = vmatpush1.msra.mxu0 0.0
        %7383 = vmatprep.subr.mxu0 0.0
        %7384 = vmatpush1.msra.mxu0 0.0
        %7385 = vmatprep.subr.mxu0 0.0
        %7386 = vmatpush1.msra.mxu0 0.0
        %7387 = vmatprep.subr.mxu0 0.0
        %7388 = vmatpush1.msra.mxu0 0.0
        %7389 = vmatprep.subr.mxu0 0.0
        %7390 = vmatpush1.msra.mxu0 0.0
        %7391 = vmatprep.subr.mxu0 0.0
        %7392 = vmatpush1.msra.mxu0 0.0
        %7393 = vmatprep.subr.mxu0 0.0
        %7394 = vmatpush1.msra.mxu0 0.0
        %7395 = vmatprep.subr.mxu0 0.0
        %7396 = vmatpush1.msra.mxu0 0.0
        %7397 = vmatprep.subr.mxu0 0.0
        %7398 = vmatpush1.msra.mxu0 0.0
        %7399 = vmatprep.subr.mxu0 0.0
        %7400 = vmatpush1.msra.mxu0 0.0
        %7401 = vmatprep.subr.mxu0 0.0
        %7402 = vmatpush1.msra.mxu0 0.0
        %7403 = vmatprep.subr.mxu0 0.0
        %7404 = vmatpush1.msra.mxu0 0.0
        %7405 = vmatprep.subr.mxu0 %v7171
        %7406 = vmatpush1.msra.mxu0 %v7168
        %7407 = vmatprep.subr.mxu0 %v4290
        %7408 = vmatpush1.msra.mxu0 %v4288
        %7409 = vmatprep.subr.mxu0 %v7111
        %7410 = vmatpush1.msra.mxu0 %v7110
        %7411 = vmatprep.subr.mxu0 %v7094
        %7412 = vmatpush1.msra.mxu0 %v7093
        %7413 = vmatprep.subr.mxu0 0.0
        %7414 = vmatpush2.msra.mxu0 0.0
        %7415 = vmatprep.subr.mxu0 0.0
        %7416 = vmatpush2.msra.mxu0 0.0
        %7417 = vmatprep.subr.mxu0 0.0
        %7418 = vmatpush2.msra.mxu0 0.0
        %7419 = vmatprep.subr.mxu0 0.0
        %7420 = vmatpush2.msra.mxu0 0.0
        %7421 = vmatprep.subr.mxu0 0.0
        %7422 = vmatpush2.msra.mxu0 0.0
        %7423 = vmatprep.subr.mxu0 0.0
        %7424 = vmatpush2.msra.mxu0 0.0
        %7425 = vmatprep.subr.mxu0 0.0
        %7426 = vmatpush2.msra.mxu0 0.0
        %7427 = vmatprep.subr.mxu0 0.0
        %7428 = vmatpush2.msra.mxu0 0.0
        %7429 = vmatprep.subr.mxu0 0.0
        %7430 = vmatpush2.msra.mxu0 0.0
        %7431 = vmatprep.subr.mxu0 0.0
        %7432 = vmatpush2.msra.mxu0 0.0
        %7433 = vmatprep.subr.mxu0 0.0
        %7434 = vmatpush2.msra.mxu0 0.0
        %7435 = vmatprep.subr.mxu0 0.0
        %7436 = vmatpush2.msra.mxu0 0.0
        %7437 = vmatprep.subr.mxu0 0.0
        %7438 = vmatpush2.msra.mxu0 0.0
        %7439 = vmatprep.subr.mxu0 0.0
        %7440 = vmatpush2.msra.mxu0 0.0
        %7441 = vmatprep.subr.mxu0 0.0
        %7442 = vmatpush2.msra.mxu0 0.0
        %7443 = vmatprep.subr.mxu0 0.0
        %7444 = vmatpush2.msra.mxu0 0.0
        %7445 = vmatprep.mubr.f32.mxu0 0.0
        %7446 = vmatmul.mubr.f32.gmra.mxu0 %v7144
        %v7447 = vpop.f32.mrf.mxu0
        %v7448 = vadd.f32 %v7125, %v7447
        %v7449 = vpop.f32.mrf.mxu0
        %v7450 = vadd.f32 %v7125, %v7449
        %7451 = vmatprep.mubr.f32.mxu0 0.0
        %7452 = vmatmul.mubr.f32.gmra.mxu0 %v7147
        %v7453 = vpop.f32.mrf.mxu0
        %v7454 = vadd.f32 %v7130, %v7453
        %v7455 = vpop.f32.mrf.mxu0
        %v7456 = vadd.f32 %v7130, %v7455
        %7457 = vmatprep.mubr.f32.mxu0 0.0
        %7458 = vmatmul.mubr.f32.gmra.mxu0 %v7150
        %v7459 = vpop.f32.mrf.mxu0
        %v7460 = vadd.f32 %v7135, %v7459
        %v7461 = vpop.f32.mrf.mxu0
        %v7462 = vadd.f32 %v7135, %v7461
        %7463 = vmatprep.mubr.f32.mxu0 0.0
        %7464 = vmatmul.mubr.f32.gmra.mxu0 %v7153
        %v7465 = vpop.f32.mrf.mxu0
        %v7466 = vadd.f32 %v7140, %v7465
        %v7467 = vpop.f32.mrf.mxu0
        %v7468 = vadd.f32 %v7140, %v7467
        %7469 = vdwg.mxu0
        %7470 = vmatprep.subr.mxu0 0.0
        %7471 = vmatpush1.msra.mxu0 0.0
        %7472 = vmatprep.subr.mxu0 0.0
        %7473 = vmatpush1.msra.mxu0 0.0
        %7474 = vmatprep.subr.mxu0 0.0
        %7475 = vmatpush1.msra.mxu0 0.0
        %7476 = vmatprep.subr.mxu0 0.0
        %7477 = vmatpush1.msra.mxu0 0.0
        %7478 = vmatprep.subr.mxu0 0.0
        %7479 = vmatpush1.msra.mxu0 0.0
        %7480 = vmatprep.subr.mxu0 0.0
        %7481 = vmatpush1.msra.mxu0 0.0
        %7482 = vmatprep.subr.mxu0 0.0
        %7483 = vmatpush1.msra.mxu0 0.0
        %7484 = vmatprep.subr.mxu0 0.0
        %7485 = vmatpush1.msra.mxu0 0.0
        %7486 = vmatprep.subr.mxu0 0.0
        %7487 = vmatpush1.msra.mxu0 0.0
        %7488 = vmatprep.subr.mxu0 0.0
        %7489 = vmatpush1.msra.mxu0 0.0
        %7490 = vmatprep.subr.mxu0 0.0
        %7491 = vmatpush1.msra.mxu0 0.0
        %7492 = vmatprep.subr.mxu0 0.0
        %7493 = vmatpush1.msra.mxu0 0.0
        %7494 = vmatprep.subr.mxu0 %v7177
        %7495 = vmatpush1.msra.mxu0 %v7174
        %7496 = vmatprep.subr.mxu0 %v4373
        %7497 = vmatpush1.msra.mxu0 %v4371
        %7498 = vmatprep.subr.mxu0 %v7113
        %7499 = vmatpush1.msra.mxu0 %v7112
        %7500 = vmatprep.subr.mxu0 %v7096
        %7501 = vmatpush1.msra.mxu0 %v7095
        %7502 = vmatprep.subr.mxu0 0.0
        %7503 = vmatpush2.msra.mxu0 0.0
        %7504 = vmatprep.subr.mxu0 0.0
        %7505 = vmatpush2.msra.mxu0 0.0
        %7506 = vmatprep.subr.mxu0 0.0
        %7507 = vmatpush2.msra.mxu0 0.0
        %7508 = vmatprep.subr.mxu0 0.0
        %7509 = vmatpush2.msra.mxu0 0.0
        %7510 = vmatprep.subr.mxu0 0.0
        %7511 = vmatpush2.msra.mxu0 0.0
        %7512 = vmatprep.subr.mxu0 0.0
        %7513 = vmatpush2.msra.mxu0 0.0
        %7514 = vmatprep.subr.mxu0 0.0
        %7515 = vmatpush2.msra.mxu0 0.0
        %7516 = vmatprep.subr.mxu0 0.0
        %7517 = vmatpush2.msra.mxu0 0.0
        %7518 = vmatprep.subr.mxu0 0.0
        %7519 = vmatpush2.msra.mxu0 0.0
        %7520 = vmatprep.subr.mxu0 0.0
        %7521 = vmatpush2.msra.mxu0 0.0
        %7522 = vmatprep.subr.mxu0 0.0
        %7523 = vmatpush2.msra.mxu0 0.0
        %7524 = vmatprep.subr.mxu0 0.0
        %7525 = vmatpush2.msra.mxu0 0.0
        %7526 = vmatprep.subr.mxu0 0.0
        %7527 = vmatpush2.msra.mxu0 0.0
        %7528 = vmatprep.subr.mxu0 0.0
        %7529 = vmatpush2.msra.mxu0 0.0
        %7530 = vmatprep.subr.mxu0 0.0
        %7531 = vmatpush2.msra.mxu0 0.0
        %7532 = vmatprep.subr.mxu0 0.0
        %7533 = vmatpush2.msra.mxu0 0.0
        %7534 = vmatprep.mubr.f32.mxu0 0.0
        %7535 = vmatmul.mubr.f32.gmra.mxu0 %v7144
        %v7536 = vpop.f32.mrf.mxu0
        %v7537 = vadd.f32 %v7125, %v7536
        %v7538 = vpop.f32.mrf.mxu0
        %v7539 = vadd.f32 %v7125, %v7538
        %7540 = vmatprep.mubr.f32.mxu0 0.0
        %7541 = vmatmul.mubr.f32.gmra.mxu0 %v7147
        %v7542 = vpop.f32.mrf.mxu0
        %v7543 = vadd.f32 %v7130, %v7542
        %v7544 = vpop.f32.mrf.mxu0
        %v7545 = vadd.f32 %v7130, %v7544
        %7546 = vmatprep.mubr.f32.mxu0 0.0
        %7547 = vmatmul.mubr.f32.gmra.mxu0 %v7150
        %v7548 = vpop.f32.mrf.mxu0
        %v7549 = vadd.f32 %v7135, %v7548
        %v7550 = vpop.f32.mrf.mxu0
        %v7551 = vadd.f32 %v7135, %v7550
        %7552 = vmatprep.mubr.f32.mxu0 0.0
        %7553 = vmatmul.mubr.f32.gmra.mxu0 %v7153
        %v7554 = vpop.f32.mrf.mxu0
        %v7555 = vadd.f32 %v7140, %v7554
        %v7556 = vpop.f32.mrf.mxu0
        %v7557 = vadd.f32 %v7140, %v7556
        %7558 = vdwg.mxu0
        %7559 = vmatprep.subr.mxu0 0.0
        %7560 = vmatpush1.msra.mxu0 0.0
        %7561 = vmatprep.subr.mxu0 0.0
        %7562 = vmatpush1.msra.mxu0 0.0
        %7563 = vmatprep.subr.mxu0 0.0
        %7564 = vmatpush1.msra.mxu0 0.0
        %7565 = vmatprep.subr.mxu0 0.0
        %7566 = vmatpush1.msra.mxu0 0.0
        %7567 = vmatprep.subr.mxu0 0.0
        %7568 = vmatpush1.msra.mxu0 0.0
        %7569 = vmatprep.subr.mxu0 0.0
        %7570 = vmatpush1.msra.mxu0 0.0
        %7571 = vmatprep.subr.mxu0 0.0
        %7572 = vmatpush1.msra.mxu0 0.0
        %7573 = vmatprep.subr.mxu0 0.0
        %7574 = vmatpush1.msra.mxu0 0.0
        %7575 = vmatprep.subr.mxu0 0.0
        %7576 = vmatpush1.msra.mxu0 0.0
        %7577 = vmatprep.subr.mxu0 0.0
        %7578 = vmatpush1.msra.mxu0 0.0
        %7579 = vmatprep.subr.mxu0 0.0
        %7580 = vmatpush1.msra.mxu0 0.0
        %7581 = vmatprep.subr.mxu0 0.0
        %7582 = vmatpush1.msra.mxu0 0.0
        %7583 = vmatprep.subr.mxu0 %v7183
        %7584 = vmatpush1.msra.mxu0 %v7180
        %7585 = vmatprep.subr.mxu0 %v4456
        %7586 = vmatpush1.msra.mxu0 %v4454
        %7587 = vmatprep.subr.mxu0 %v7115
        %7588 = vmatpush1.msra.mxu0 %v7114
        %7589 = vmatprep.subr.mxu0 %v7098
        %7590 = vmatpush1.msra.mxu0 %v7097
        %7591 = vmatprep.subr.mxu0 0.0
        %7592 = vmatpush2.msra.mxu0 0.0
        %7593 = vmatprep.subr.mxu0 0.0
        %7594 = vmatpush2.msra.mxu0 0.0
        %7595 = vmatprep.subr.mxu0 0.0
        %7596 = vmatpush2.msra.mxu0 0.0
        %7597 = vmatprep.subr.mxu0 0.0
        %7598 = vmatpush2.msra.mxu0 0.0
        %7599 = vmatprep.subr.mxu0 0.0
        %7600 = vmatpush2.msra.mxu0 0.0
        %7601 = vmatprep.subr.mxu0 0.0
        %7602 = vmatpush2.msra.mxu0 0.0
        %7603 = vmatprep.subr.mxu0 0.0
        %7604 = vmatpush2.msra.mxu0 0.0
        %7605 = vmatprep.subr.mxu0 0.0
        %7606 = vmatpush2.msra.mxu0 0.0
        %7607 = vmatprep.subr.mxu0 0.0
        %7608 = vmatpush2.msra.mxu0 0.0
        %7609 = vmatprep.subr.mxu0 0.0
        %7610 = vmatpush2.msra.mxu0 0.0
        %7611 = vmatprep.subr.mxu0 0.0
        %7612 = vmatpush2.msra.mxu0 0.0
        %7613 = vmatprep.subr.mxu0 0.0
        %7614 = vmatpush2.msra.mxu0 0.0
        %7615 = vmatprep.subr.mxu0 0.0
        %7616 = vmatpush2.msra.mxu0 0.0
        %7617 = vmatprep.subr.mxu0 0.0
        %7618 = vmatpush2.msra.mxu0 0.0
        %7619 = vmatprep.subr.mxu0 0.0
        %7620 = vmatpush2.msra.mxu0 0.0
        %7621 = vmatprep.subr.mxu0 0.0
        %7622 = vmatpush2.msra.mxu0 0.0
        %7623 = vmatprep.mubr.f32.mxu0 0.0
        %7624 = vmatmul.mubr.f32.gmra.mxu0 %v7144
        %v7625 = vpop.f32.mrf.mxu0
        %v7626 = vadd.f32 %v7125, %v7625
        %v7627 = vpop.f32.mrf.mxu0
        %v7628 = vadd.f32 %v7125, %v7627
        %7629 = vmatprep.mubr.f32.mxu0 0.0
        %7630 = vmatmul.mubr.f32.gmra.mxu0 %v7147
        %v7631 = vpop.f32.mrf.mxu0
        %v7632 = vadd.f32 %v7130, %v7631
        %v7633 = vpop.f32.mrf.mxu0
        %v7634 = vadd.f32 %v7130, %v7633
        %7635 = vmatprep.mubr.f32.mxu0 0.0
        %7636 = vmatmul.mubr.f32.gmra.mxu0 %v7150
        %v7637 = vpop.f32.mrf.mxu0
        %v7638 = vadd.f32 %v7135, %v7637
        %v7639 = vpop.f32.mrf.mxu0
        %v7640 = vadd.f32 %v7135, %v7639
        %7641 = vmatprep.mubr.f32.mxu0 0.0
        %7642 = vmatmul.mubr.f32.gmra.mxu0 %v7153
        %v7643 = vpop.f32.mrf.mxu0
        %v7644 = vadd.f32 %v7140, %v7643
        %v7645 = vpop.f32.mrf.mxu0
        %v7646 = vadd.f32 %v7140, %v7645
        %7647 = vdwg.mxu0
        %7648 = vmatprep.subr.mxu0 0.0
        %7649 = vmatpush1.msra.mxu0 0.0
        %7650 = vmatprep.subr.mxu0 0.0
        %7651 = vmatpush1.msra.mxu0 0.0
        %7652 = vmatprep.subr.mxu0 0.0
        %7653 = vmatpush1.msra.mxu0 0.0
        %7654 = vmatprep.subr.mxu0 0.0
        %7655 = vmatpush1.msra.mxu0 0.0
        %7656 = vmatprep.subr.mxu0 0.0
        %7657 = vmatpush1.msra.mxu0 0.0
        %7658 = vmatprep.subr.mxu0 0.0
        %7659 = vmatpush1.msra.mxu0 0.0
        %7660 = vmatprep.subr.mxu0 0.0
        %7661 = vmatpush1.msra.mxu0 0.0
        %7662 = vmatprep.subr.mxu0 0.0
        %7663 = vmatpush1.msra.mxu0 0.0
        %7664 = vmatprep.subr.mxu0 0.0
        %7665 = vmatpush1.msra.mxu0 0.0
        %7666 = vmatprep.subr.mxu0 0.0
        %7667 = vmatpush1.msra.mxu0 0.0
        %7668 = vmatprep.subr.mxu0 0.0
        %7669 = vmatpush1.msra.mxu0 0.0
        %7670 = vmatprep.subr.mxu0 0.0
        %7671 = vmatpush1.msra.mxu0 0.0
        %7672 = vmatprep.subr.mxu0 %v7189
        %7673 = vmatpush1.msra.mxu0 %v7186
        %7674 = vmatprep.subr.mxu0 %v4539
        %7675 = vmatpush1.msra.mxu0 %v4537
        %7676 = vmatprep.subr.mxu0 %v7117
        %7677 = vmatpush1.msra.mxu0 %v7116
        %7678 = vmatprep.subr.mxu0 %v7100
        %7679 = vmatpush1.msra.mxu0 %v7099
        %7680 = vmatprep.subr.mxu0 0.0
        %7681 = vmatpush2.msra.mxu0 0.0
        %7682 = vmatprep.subr.mxu0 0.0
        %7683 = vmatpush2.msra.mxu0 0.0
        %7684 = vmatprep.subr.mxu0 0.0
        %7685 = vmatpush2.msra.mxu0 0.0
        %7686 = vmatprep.subr.mxu0 0.0
        %7687 = vmatpush2.msra.mxu0 0.0
        %7688 = vmatprep.subr.mxu0 0.0
        %7689 = vmatpush2.msra.mxu0 0.0
        %7690 = vmatprep.subr.mxu0 0.0
        %7691 = vmatpush2.msra.mxu0 0.0
        %7692 = vmatprep.subr.mxu0 0.0
        %7693 = vmatpush2.msra.mxu0 0.0
        %7694 = vmatprep.subr.mxu0 0.0
        %7695 = vmatpush2.msra.mxu0 0.0
        %7696 = vmatprep.subr.mxu0 0.0
        %7697 = vmatpush2.msra.mxu0 0.0
        %7698 = vmatprep.subr.mxu0 0.0
        %7699 = vmatpush2.msra.mxu0 0.0
        %7700 = vmatprep.subr.mxu0 0.0
        %7701 = vmatpush2.msra.mxu0 0.0
        %7702 = vmatprep.subr.mxu0 0.0
        %7703 = vmatpush2.msra.mxu0 0.0
        %7704 = vmatprep.subr.mxu0 0.0
        %7705 = vmatpush2.msra.mxu0 0.0
        %7706 = vmatprep.subr.mxu0 0.0
        %7707 = vmatpush2.msra.mxu0 0.0
        %7708 = vmatprep.subr.mxu0 0.0
        %7709 = vmatpush2.msra.mxu0 0.0
        %7710 = vmatprep.subr.mxu0 0.0
        %7711 = vmatpush2.msra.mxu0 0.0
        %7712 = vmatprep.mubr.f32.mxu0 0.0
        %7713 = vmatmul.mubr.f32.gmra.mxu0 %v7144
        %v7714 = vpop.f32.mrf.mxu0
        %v7715 = vadd.f32 %v7125, %v7714
        %v7716 = vpop.f32.mrf.mxu0
        %v7717 = vadd.f32 %v7125, %v7716
        %7718 = vmatprep.mubr.f32.mxu0 0.0
        %7719 = vmatmul.mubr.f32.gmra.mxu0 %v7147
        %v7720 = vpop.f32.mrf.mxu0
        %v7721 = vadd.f32 %v7130, %v7720
        %v7722 = vpop.f32.mrf.mxu0
        %v7723 = vadd.f32 %v7130, %v7722
        %7724 = vmatprep.mubr.f32.mxu0 0.0
        %7725 = vmatmul.mubr.f32.gmra.mxu0 %v7150
        %v7726 = vpop.f32.mrf.mxu0
        %v7727 = vadd.f32 %v7135, %v7726
        %v7728 = vpop.f32.mrf.mxu0
        %v7729 = vadd.f32 %v7135, %v7728
        %7730 = vmatprep.mubr.f32.mxu0 0.0
        %7731 = vmatmul.mubr.f32.gmra.mxu0 %v7153
        %v7732 = vpop.f32.mrf.mxu0
        %v7733 = vadd.f32 %v7140, %v7732
        %v7734 = vpop.f32.mrf.mxu0
        %v7735 = vadd.f32 %v7140, %v7734
        %7736 = vdwg.mxu0
        %7737 = vmatprep.subr.mxu0 0.0
        %7738 = vmatpush1.msra.mxu0 0.0
        %7739 = vmatprep.subr.mxu0 0.0
        %7740 = vmatpush1.msra.mxu0 0.0
        %7741 = vmatprep.subr.mxu0 0.0
        %7742 = vmatpush1.msra.mxu0 0.0
        %7743 = vmatprep.subr.mxu0 0.0
        %7744 = vmatpush1.msra.mxu0 0.0
        %7745 = vmatprep.subr.mxu0 0.0
        %7746 = vmatpush1.msra.mxu0 0.0
        %7747 = vmatprep.subr.mxu0 0.0
        %7748 = vmatpush1.msra.mxu0 0.0
        %7749 = vmatprep.subr.mxu0 0.0
        %7750 = vmatpush1.msra.mxu0 0.0
        %7751 = vmatprep.subr.mxu0 0.0
        %7752 = vmatpush1.msra.mxu0 0.0
        %7753 = vmatprep.subr.mxu0 0.0
        %7754 = vmatpush1.msra.mxu0 0.0
        %7755 = vmatprep.subr.mxu0 0.0
        %7756 = vmatpush1.msra.mxu0 0.0
        %7757 = vmatprep.subr.mxu0 0.0
        %7758 = vmatpush1.msra.mxu0 0.0
        %7759 = vmatprep.subr.mxu0 0.0
        %7760 = vmatpush1.msra.mxu0 0.0
        %7761 = vmatprep.subr.mxu0 %v7195
        %7762 = vmatpush1.msra.mxu0 %v7192
        %7763 = vmatprep.subr.mxu0 %v4622
        %7764 = vmatpush1.msra.mxu0 %v4620
        %7765 = vmatprep.subr.mxu0 %v7119
        %7766 = vmatpush1.msra.mxu0 %v7118
        %7767 = vmatprep.subr.mxu0 %v7102
        %7768 = vmatpush1.msra.mxu0 %v7101
        %7769 = vmatprep.subr.mxu0 0.0
        %7770 = vmatpush2.msra.mxu0 0.0
        %7771 = vmatprep.subr.mxu0 0.0
        %7772 = vmatpush2.msra.mxu0 0.0
        %7773 = vmatprep.subr.mxu0 0.0
        %7774 = vmatpush2.msra.mxu0 0.0
        %7775 = vmatprep.subr.mxu0 0.0
        %7776 = vmatpush2.msra.mxu0 0.0
        %7777 = vmatprep.subr.mxu0 0.0
        %7778 = vmatpush2.msra.mxu0 0.0
        %7779 = vmatprep.subr.mxu0 0.0
        %7780 = vmatpush2.msra.mxu0 0.0
        %7781 = vmatprep.subr.mxu0 0.0
        %7782 = vmatpush2.msra.mxu0 0.0
        %7783 = vmatprep.subr.mxu0 0.0
        %7784 = vmatpush2.msra.mxu0 0.0
        %7785 = vmatprep.subr.mxu0 0.0
        %7786 = vmatpush2.msra.mxu0 0.0
        %7787 = vmatprep.subr.mxu0 0.0
        %7788 = vmatpush2.msra.mxu0 0.0
        %7789 = vmatprep.subr.mxu0 0.0
        %7790 = vmatpush2.msra.mxu0 0.0
        %7791 = vmatprep.subr.mxu0 0.0
        %7792 = vmatpush2.msra.mxu0 0.0
        %7793 = vmatprep.subr.mxu0 0.0
        %7794 = vmatpush2.msra.mxu0 0.0
        %7795 = vmatprep.subr.mxu0 0.0
        %7796 = vmatpush2.msra.mxu0 0.0
        %7797 = vmatprep.subr.mxu0 0.0
        %7798 = vmatpush2.msra.mxu0 0.0
        %7799 = vmatprep.subr.mxu0 0.0
        %7800 = vmatpush2.msra.mxu0 0.0
        %7801 = vmatprep.mubr.f32.mxu0 0.0
        %7802 = vmatmul.mubr.f32.gmra.mxu0 %v7144
        %v7803 = vpop.f32.mrf.mxu0
        %v7804 = vadd.f32 %v7125, %v7803
        %v7805 = vpop.f32.mrf.mxu0
        %v7806 = vadd.f32 %v7125, %v7805
        %7807 = vmatprep.mubr.f32.mxu0 0.0
        %7808 = vmatmul.mubr.f32.gmra.mxu0 %v7147
        %v7809 = vpop.f32.mrf.mxu0
        %v7810 = vadd.f32 %v7130, %v7809
        %v7811 = vpop.f32.mrf.mxu0
        %v7812 = vadd.f32 %v7130, %v7811
        %7813 = vmatprep.mubr.f32.mxu0 0.0
        %7814 = vmatmul.mubr.f32.gmra.mxu0 %v7150
        %v7815 = vpop.f32.mrf.mxu0
        %v7816 = vadd.f32 %v7135, %v7815
        %v7817 = vpop.f32.mrf.mxu0
        %v7818 = vadd.f32 %v7135, %v7817
        %7819 = vmatprep.mubr.f32.mxu0 0.0
        %7820 = vmatmul.mubr.f32.gmra.mxu0 %v7153
        %v7821 = vpop.f32.mrf.mxu0
        %v7822 = vadd.f32 %v7140, %v7821
        %v7823 = vpop.f32.mrf.mxu0
        %v7824 = vadd.f32 %v7140, %v7823
        %7825 = vdwg.mxu0
        %7826 = vmatprep.subr.mxu0 0.0
        %7827 = vmatpush1.msra.mxu0 0.0
        %7828 = vmatprep.subr.mxu0 0.0
        %7829 = vmatpush1.msra.mxu0 0.0
        %7830 = vmatprep.subr.mxu0 0.0
        %7831 = vmatpush1.msra.mxu0 0.0
        %7832 = vmatprep.subr.mxu0 0.0
        %7833 = vmatpush1.msra.mxu0 0.0
        %7834 = vmatprep.subr.mxu0 0.0
        %7835 = vmatpush1.msra.mxu0 0.0
        %7836 = vmatprep.subr.mxu0 0.0
        %7837 = vmatpush1.msra.mxu0 0.0
        %7838 = vmatprep.subr.mxu0 0.0
        %7839 = vmatpush1.msra.mxu0 0.0
        %7840 = vmatprep.subr.mxu0 0.0
        %7841 = vmatpush1.msra.mxu0 0.0
        %7842 = vmatprep.subr.mxu0 0.0
        %7843 = vmatpush1.msra.mxu0 0.0
        %7844 = vmatprep.subr.mxu0 0.0
        %7845 = vmatpush1.msra.mxu0 0.0
        %7846 = vmatprep.subr.mxu0 0.0
        %7847 = vmatpush1.msra.mxu0 0.0
        %7848 = vmatprep.subr.mxu0 0.0
        %7849 = vmatpush1.msra.mxu0 0.0
        %7850 = vmatprep.subr.mxu0 %v7201
        %7851 = vmatpush1.msra.mxu0 %v7198
        %7852 = vmatprep.subr.mxu0 %v4705
        %7853 = vmatpush1.msra.mxu0 %v4703
        %7854 = vmatprep.subr.mxu0 %v7121
        %7855 = vmatpush1.msra.mxu0 %v7120
        %7856 = vmatprep.subr.mxu0 %v7104
        %7857 = vmatpush1.msra.mxu0 %v7103
        %7858 = vmatprep.subr.mxu0 0.0
        %7859 = vmatpush2.msra.mxu0 0.0
        %7860 = vmatprep.subr.mxu0 0.0
        %7861 = vmatpush2.msra.mxu0 0.0
        %7862 = vmatprep.subr.mxu0 0.0
        %7863 = vmatpush2.msra.mxu0 0.0
        %7864 = vmatprep.subr.mxu0 0.0
        %7865 = vmatpush2.msra.mxu0 0.0
        %7866 = vmatprep.subr.mxu0 0.0
        %7867 = vmatpush2.msra.mxu0 0.0
        %7868 = vmatprep.subr.mxu0 0.0
        %7869 = vmatpush2.msra.mxu0 0.0
        %7870 = vmatprep.subr.mxu0 0.0
        %7871 = vmatpush2.msra.mxu0 0.0
        %7872 = vmatprep.subr.mxu0 0.0
        %7873 = vmatpush2.msra.mxu0 0.0
        %7874 = vmatprep.subr.mxu0 0.0
        %7875 = vmatpush2.msra.mxu0 0.0
        %7876 = vmatprep.subr.mxu0 0.0
        %7877 = vmatpush2.msra.mxu0 0.0
        %7878 = vmatprep.subr.mxu0 0.0
        %7879 = vmatpush2.msra.mxu0 0.0
        %7880 = vmatprep.subr.mxu0 0.0
        %7881 = vmatpush2.msra.mxu0 0.0
        %7882 = vmatprep.subr.mxu0 0.0
        %7883 = vmatpush2.msra.mxu0 0.0
        %7884 = vmatprep.subr.mxu0 0.0
        %7885 = vmatpush2.msra.mxu0 0.0
        %7886 = vmatprep.subr.mxu0 0.0
        %7887 = vmatpush2.msra.mxu0 0.0
        %7888 = vmatprep.subr.mxu0 0.0
        %7889 = vmatpush2.msra.mxu0 0.0
        %7890 = vmatprep.mubr.f32.mxu0 0.0
        %7891 = vmatmul.mubr.f32.gmra.mxu0 %v7144
        %v7892 = vpop.f32.mrf.mxu0
        %v7893 = vadd.f32 %v7125, %v7892
        %v7894 = vpop.f32.mrf.mxu0
        %v7895 = vadd.f32 %v7125, %v7894
        %7896 = vmatprep.mubr.f32.mxu0 0.0
        %7897 = vmatmul.mubr.f32.gmra.mxu0 %v7147
        %v7898 = vpop.f32.mrf.mxu0
        %v7899 = vadd.f32 %v7130, %v7898
        %v7900 = vpop.f32.mrf.mxu0
        %v7901 = vadd.f32 %v7130, %v7900
        %7902 = vmatprep.mubr.f32.mxu0 0.0
        %7903 = vmatmul.mubr.f32.gmra.mxu0 %v7150
        %v7904 = vpop.f32.mrf.mxu0
        %v7905 = vadd.f32 %v7135, %v7904
        %v7906 = vpop.f32.mrf.mxu0
        %v7907 = vadd.f32 %v7135, %v7906
        %7908 = vmatprep.mubr.f32.mxu0 0.0
        %7909 = vmatmul.mubr.f32.gmra.mxu0 %v7153
        %v7910 = vpop.f32.mrf.mxu0
        %v7911 = vadd.f32 %v7140, %v7910
        %v7912 = vpop.f32.mrf.mxu0
        %v7913 = vadd.f32 %v7140, %v7912
        %7914 = vdwg.mxu0
        %v7915 = vmax.f32 %v7270, 0.0
        %v7916 = vmax.f32 %v7272, 0.0
        %v7917 = vmax.f32 %v7359, 0.0
        %v7918 = vmax.f32 %v7361, 0.0
        %v7919 = vmax.f32 %v7448, 0.0
        %v7920 = vmax.f32 %v7450, 0.0
        %v7921 = vmax.f32 %v7537, 0.0
        %v7922 = vmax.f32 %v7539, 0.0
        %v7923 = vmax.f32 %v7626, 0.0
        %v7924 = vmax.f32 %v7628, 0.0
        %v7925 = vmax.f32 %v7715, 0.0
        %v7926 = vmax.f32 %v7717, 0.0
        %v7927 = vmax.f32 %v7804, 0.0
        %v7928 = vmax.f32 %v7806, 0.0
        %v7929 = vmax.f32 %v7893, 0.0
        %v7930 = vmax.f32 %v7895, 0.0
        %v7931 = vmax.f32 %v7276, 0.0
        %v7932 = vmax.f32 %v7278, 0.0
        %v7933 = vmax.f32 %v7365, 0.0
        %v7934 = vmax.f32 %v7367, 0.0
        %v7935 = vmax.f32 %v7454, 0.0
        %v7936 = vmax.f32 %v7456, 0.0
        %v7937 = vmax.f32 %v7543, 0.0
        %v7938 = vmax.f32 %v7545, 0.0
        %v7939 = vmax.f32 %v7632, 0.0
        %v7940 = vmax.f32 %v7634, 0.0
        %v7941 = vmax.f32 %v7721, 0.0
        %v7942 = vmax.f32 %v7723, 0.0
        %v7943 = vmax.f32 %v7810, 0.0
        %v7944 = vmax.f32 %v7812, 0.0
        %v7945 = vmax.f32 %v7899, 0.0
        %v7946 = vmax.f32 %v7901, 0.0
        %v7947 = vmax.f32 %v7282, 0.0
        %v7948 = vmax.f32 %v7284, 0.0
        %v7949 = vmax.f32 %v7371, 0.0
        %v7950 = vmax.f32 %v7373, 0.0
        %v7951 = vmax.f32 %v7460, 0.0
        %v7952 = vmax.f32 %v7462, 0.0
        %v7953 = vmax.f32 %v7549, 0.0
        %v7954 = vmax.f32 %v7551, 0.0
        %v7955 = vmax.f32 %v7638, 0.0
        %v7956 = vmax.f32 %v7640, 0.0
        %v7957 = vmax.f32 %v7727, 0.0
        %v7958 = vmax.f32 %v7729, 0.0
        %v7959 = vmax.f32 %v7816, 0.0
        %v7960 = vmax.f32 %v7818, 0.0
        %v7961 = vmax.f32 %v7905, 0.0
        %v7962 = vmax.f32 %v7907, 0.0
        %v7963 = vmax.f32 %v7288, 0.0
        %v7964 = vmax.f32 %v7290, 0.0
        %v7965 = vmax.f32 %v7377, 0.0
        %v7966 = vmax.f32 %v7379, 0.0
        %v7967 = vmax.f32 %v7466, 0.0
        %v7968 = vmax.f32 %v7468, 0.0
        %v7969 = vmax.f32 %v7555, 0.0
        %v7970 = vmax.f32 %v7557, 0.0
        %v7971 = vmax.f32 %v7644, 0.0
        %v7972 = vmax.f32 %v7646, 0.0
        %v7973 = vmax.f32 %v7733, 0.0
        %v7974 = vmax.f32 %v7735, 0.0
        %v7975 = vmax.f32 %v7822, 0.0
        %v7976 = vmax.f32 %v7824, 0.0
        %v7977 = vmax.f32 %v7911, 0.0
        %v7978 = vmax.f32 %v7913, 0.0
        %7980 = vset.pattern.permute.xlu0 0
        %7981 = vperm.xlu0 %7980, %v607
        %v7982 = vpop.permute.xlu0 %7981
        %v7985 = vsel %vm2468, %v606, 0
        %7987 = vmatprep.subr.mxu0 0.0
        %7988 = vmatpush1.msra.mxu0 0.0
        %7989 = vmatprep.subr.mxu0 0.0
        %7990 = vmatpush1.msra.mxu0 0.0
        %7991 = vmatprep.subr.mxu0 0.0
        %7992 = vmatpush1.msra.mxu0 0.0
        %7993 = vmatprep.subr.mxu0 0.0
        %7994 = vmatpush1.msra.mxu0 0.0
        %7995 = vmatprep.subr.mxu0 0.0
        %7996 = vmatpush1.msra.mxu0 0.0
        %7997 = vmatprep.subr.mxu0 0.0
        %7998 = vmatpush1.msra.mxu0 0.0
        %7999 = vmatprep.subr.mxu0 0.0
        %8000 = vmatpush1.msra.mxu0 0.0
        %8001 = vmatprep.subr.mxu0 0.0
        %8002 = vmatpush1.msra.mxu0 0.0
        %8003 = vmatprep.subr.mxu0 0.0
        %8004 = vmatpush1.msra.mxu0 0.0
        %8005 = vmatprep.subr.mxu0 0.0
        %8006 = vmatpush1.msra.mxu0 0.0
        %8007 = vmatprep.subr.mxu0 0.0
        %8008 = vmatpush1.msra.mxu0 0.0
        %8009 = vmatprep.subr.mxu0 0.0
        %8010 = vmatpush1.msra.mxu0 0.0
        %8011 = vmatprep.subr.mxu0 %v7964
        %8012 = vmatpush1.msra.mxu0 %v7963
        %8013 = vmatprep.subr.mxu0 %v7948
        %8014 = vmatpush1.msra.mxu0 %v7947
        %8015 = vmatprep.subr.mxu0 %v7932
        %8016 = vmatpush1.msra.mxu0 %v7931
        %8017 = vmatprep.subr.mxu0 %v7916
        %8018 = vmatpush1.msra.mxu0 %v7915
        %8019 = vmatprep.subr.mxu0 0.0
        %8020 = vmatpush2.msra.mxu0 0.0
        %8021 = vmatprep.subr.mxu0 0.0
        %8022 = vmatpush2.msra.mxu0 0.0
        %8023 = vmatprep.subr.mxu0 0.0
        %8024 = vmatpush2.msra.mxu0 0.0
        %8025 = vmatprep.subr.mxu0 0.0
        %8026 = vmatpush2.msra.mxu0 0.0
        %8027 = vmatprep.subr.mxu0 0.0
        %8028 = vmatpush2.msra.mxu0 0.0
        %8029 = vmatprep.subr.mxu0 0.0
        %8030 = vmatpush2.msra.mxu0 0.0
        %8031 = vmatprep.subr.mxu0 0.0
        %8032 = vmatpush2.msra.mxu0 0.0
        %8033 = vmatprep.subr.mxu0 0.0
        %8034 = vmatpush2.msra.mxu0 0.0
        %8035 = vmatprep.subr.mxu0 0.0
        %8036 = vmatpush2.msra.mxu0 0.0
        %8037 = vmatprep.subr.mxu0 0.0
        %8038 = vmatpush2.msra.mxu0 0.0
        %8039 = vmatprep.subr.mxu0 0.0
        %8040 = vmatpush2.msra.mxu0 0.0
        %8041 = vmatprep.subr.mxu0 0.0
        %8042 = vmatpush2.msra.mxu0 0.0
        %8043 = vmatprep.subr.mxu0 0.0
        %8044 = vmatpush2.msra.mxu0 0.0
        %8045 = vmatprep.subr.mxu0 0.0
        %8046 = vmatpush2.msra.mxu0 0.0
        %8047 = vmatprep.subr.mxu0 0.0
        %8048 = vmatpush2.msra.mxu0 0.0
        %8049 = vmatprep.subr.mxu0 0.0
        %8050 = vmatpush2.msra.mxu0 0.0
        %8051 = vmatprep.mubr.f32.mxu0 0.0
        %8052 = vmatmul.mubr.f32.gmra.mxu0 %v7985
        %v8053 = vpop.f32.mrf.mxu0
        %v8054 = vadd.f32 %v7982, %v8053
        %v8055 = vpop.f32.mrf.mxu0
        %v8056 = vadd.f32 %v7982, %v8055
        %8057 = vdwg.mxu0
        %8058 = vmatprep.subr.mxu0 0.0
        %8059 = vmatpush1.msra.mxu0 0.0
        %8060 = vmatprep.subr.mxu0 0.0
        %8061 = vmatpush1.msra.mxu0 0.0
        %8062 = vmatprep.subr.mxu0 0.0
        %8063 = vmatpush1.msra.mxu0 0.0
        %8064 = vmatprep.subr.mxu0 0.0
        %8065 = vmatpush1.msra.mxu0 0.0
        %8066 = vmatprep.subr.mxu0 0.0
        %8067 = vmatpush1.msra.mxu0 0.0
        %8068 = vmatprep.subr.mxu0 0.0
        %8069 = vmatpush1.msra.mxu0 0.0
        %8070 = vmatprep.subr.mxu0 0.0
        %8071 = vmatpush1.msra.mxu0 0.0
        %8072 = vmatprep.subr.mxu0 0.0
        %8073 = vmatpush1.msra.mxu0 0.0
        %8074 = vmatprep.subr.mxu0 0.0
        %8075 = vmatpush1.msra.mxu0 0.0
        %8076 = vmatprep.subr.mxu0 0.0
        %8077 = vmatpush1.msra.mxu0 0.0
        %8078 = vmatprep.subr.mxu0 0.0
        %8079 = vmatpush1.msra.mxu0 0.0
        %8080 = vmatprep.subr.mxu0 0.0
        %8081 = vmatpush1.msra.mxu0 0.0
        %8082 = vmatprep.subr.mxu0 %v7966
        %8083 = vmatpush1.msra.mxu0 %v7965
        %8084 = vmatprep.subr.mxu0 %v7950
        %8085 = vmatpush1.msra.mxu0 %v7949
        %8086 = vmatprep.subr.mxu0 %v7934
        %8087 = vmatpush1.msra.mxu0 %v7933
        %8088 = vmatprep.subr.mxu0 %v7918
        %8089 = vmatpush1.msra.mxu0 %v7917
        %8090 = vmatprep.subr.mxu0 0.0
        %8091 = vmatpush2.msra.mxu0 0.0
        %8092 = vmatprep.subr.mxu0 0.0
        %8093 = vmatpush2.msra.mxu0 0.0
        %8094 = vmatprep.subr.mxu0 0.0
        %8095 = vmatpush2.msra.mxu0 0.0
        %8096 = vmatprep.subr.mxu0 0.0
        %8097 = vmatpush2.msra.mxu0 0.0
        %8098 = vmatprep.subr.mxu0 0.0
        %8099 = vmatpush2.msra.mxu0 0.0
        %8100 = vmatprep.subr.mxu0 0.0
        %8101 = vmatpush2.msra.mxu0 0.0
        %8102 = vmatprep.subr.mxu0 0.0
        %8103 = vmatpush2.msra.mxu0 0.0
        %8104 = vmatprep.subr.mxu0 0.0
        %8105 = vmatpush2.msra.mxu0 0.0
        %8106 = vmatprep.subr.mxu0 0.0
        %8107 = vmatpush2.msra.mxu0 0.0
        %8108 = vmatprep.subr.mxu0 0.0
        %8109 = vmatpush2.msra.mxu0 0.0
        %8110 = vmatprep.subr.mxu0 0.0
        %8111 = vmatpush2.msra.mxu0 0.0
        %8112 = vmatprep.subr.mxu0 0.0
        %8113 = vmatpush2.msra.mxu0 0.0
        %8114 = vmatprep.subr.mxu0 0.0
        %8115 = vmatpush2.msra.mxu0 0.0
        %8116 = vmatprep.subr.mxu0 0.0
        %8117 = vmatpush2.msra.mxu0 0.0
        %8118 = vmatprep.subr.mxu0 0.0
        %8119 = vmatpush2.msra.mxu0 0.0
        %8120 = vmatprep.subr.mxu0 0.0
        %8121 = vmatpush2.msra.mxu0 0.0
        %8122 = vmatprep.mubr.f32.mxu0 0.0
        %8123 = vmatmul.mubr.f32.gmra.mxu0 %v7985
        %v8124 = vpop.f32.mrf.mxu0
        %v8125 = vadd.f32 %v7982, %v8124
        %v8126 = vpop.f32.mrf.mxu0
        %v8127 = vadd.f32 %v7982, %v8126
        %8128 = vdwg.mxu0
        %8129 = vmatprep.subr.mxu0 0.0
        %8130 = vmatpush1.msra.mxu0 0.0
        %8131 = vmatprep.subr.mxu0 0.0
        %8132 = vmatpush1.msra.mxu0 0.0
        %8133 = vmatprep.subr.mxu0 0.0
        %8134 = vmatpush1.msra.mxu0 0.0
        %8135 = vmatprep.subr.mxu0 0.0
        %8136 = vmatpush1.msra.mxu0 0.0
        %8137 = vmatprep.subr.mxu0 0.0
        %8138 = vmatpush1.msra.mxu0 0.0
        %8139 = vmatprep.subr.mxu0 0.0
        %8140 = vmatpush1.msra.mxu0 0.0
        %8141 = vmatprep.subr.mxu0 0.0
        %8142 = vmatpush1.msra.mxu0 0.0
        %8143 = vmatprep.subr.mxu0 0.0
        %8144 = vmatpush1.msra.mxu0 0.0
        %8145 = vmatprep.subr.mxu0 0.0
        %8146 = vmatpush1.msra.mxu0 0.0
        %8147 = vmatprep.subr.mxu0 0.0
        %8148 = vmatpush1.msra.mxu0 0.0
        %8149 = vmatprep.subr.mxu0 0.0
        %8150 = vmatpush1.msra.mxu0 0.0
        %8151 = vmatprep.subr.mxu0 0.0
        %8152 = vmatpush1.msra.mxu0 0.0
        %8153 = vmatprep.subr.mxu0 %v7968
        %8154 = vmatpush1.msra.mxu0 %v7967
        %8155 = vmatprep.subr.mxu0 %v7952
        %8156 = vmatpush1.msra.mxu0 %v7951
        %8157 = vmatprep.subr.mxu0 %v7936
        %8158 = vmatpush1.msra.mxu0 %v7935
        %8159 = vmatprep.subr.mxu0 %v7920
        %8160 = vmatpush1.msra.mxu0 %v7919
        %8161 = vmatprep.subr.mxu0 0.0
        %8162 = vmatpush2.msra.mxu0 0.0
        %8163 = vmatprep.subr.mxu0 0.0
        %8164 = vmatpush2.msra.mxu0 0.0
        %8165 = vmatprep.subr.mxu0 0.0
        %8166 = vmatpush2.msra.mxu0 0.0
        %8167 = vmatprep.subr.mxu0 0.0
        %8168 = vmatpush2.msra.mxu0 0.0
        %8169 = vmatprep.subr.mxu0 0.0
        %8170 = vmatpush2.msra.mxu0 0.0
        %8171 = vmatprep.subr.mxu0 0.0
        %8172 = vmatpush2.msra.mxu0 0.0
        %8173 = vmatprep.subr.mxu0 0.0
        %8174 = vmatpush2.msra.mxu0 0.0
        %8175 = vmatprep.subr.mxu0 0.0
        %8176 = vmatpush2.msra.mxu0 0.0
        %8177 = vmatprep.subr.mxu0 0.0
        %8178 = vmatpush2.msra.mxu0 0.0
        %8179 = vmatprep.subr.mxu0 0.0
        %8180 = vmatpush2.msra.mxu0 0.0
        %8181 = vmatprep.subr.mxu0 0.0
        %8182 = vmatpush2.msra.mxu0 0.0
        %8183 = vmatprep.subr.mxu0 0.0
        %8184 = vmatpush2.msra.mxu0 0.0
        %8185 = vmatprep.subr.mxu0 0.0
        %8186 = vmatpush2.msra.mxu0 0.0
        %8187 = vmatprep.subr.mxu0 0.0
        %8188 = vmatpush2.msra.mxu0 0.0
        %8189 = vmatprep.subr.mxu0 0.0
        %8190 = vmatpush2.msra.mxu0 0.0
        %8191 = vmatprep.subr.mxu0 0.0
        %8192 = vmatpush2.msra.mxu0 0.0
        %8193 = vmatprep.mubr.f32.mxu0 0.0
        %8194 = vmatmul.mubr.f32.gmra.mxu0 %v7985
        %v8195 = vpop.f32.mrf.mxu0
        %v8196 = vadd.f32 %v7982, %v8195
        %v8197 = vpop.f32.mrf.mxu0
        %v8198 = vadd.f32 %v7982, %v8197
        %8199 = vdwg.mxu0
        %8200 = vmatprep.subr.mxu0 0.0
        %8201 = vmatpush1.msra.mxu0 0.0
        %8202 = vmatprep.subr.mxu0 0.0
        %8203 = vmatpush1.msra.mxu0 0.0
        %8204 = vmatprep.subr.mxu0 0.0
        %8205 = vmatpush1.msra.mxu0 0.0
        %8206 = vmatprep.subr.mxu0 0.0
        %8207 = vmatpush1.msra.mxu0 0.0
        %8208 = vmatprep.subr.mxu0 0.0
        %8209 = vmatpush1.msra.mxu0 0.0
        %8210 = vmatprep.subr.mxu0 0.0
        %8211 = vmatpush1.msra.mxu0 0.0
        %8212 = vmatprep.subr.mxu0 0.0
        %8213 = vmatpush1.msra.mxu0 0.0
        %8214 = vmatprep.subr.mxu0 0.0
        %8215 = vmatpush1.msra.mxu0 0.0
        %8216 = vmatprep.subr.mxu0 0.0
        %8217 = vmatpush1.msra.mxu0 0.0
        %8218 = vmatprep.subr.mxu0 0.0
        %8219 = vmatpush1.msra.mxu0 0.0
        %8220 = vmatprep.subr.mxu0 0.0
        %8221 = vmatpush1.msra.mxu0 0.0
        %8222 = vmatprep.subr.mxu0 0.0
        %8223 = vmatpush1.msra.mxu0 0.0
        %8224 = vmatprep.subr.mxu0 %v7970
        %8225 = vmatpush1.msra.mxu0 %v7969
        %8226 = vmatprep.subr.mxu0 %v7954
        %8227 = vmatpush1.msra.mxu0 %v7953
        %8228 = vmatprep.subr.mxu0 %v7938
        %8229 = vmatpush1.msra.mxu0 %v7937
        %8230 = vmatprep.subr.mxu0 %v7922
        %8231 = vmatpush1.msra.mxu0 %v7921
        %8232 = vmatprep.subr.mxu0 0.0
        %8233 = vmatpush2.msra.mxu0 0.0
        %8234 = vmatprep.subr.mxu0 0.0
        %8235 = vmatpush2.msra.mxu0 0.0
        %8236 = vmatprep.subr.mxu0 0.0
        %8237 = vmatpush2.msra.mxu0 0.0
        %8238 = vmatprep.subr.mxu0 0.0
        %8239 = vmatpush2.msra.mxu0 0.0
        %8240 = vmatprep.subr.mxu0 0.0
        %8241 = vmatpush2.msra.mxu0 0.0
        %8242 = vmatprep.subr.mxu0 0.0
        %8243 = vmatpush2.msra.mxu0 0.0
        %8244 = vmatprep.subr.mxu0 0.0
        %8245 = vmatpush2.msra.mxu0 0.0
        %8246 = vmatprep.subr.mxu0 0.0
        %8247 = vmatpush2.msra.mxu0 0.0
        %8248 = vmatprep.subr.mxu0 0.0
        %8249 = vmatpush2.msra.mxu0 0.0
        %8250 = vmatprep.subr.mxu0 0.0
        %8251 = vmatpush2.msra.mxu0 0.0
        %8252 = vmatprep.subr.mxu0 0.0
        %8253 = vmatpush2.msra.mxu0 0.0
        %8254 = vmatprep.subr.mxu0 0.0
        %8255 = vmatpush2.msra.mxu0 0.0
        %8256 = vmatprep.subr.mxu0 0.0
        %8257 = vmatpush2.msra.mxu0 0.0
        %8258 = vmatprep.subr.mxu0 0.0
        %8259 = vmatpush2.msra.mxu0 0.0
        %8260 = vmatprep.subr.mxu0 0.0
        %8261 = vmatpush2.msra.mxu0 0.0
        %8262 = vmatprep.subr.mxu0 0.0
        %8263 = vmatpush2.msra.mxu0 0.0
        %8264 = vmatprep.mubr.f32.mxu0 0.0
        %8265 = vmatmul.mubr.f32.gmra.mxu0 %v7985
        %v8266 = vpop.f32.mrf.mxu0
        %v8267 = vadd.f32 %v7982, %v8266
        %v8268 = vpop.f32.mrf.mxu0
        %v8269 = vadd.f32 %v7982, %v8268
        %8270 = vdwg.mxu0
        %8271 = vmatprep.subr.mxu0 0.0
        %8272 = vmatpush1.msra.mxu0 0.0
        %8273 = vmatprep.subr.mxu0 0.0
        %8274 = vmatpush1.msra.mxu0 0.0
        %8275 = vmatprep.subr.mxu0 0.0
        %8276 = vmatpush1.msra.mxu0 0.0
        %8277 = vmatprep.subr.mxu0 0.0
        %8278 = vmatpush1.msra.mxu0 0.0
        %8279 = vmatprep.subr.mxu0 0.0
        %8280 = vmatpush1.msra.mxu0 0.0
        %8281 = vmatprep.subr.mxu0 0.0
        %8282 = vmatpush1.msra.mxu0 0.0
        %8283 = vmatprep.subr.mxu0 0.0
        %8284 = vmatpush1.msra.mxu0 0.0
        %8285 = vmatprep.subr.mxu0 0.0
        %8286 = vmatpush1.msra.mxu0 0.0
        %8287 = vmatprep.subr.mxu0 0.0
        %8288 = vmatpush1.msra.mxu0 0.0
        %8289 = vmatprep.subr.mxu0 0.0
        %8290 = vmatpush1.msra.mxu0 0.0
        %8291 = vmatprep.subr.mxu0 0.0
        %8292 = vmatpush1.msra.mxu0 0.0
        %8293 = vmatprep.subr.mxu0 0.0
        %8294 = vmatpush1.msra.mxu0 0.0
        %8295 = vmatprep.subr.mxu0 %v7972
        %8296 = vmatpush1.msra.mxu0 %v7971
        %8297 = vmatprep.subr.mxu0 %v7956
        %8298 = vmatpush1.msra.mxu0 %v7955
        %8299 = vmatprep.subr.mxu0 %v7940
        %8300 = vmatpush1.msra.mxu0 %v7939
        %8301 = vmatprep.subr.mxu0 %v7924
        %8302 = vmatpush1.msra.mxu0 %v7923
        %8303 = vmatprep.subr.mxu0 0.0
        %8304 = vmatpush2.msra.mxu0 0.0
        %8305 = vmatprep.subr.mxu0 0.0
        %8306 = vmatpush2.msra.mxu0 0.0
        %8307 = vmatprep.subr.mxu0 0.0
        %8308 = vmatpush2.msra.mxu0 0.0
        %8309 = vmatprep.subr.mxu0 0.0
        %8310 = vmatpush2.msra.mxu0 0.0
        %8311 = vmatprep.subr.mxu0 0.0
        %8312 = vmatpush2.msra.mxu0 0.0
        %8313 = vmatprep.subr.mxu0 0.0
        %8314 = vmatpush2.msra.mxu0 0.0
        %8315 = vmatprep.subr.mxu0 0.0
        %8316 = vmatpush2.msra.mxu0 0.0
        %8317 = vmatprep.subr.mxu0 0.0
        %8318 = vmatpush2.msra.mxu0 0.0
        %8319 = vmatprep.subr.mxu0 0.0
        %8320 = vmatpush2.msra.mxu0 0.0
        %8321 = vmatprep.subr.mxu0 0.0
        %8322 = vmatpush2.msra.mxu0 0.0
        %8323 = vmatprep.subr.mxu0 0.0
        %8324 = vmatpush2.msra.mxu0 0.0
        %8325 = vmatprep.subr.mxu0 0.0
        %8326 = vmatpush2.msra.mxu0 0.0
        %8327 = vmatprep.subr.mxu0 0.0
        %8328 = vmatpush2.msra.mxu0 0.0
        %8329 = vmatprep.subr.mxu0 0.0
        %8330 = vmatpush2.msra.mxu0 0.0
        %8331 = vmatprep.subr.mxu0 0.0
        %8332 = vmatpush2.msra.mxu0 0.0
        %8333 = vmatprep.subr.mxu0 0.0
        %8334 = vmatpush2.msra.mxu0 0.0
        %8335 = vmatprep.mubr.f32.mxu0 0.0
        %8336 = vmatmul.mubr.f32.gmra.mxu0 %v7985
        %v8337 = vpop.f32.mrf.mxu0
        %v8338 = vadd.f32 %v7982, %v8337
        %v8339 = vpop.f32.mrf.mxu0
        %v8340 = vadd.f32 %v7982, %v8339
        %8341 = vdwg.mxu0
        %8342 = vmatprep.subr.mxu0 0.0
        %8343 = vmatpush1.msra.mxu0 0.0
        %8344 = vmatprep.subr.mxu0 0.0
        %8345 = vmatpush1.msra.mxu0 0.0
        %8346 = vmatprep.subr.mxu0 0.0
        %8347 = vmatpush1.msra.mxu0 0.0
        %8348 = vmatprep.subr.mxu0 0.0
        %8349 = vmatpush1.msra.mxu0 0.0
        %8350 = vmatprep.subr.mxu0 0.0
        %8351 = vmatpush1.msra.mxu0 0.0
        %8352 = vmatprep.subr.mxu0 0.0
        %8353 = vmatpush1.msra.mxu0 0.0
        %8354 = vmatprep.subr.mxu0 0.0
        %8355 = vmatpush1.msra.mxu0 0.0
        %8356 = vmatprep.subr.mxu0 0.0
        %8357 = vmatpush1.msra.mxu0 0.0
        %8358 = vmatprep.subr.mxu0 0.0
        %8359 = vmatpush1.msra.mxu0 0.0
        %8360 = vmatprep.subr.mxu0 0.0
        %8361 = vmatpush1.msra.mxu0 0.0
        %8362 = vmatprep.subr.mxu0 0.0
        %8363 = vmatpush1.msra.mxu0 0.0
        %8364 = vmatprep.subr.mxu0 0.0
        %8365 = vmatpush1.msra.mxu0 0.0
        %8366 = vmatprep.subr.mxu0 %v7974
        %8367 = vmatpush1.msra.mxu0 %v7973
        %8368 = vmatprep.subr.mxu0 %v7958
        %8369 = vmatpush1.msra.mxu0 %v7957
        %8370 = vmatprep.subr.mxu0 %v7942
        %8371 = vmatpush1.msra.mxu0 %v7941
        %8372 = vmatprep.subr.mxu0 %v7926
        %8373 = vmatpush1.msra.mxu0 %v7925
        %8374 = vmatprep.subr.mxu0 0.0
        %8375 = vmatpush2.msra.mxu0 0.0
        %8376 = vmatprep.subr.mxu0 0.0
        %8377 = vmatpush2.msra.mxu0 0.0
        %8378 = vmatprep.subr.mxu0 0.0
        %8379 = vmatpush2.msra.mxu0 0.0
        %8380 = vmatprep.subr.mxu0 0.0
        %8381 = vmatpush2.msra.mxu0 0.0
        %8382 = vmatprep.subr.mxu0 0.0
        %8383 = vmatpush2.msra.mxu0 0.0
        %8384 = vmatprep.subr.mxu0 0.0
        %8385 = vmatpush2.msra.mxu0 0.0
        %8386 = vmatprep.subr.mxu0 0.0
        %8387 = vmatpush2.msra.mxu0 0.0
        %8388 = vmatprep.subr.mxu0 0.0
        %8389 = vmatpush2.msra.mxu0 0.0
        %8390 = vmatprep.subr.mxu0 0.0
        %8391 = vmatpush2.msra.mxu0 0.0
        %8392 = vmatprep.subr.mxu0 0.0
        %8393 = vmatpush2.msra.mxu0 0.0
        %8394 = vmatprep.subr.mxu0 0.0
        %8395 = vmatpush2.msra.mxu0 0.0
        %8396 = vmatprep.subr.mxu0 0.0
        %8397 = vmatpush2.msra.mxu0 0.0
        %8398 = vmatprep.subr.mxu0 0.0
        %8399 = vmatpush2.msra.mxu0 0.0
        %8400 = vmatprep.subr.mxu0 0.0
        %8401 = vmatpush2.msra.mxu0 0.0
        %8402 = vmatprep.subr.mxu0 0.0
        %8403 = vmatpush2.msra.mxu0 0.0
        %8404 = vmatprep.subr.mxu0 0.0
        %8405 = vmatpush2.msra.mxu0 0.0
        %8406 = vmatprep.mubr.f32.mxu0 0.0
        %8407 = vmatmul.mubr.f32.gmra.mxu0 %v7985
        %v8408 = vpop.f32.mrf.mxu0
        %v8409 = vadd.f32 %v7982, %v8408
        %v8410 = vpop.f32.mrf.mxu0
        %v8411 = vadd.f32 %v7982, %v8410
        %8412 = vdwg.mxu0
        %8413 = vmatprep.subr.mxu0 0.0
        %8414 = vmatpush1.msra.mxu0 0.0
        %8415 = vmatprep.subr.mxu0 0.0
        %8416 = vmatpush1.msra.mxu0 0.0
        %8417 = vmatprep.subr.mxu0 0.0
        %8418 = vmatpush1.msra.mxu0 0.0
        %8419 = vmatprep.subr.mxu0 0.0
        %8420 = vmatpush1.msra.mxu0 0.0
        %8421 = vmatprep.subr.mxu0 0.0
        %8422 = vmatpush1.msra.mxu0 0.0
        %8423 = vmatprep.subr.mxu0 0.0
        %8424 = vmatpush1.msra.mxu0 0.0
        %8425 = vmatprep.subr.mxu0 0.0
        %8426 = vmatpush1.msra.mxu0 0.0
        %8427 = vmatprep.subr.mxu0 0.0
        %8428 = vmatpush1.msra.mxu0 0.0
        %8429 = vmatprep.subr.mxu0 0.0
        %8430 = vmatpush1.msra.mxu0 0.0
        %8431 = vmatprep.subr.mxu0 0.0
        %8432 = vmatpush1.msra.mxu0 0.0
        %8433 = vmatprep.subr.mxu0 0.0
        %8434 = vmatpush1.msra.mxu0 0.0
        %8435 = vmatprep.subr.mxu0 0.0
        %8436 = vmatpush1.msra.mxu0 0.0
        %8437 = vmatprep.subr.mxu0 %v7976
        %8438 = vmatpush1.msra.mxu0 %v7975
        %8439 = vmatprep.subr.mxu0 %v7960
        %8440 = vmatpush1.msra.mxu0 %v7959
        %8441 = vmatprep.subr.mxu0 %v7944
        %8442 = vmatpush1.msra.mxu0 %v7943
        %8443 = vmatprep.subr.mxu0 %v7928
        %8444 = vmatpush1.msra.mxu0 %v7927
        %8445 = vmatprep.subr.mxu0 0.0
        %8446 = vmatpush2.msra.mxu0 0.0
        %8447 = vmatprep.subr.mxu0 0.0
        %8448 = vmatpush2.msra.mxu0 0.0
        %8449 = vmatprep.subr.mxu0 0.0
        %8450 = vmatpush2.msra.mxu0 0.0
        %8451 = vmatprep.subr.mxu0 0.0
        %8452 = vmatpush2.msra.mxu0 0.0
        %8453 = vmatprep.subr.mxu0 0.0
        %8454 = vmatpush2.msra.mxu0 0.0
        %8455 = vmatprep.subr.mxu0 0.0
        %8456 = vmatpush2.msra.mxu0 0.0
        %8457 = vmatprep.subr.mxu0 0.0
        %8458 = vmatpush2.msra.mxu0 0.0
        %8459 = vmatprep.subr.mxu0 0.0
        %8460 = vmatpush2.msra.mxu0 0.0
        %8461 = vmatprep.subr.mxu0 0.0
        %8462 = vmatpush2.msra.mxu0 0.0
        %8463 = vmatprep.subr.mxu0 0.0
        %8464 = vmatpush2.msra.mxu0 0.0
        %8465 = vmatprep.subr.mxu0 0.0
        %8466 = vmatpush2.msra.mxu0 0.0
        %8467 = vmatprep.subr.mxu0 0.0
        %8468 = vmatpush2.msra.mxu0 0.0
        %8469 = vmatprep.subr.mxu0 0.0
        %8470 = vmatpush2.msra.mxu0 0.0
        %8471 = vmatprep.subr.mxu0 0.0
        %8472 = vmatpush2.msra.mxu0 0.0
        %8473 = vmatprep.subr.mxu0 0.0
        %8474 = vmatpush2.msra.mxu0 0.0
        %8475 = vmatprep.subr.mxu0 0.0
        %8476 = vmatpush2.msra.mxu0 0.0
        %8477 = vmatprep.mubr.f32.mxu0 0.0
        %8478 = vmatmul.mubr.f32.gmra.mxu0 %v7985
        %v8479 = vpop.f32.mrf.mxu0
        %v8480 = vadd.f32 %v7982, %v8479
        %v8481 = vpop.f32.mrf.mxu0
        %v8482 = vadd.f32 %v7982, %v8481
        %8483 = vdwg.mxu0
        %8484 = vmatprep.subr.mxu0 0.0
        %8485 = vmatpush1.msra.mxu0 0.0
        %8486 = vmatprep.subr.mxu0 0.0
        %8487 = vmatpush1.msra.mxu0 0.0
        %8488 = vmatprep.subr.mxu0 0.0
        %8489 = vmatpush1.msra.mxu0 0.0
        %8490 = vmatprep.subr.mxu0 0.0
        %8491 = vmatpush1.msra.mxu0 0.0
        %8492 = vmatprep.subr.mxu0 0.0
        %8493 = vmatpush1.msra.mxu0 0.0
        %8494 = vmatprep.subr.mxu0 0.0
        %8495 = vmatpush1.msra.mxu0 0.0
        %8496 = vmatprep.subr.mxu0 0.0
        %8497 = vmatpush1.msra.mxu0 0.0
        %8498 = vmatprep.subr.mxu0 0.0
        %8499 = vmatpush1.msra.mxu0 0.0
        %8500 = vmatprep.subr.mxu0 0.0
        %8501 = vmatpush1.msra.mxu0 0.0
        %8502 = vmatprep.subr.mxu0 0.0
        %8503 = vmatpush1.msra.mxu0 0.0
        %8504 = vmatprep.subr.mxu0 0.0
        %8505 = vmatpush1.msra.mxu0 0.0
        %8506 = vmatprep.subr.mxu0 0.0
        %8507 = vmatpush1.msra.mxu0 0.0
        %8508 = vmatprep.subr.mxu0 %v7978
        %8509 = vmatpush1.msra.mxu0 %v7977
        %8510 = vmatprep.subr.mxu0 %v7962
        %8511 = vmatpush1.msra.mxu0 %v7961
        %8512 = vmatprep.subr.mxu0 %v7946
        %8513 = vmatpush1.msra.mxu0 %v7945
        %8514 = vmatprep.subr.mxu0 %v7930
        %8515 = vmatpush1.msra.mxu0 %v7929
        %8516 = vmatprep.subr.mxu0 0.0
        %8517 = vmatpush2.msra.mxu0 0.0
        %8518 = vmatprep.subr.mxu0 0.0
        %8519 = vmatpush2.msra.mxu0 0.0
        %8520 = vmatprep.subr.mxu0 0.0
        %8521 = vmatpush2.msra.mxu0 0.0
        %8522 = vmatprep.subr.mxu0 0.0
        %8523 = vmatpush2.msra.mxu0 0.0
        %8524 = vmatprep.subr.mxu0 0.0
        %8525 = vmatpush2.msra.mxu0 0.0
        %8526 = vmatprep.subr.mxu0 0.0
        %8527 = vmatpush2.msra.mxu0 0.0
        %8528 = vmatprep.subr.mxu0 0.0
        %8529 = vmatpush2.msra.mxu0 0.0
        %8530 = vmatprep.subr.mxu0 0.0
        %8531 = vmatpush2.msra.mxu0 0.0
        %8532 = vmatprep.subr.mxu0 0.0
        %8533 = vmatpush2.msra.mxu0 0.0
        %8534 = vmatprep.subr.mxu0 0.0
        %8535 = vmatpush2.msra.mxu0 0.0
        %8536 = vmatprep.subr.mxu0 0.0
        %8537 = vmatpush2.msra.mxu0 0.0
        %8538 = vmatprep.subr.mxu0 0.0
        %8539 = vmatpush2.msra.mxu0 0.0
        %8540 = vmatprep.subr.mxu0 0.0
        %8541 = vmatpush2.msra.mxu0 0.0
        %8542 = vmatprep.subr.mxu0 0.0
        %8543 = vmatpush2.msra.mxu0 0.0
        %8544 = vmatprep.subr.mxu0 0.0
        %8545 = vmatpush2.msra.mxu0 0.0
        %8546 = vmatprep.subr.mxu0 0.0
        %8547 = vmatpush2.msra.mxu0 0.0
        %8548 = vmatprep.mubr.f32.mxu0 0.0
        %8549 = vmatmul.mubr.f32.gmra.mxu0 %v7985
        %v8550 = vpop.f32.mrf.mxu0
        %v8551 = vadd.f32 %v7982, %v8550
        %v8552 = vpop.f32.mrf.mxu0
        %v8553 = vadd.f32 %v7982, %v8552
        %8554 = vdwg.mxu0
        %v8555 = vand.u32 2147483647, %v8054
        %v8556 = vand.u32 2147483647, %v8056
        %v8557 = vand.u32 2147483647, %v8125
        %v8558 = vand.u32 2147483647, %v8127
        %v8559 = vand.u32 2147483647, %v8196
        %v8560 = vand.u32 2147483647, %v8198
        %v8561 = vand.u32 2147483647, %v8267
        %v8562 = vand.u32 2147483647, %v8269
        %v8563 = vand.u32 2147483647, %v8338
        %v8564 = vand.u32 2147483647, %v8340
        %v8565 = vand.u32 2147483647, %v8409
        %v8566 = vand.u32 2147483647, %v8411
        %v8567 = vand.u32 2147483647, %v8480
        %v8568 = vand.u32 2147483647, %v8482
        %v8569 = vand.u32 2147483647, %v8551
        %v8570 = vand.u32 2147483647, %v8553
        %v8571 = vsub.f32 0.0, %v8555
        %v8572 = vsub.f32 0.0, %v8556
        %v8573 = vsub.f32 0.0, %v8557
        %v8574 = vsub.f32 0.0, %v8558
        %v8575 = vsub.f32 0.0, %v8559
        %v8576 = vsub.f32 0.0, %v8560
        %v8577 = vsub.f32 0.0, %v8561
        %v8578 = vsub.f32 0.0, %v8562
        %v8579 = vsub.f32 0.0, %v8563
        %v8580 = vsub.f32 0.0, %v8564
        %v8581 = vsub.f32 0.0, %v8565
        %v8582 = vsub.f32 0.0, %v8566
        %v8583 = vsub.f32 0.0, %v8567
        %v8584 = vsub.f32 0.0, %v8568
        %v8585 = vsub.f32 0.0, %v8569
        %v8586 = vsub.f32 0.0, %v8570
        %v8587 = vmul.f32 %v8571, 1.442695
        %v8588 = vpow.pop %v8587
        %v8589 = vmul.f32 %v8572, 1.442695
        %v8590 = vpow.pop %v8589
        %v8591 = vmul.f32 %v8573, 1.442695
        %v8592 = vpow.pop %v8591
        %v8593 = vmul.f32 %v8574, 1.442695
        %v8594 = vpow.pop %v8593
        %v8595 = vmul.f32 %v8575, 1.442695
        %v8596 = vpow.pop %v8595
        %v8597 = vmul.f32 %v8576, 1.442695
        %v8598 = vpow.pop %v8597
        %v8599 = vmul.f32 %v8577, 1.442695
        %v8600 = vpow.pop %v8599
        %v8601 = vmul.f32 %v8578, 1.442695
        %v8602 = vpow.pop %v8601
        %v8603 = vmul.f32 %v8579, 1.442695
        %v8604 = vpow.pop %v8603
        %v8605 = vmul.f32 %v8580, 1.442695
        %v8606 = vpow.pop %v8605
        %v8607 = vmul.f32 %v8581, 1.442695
        %v8608 = vpow.pop %v8607
        %v8609 = vmul.f32 %v8582, 1.442695
        %v8610 = vpow.pop %v8609
        %v8611 = vmul.f32 %v8583, 1.442695
        %v8612 = vpow.pop %v8611
        %v8613 = vmul.f32 %v8584, 1.442695
        %v8614 = vpow.pop %v8613
        %v8615 = vmul.f32 %v8585, 1.442695
        %v8616 = vpow.pop %v8615
        %v8617 = vmul.f32 %v8586, 1.442695
        %v8618 = vpow.pop %v8617
        %vm8619 = vcmp.ge.f32.partialorder %v8054, 0.0
        %vm8620 = vcmp.ge.f32.partialorder %v8056, 0.0
        %vm8621 = vcmp.ge.f32.partialorder %v8125, 0.0
        %vm8622 = vcmp.ge.f32.partialorder %v8127, 0.0
        %vm8623 = vcmp.ge.f32.partialorder %v8196, 0.0
        %vm8624 = vcmp.ge.f32.partialorder %v8198, 0.0
        %vm8625 = vcmp.ge.f32.partialorder %v8267, 0.0
        %vm8626 = vcmp.ge.f32.partialorder %v8269, 0.0
        %vm8627 = vcmp.ge.f32.partialorder %v8338, 0.0
        %vm8628 = vcmp.ge.f32.partialorder %v8340, 0.0
        %vm8629 = vcmp.ge.f32.partialorder %v8409, 0.0
        %vm8630 = vcmp.ge.f32.partialorder %v8411, 0.0
        %vm8631 = vcmp.ge.f32.partialorder %v8480, 0.0
        %vm8632 = vcmp.ge.f32.partialorder %v8482, 0.0
        %vm8633 = vcmp.ge.f32.partialorder %v8551, 0.0
        %vm8634 = vcmp.ge.f32.partialorder %v8553, 0.0
        %v8635 = vsel %vm8619, 1.0, %v8588
        %v8636 = vsel %vm8620, 1.0, %v8590
        %v8637 = vsel %vm8621, 1.0, %v8592
        %v8638 = vsel %vm8622, 1.0, %v8594
        %v8639 = vsel %vm8623, 1.0, %v8596
        %v8640 = vsel %vm8624, 1.0, %v8598
        %v8641 = vsel %vm8625, 1.0, %v8600
        %v8642 = vsel %vm8626, 1.0, %v8602
        %v8643 = vsel %vm8627, 1.0, %v8604
        %v8644 = vsel %vm8628, 1.0, %v8606
        %v8645 = vsel %vm8629, 1.0, %v8608
        %v8646 = vsel %vm8630, 1.0, %v8610
        %v8647 = vsel %vm8631, 1.0, %v8612
        %v8648 = vsel %vm8632, 1.0, %v8614
        %v8649 = vsel %vm8633, 1.0, %v8616
        %v8650 = vsel %vm8634, 1.0, %v8618
        %v8651 = vadd.f32 %v8588, 1.0
        %v8652 = vadd.f32 %v8590, 1.0
        %v8653 = vadd.f32 %v8592, 1.0
        %v8654 = vadd.f32 %v8594, 1.0
        %v8655 = vadd.f32 %v8596, 1.0
        %v8656 = vadd.f32 %v8598, 1.0
        %v8657 = vadd.f32 %v8600, 1.0
        %v8658 = vadd.f32 %v8602, 1.0
        %v8659 = vadd.f32 %v8604, 1.0
        %v8660 = vadd.f32 %v8606, 1.0
        %v8661 = vadd.f32 %v8608, 1.0
        %v8662 = vadd.f32 %v8610, 1.0
        %v8663 = vadd.f32 %v8612, 1.0
        %v8664 = vadd.f32 %v8614, 1.0
        %v8665 = vadd.f32 %v8616, 1.0
        %v8666 = vadd.f32 %v8618, 1.0
        %v8667 = vrcp.pop %v8651
        %v8668 = vmul.f32 %v8635, %v8667
        %v8669 = vrcp.pop %v8652
        %v8670 = vmul.f32 %v8636, %v8669
        %v8671 = vrcp.pop %v8653
        %v8672 = vmul.f32 %v8637, %v8671
        %v8673 = vrcp.pop %v8654
        %v8674 = vmul.f32 %v8638, %v8673
        %v8675 = vrcp.pop %v8655
        %v8676 = vmul.f32 %v8639, %v8675
        %v8677 = vrcp.pop %v8656
        %v8678 = vmul.f32 %v8640, %v8677
        %v8679 = vrcp.pop %v8657
        %v8680 = vmul.f32 %v8641, %v8679
        %v8681 = vrcp.pop %v8658
        %v8682 = vmul.f32 %v8642, %v8681
        %v8683 = vrcp.pop %v8659
        %v8684 = vmul.f32 %v8643, %v8683
        %v8685 = vrcp.pop %v8660
        %v8686 = vmul.f32 %v8644, %v8685
        %v8687 = vrcp.pop %v8661
        %v8688 = vmul.f32 %v8645, %v8687
        %v8689 = vrcp.pop %v8662
        %v8690 = vmul.f32 %v8646, %v8689
        %v8691 = vrcp.pop %v8663
        %v8692 = vmul.f32 %v8647, %v8691
        %v8693 = vrcp.pop %v8664
        %v8694 = vmul.f32 %v8648, %v8693
        %v8695 = vrcp.pop %v8665
        %v8696 = vmul.f32 %v8649, %v8695
        %v8697 = vrcp.pop %v8666
        %v8698 = vmul.f32 %v8650, %v8697
        %v8699 = vadd.f32 %v6348, 0.0
        %v8700 = vadd.f32 %v8699, %v6349
        %v8701 = vadd.f32 %v8700, %v6350
        %v8702 = vadd.f32 %v8701, %v6351
        %v8703 = vadd.f32 %v8702, %v6352
        %v8704 = vadd.f32 %v8703, %v6353
        %v8705 = vadd.f32 %v8704, %v6354
        %v8706 = vadd.f32 %v8705, %v6355
        %v8707 = vadd.f32 %v8706, %v6356
        %v8708 = vadd.f32 %v8707, %v6357
        %v8709 = vadd.f32 %v8708, %v6358
        %v8710 = vadd.f32 %v8709, %v6359
        %v8711 = vadd.f32 %v8710, %v6360
        %v8712 = vadd.f32 %v8711, %v6361
        %v8713 = vadd.f32 %v8712, %v6362
        %v8714 = vadd.f32 %v8713, %v6363
        %v8715 = vlaneseq
        %v8716 = vshrl.u32 %v8715, 7
        %v8717 = vsub.s32 0, %v8716
        %v8718 = vrot.slane %v6989, %v8717
        %v8719 = vmul.f32 %v8718, %v8668
        %v8720 = vadd.f32 %v8719, 0.0
        %v8721 = vadd.f32 %v6989, 0.0
        %v8722 = vmul.f32 %v6989, %v711
        %v8723 = vadd.f32 %v8722, 0.0
        %v8724 = vsub.f32 1.0, %v6989
        %v8725 = vmul.f32 %v6990, %v8724
        %v8726 = vlaneseq
        %v8727 = vshrl.u32 %v8726, 7
        %v8728 = vsub.s32 0, %v8727
        %v8729 = vrot.slane %v8725, %v8728
        %v8730 = vmul.f32 %v8729, %v8670
        %v8731 = vadd.f32 %v8720, %v8730
        %v8732 = vadd.f32 %v8721, %v8725
        %v8733 = vmul.f32 %v8725, %v712
        %v8734 = vadd.f32 %v8723, %v8733
        %v8735 = vsub.f32 1.0, %v6990
        %v8736 = vmul.f32 %v8724, %v8735
        %v8737 = vmul.f32 %v6991, %v8736
        %v8738 = vlaneseq
        %v8739 = vshrl.u32 %v8738, 7
        %v8740 = vsub.s32 0, %v8739
        %v8741 = vrot.slane %v8737, %v8740
        %v8742 = vmul.f32 %v8741, %v8672
        %v8743 = vadd.f32 %v8731, %v8742
        %v8744 = vadd.f32 %v8732, %v8737
        %v8745 = vmul.f32 %v8737, %v713
        %v8746 = vadd.f32 %v8734, %v8745
        %v8747 = vsub.f32 1.0, %v6991
        %v8748 = vmul.f32 %v8736, %v8747
        %v8749 = vmul.f32 %v6992, %v8748
        %v8750 = vlaneseq
        %v8751 = vshrl.u32 %v8750, 7
        %v8752 = vsub.s32 0, %v8751
        %v8753 = vrot.slane %v8749, %v8752
        %v8754 = vmul.f32 %v8753, %v8674
        %v8755 = vadd.f32 %v8743, %v8754
        %v8756 = vadd.f32 %v8744, %v8749
        %v8757 = vmul.f32 %v8749, %v714
        %v8758 = vadd.f32 %v8746, %v8757
        %v8759 = vsub.f32 1.0, %v6992
        %v8760 = vmul.f32 %v8748, %v8759
        %v8761 = vmul.f32 %v6993, %v8760
        %v8762 = vlaneseq
        %v8763 = vshrl.u32 %v8762, 7
        %v8764 = vsub.s32 0, %v8763
        %v8765 = vrot.slane %v8761, %v8764
        %v8766 = vmul.f32 %v8765, %v8676
        %v8767 = vadd.f32 %v8755, %v8766
        %v8768 = vadd.f32 %v8756, %v8761
        %v8769 = vmul.f32 %v8761, %v715
        %v8770 = vadd.f32 %v8758, %v8769
        %v8771 = vsub.f32 1.0, %v6993
        %v8772 = vmul.f32 %v8760, %v8771
        %v8773 = vmul.f32 %v6994, %v8772
        %v8774 = vlaneseq
        %v8775 = vshrl.u32 %v8774, 7
        %v8776 = vsub.s32 0, %v8775
        %v8777 = vrot.slane %v8773, %v8776
        %v8778 = vmul.f32 %v8777, %v8678
        %v8779 = vadd.f32 %v8767, %v8778
        %v8780 = vadd.f32 %v8768, %v8773
        %v8781 = vmul.f32 %v8773, %v716
        %v8782 = vadd.f32 %v8770, %v8781
        %v8783 = vsub.f32 1.0, %v6994
        %v8784 = vmul.f32 %v8772, %v8783
        %v8785 = vmul.f32 %v6995, %v8784
        %v8786 = vlaneseq
        %v8787 = vshrl.u32 %v8786, 7
        %v8788 = vsub.s32 0, %v8787
        %v8789 = vrot.slane %v8785, %v8788
        %v8790 = vmul.f32 %v8789, %v8680
        %v8791 = vadd.f32 %v8779, %v8790
        %v8792 = vadd.f32 %v8780, %v8785
        %v8793 = vmul.f32 %v8785, %v717
        %v8794 = vadd.f32 %v8782, %v8793
        %v8795 = vsub.f32 1.0, %v6995
        %v8796 = vmul.f32 %v8784, %v8795
        %v8797 = vmul.f32 %v6996, %v8796
        %v8798 = vlaneseq
        %v8799 = vshrl.u32 %v8798, 7
        %v8800 = vsub.s32 0, %v8799
        %v8801 = vrot.slane %v8797, %v8800
        %v8802 = vmul.f32 %v8801, %v8682
        %v8803 = vadd.f32 %v8791, %v8802
        %v8804 = vadd.f32 %v8792, %v8797
        %v8805 = vmul.f32 %v8797, %v718
        %v8806 = vadd.f32 %v8794, %v8805
        %v8807 = vsub.f32 1.0, %v6996
        %v8808 = vmul.f32 %v8796, %v8807
        %v8809 = vmul.f32 %v6997, %v8808
        %v8810 = vlaneseq
        %v8811 = vshrl.u32 %v8810, 7
        %v8812 = vsub.s32 0, %v8811
        %v8813 = vrot.slane %v8809, %v8812
        %v8814 = vmul.f32 %v8813, %v8684
        %v8815 = vadd.f32 %v8803, %v8814
        %v8816 = vadd.f32 %v8804, %v8809
        %v8817 = vmul.f32 %v8809, %v719
        %v8818 = vadd.f32 %v8806, %v8817
        %v8819 = vsub.f32 1.0, %v6997
        %v8820 = vmul.f32 %v8808, %v8819
        %v8821 = vmul.f32 %v6998, %v8820
        %v8822 = vlaneseq
        %v8823 = vshrl.u32 %v8822, 7
        %v8824 = vsub.s32 0, %v8823
        %v8825 = vrot.slane %v8821, %v8824
        %v8826 = vmul.f32 %v8825, %v8686
        %v8827 = vadd.f32 %v8815, %v8826
        %v8828 = vadd.f32 %v8816, %v8821
        %v8829 = vmul.f32 %v8821, %v720
        %v8830 = vadd.f32 %v8818, %v8829
        %v8831 = vsub.f32 1.0, %v6998
        %v8832 = vmul.f32 %v8820, %v8831
        %v8833 = vmul.f32 %v6999, %v8832
        %v8834 = vlaneseq
        %v8835 = vshrl.u32 %v8834, 7
        %v8836 = vsub.s32 0, %v8835
        %v8837 = vrot.slane %v8833, %v8836
        %v8838 = vmul.f32 %v8837, %v8688
        %v8839 = vadd.f32 %v8827, %v8838
        %v8840 = vadd.f32 %v8828, %v8833
        %v8841 = vmul.f32 %v8833, %v721
        %v8842 = vadd.f32 %v8830, %v8841
        %v8843 = vsub.f32 1.0, %v6999
        %v8844 = vmul.f32 %v8832, %v8843
        %v8845 = vmul.f32 %v7000, %v8844
        %v8846 = vlaneseq
        %v8847 = vshrl.u32 %v8846, 7
        %v8848 = vsub.s32 0, %v8847
        %v8849 = vrot.slane %v8845, %v8848
        %v8850 = vmul.f32 %v8849, %v8690
        %v8851 = vadd.f32 %v8839, %v8850
        %v8852 = vadd.f32 %v8840, %v8845
        %v8853 = vmul.f32 %v8845, %v722
        %v8854 = vadd.f32 %v8842, %v8853
        %v8855 = vsub.f32 1.0, %v7000
        %v8856 = vmul.f32 %v8844, %v8855
        %v8857 = vmul.f32 %v7001, %v8856
        %v8858 = vlaneseq
        %v8859 = vshrl.u32 %v8858, 7
        %v8860 = vsub.s32 0, %v8859
        %v8861 = vrot.slane %v8857, %v8860
        %v8862 = vmul.f32 %v8861, %v8692
        %v8863 = vadd.f32 %v8851, %v8862
        %v8864 = vadd.f32 %v8852, %v8857
        %v8865 = vmul.f32 %v8857, %v723
        %v8866 = vadd.f32 %v8854, %v8865
        %v8867 = vsub.f32 1.0, %v7001
        %v8868 = vmul.f32 %v8856, %v8867
        %v8869 = vmul.f32 %v7002, %v8868
        %v8870 = vlaneseq
        %v8871 = vshrl.u32 %v8870, 7
        %v8872 = vsub.s32 0, %v8871
        %v8873 = vrot.slane %v8869, %v8872
        %v8874 = vmul.f32 %v8873, %v8694
        %v8875 = vadd.f32 %v8863, %v8874
        %v8876 = vadd.f32 %v8864, %v8869
        %v8877 = vmul.f32 %v8869, %v724
        %v8878 = vadd.f32 %v8866, %v8877
        %v8879 = vsub.f32 1.0, %v7002
        %v8880 = vmul.f32 %v8868, %v8879
        %v8881 = vmul.f32 %v7003, %v8880
        %v8882 = vlaneseq
        %v8883 = vshrl.u32 %v8882, 7
        %v8884 = vsub.s32 0, %v8883
        %v8885 = vrot.slane %v8881, %v8884
        %v8886 = vmul.f32 %v8885, %v8696
        %v8887 = vadd.f32 %v8875, %v8886
        %v8888 = vadd.f32 %v8876, %v8881
        %v8889 = vmul.f32 %v8881, %v725
        %v8890 = vadd.f32 %v8878, %v8889
        %v8891 = vsub.f32 1.0, %v7003
        %v8892 = vmul.f32 %v8880, %v8891
        %v8893 = vmul.f32 %v7004, %v8892
        %v8894 = vlaneseq
        %v8895 = vshrl.u32 %v8894, 7
        %v8896 = vsub.s32 0, %v8895
        %v8897 = vrot.slane %v8893, %v8896
        %v8898 = vmul.f32 %v8897, %v8698
        %v8899 = vadd.f32 %v8887, %v8898
        %v8900 = vadd.f32 %v8888, %v8893
        %v8901 = vmul.f32 %v8893, %v726
        %v8902 = vadd.f32 %v8890, %v8901
        %v8903 = vmul.f32 %v8714, 0.0625
        %v8905 = vrot.slane %v8900, 5
        %v8908 = vrot.slane %v8902, 3
        %v8910 = vsel %vm609, %v8899, %v8905
        %vm8911 = vcmask 1043456
        %v8912 = vsel %vm8911, %v8910, %v8903
        %vm8913 = vcmask 1044480
        %v8914 = vsel %vm8913, %v8912, %v8908
        %v8915 = vsel %vm7088, %v8914, 0.0
        %8916 = vst [vmem:[%s553] sm:$0xff] %v8915
        %s8917 = sand.u32 %s407, 1
        %s8918 = scalar_lea.sflag [#allocation4], %s8917
        %s8919 = sand.u32 %s407, 1
        %s8920 = smul.addr %s8919, 8
        %s8921 = scalar_lea.vmem [#allocation3], %s8920
        // Predicated region
        $region89: #{tpu_custom_call.1} parent=87 // pred_check
          %p8922 = pneg %p417
        $region90: #{tpu_custom_call.1} parent=87 // pred_check_branch
          %8924 = sbr.rel (%p8922) target = $region92
        $region91: #{tpu_custom_call.1} parent=87 // pred_region
          %s8926 = ssub.s32 128, 128
          %8927 = vsyncadd %s8918, %s8926
          %s8928 = smul.addr %s32, 128
          %s8929 = scalar_lea.hbm %s17, %s8928
          %s8931 = sshll.u32 %s8921, 4
          %s8932 = int_to_ptr.vmem [resolvable:$true] %s8931
          %8934 = dma.vmem_to_hbm [thread:$0]  %s8932, 128, %s8929, %s8918
        $region92: #{tpu_custom_call.1} parent=87 // pred_fallthru
          _
      $region88: #{tpu_custom_call.1} parent=5 // pred_fallthru
        _
      %p8935 = scmp.le.s32.totalorder 2, %s27
      // Predicated region
      $region93: #{tpu_custom_call.1} parent=5 // pred_check
        %p8936 = pneg %p8935
      $region94: #{tpu_custom_call.1} parent=5 // pred_check_branch
        %8938 = sbr.rel (%p8936) target = $region96
      $region95: #{tpu_custom_call.1} parent=5 // pred_region
        %s8939 = ssub.s32 %s27, 2
        // Predicated region
        $region97: #{tpu_custom_call.1} parent=95 // pred_check
          %p8940 = pneg %p423
        $region98: #{tpu_custom_call.1} parent=95 // pred_check_branch
          %8942 = sbr.rel (%p8940) target = $region100
        $region99: #{tpu_custom_call.1} parent=95 // pred_region
          %s8943 = sand.u32 %s408, 1
          %s8944 = scalar_lea.sflag [#allocation4], %s8943
          %s8945 = sand.u32 %s408, 1
          %s8946 = smul.addr %s8945, 8
          %s8947 = scalar_lea.vmem [#allocation3], %s8946
          %8948 = dma.done %s8944, 128
        $region100: #{tpu_custom_call.1} parent=95 // pred_fallthru
          _
      $region96: #{tpu_custom_call.1} parent=5 // pred_fallthru
        _
    $region6: #{tpu_custom_call.1} parent=1 // loop_footer
      %s31 = sadd.s32 1, %s27
    $region7: #{tpu_custom_call.1} parent=1 // loop_footer_branch
      %26 = sbr.rel target = $region3
    $region8: #{tpu_custom_call.1} parent=1 // loop_exit
      _
    %8949 = vsyncpa [#allocation4], 1
    %s8950 = scalar_lea.sflag [#allocation4], 1
    %8951 = vsyncpa %s8950, 1

</llo_original>
